<compile_context>
chip_gen: v5e
topology: v5e:2x2
jax: 0.10.0
libtpu: 0.0.40
codegen_flags: <defaults>
</compile_context>

<pallas_src>
import jax
import jax.numpy as jnp
from jax.experimental import pallas as pl
from jax.experimental.pallas import tpu as pltpu

# ---- synthetic "args" (small shapes, consistent with the module) ------------
N_BATCH = 2
C_IN = 4          # input_dim
H = 16
W = 16
N_CHANNEL = 32    # args.nChannel
N_CONV = 3        # args.nConv  (=> conv1 + 2 middle conv layers, all 3x3)
EPS = 1e-5        # nn.BatchNorm2d default

_W_OFF = 8        # sublane-aligned column offset of the interior in the
                  # padded VMEM scratch (left/right halo of 8 f32 sublanes)


# ---- in-kernel helpers ------------------------------------------------------
def _bn(y, gamma, beta):
    # PyTorch training-mode BN: biased variance over the (N*H*W) rows, per channel.
    mean = jnp.mean(y, axis=0, keepdims=True)
    yc = y - mean
    var = jnp.mean(yc * yc, axis=0, keepdims=True)
    return yc * jax.lax.rsqrt(var + EPS) * gamma + beta


def _csnet_kernel(x_ref, w3_ref, b3_ref, g3_ref, bt3_ref,
                  w1_ref, g1_ref, bt1_ref, o_ref, pad_ref):
    n, h, w, c = x_ref.shape
    m = n * h * w
    off = _W_OFF

    # Zero the padded scratch once; the halo stays zero for every layer
    # because only the (tile-aligned) interior is ever rewritten.
    pad_ref[...] = jnp.zeros_like(pad_ref)
    pad_ref[:, 1:h + 1, off:off + w, :] = x_ref[...]

    y = None
    for layer in range(N_CONV):
        # im2col: 9 shifted windows -> one (m, 9*c) matrix -> single big-K matmul.
        cols = [
            pad_ref[:, ky:ky + h, off - 1 + kx:off - 1 + kx + w, :].reshape(m, c)
            for ky in range(3) for kx in range(3)
        ]
        lhs = jnp.concatenate(cols, axis=-1).astype(jnp.bfloat16)    # (m, 9c)
        acc = jnp.dot(lhs, w3_ref[layer],
                      preferred_element_type=jnp.float32)            # (m, c) f32
        acc = jnp.maximum(acc + b3_ref[layer], 0.0)                  # bias + relu
        y = _bn(acc, g3_ref[layer], bt3_ref[layer])                  # (m, c) f32
        if layer < N_CONV - 1:
            pad_ref[:, 1:h + 1, off:off + w, :] = y.reshape(n, h, w, c)

    # conv3 (1x1) -> bn3, no relu.  conv3's bias is omitted: bn3's mean
    # subtraction cancels it exactly.
    acc = jnp.dot(y.astype(jnp.bfloat16), w1_ref[...],
                  preferred_element_type=jnp.float32)                 # (m, c)
    o_ref[...] = _bn(acc, g1_ref[...], bt1_ref[...]).reshape(n, h, w, c)


# ---- fused pallas_call wrapper ----------------------------------------------
def csnet_forward(x_nchw, params):
    """x_nchw: (N, C_in, H, W) float32 -> (N, nChannel, H, W) float32."""
    n, cin, h, w = x_nchw.shape
    c = N_CHANNEL

    # NCHW -> NHWC; zero-pad input channels to nChannel so every 3x3 layer has
    # identical shapes (exact, since the matching weight rows are zero too).
    x = jnp.transpose(x_nchw, (0, 2, 3, 1))
    x = jnp.pad(x, ((0, 0), (0, 0), (0, 0), (0, c - cin)))

    # Stack the nConv 3x3 conv weights as (nConv, 9*c, c); the (ky, kx, cin)
    # flattening order matches the kernel's im2col column order.  MXU operands
    # are cast to bf16 once, here.
    w1p = jnp.pad(params["w1"], ((0, 0), (0, 0), (0, c - cin), (0, 0)))
    w3 = jnp.stack([w1p.reshape(9 * c, c)] +
                   [wi.reshape(9 * c, c) for wi in params["w2"]]).astype(jnp.bfloat16)
    b3 = jnp.stack([params["b1"]] + list(params["b2"]))      # (nConv, 1, c)
    g3 = jnp.stack([params["g1"]] + list(params["g2"]))      # (nConv, 1, c)
    bt3 = jnp.stack([params["beta1"]] + list(params["beta2"]))
    w1x1 = params["w3"].astype(jnp.bfloat16)                 # (c, c)
    g1, bt1 = params["g3"], params["beta3"]                  # (1, c)
    # params["b3"] is intentionally unused (canceled exactly by bn3).

    m = n * h * w
    flops = 2 * m * (9 * c) * c * N_CONV + 2 * m * c * c
    operands = (x, w3, b3, g3, bt3, w1x1, g1, bt1)
    bytes_accessed = sum(int(a.size) * a.dtype.itemsize for a in operands)
    bytes_accessed += m * c * 4  # output

    vmem = pl.BlockSpec(memory_space=pltpu.MemorySpace.VMEM)
    out = pl.pallas_call(
        _csnet_kernel,
        out_shape=jax.ShapeDtypeStruct((n, h, w, c), jnp.float32),
        in_specs=[vmem] * len(operands),
        out_specs=vmem,
        scratch_shapes=[pltpu.VMEM((n, h + 2, w + 2 * _W_OFF, c), jnp.float32)],
        cost_estimate=pl.CostEstimate(flops=flops,
                                      transcendentals=(N_CONV + 1) * c,
                                      bytes_accessed=bytes_accessed),
    )(*operands)
    return jnp.transpose(out, (0, 3, 1, 2))                  # NHWC -> NCHW


# ---- deterministic parameter construction -----------------------------------
def make_params(key):
    keys = jax.random.split(key, 2 + 2 * (N_CONV - 1) + 2)
    k_it = iter(keys)
    params = {}
    # conv1: stored as (3, 3, Cin, Cout) (HWIO)
    params["w1"] = 0.1 * jax.random.normal(next(k_it), (3, 3, C_IN, N_CHANNEL),
                                           jnp.float32)
    params["b1"] = 0.01 * jax.random.normal(next(k_it), (1, N_CHANNEL), jnp.float32)
    params["g1"] = jnp.ones((1, N_CHANNEL), jnp.float32)      # BN gamma init
    params["beta1"] = jnp.zeros((1, N_CHANNEL), jnp.float32)  # BN beta init
    params["w2"], params["b2"], params["g2"], params["beta2"] = [], [], [], []
    for _ in range(N_CONV - 1):
        params["w2"].append(0.1 * jax.random.normal(
            next(k_it), (3, 3, N_CHANNEL, N_CHANNEL), jnp.float32))
        params["b2"].append(0.01 * jax.random.normal(
            next(k_it), (1, N_CHANNEL), jnp.float32))
        params["g2"].append(jnp.ones((1, N_CHANNEL), jnp.float32))
        params["beta2"].append(jnp.zeros((1, N_CHANNEL), jnp.float32))
    # conv3: 1x1, stored as (Cin, Cout)
    params["w3"] = 0.1 * jax.random.normal(next(k_it), (N_CHANNEL, N_CHANNEL),
                                           jnp.float32)
    params["b3"] = 0.01 * jax.random.normal(next(k_it), (1, N_CHANNEL), jnp.float32)
    params["g3"] = jnp.ones((1, N_CHANNEL), jnp.float32)
    params["beta3"] = jnp.zeros((1, N_CHANNEL), jnp.float32)
    return params


if __name__ == "__main__":
    key = jax.random.PRNGKey(0)
    kx_, kp = jax.random.split(key)
    x = jax.random.normal(kx_, (N_BATCH, C_IN, H, W), jnp.float32)
    params = make_params(kp)

    fwd = jax.jit(csnet_forward)
    out = fwd(x, params)
    jax.block_until_ready(out)

    assert out.shape == (N_BATCH, N_CHANNEL, H, W), out.shape
    assert out.dtype == jnp.float32
    assert bool(jnp.all(jnp.isfinite(out)))
    print("KERNEL_OK")
</pallas_src>

<mosaic_0001>
module attributes {stable_mosaic.version = 11 : i64} {
  func.func @_csnet_kernel(%arg0: memref<2x16x16x32xf32, #tpu.memory_space<vmem>>, %arg1: memref<3x288x32xbf16, #tpu.memory_space<vmem>>, %arg2: memref<3x1x32xf32, #tpu.memory_space<vmem>>, %arg3: memref<3x1x32xf32, #tpu.memory_space<vmem>>, %arg4: memref<3x1x32xf32, #tpu.memory_space<vmem>>, %arg5: memref<32x32xbf16, #tpu.memory_space<vmem>>, %arg6: memref<1x32xf32, #tpu.memory_space<vmem>>, %arg7: memref<1x32xf32, #tpu.memory_space<vmem>>, %arg8: memref<2x16x16x32xf32, #tpu.memory_space<vmem>>, %arg9: memref<2x18x32x32xf32, #tpu.memory_space<vmem>>) attributes {dimension_semantics = [], scalar_prefetch = 0 : i64, scratch_operands = 1 : i64, tpu.core_type = #tpu.core_type<tc>} {
    %cst = arith.constant 0.000000e+00 : f32
    %0 = vector.broadcast %cst : f32 to vector<2x18x32x32xf32>
    %c0 = arith.constant 0 : index
    %c0_0 = arith.constant 0 : index
    %c0_1 = arith.constant 0 : index
    %c0_2 = arith.constant 0 : index
    %1 = vector.load %arg9[%c0, %c0_0, %c0_1, %c0_2] : memref<2x18x32x32xf32, #tpu.memory_space<vmem>>, vector<2x18x32x32xf32>
    tpu.vector_store %arg9[%c0, %c0_0, %c0_1, %c0_2], %0 {strides = array<i32>} : memref<2x18x32x32xf32, #tpu.memory_space<vmem>>, vector<2x18x32x32xf32>,
    %c0_3 = arith.constant 0 : index
    %c0_4 = arith.constant 0 : index
    %c0_5 = arith.constant 0 : index
    %c0_6 = arith.constant 0 : index
    %2 = vector.load %arg0[%c0_3, %c0_4, %c0_5, %c0_6] : memref<2x16x16x32xf32, #tpu.memory_space<vmem>>, vector<2x16x16x32xf32>
    %c0_7 = arith.constant 0 : index
    %c1 = arith.constant 1 : index
    %c8 = arith.constant 8 : index
    %c0_8 = arith.constant 0 : index
    %3 = vector.load %arg9[%c0_7, %c1, %c8, %c0_8] : memref<2x18x32x32xf32, #tpu.memory_space<vmem>>, vector<2x16x16x32xf32>
    tpu.vector_store %arg9[%c0_7, %c1, %c8, %c0_8], %2 {strides = array<i32>} : memref<2x18x32x32xf32, #tpu.memory_space<vmem>>, vector<2x16x16x32xf32>,
    %c0_9 = arith.constant 0 : index
    %c0_10 = arith.constant 0 : index
    %c7 = arith.constant 7 : index
    %c0_11 = arith.constant 0 : index
    %4 = vector.load %arg9[%c0_9, %c0_10, %c7, %c0_11] : memref<2x18x32x32xf32, #tpu.memory_space<vmem>>, vector<2x16x16x32xf32>
    %5 = vector.shape_cast %4 : vector<2x16x16x32xf32> to vector<512x32xf32>
    %c0_12 = arith.constant 0 : index
    %c0_13 = arith.constant 0 : index
    %c8_14 = arith.constant 8 : index
    %c0_15 = arith.constant 0 : index
    %6 = vector.load %arg9[%c0_12, %c0_13, %c8_14, %c0_15] : memref<2x18x32x32xf32, #tpu.memory_space<vmem>>, vector<2x16x16x32xf32>
    %7 = vector.shape_cast %6 : vector<2x16x16x32xf32> to vector<512x32xf32>
    %c0_16 = arith.constant 0 : index
    %c0_17 = arith.constant 0 : index
    %c9 = arith.constant 9 : index
    %c0_18 = arith.constant 0 : index
    %8 = vector.load %arg9[%c0_16, %c0_17, %c9, %c0_18] : memref<2x18x32x32xf32, #tpu.memory_space<vmem>>, vector<2x16x16x32xf32>
    %9 = vector.shape_cast %8 : vector<2x16x16x32xf32> to vector<512x32xf32>
    %c0_19 = arith.constant 0 : index
    %c1_20 = arith.constant 1 : index
    %c7_21 = arith.constant 7 : index
    %c0_22 = arith.constant 0 : index
    %10 = vector.load %arg9[%c0_19, %c1_20, %c7_21, %c0_22] : memref<2x18x32x32xf32, #tpu.memory_space<vmem>>, vector<2x16x16x32xf32>
    %11 = vector.shape_cast %10 : vector<2x16x16x32xf32> to vector<512x32xf32>
    %c0_23 = arith.constant 0 : index
    %c1_24 = arith.constant 1 : index
    %c8_25 = arith.constant 8 : index
    %c0_26 = arith.constant 0 : index
    %12 = vector.load %arg9[%c0_23, %c1_24, %c8_25, %c0_26] : memref<2x18x32x32xf32, #tpu.memory_space<vmem>>, vector<2x16x16x32xf32>
    %13 = vector.shape_cast %12 : vector<2x16x16x32xf32> to vector<512x32xf32>
    %c0_27 = arith.constant 0 : index
    %c1_28 = arith.constant 1 : index
    %c9_29 = arith.constant 9 : index
    %c0_30 = arith.constant 0 : index
    %14 = vector.load %arg9[%c0_27, %c1_28, %c9_29, %c0_30] : memref<2x18x32x32xf32, #tpu.memory_space<vmem>>, vector<2x16x16x32xf32>
    %15 = vector.shape_cast %14 : vector<2x16x16x32xf32> to vector<512x32xf32>
    %c0_31 = arith.constant 0 : index
    %c2 = arith.constant 2 : index
    %c7_32 = arith.constant 7 : index
    %c0_33 = arith.constant 0 : index
    %16 = vector.load %arg9[%c0_31, %c2, %c7_32, %c0_33] : memref<2x18x32x32xf32, #tpu.memory_space<vmem>>, vector<2x16x16x32xf32>
    %17 = vector.shape_cast %16 : vector<2x16x16x32xf32> to vector<512x32xf32>
    %c0_34 = arith.constant 0 : index
    %c2_35 = arith.constant 2 : index
    %c8_36 = arith.constant 8 : index
    %c0_37 = arith.constant 0 : index
    %18 = vector.load %arg9[%c0_34, %c2_35, %c8_36, %c0_37] : memref<2x18x32x32xf32, #tpu.memory_space<vmem>>, vector<2x16x16x32xf32>
    %19 = vector.shape_cast %18 : vector<2x16x16x32xf32> to vector<512x32xf32>
    %c0_38 = arith.constant 0 : index
    %c2_39 = arith.constant 2 : index
    %c9_40 = arith.constant 9 : index
    %c0_41 = arith.constant 0 : index
    %20 = vector.load %arg9[%c0_38, %c2_39, %c9_40, %c0_41] : memref<2x18x32x32xf32, #tpu.memory_space<vmem>>, vector<2x16x16x32xf32>
    %21 = vector.shape_cast %20 : vector<2x16x16x32xf32> to vector<512x32xf32>
    %22 = tpu.concatenate %5, %7, %9, %11, %13, %15, %17, %19, %21 in 1 : vector<512x32xf32>, vector<512x32xf32>, vector<512x32xf32>, vector<512x32xf32>, vector<512x32xf32>, vector<512x32xf32>, vector<512x32xf32>, vector<512x32xf32>, vector<512x32xf32> -> vector<512x288xf32>
    %23 = arith.truncf %22 : vector<512x288xf32> to vector<512x288xbf16>
    %c0_42 = arith.constant 0 : index
    %c0_43 = arith.constant 0 : index
    %c0_44 = arith.constant 0 : index
    %24 = vector.load %arg1[%c0_42, %c0_43, %c0_44] : memref<3x288x32xbf16, #tpu.memory_space<vmem>>, vector<1x288x32xbf16>
    %25 = vector.shape_cast %24 : vector<1x288x32xbf16> to vector<288x32xbf16>
    %cst_45 = arith.constant dense<0.000000e+00> : vector<512x32xf32>
    %26 = tpu.matmul %23, %25, %cst_45 {dimension_numbers = #tpu.dot_dimension_numbers<[1], [0], [0], [1], [0, 0, 1, 1], [], []>} : vector<512x288xbf16>, vector<288x32xbf16>, vector<512x32xf32> -> vector<512x32xf32>
    %c0_46 = arith.constant 0 : index
    %c0_47 = arith.constant 0 : index
    %c0_48 = arith.constant 0 : index
    %27 = vector.load %arg2[%c0_46, %c0_47, %c0_48] : memref<3x1x32xf32, #tpu.memory_space<vmem>>, vector<1x1x32xf32>
    %28 = vector.shape_cast %27 : vector<1x1x32xf32> to vector<1x32xf32>
    %29 = vector.broadcast %28 : vector<1x32xf32> to vector<512x32xf32>
    %30 = arith.addf %26, %29 : vector<512x32xf32>
    %cst_49 = arith.constant 0.000000e+00 : f32
    %31 = vector.broadcast %cst_49 : f32 to vector<512x32xf32>
    %32 = arith.maximumf %30, %31 : vector<512x32xf32>
    %c0_50 = arith.constant 0 : index
    %c0_51 = arith.constant 0 : index
    %c0_52 = arith.constant 0 : index
    %33 = vector.load %arg3[%c0_50, %c0_51, %c0_52] : memref<3x1x32xf32, #tpu.memory_space<vmem>>, vector<1x1x32xf32>
    %34 = vector.shape_cast %33 : vector<1x1x32xf32> to vector<1x32xf32>
    %c0_53 = arith.constant 0 : index
    %c0_54 = arith.constant 0 : index
    %c0_55 = arith.constant 0 : index
    %35 = vector.load %arg4[%c0_53, %c0_54, %c0_55] : memref<3x1x32xf32, #tpu.memory_space<vmem>>, vector<1x1x32xf32>
    %36 = vector.shape_cast %35 : vector<1x1x32xf32> to vector<1x32xf32>
    %cst_56 = arith.constant dense<0.000000e+00> : vector<32xf32>
    %37 = vector.multi_reduction <add>, %32, %cst_56 [0] : vector<512x32xf32> to vector<32xf32>
    %38 = vector.shape_cast %37 : vector<32xf32> to vector<1x32xf32>
    %cst_57 = arith.constant 5.120000e+02 : f32
    %39 = vector.broadcast %cst_57 : f32 to vector<1x32xf32>
    %40 = arith.divf %38, %39 : vector<1x32xf32>
    %41 = vector.broadcast %40 : vector<1x32xf32> to vector<512x32xf32>
    %42 = arith.subf %32, %41 : vector<512x32xf32>
    %43 = arith.mulf %42, %42 : vector<512x32xf32>
    %cst_58 = arith.constant dense<0.000000e+00> : vector<32xf32>
    %44 = vector.multi_reduction <add>, %43, %cst_58 [0] : vector<512x32xf32> to vector<32xf32>
    %45 = vector.shape_cast %44 : vector<32xf32> to vector<1x32xf32>
    %cst_59 = arith.constant 5.120000e+02 : f32
    %46 = vector.broadcast %cst_59 : f32 to vector<1x32xf32>
    %47 = arith.divf %45, %46 : vector<1x32xf32>
    %cst_60 = arith.constant 9.99999974E-6 : f32
    %48 = vector.broadcast %cst_60 : f32 to vector<1x32xf32>
    %49 = arith.addf %47, %48 : vector<1x32xf32>
    %50 = math.rsqrt %49 : vector<1x32xf32>
    %51 = vector.broadcast %50 : vector<1x32xf32> to vector<512x32xf32>
    %52 = arith.mulf %42, %51 : vector<512x32xf32>
    %53 = vector.broadcast %34 : vector<1x32xf32> to vector<512x32xf32>
    %54 = arith.mulf %52, %53 : vector<512x32xf32>
    %55 = vector.broadcast %36 : vector<1x32xf32> to vector<512x32xf32>
    %56 = arith.addf %54, %55 : vector<512x32xf32>
    %57 = vector.shape_cast %56 : vector<512x32xf32> to vector<2x16x16x32xf32>
    %c0_61 = arith.constant 0 : index
    %c1_62 = arith.constant 1 : index
    %c8_63 = arith.constant 8 : index
    %c0_64 = arith.constant 0 : index
    %58 = vector.load %arg9[%c0_61, %c1_62, %c8_63, %c0_64] : memref<2x18x32x32xf32, #tpu.memory_space<vmem>>, vector<2x16x16x32xf32>
    tpu.vector_store %arg9[%c0_61, %c1_62, %c8_63, %c0_64], %57 {strides = array<i32>} : memref<2x18x32x32xf32, #tpu.memory_space<vmem>>, vector<2x16x16x32xf32>,
    %c0_65 = arith.constant 0 : index
    %c0_66 = arith.constant 0 : index
    %c7_67 = arith.constant 7 : index
    %c0_68 = arith.constant 0 : index
    %59 = vector.load %arg9[%c0_65, %c0_66, %c7_67, %c0_68] : memref<2x18x32x32xf32, #tpu.memory_space<vmem>>, vector<2x16x16x32xf32>
    %60 = vector.shape_cast %59 : vector<2x16x16x32xf32> to vector<512x32xf32>
    %c0_69 = arith.constant 0 : index
    %c0_70 = arith.constant 0 : index
    %c8_71 = arith.constant 8 : index
    %c0_72 = arith.constant 0 : index
    %61 = vector.load %arg9[%c0_69, %c0_70, %c8_71, %c0_72] : memref<2x18x32x32xf32, #tpu.memory_space<vmem>>, vector<2x16x16x32xf32>
    %62 = vector.shape_cast %61 : vector<2x16x16x32xf32> to vector<512x32xf32>
    %c0_73 = arith.constant 0 : index
    %c0_74 = arith.constant 0 : index
    %c9_75 = arith.constant 9 : index
    %c0_76 = arith.constant 0 : index
    %63 = vector.load %arg9[%c0_73, %c0_74, %c9_75, %c0_76] : memref<2x18x32x32xf32, #tpu.memory_space<vmem>>, vector<2x16x16x32xf32>
    %64 = vector.shape_cast %63 : vector<2x16x16x32xf32> to vector<512x32xf32>
    %c0_77 = arith.constant 0 : index
    %c1_78 = arith.constant 1 : index
    %c7_79 = arith.constant 7 : index
    %c0_80 = arith.constant 0 : index
    %65 = vector.load %arg9[%c0_77, %c1_78, %c7_79, %c0_80] : memref<2x18x32x32xf32, #tpu.memory_space<vmem>>, vector<2x16x16x32xf32>
    %66 = vector.shape_cast %65 : vector<2x16x16x32xf32> to vector<512x32xf32>
    %c0_81 = arith.constant 0 : index
    %c1_82 = arith.constant 1 : index
    %c8_83 = arith.constant 8 : index
    %c0_84 = arith.constant 0 : index
    %67 = vector.load %arg9[%c0_81, %c1_82, %c8_83, %c0_84] : memref<2x18x32x32xf32, #tpu.memory_space<vmem>>, vector<2x16x16x32xf32>
    %68 = vector.shape_cast %67 : vector<2x16x16x32xf32> to vector<512x32xf32>
    %c0_85 = arith.constant 0 : index
    %c1_86 = arith.constant 1 : index
    %c9_87 = arith.constant 9 : index
    %c0_88 = arith.constant 0 : index
    %69 = vector.load %arg9[%c0_85, %c1_86, %c9_87, %c0_88] : memref<2x18x32x32xf32, #tpu.memory_space<vmem>>, vector<2x16x16x32xf32>
    %70 = vector.shape_cast %69 : vector<2x16x16x32xf32> to vector<512x32xf32>
    %c0_89 = arith.constant 0 : index
    %c2_90 = arith.constant 2 : index
    %c7_91 = arith.constant 7 : index
    %c0_92 = arith.constant 0 : index
    %71 = vector.load %arg9[%c0_89, %c2_90, %c7_91, %c0_92] : memref<2x18x32x32xf32, #tpu.memory_space<vmem>>, vector<2x16x16x32xf32>
    %72 = vector.shape_cast %71 : vector<2x16x16x32xf32> to vector<512x32xf32>
    %c0_93 = arith.constant 0 : index
    %c2_94 = arith.constant 2 : index
    %c8_95 = arith.constant 8 : index
    %c0_96 = arith.constant 0 : index
    %73 = vector.load %arg9[%c0_93, %c2_94, %c8_95, %c0_96] : memref<2x18x32x32xf32, #tpu.memory_space<vmem>>, vector<2x16x16x32xf32>
    %74 = vector.shape_cast %73 : vector<2x16x16x32xf32> to vector<512x32xf32>
    %c0_97 = arith.constant 0 : index
    %c2_98 = arith.constant 2 : index
    %c9_99 = arith.constant 9 : index
    %c0_100 = arith.constant 0 : index
    %75 = vector.load %arg9[%c0_97, %c2_98, %c9_99, %c0_100] : memref<2x18x32x32xf32, #tpu.memory_space<vmem>>, vector<2x16x16x32xf32>
    %76 = vector.shape_cast %75 : vector<2x16x16x32xf32> to vector<512x32xf32>
    %77 = tpu.concatenate %60, %62, %64, %66, %68, %70, %72, %74, %76 in 1 : vector<512x32xf32>, vector<512x32xf32>, vector<512x32xf32>, vector<512x32xf32>, vector<512x32xf32>, vector<512x32xf32>, vector<512x32xf32>, vector<512x32xf32>, vector<512x32xf32> -> vector<512x288xf32>
    %78 = arith.truncf %77 : vector<512x288xf32> to vector<512x288xbf16>
    %c1_101 = arith.constant 1 : index
    %c0_102 = arith.constant 0 : index
    %c0_103 = arith.constant 0 : index
    %79 = vector.load %arg1[%c1_101, %c0_102, %c0_103] : memref<3x288x32xbf16, #tpu.memory_space<vmem>>, vector<1x288x32xbf16>
    %80 = vector.shape_cast %79 : vector<1x288x32xbf16> to vector<288x32xbf16>
    %cst_104 = arith.constant dense<0.000000e+00> : vector<512x32xf32>
    %81 = tpu.matmul %78, %80, %cst_104 {dimension_numbers = #tpu.dot_dimension_numbers<[1], [0], [0], [1], [0, 0, 1, 1], [], []>} : vector<512x288xbf16>, vector<288x32xbf16>, vector<512x32xf32> -> vector<512x32xf32>
    %c1_105 = arith.constant 1 : index
    %c0_106 = arith.constant 0 : index
    %c0_107 = arith.constant 0 : index
    %82 = vector.load %arg2[%c1_105, %c0_106, %c0_107] : memref<3x1x32xf32, #tpu.memory_space<vmem>>, vector<1x1x32xf32>
    %83 = vector.shape_cast %82 : vector<1x1x32xf32> to vector<1x32xf32>
    %84 = vector.broadcast %83 : vector<1x32xf32> to vector<512x32xf32>
    %85 = arith.addf %81, %84 : vector<512x32xf32>
    %cst_108 = arith.constant 0.000000e+00 : f32
    %86 = vector.broadcast %cst_108 : f32 to vector<512x32xf32>
    %87 = arith.maximumf %85, %86 : vector<512x32xf32>
    %c1_109 = arith.constant 1 : index
    %c0_110 = arith.constant 0 : index
    %c0_111 = arith.constant 0 : index
    %88 = vector.load %arg3[%c1_109, %c0_110, %c0_111] : memref<3x1x32xf32, #tpu.memory_space<vmem>>, vector<1x1x32xf32>
    %89 = vector.shape_cast %88 : vector<1x1x32xf32> to vector<1x32xf32>
    %c1_112 = arith.constant 1 : index
    %c0_113 = arith.constant 0 : index
    %c0_114 = arith.constant 0 : index
    %90 = vector.load %arg4[%c1_112, %c0_113, %c0_114] : memref<3x1x32xf32, #tpu.memory_space<vmem>>, vector<1x1x32xf32>
    %91 = vector.shape_cast %90 : vector<1x1x32xf32> to vector<1x32xf32>
    %cst_115 = arith.constant dense<0.000000e+00> : vector<32xf32>
    %92 = vector.multi_reduction <add>, %87, %cst_115 [0] : vector<512x32xf32> to vector<32xf32>
    %93 = vector.shape_cast %92 : vector<32xf32> to vector<1x32xf32>
    %cst_116 = arith.constant 5.120000e+02 : f32
    %94 = vector.broadcast %cst_116 : f32 to vector<1x32xf32>
    %95 = arith.divf %93, %94 : vector<1x32xf32>
    %96 = vector.broadcast %95 : vector<1x32xf32> to vector<512x32xf32>
    %97 = arith.subf %87, %96 : vector<512x32xf32>
    %98 = arith.mulf %97, %97 : vector<512x32xf32>
    %cst_117 = arith.constant dense<0.000000e+00> : vector<32xf32>
    %99 = vector.multi_reduction <add>, %98, %cst_117 [0] : vector<512x32xf32> to vector<32xf32>
    %100 = vector.shape_cast %99 : vector<32xf32> to vector<1x32xf32>
    %cst_118 = arith.constant 5.120000e+02 : f32
    %101 = vector.broadcast %cst_118 : f32 to vector<1x32xf32>
    %102 = arith.divf %100, %101 : vector<1x32xf32>
    %cst_119 = arith.constant 9.99999974E-6 : f32
    %103 = vector.broadcast %cst_119 : f32 to vector<1x32xf32>
    %104 = arith.addf %102, %103 : vector<1x32xf32>
    %105 = math.rsqrt %104 : vector<1x32xf32>
    %106 = vector.broadcast %105 : vector<1x32xf32> to vector<512x32xf32>
    %107 = arith.mulf %97, %106 : vector<512x32xf32>
    %108 = vector.broadcast %89 : vector<1x32xf32> to vector<512x32xf32>
    %109 = arith.mulf %107, %108 : vector<512x32xf32>
    %110 = vector.broadcast %91 : vector<1x32xf32> to vector<512x32xf32>
    %111 = arith.addf %109, %110 : vector<512x32xf32>
    %112 = vector.shape_cast %111 : vector<512x32xf32> to vector<2x16x16x32xf32>
    %c0_120 = arith.constant 0 : index
    %c1_121 = arith.constant 1 : index
    %c8_122 = arith.constant 8 : index
    %c0_123 = arith.constant 0 : index
    %113 = vector.load %arg9[%c0_120, %c1_121, %c8_122, %c0_123] : memref<2x18x32x32xf32, #tpu.memory_space<vmem>>, vector<2x16x16x32xf32>
    tpu.vector_store %arg9[%c0_120, %c1_121, %c8_122, %c0_123], %112 {strides = array<i32>} : memref<2x18x32x32xf32, #tpu.memory_space<vmem>>, vector<2x16x16x32xf32>,
    %c0_124 = arith.constant 0 : index
    %c0_125 = arith.constant 0 : index
    %c7_126 = arith.constant 7 : index
    %c0_127 = arith.constant 0 : index
    %114 = vector.load %arg9[%c0_124, %c0_125, %c7_126, %c0_127] : memref<2x18x32x32xf32, #tpu.memory_space<vmem>>, vector<2x16x16x32xf32>
    %115 = vector.shape_cast %114 : vector<2x16x16x32xf32> to vector<512x32xf32>
    %c0_128 = arith.constant 0 : index
    %c0_129 = arith.constant 0 : index
    %c8_130 = arith.constant 8 : index
    %c0_131 = arith.constant 0 : index
    %116 = vector.load %arg9[%c0_128, %c0_129, %c8_130, %c0_131] : memref<2x18x32x32xf32, #tpu.memory_space<vmem>>, vector<2x16x16x32xf32>
    %117 = vector.shape_cast %116 : vector<2x16x16x32xf32> to vector<512x32xf32>
    %c0_132 = arith.constant 0 : index
    %c0_133 = arith.constant 0 : index
    %c9_134 = arith.constant 9 : index
    %c0_135 = arith.constant 0 : index
    %118 = vector.load %arg9[%c0_132, %c0_133, %c9_134, %c0_135] : memref<2x18x32x32xf32, #tpu.memory_space<vmem>>, vector<2x16x16x32xf32>
    %119 = vector.shape_cast %118 : vector<2x16x16x32xf32> to vector<512x32xf32>
    %c0_136 = arith.constant 0 : index
    %c1_137 = arith.constant 1 : index
    %c7_138 = arith.constant 7 : index
    %c0_139 = arith.constant 0 : index
    %120 = vector.load %arg9[%c0_136, %c1_137, %c7_138, %c0_139] : memref<2x18x32x32xf32, #tpu.memory_space<vmem>>, vector<2x16x16x32xf32>
    %121 = vector.shape_cast %120 : vector<2x16x16x32xf32> to vector<512x32xf32>
    %c0_140 = arith.constant 0 : index
    %c1_141 = arith.constant 1 : index
    %c8_142 = arith.constant 8 : index
    %c0_143 = arith.constant 0 : index
    %122 = vector.load %arg9[%c0_140, %c1_141, %c8_142, %c0_143] : memref<2x18x32x32xf32, #tpu.memory_space<vmem>>, vector<2x16x16x32xf32>
    %123 = vector.shape_cast %122 : vector<2x16x16x32xf32> to vector<512x32xf32>
    %c0_144 = arith.constant 0 : index
    %c1_145 = arith.constant 1 : index
    %c9_146 = arith.constant 9 : index
    %c0_147 = arith.constant 0 : index
    %124 = vector.load %arg9[%c0_144, %c1_145, %c9_146, %c0_147] : memref<2x18x32x32xf32, #tpu.memory_space<vmem>>, vector<2x16x16x32xf32>
    %125 = vector.shape_cast %124 : vector<2x16x16x32xf32> to vector<512x32xf32>
    %c0_148 = arith.constant 0 : index
    %c2_149 = arith.constant 2 : index
    %c7_150 = arith.constant 7 : index
    %c0_151 = arith.constant 0 : index
    %126 = vector.load %arg9[%c0_148, %c2_149, %c7_150, %c0_151] : memref<2x18x32x32xf32, #tpu.memory_space<vmem>>, vector<2x16x16x32xf32>
    %127 = vector.shape_cast %126 : vector<2x16x16x32xf32> to vector<512x32xf32>
    %c0_152 = arith.constant 0 : index
    %c2_153 = arith.constant 2 : index
    %c8_154 = arith.constant 8 : index
    %c0_155 = arith.constant 0 : index
    %128 = vector.load %arg9[%c0_152, %c2_153, %c8_154, %c0_155] : memref<2x18x32x32xf32, #tpu.memory_space<vmem>>, vector<2x16x16x32xf32>
    %129 = vector.shape_cast %128 : vector<2x16x16x32xf32> to vector<512x32xf32>
    %c0_156 = arith.constant 0 : index
    %c2_157 = arith.constant 2 : index
    %c9_158 = arith.constant 9 : index
    %c0_159 = arith.constant 0 : index
    %130 = vector.load %arg9[%c0_156, %c2_157, %c9_158, %c0_159] : memref<2x18x32x32xf32, #tpu.memory_space<vmem>>, vector<2x16x16x32xf32>
    %131 = vector.shape_cast %130 : vector<2x16x16x32xf32> to vector<512x32xf32>
    %132 = tpu.concatenate %115, %117, %119, %121, %123, %125, %127, %129, %131 in 1 : vector<512x32xf32>, vector<512x32xf32>, vector<512x32xf32>, vector<512x32xf32>, vector<512x32xf32>, vector<512x32xf32>, vector<512x32xf32>, vector<512x32xf32>, vector<512x32xf32> -> vector<512x288xf32>
    %133 = arith.truncf %132 : vector<512x288xf32> to vector<512x288xbf16>
    %c2_160 = arith.constant 2 : index
    %c0_161 = arith.constant 0 : index
    %c0_162 = arith.constant 0 : index
    %134 = vector.load %arg1[%c2_160, %c0_161, %c0_162] : memref<3x288x32xbf16, #tpu.memory_space<vmem>>, vector<1x288x32xbf16>
    %135 = vector.shape_cast %134 : vector<1x288x32xbf16> to vector<288x32xbf16>
    %cst_163 = arith.constant dense<0.000000e+00> : vector<512x32xf32>
    %136 = tpu.matmul %133, %135, %cst_163 {dimension_numbers = #tpu.dot_dimension_numbers<[1], [0], [0], [1], [0, 0, 1, 1], [], []>} : vector<512x288xbf16>, vector<288x32xbf16>, vector<512x32xf32> -> vector<512x32xf32>
    %c2_164 = arith.constant 2 : index
    %c0_165 = arith.constant 0 : index
    %c0_166 = arith.constant 0 : index
    %137 = vector.load %arg2[%c2_164, %c0_165, %c0_166] : memref<3x1x32xf32, #tpu.memory_space<vmem>>, vector<1x1x32xf32>
    %138 = vector.shape_cast %137 : vector<1x1x32xf32> to vector<1x32xf32>
    %139 = vector.broadcast %138 : vector<1x32xf32> to vector<512x32xf32>
    %140 = arith.addf %136, %139 : vector<512x32xf32>
    %cst_167 = arith.constant 0.000000e+00 : f32
    %141 = vector.broadcast %cst_167 : f32 to vector<512x32xf32>
    %142 = arith.maximumf %140, %141 : vector<512x32xf32>
    %c2_168 = arith.constant 2 : index
    %c0_169 = arith.constant 0 : index
    %c0_170 = arith.constant 0 : index
    %143 = vector.load %arg3[%c2_168, %c0_169, %c0_170] : memref<3x1x32xf32, #tpu.memory_space<vmem>>, vector<1x1x32xf32>
    %144 = vector.shape_cast %143 : vector<1x1x32xf32> to vector<1x32xf32>
    %c2_171 = arith.constant 2 : index
    %c0_172 = arith.constant 0 : index
    %c0_173 = arith.constant 0 : index
    %145 = vector.load %arg4[%c2_171, %c0_172, %c0_173] : memref<3x1x32xf32, #tpu.memory_space<vmem>>, vector<1x1x32xf32>
    %146 = vector.shape_cast %145 : vector<1x1x32xf32> to vector<1x32xf32>
    %cst_174 = arith.constant dense<0.000000e+00> : vector<32xf32>
    %147 = vector.multi_reduction <add>, %142, %cst_174 [0] : vector<512x32xf32> to vector<32xf32>
    %148 = vector.shape_cast %147 : vector<32xf32> to vector<1x32xf32>
    %cst_175 = arith.constant 5.120000e+02 : f32
    %149 = vector.broadcast %cst_175 : f32 to vector<1x32xf32>
    %150 = arith.divf %148, %149 : vector<1x32xf32>
    %151 = vector.broadcast %150 : vector<1x32xf32> to vector<512x32xf32>
    %152 = arith.subf %142, %151 : vector<512x32xf32>
    %153 = arith.mulf %152, %152 : vector<512x32xf32>
    %cst_176 = arith.constant dense<0.000000e+00> : vector<32xf32>
    %154 = vector.multi_reduction <add>, %153, %cst_176 [0] : vector<512x32xf32> to vector<32xf32>
    %155 = vector.shape_cast %154 : vector<32xf32> to vector<1x32xf32>
    %cst_177 = arith.constant 5.120000e+02 : f32
    %156 = vector.broadcast %cst_177 : f32 to vector<1x32xf32>
    %157 = arith.divf %155, %156 : vector<1x32xf32>
    %cst_178 = arith.constant 9.99999974E-6 : f32
    %158 = vector.broadcast %cst_178 : f32 to vector<1x32xf32>
    %159 = arith.addf %157, %158 : vector<1x32xf32>
    %160 = math.rsqrt %159 : vector<1x32xf32>
    %161 = vector.broadcast %160 : vector<1x32xf32> to vector<512x32xf32>
    %162 = arith.mulf %152, %161 : vector<512x32xf32>
    %163 = vector.broadcast %144 : vector<1x32xf32> to vector<512x32xf32>
    %164 = arith.mulf %162, %163 : vector<512x32xf32>
    %165 = vector.broadcast %146 : vector<1x32xf32> to vector<512x32xf32>
    %166 = arith.addf %164, %165 : vector<512x32xf32>
    %167 = arith.truncf %166 : vector<512x32xf32> to vector<512x32xbf16>
    %c0_179 = arith.constant 0 : index
    %c0_180 = arith.constant 0 : index
    %168 = vector.load %arg5[%c0_179, %c0_180] : memref<32x32xbf16, #tpu.memory_space<vmem>>, vector<32x32xbf16>
    %cst_181 = arith.constant dense<0.000000e+00> : vector<512x32xf32>
    %169 = tpu.matmul %167, %168, %cst_181 {dimension_numbers = #tpu.dot_dimension_numbers<[1], [0], [0], [1], [0, 0, 1, 1], [], []>} : vector<512x32xbf16>, vector<32x32xbf16>, vector<512x32xf32> -> vector<512x32xf32>
    %c0_182 = arith.constant 0 : index
    %c0_183 = arith.constant 0 : index
    %170 = vector.load %arg6[%c0_182, %c0_183] : memref<1x32xf32, #tpu.memory_space<vmem>>, vector<1x32xf32>
    %c0_184 = arith.constant 0 : index
    %c0_185 = arith.constant 0 : index
    %171 = vector.load %arg7[%c0_184, %c0_185] : memref<1x32xf32, #tpu.memory_space<vmem>>, vector<1x32xf32>
    %cst_186 = arith.constant dense<0.000000e+00> : vector<32xf32>
    %172 = vector.multi_reduction <add>, %169, %cst_186 [0] : vector<512x32xf32> to vector<32xf32>
    %173 = vector.shape_cast %172 : vector<32xf32> to vector<1x32xf32>
    %cst_187 = arith.constant 5.120000e+02 : f32
    %174 = vector.broadcast %cst_187 : f32 to vector<1x32xf32>
    %175 = arith.divf %173, %174 : vector<1x32xf32>
    %176 = vector.broadcast %175 : vector<1x32xf32> to vector<512x32xf32>
    %177 = arith.subf %169, %176 : vector<512x32xf32>
    %178 = arith.mulf %177, %177 : vector<512x32xf32>
    %cst_188 = arith.constant dense<0.000000e+00> : vector<32xf32>
    %179 = vector.multi_reduction <add>, %178, %cst_188 [0] : vector<512x32xf32> to vector<32xf32>
    %180 = vector.shape_cast %179 : vector<32xf32> to vector<1x32xf32>
    %cst_189 = arith.constant 5.120000e+02 : f32
    %181 = vector.broadcast %cst_189 : f32 to vector<1x32xf32>
    %182 = arith.divf %180, %181 : vector<1x32xf32>
    %cst_190 = arith.constant 9.99999974E-6 : f32
    %183 = vector.broadcast %cst_190 : f32 to vector<1x32xf32>
    %184 = arith.addf %182, %183 : vector<1x32xf32>
    %185 = math.rsqrt %184 : vector<1x32xf32>
    %186 = vector.broadcast %185 : vector<1x32xf32> to vector<512x32xf32>
    %187 = arith.mulf %177, %186 : vector<512x32xf32>
    %188 = vector.broadcast %170 : vector<1x32xf32> to vector<512x32xf32>
    %189 = arith.mulf %187, %188 : vector<512x32xf32>
    %190 = vector.broadcast %171 : vector<1x32xf32> to vector<512x32xf32>
    %191 = arith.addf %189, %190 : vector<512x32xf32>
    %192 = vector.shape_cast %191 : vector<512x32xf32> to vector<2x16x16x32xf32>
    %c0_191 = arith.constant 0 : index
    %c0_192 = arith.constant 0 : index
    %c0_193 = arith.constant 0 : index
    %c0_194 = arith.constant 0 : index
    %193 = vector.load %arg8[%c0_191, %c0_192, %c0_193, %c0_194] : memref<2x16x16x32xf32, #tpu.memory_space<vmem>>, vector<2x16x16x32xf32>
    tpu.vector_store %arg8[%c0_191, %c0_192, %c0_193, %c0_194], %192 {strides = array<i32>} : memref<2x16x16x32xf32, #tpu.memory_space<vmem>>, vector<2x16x16x32xf32>,
    return
  }
}

</mosaic_0001>

<llo_original>
// kernel: csnet_forward.1
$region0: #{csnet_forward.1}
  #allocation0 [shape = 'u32[]', space=smem, size = 0x4, offset = 0x4, fixed_abs, tag = 'smem constant byte address 0x4 - core index']
  #allocation1 [shape = 'u32[72,128]{1,0:T(1,128)}', space=vmem, size = 0x9000, scoped, tag = 'internal scratch']
  #allocation2 [shape = 'f32[2,18,32,32]{3,2,1,0:T(8,128)}', space=vmem, size = 0x90000, scoped, tag = 'scratch operand']
  %s0 = inlined_call_operand.vmem [shape: f32[2,16,16,32], index: 0, kind: input, shape index: {}]
  %s1 = inlined_call_operand.vmem [shape: bf16[3,288,32], index: 1, kind: input, shape index: {}]
  %s2 = inlined_call_operand.vmem [shape: f32[3,1,32], index: 2, kind: input, shape index: {}]
  %s3 = inlined_call_operand.vmem [shape: f32[3,1,32], index: 3, kind: input, shape index: {}]
  %s4 = inlined_call_operand.vmem [shape: f32[3,1,32], index: 4, kind: input, shape index: {}]
  %s5 = inlined_call_operand.vmem [shape: bf16[32,32], index: 5, kind: input, shape index: {}]
  %s6 = inlined_call_operand.vmem [shape: f32[1,32], index: 6, kind: input, shape index: {}]
  %s7 = inlined_call_operand.vmem [shape: f32[1,32], index: 7, kind: input, shape index: {}]
  %s8 = inlined_call_operand.hbm [shape: f32[2,16,16,32], index: 8, kind: output, shape index: {}]
  %s9 = sld [smem:[#allocation0]]
  $region42: #{csnet_forward.1} parent=0
    _
  %s11 = ssub.s32 1, %s9
  %s12 = scalar_select 0, %s11, %s9
  $region1: #{csnet_forward.1} parent=0
    #allocation3 [shape = 'u8[262144]{0}', space=vmem, size = 0x40000, scoped, tag = 'output window, operand 0, single buffered']
    #allocation4 [shape = 's32[1]{0}', space=sflag, size = 0x4, scoped, tag = 'scoped memory for csnet_forward.1']
    %13 = vsyncpa [#allocation4], 0
    // Predicated region
    $region2: #{csnet_forward.1} parent=1 // pred_check
      _
    $region3: #{csnet_forward.1} parent=1 // pred_check_branch
      %15 = sbr.rel (0) target = $region5
    $region4: #{csnet_forward.1} parent=1 // pred_region
      _
    $region5: #{csnet_forward.1} parent=1 // pred_fallthru
      _
    // Predicated region
    $region6: #{csnet_forward.1} parent=1 // pred_check
      _
    $region7: #{csnet_forward.1} parent=1 // pred_check_branch
      %17 = sbr.rel (0) target = $region9
    $region8: #{csnet_forward.1} parent=1 // pred_region
      _
    $region9: #{csnet_forward.1} parent=1 // pred_fallthru
      _
    // Predicated region
    $region10: #{csnet_forward.1} parent=1 // pred_check
      _
    $region11: #{csnet_forward.1} parent=1 // pred_check_branch
      %19 = sbr.rel (0) target = $region13
    $region12: #{csnet_forward.1} parent=1 // pred_region
      _
    $region13: #{csnet_forward.1} parent=1 // pred_fallthru
      _
    // Predicated region
    $region14: #{csnet_forward.1} parent=1 // pred_check
      _
    $region15: #{csnet_forward.1} parent=1 // pred_check_branch
      %21 = sbr.rel (0) target = $region17
    $region16: #{csnet_forward.1} parent=1 // pred_region
      _
    $region17: #{csnet_forward.1} parent=1 // pred_fallthru
      _
    // Predicated region
    $region18: #{csnet_forward.1} parent=1 // pred_check
      _
    $region19: #{csnet_forward.1} parent=1 // pred_check_branch
      %23 = sbr.rel (0) target = $region21
    $region20: #{csnet_forward.1} parent=1 // pred_region
      _
    $region21: #{csnet_forward.1} parent=1 // pred_fallthru
      _
    // Predicated region
    $region22: #{csnet_forward.1} parent=1 // pred_check
      _
    $region23: #{csnet_forward.1} parent=1 // pred_check_branch
      %25 = sbr.rel (0) target = $region25
    $region24: #{csnet_forward.1} parent=1 // pred_region
      _
    $region25: #{csnet_forward.1} parent=1 // pred_fallthru
      _
    // Predicated region
    $region26: #{csnet_forward.1} parent=1 // pred_check
      _
    $region27: #{csnet_forward.1} parent=1 // pred_check_branch
      %27 = sbr.rel (0) target = $region29
    $region28: #{csnet_forward.1} parent=1 // pred_region
      _
    $region29: #{csnet_forward.1} parent=1 // pred_fallthru
      _
    // Predicated region
    $region30: #{csnet_forward.1} parent=1 // pred_check
      _
    $region31: #{csnet_forward.1} parent=1 // pred_check_branch
      %29 = sbr.rel (0) target = $region33
    $region32: #{csnet_forward.1} parent=1 // pred_region
      _
    $region33: #{csnet_forward.1} parent=1 // pred_fallthru
      _
    %vm31 = vcmask 261120
    %32 = vst.msk [vmem:[#allocation2] sm:$0xff] %vm31, 0.0
    %33 = vst.msk [vmem:[#allocation2 + $0x8] sm:$0xff] %vm31, 0.0
    %34 = vst.msk [vmem:[#allocation2 + $0x10] sm:$0xff] %vm31, 0.0
    %35 = vst.msk [vmem:[#allocation2 + $0x18] sm:$0xff] %vm31, 0.0
    %36 = vst.msk [vmem:[#allocation2 + $0x20] sm:$0xff] %vm31, 0.0
    %37 = vst.msk [vmem:[#allocation2 + $0x28] sm:$0xff] %vm31, 0.0
    %38 = vst.msk [vmem:[#allocation2 + $0x30] sm:$0xff] %vm31, 0.0
    %39 = vst.msk [vmem:[#allocation2 + $0x38] sm:$0xff] %vm31, 0.0
    %40 = vst.msk [vmem:[#allocation2 + $0x40] sm:$0xff] %vm31, 0.0
    %41 = vst.msk [vmem:[#allocation2 + $0x48] sm:$0xff] %vm31, 0.0
    %42 = vst.msk [vmem:[#allocation2 + $0x50] sm:$0xff] %vm31, 0.0
    %43 = vst.msk [vmem:[#allocation2 + $0x58] sm:$0xff] %vm31, 0.0
    %44 = vst.msk [vmem:[#allocation2 + $0x60] sm:$0xff] %vm31, 0.0
    %45 = vst.msk [vmem:[#allocation2 + $0x68] sm:$0xff] %vm31, 0.0
    %46 = vst.msk [vmem:[#allocation2 + $0x70] sm:$0xff] %vm31, 0.0
    %47 = vst.msk [vmem:[#allocation2 + $0x78] sm:$0xff] %vm31, 0.0
    %48 = vst.msk [vmem:[#allocation2 + $0x80] sm:$0xff] %vm31, 0.0
    %49 = vst.msk [vmem:[#allocation2 + $0x88] sm:$0xff] %vm31, 0.0
    %50 = vst.msk [vmem:[#allocation2 + $0x90] sm:$0xff] %vm31, 0.0
    %51 = vst.msk [vmem:[#allocation2 + $0x98] sm:$0xff] %vm31, 0.0
    %52 = vst.msk [vmem:[#allocation2 + $0xa0] sm:$0xff] %vm31, 0.0
    %53 = vst.msk [vmem:[#allocation2 + $0xa8] sm:$0xff] %vm31, 0.0
    %54 = vst.msk [vmem:[#allocation2 + $0xb0] sm:$0xff] %vm31, 0.0
    %55 = vst.msk [vmem:[#allocation2 + $0xb8] sm:$0xff] %vm31, 0.0
    %56 = vst.msk [vmem:[#allocation2 + $0xc0] sm:$0xff] %vm31, 0.0
    %57 = vst.msk [vmem:[#allocation2 + $0xc8] sm:$0xff] %vm31, 0.0
    %58 = vst.msk [vmem:[#allocation2 + $0xd0] sm:$0xff] %vm31, 0.0
    %59 = vst.msk [vmem:[#allocation2 + $0xd8] sm:$0xff] %vm31, 0.0
    %60 = vst.msk [vmem:[#allocation2 + $0xe0] sm:$0xff] %vm31, 0.0
    %61 = vst.msk [vmem:[#allocation2 + $0xe8] sm:$0xff] %vm31, 0.0
    %62 = vst.msk [vmem:[#allocation2 + $0xf0] sm:$0xff] %vm31, 0.0
    %63 = vst.msk [vmem:[#allocation2 + $0xf8] sm:$0xff] %vm31, 0.0
    %64 = vst.msk [vmem:[#allocation2 + $0x100] sm:$0xff] %vm31, 0.0
    %65 = vst.msk [vmem:[#allocation2 + $0x108] sm:$0xff] %vm31, 0.0
    %66 = vst.msk [vmem:[#allocation2 + $0x110] sm:$0xff] %vm31, 0.0
    %67 = vst.msk [vmem:[#allocation2 + $0x118] sm:$0xff] %vm31, 0.0
    %68 = vst.msk [vmem:[#allocation2 + $0x120] sm:$0xff] %vm31, 0.0
    %69 = vst.msk [vmem:[#allocation2 + $0x128] sm:$0xff] %vm31, 0.0
    %70 = vst.msk [vmem:[#allocation2 + $0x130] sm:$0xff] %vm31, 0.0
    %71 = vst.msk [vmem:[#allocation2 + $0x138] sm:$0xff] %vm31, 0.0
    %72 = vst.msk [vmem:[#allocation2 + $0x140] sm:$0xff] %vm31, 0.0
    %73 = vst.msk [vmem:[#allocation2 + $0x148] sm:$0xff] %vm31, 0.0
    %74 = vst.msk [vmem:[#allocation2 + $0x150] sm:$0xff] %vm31, 0.0
    %75 = vst.msk [vmem:[#allocation2 + $0x158] sm:$0xff] %vm31, 0.0
    %76 = vst.msk [vmem:[#allocation2 + $0x160] sm:$0xff] %vm31, 0.0
    %77 = vst.msk [vmem:[#allocation2 + $0x168] sm:$0xff] %vm31, 0.0
    %78 = vst.msk [vmem:[#allocation2 + $0x170] sm:$0xff] %vm31, 0.0
    %79 = vst.msk [vmem:[#allocation2 + $0x178] sm:$0xff] %vm31, 0.0
    %80 = vst.msk [vmem:[#allocation2 + $0x180] sm:$0xff] %vm31, 0.0
    %81 = vst.msk [vmem:[#allocation2 + $0x188] sm:$0xff] %vm31, 0.0
    %82 = vst.msk [vmem:[#allocation2 + $0x190] sm:$0xff] %vm31, 0.0
    %83 = vst.msk [vmem:[#allocation2 + $0x198] sm:$0xff] %vm31, 0.0
    %84 = vst.msk [vmem:[#allocation2 + $0x1a0] sm:$0xff] %vm31, 0.0
    %85 = vst.msk [vmem:[#allocation2 + $0x1a8] sm:$0xff] %vm31, 0.0
    %86 = vst.msk [vmem:[#allocation2 + $0x1b0] sm:$0xff] %vm31, 0.0
    %87 = vst.msk [vmem:[#allocation2 + $0x1b8] sm:$0xff] %vm31, 0.0
    %88 = vst.msk [vmem:[#allocation2 + $0x1c0] sm:$0xff] %vm31, 0.0
    %89 = vst.msk [vmem:[#allocation2 + $0x1c8] sm:$0xff] %vm31, 0.0
    %90 = vst.msk [vmem:[#allocation2 + $0x1d0] sm:$0xff] %vm31, 0.0
    %91 = vst.msk [vmem:[#allocation2 + $0x1d8] sm:$0xff] %vm31, 0.0
    %92 = vst.msk [vmem:[#allocation2 + $0x1e0] sm:$0xff] %vm31, 0.0
    %93 = vst.msk [vmem:[#allocation2 + $0x1e8] sm:$0xff] %vm31, 0.0
    %94 = vst.msk [vmem:[#allocation2 + $0x1f0] sm:$0xff] %vm31, 0.0
    %95 = vst.msk [vmem:[#allocation2 + $0x1f8] sm:$0xff] %vm31, 0.0
    %96 = vst.msk [vmem:[#allocation2 + $0x200] sm:$0xff] %vm31, 0.0
    %97 = vst.msk [vmem:[#allocation2 + $0x208] sm:$0xff] %vm31, 0.0
    %98 = vst.msk [vmem:[#allocation2 + $0x210] sm:$0xff] %vm31, 0.0
    %99 = vst.msk [vmem:[#allocation2 + $0x218] sm:$0xff] %vm31, 0.0
    %100 = vst.msk [vmem:[#allocation2 + $0x220] sm:$0xff] %vm31, 0.0
    %101 = vst.msk [vmem:[#allocation2 + $0x228] sm:$0xff] %vm31, 0.0
    %102 = vst.msk [vmem:[#allocation2 + $0x230] sm:$0xff] %vm31, 0.0
    %103 = vst.msk [vmem:[#allocation2 + $0x238] sm:$0xff] %vm31, 0.0
    %104 = vst.msk [vmem:[#allocation2 + $0x240] sm:$0xff] %vm31, 0.0
    %105 = vst.msk [vmem:[#allocation2 + $0x248] sm:$0xff] %vm31, 0.0
    %106 = vst.msk [vmem:[#allocation2 + $0x250] sm:$0xff] %vm31, 0.0
    %107 = vst.msk [vmem:[#allocation2 + $0x258] sm:$0xff] %vm31, 0.0
    %108 = vst.msk [vmem:[#allocation2 + $0x260] sm:$0xff] %vm31, 0.0
    %109 = vst.msk [vmem:[#allocation2 + $0x268] sm:$0xff] %vm31, 0.0
    %110 = vst.msk [vmem:[#allocation2 + $0x270] sm:$0xff] %vm31, 0.0
    %111 = vst.msk [vmem:[#allocation2 + $0x278] sm:$0xff] %vm31, 0.0
    %112 = vst.msk [vmem:[#allocation2 + $0x280] sm:$0xff] %vm31, 0.0
    %113 = vst.msk [vmem:[#allocation2 + $0x288] sm:$0xff] %vm31, 0.0
    %114 = vst.msk [vmem:[#allocation2 + $0x290] sm:$0xff] %vm31, 0.0
    %115 = vst.msk [vmem:[#allocation2 + $0x298] sm:$0xff] %vm31, 0.0
    %116 = vst.msk [vmem:[#allocation2 + $0x2a0] sm:$0xff] %vm31, 0.0
    %117 = vst.msk [vmem:[#allocation2 + $0x2a8] sm:$0xff] %vm31, 0.0
    %118 = vst.msk [vmem:[#allocation2 + $0x2b0] sm:$0xff] %vm31, 0.0
    %119 = vst.msk [vmem:[#allocation2 + $0x2b8] sm:$0xff] %vm31, 0.0
    %120 = vst.msk [vmem:[#allocation2 + $0x2c0] sm:$0xff] %vm31, 0.0
    %121 = vst.msk [vmem:[#allocation2 + $0x2c8] sm:$0xff] %vm31, 0.0
    %122 = vst.msk [vmem:[#allocation2 + $0x2d0] sm:$0xff] %vm31, 0.0
    %123 = vst.msk [vmem:[#allocation2 + $0x2d8] sm:$0xff] %vm31, 0.0
    %124 = vst.msk [vmem:[#allocation2 + $0x2e0] sm:$0xff] %vm31, 0.0
    %125 = vst.msk [vmem:[#allocation2 + $0x2e8] sm:$0xff] %vm31, 0.0
    %126 = vst.msk [vmem:[#allocation2 + $0x2f0] sm:$0xff] %vm31, 0.0
    %127 = vst.msk [vmem:[#allocation2 + $0x2f8] sm:$0xff] %vm31, 0.0
    %128 = vst.msk [vmem:[#allocation2 + $0x300] sm:$0xff] %vm31, 0.0
    %129 = vst.msk [vmem:[#allocation2 + $0x308] sm:$0xff] %vm31, 0.0
    %130 = vst.msk [vmem:[#allocation2 + $0x310] sm:$0xff] %vm31, 0.0
    %131 = vst.msk [vmem:[#allocation2 + $0x318] sm:$0xff] %vm31, 0.0
    %132 = vst.msk [vmem:[#allocation2 + $0x320] sm:$0xff] %vm31, 0.0
    %133 = vst.msk [vmem:[#allocation2 + $0x328] sm:$0xff] %vm31, 0.0
    %134 = vst.msk [vmem:[#allocation2 + $0x330] sm:$0xff] %vm31, 0.0
    %135 = vst.msk [vmem:[#allocation2 + $0x338] sm:$0xff] %vm31, 0.0
    %136 = vst.msk [vmem:[#allocation2 + $0x340] sm:$0xff] %vm31, 0.0
    %137 = vst.msk [vmem:[#allocation2 + $0x348] sm:$0xff] %vm31, 0.0
    %138 = vst.msk [vmem:[#allocation2 + $0x350] sm:$0xff] %vm31, 0.0
    %139 = vst.msk [vmem:[#allocation2 + $0x358] sm:$0xff] %vm31, 0.0
    %140 = vst.msk [vmem:[#allocation2 + $0x360] sm:$0xff] %vm31, 0.0
    %141 = vst.msk [vmem:[#allocation2 + $0x368] sm:$0xff] %vm31, 0.0
    %142 = vst.msk [vmem:[#allocation2 + $0x370] sm:$0xff] %vm31, 0.0
    %143 = vst.msk [vmem:[#allocation2 + $0x378] sm:$0xff] %vm31, 0.0
    %144 = vst.msk [vmem:[#allocation2 + $0x380] sm:$0xff] %vm31, 0.0
    %145 = vst.msk [vmem:[#allocation2 + $0x388] sm:$0xff] %vm31, 0.0
    %146 = vst.msk [vmem:[#allocation2 + $0x390] sm:$0xff] %vm31, 0.0
    %147 = vst.msk [vmem:[#allocation2 + $0x398] sm:$0xff] %vm31, 0.0
    %148 = vst.msk [vmem:[#allocation2 + $0x3a0] sm:$0xff] %vm31, 0.0
    %149 = vst.msk [vmem:[#allocation2 + $0x3a8] sm:$0xff] %vm31, 0.0
    %150 = vst.msk [vmem:[#allocation2 + $0x3b0] sm:$0xff] %vm31, 0.0
    %151 = vst.msk [vmem:[#allocation2 + $0x3b8] sm:$0xff] %vm31, 0.0
    %152 = vst.msk [vmem:[#allocation2 + $0x3c0] sm:$0xff] %vm31, 0.0
    %153 = vst.msk [vmem:[#allocation2 + $0x3c8] sm:$0xff] %vm31, 0.0
    %154 = vst.msk [vmem:[#allocation2 + $0x3d0] sm:$0xff] %vm31, 0.0
    %155 = vst.msk [vmem:[#allocation2 + $0x3d8] sm:$0xff] %vm31, 0.0
    %156 = vst.msk [vmem:[#allocation2 + $0x3e0] sm:$0xff] %vm31, 0.0
    %157 = vst.msk [vmem:[#allocation2 + $0x3e8] sm:$0xff] %vm31, 0.0
    %158 = vst.msk [vmem:[#allocation2 + $0x3f0] sm:$0xff] %vm31, 0.0
    %159 = vst.msk [vmem:[#allocation2 + $0x3f8] sm:$0xff] %vm31, 0.0
    %160 = vst.msk [vmem:[#allocation2 + $0x400] sm:$0xff] %vm31, 0.0
    %161 = vst.msk [vmem:[#allocation2 + $0x408] sm:$0xff] %vm31, 0.0
    %162 = vst.msk [vmem:[#allocation2 + $0x410] sm:$0xff] %vm31, 0.0
    %163 = vst.msk [vmem:[#allocation2 + $0x418] sm:$0xff] %vm31, 0.0
    %164 = vst.msk [vmem:[#allocation2 + $0x420] sm:$0xff] %vm31, 0.0
    %165 = vst.msk [vmem:[#allocation2 + $0x428] sm:$0xff] %vm31, 0.0
    %166 = vst.msk [vmem:[#allocation2 + $0x430] sm:$0xff] %vm31, 0.0
    %167 = vst.msk [vmem:[#allocation2 + $0x438] sm:$0xff] %vm31, 0.0
    %168 = vst.msk [vmem:[#allocation2 + $0x440] sm:$0xff] %vm31, 0.0
    %169 = vst.msk [vmem:[#allocation2 + $0x448] sm:$0xff] %vm31, 0.0
    %170 = vst.msk [vmem:[#allocation2 + $0x450] sm:$0xff] %vm31, 0.0
    %171 = vst.msk [vmem:[#allocation2 + $0x458] sm:$0xff] %vm31, 0.0
    %172 = vst.msk [vmem:[#allocation2 + $0x460] sm:$0xff] %vm31, 0.0
    %173 = vst.msk [vmem:[#allocation2 + $0x468] sm:$0xff] %vm31, 0.0
    %174 = vst.msk [vmem:[#allocation2 + $0x470] sm:$0xff] %vm31, 0.0
    %175 = vst.msk [vmem:[#allocation2 + $0x478] sm:$0xff] %vm31, 0.0
    %v176 = vld [vmem:[%s0] sm:$0xff]
    %v177 = vld [vmem:[%s0 + $0x8] sm:$0xff]
    %v178 = vld [vmem:[%s0 + $0x10] sm:$0xff]
    %v179 = vld [vmem:[%s0 + $0x18] sm:$0xff]
    %v180 = vld [vmem:[%s0 + $0x20] sm:$0xff]
    %v181 = vld [vmem:[%s0 + $0x28] sm:$0xff]
    %v182 = vld [vmem:[%s0 + $0x30] sm:$0xff]
    %v183 = vld [vmem:[%s0 + $0x38] sm:$0xff]
    %v184 = vld [vmem:[%s0 + $0x40] sm:$0xff]
    %v185 = vld [vmem:[%s0 + $0x48] sm:$0xff]
    %v186 = vld [vmem:[%s0 + $0x50] sm:$0xff]
    %v187 = vld [vmem:[%s0 + $0x58] sm:$0xff]
    %v188 = vld [vmem:[%s0 + $0x60] sm:$0xff]
    %v189 = vld [vmem:[%s0 + $0x68] sm:$0xff]
    %v190 = vld [vmem:[%s0 + $0x70] sm:$0xff]
    %v191 = vld [vmem:[%s0 + $0x78] sm:$0xff]
    %v192 = vld [vmem:[%s0 + $0x80] sm:$0xff]
    %v193 = vld [vmem:[%s0 + $0x88] sm:$0xff]
    %v194 = vld [vmem:[%s0 + $0x90] sm:$0xff]
    %v195 = vld [vmem:[%s0 + $0x98] sm:$0xff]
    %v196 = vld [vmem:[%s0 + $0xa0] sm:$0xff]
    %v197 = vld [vmem:[%s0 + $0xa8] sm:$0xff]
    %v198 = vld [vmem:[%s0 + $0xb0] sm:$0xff]
    %v199 = vld [vmem:[%s0 + $0xb8] sm:$0xff]
    %v200 = vld [vmem:[%s0 + $0xc0] sm:$0xff]
    %v201 = vld [vmem:[%s0 + $0xc8] sm:$0xff]
    %v202 = vld [vmem:[%s0 + $0xd0] sm:$0xff]
    %v203 = vld [vmem:[%s0 + $0xd8] sm:$0xff]
    %v204 = vld [vmem:[%s0 + $0xe0] sm:$0xff]
    %v205 = vld [vmem:[%s0 + $0xe8] sm:$0xff]
    %v206 = vld [vmem:[%s0 + $0xf0] sm:$0xff]
    %v207 = vld [vmem:[%s0 + $0xf8] sm:$0xff]
    %v208 = vld [vmem:[%s0 + $0x100] sm:$0xff]
    %v209 = vld [vmem:[%s0 + $0x108] sm:$0xff]
    %v210 = vld [vmem:[%s0 + $0x110] sm:$0xff]
    %v211 = vld [vmem:[%s0 + $0x118] sm:$0xff]
    %v212 = vld [vmem:[%s0 + $0x120] sm:$0xff]
    %v213 = vld [vmem:[%s0 + $0x128] sm:$0xff]
    %v214 = vld [vmem:[%s0 + $0x130] sm:$0xff]
    %v215 = vld [vmem:[%s0 + $0x138] sm:$0xff]
    %v216 = vld [vmem:[%s0 + $0x140] sm:$0xff]
    %v217 = vld [vmem:[%s0 + $0x148] sm:$0xff]
    %v218 = vld [vmem:[%s0 + $0x150] sm:$0xff]
    %v219 = vld [vmem:[%s0 + $0x158] sm:$0xff]
    %v220 = vld [vmem:[%s0 + $0x160] sm:$0xff]
    %v221 = vld [vmem:[%s0 + $0x168] sm:$0xff]
    %v222 = vld [vmem:[%s0 + $0x170] sm:$0xff]
    %v223 = vld [vmem:[%s0 + $0x178] sm:$0xff]
    %v224 = vld [vmem:[%s0 + $0x180] sm:$0xff]
    %v225 = vld [vmem:[%s0 + $0x188] sm:$0xff]
    %v226 = vld [vmem:[%s0 + $0x190] sm:$0xff]
    %v227 = vld [vmem:[%s0 + $0x198] sm:$0xff]
    %v228 = vld [vmem:[%s0 + $0x1a0] sm:$0xff]
    %v229 = vld [vmem:[%s0 + $0x1a8] sm:$0xff]
    %v230 = vld [vmem:[%s0 + $0x1b0] sm:$0xff]
    %v231 = vld [vmem:[%s0 + $0x1b8] sm:$0xff]
    %v232 = vld [vmem:[%s0 + $0x1c0] sm:$0xff]
    %v233 = vld [vmem:[%s0 + $0x1c8] sm:$0xff]
    %v234 = vld [vmem:[%s0 + $0x1d0] sm:$0xff]
    %v235 = vld [vmem:[%s0 + $0x1d8] sm:$0xff]
    %v236 = vld [vmem:[%s0 + $0x1e0] sm:$0xff]
    %v237 = vld [vmem:[%s0 + $0x1e8] sm:$0xff]
    %v238 = vld [vmem:[%s0 + $0x1f0] sm:$0xff]
    %v239 = vld [vmem:[%s0 + $0x1f8] sm:$0xff]
    %s240 = scalar_lea.vmem [#allocation2], 32
    %241 = vst.msk [vmem:[%s240 + $0x8] sm:$0xff] %vm31, %v176
    %242 = vst.msk [vmem:[%s240 + $0x10] sm:$0xff] %vm31, %v177
    %243 = vst.msk [vmem:[%s240 + $0x28] sm:$0xff] %vm31, %v178
    %244 = vst.msk [vmem:[%s240 + $0x30] sm:$0xff] %vm31, %v179
    %245 = vst.msk [vmem:[%s240 + $0x48] sm:$0xff] %vm31, %v180
    %246 = vst.msk [vmem:[%s240 + $0x50] sm:$0xff] %vm31, %v181
    %247 = vst.msk [vmem:[%s240 + $0x68] sm:$0xff] %vm31, %v182
    %248 = vst.msk [vmem:[%s240 + $0x70] sm:$0xff] %vm31, %v183
    %249 = vst.msk [vmem:[%s240 + $0x88] sm:$0xff] %vm31, %v184
    %250 = vst.msk [vmem:[%s240 + $0x90] sm:$0xff] %vm31, %v185
    %251 = vst.msk [vmem:[%s240 + $0xa8] sm:$0xff] %vm31, %v186
    %252 = vst.msk [vmem:[%s240 + $0xb0] sm:$0xff] %vm31, %v187
    %253 = vst.msk [vmem:[%s240 + $0xc8] sm:$0xff] %vm31, %v188
    %254 = vst.msk [vmem:[%s240 + $0xd0] sm:$0xff] %vm31, %v189
    %255 = vst.msk [vmem:[%s240 + $0xe8] sm:$0xff] %vm31, %v190
    %256 = vst.msk [vmem:[%s240 + $0xf0] sm:$0xff] %vm31, %v191
    %257 = vst.msk [vmem:[%s240 + $0x108] sm:$0xff] %vm31, %v192
    %258 = vst.msk [vmem:[%s240 + $0x110] sm:$0xff] %vm31, %v193
    %259 = vst.msk [vmem:[%s240 + $0x128] sm:$0xff] %vm31, %v194
    %260 = vst.msk [vmem:[%s240 + $0x130] sm:$0xff] %vm31, %v195
    %261 = vst.msk [vmem:[%s240 + $0x148] sm:$0xff] %vm31, %v196
    %262 = vst.msk [vmem:[%s240 + $0x150] sm:$0xff] %vm31, %v197
    %263 = vst.msk [vmem:[%s240 + $0x168] sm:$0xff] %vm31, %v198
    %264 = vst.msk [vmem:[%s240 + $0x170] sm:$0xff] %vm31, %v199
    %265 = vst.msk [vmem:[%s240 + $0x188] sm:$0xff] %vm31, %v200
    %266 = vst.msk [vmem:[%s240 + $0x190] sm:$0xff] %vm31, %v201
    %267 = vst.msk [vmem:[%s240 + $0x1a8] sm:$0xff] %vm31, %v202
    %268 = vst.msk [vmem:[%s240 + $0x1b0] sm:$0xff] %vm31, %v203
    %269 = vst.msk [vmem:[%s240 + $0x1c8] sm:$0xff] %vm31, %v204
    %270 = vst.msk [vmem:[%s240 + $0x1d0] sm:$0xff] %vm31, %v205
    %271 = vst.msk [vmem:[%s240 + $0x1e8] sm:$0xff] %vm31, %v206
    %272 = vst.msk [vmem:[%s240 + $0x1f0] sm:$0xff] %vm31, %v207
    %273 = vst.msk [vmem:[%s240 + $0x248] sm:$0xff] %vm31, %v208
    %274 = vst.msk [vmem:[%s240 + $0x250] sm:$0xff] %vm31, %v209
    %275 = vst.msk [vmem:[%s240 + $0x268] sm:$0xff] %vm31, %v210
    %276 = vst.msk [vmem:[%s240 + $0x270] sm:$0xff] %vm31, %v211
    %277 = vst.msk [vmem:[%s240 + $0x288] sm:$0xff] %vm31, %v212
    %278 = vst.msk [vmem:[%s240 + $0x290] sm:$0xff] %vm31, %v213
    %279 = vst.msk [vmem:[%s240 + $0x2a8] sm:$0xff] %vm31, %v214
    %280 = vst.msk [vmem:[%s240 + $0x2b0] sm:$0xff] %vm31, %v215
    %281 = vst.msk [vmem:[%s240 + $0x2c8] sm:$0xff] %vm31, %v216
    %282 = vst.msk [vmem:[%s240 + $0x2d0] sm:$0xff] %vm31, %v217
    %283 = vst.msk [vmem:[%s240 + $0x2e8] sm:$0xff] %vm31, %v218
    %284 = vst.msk [vmem:[%s240 + $0x2f0] sm:$0xff] %vm31, %v219
    %285 = vst.msk [vmem:[%s240 + $0x308] sm:$0xff] %vm31, %v220
    %286 = vst.msk [vmem:[%s240 + $0x310] sm:$0xff] %vm31, %v221
    %287 = vst.msk [vmem:[%s240 + $0x328] sm:$0xff] %vm31, %v222
    %288 = vst.msk [vmem:[%s240 + $0x330] sm:$0xff] %vm31, %v223
    %289 = vst.msk [vmem:[%s240 + $0x348] sm:$0xff] %vm31, %v224
    %290 = vst.msk [vmem:[%s240 + $0x350] sm:$0xff] %vm31, %v225
    %291 = vst.msk [vmem:[%s240 + $0x368] sm:$0xff] %vm31, %v226
    %292 = vst.msk [vmem:[%s240 + $0x370] sm:$0xff] %vm31, %v227
    %293 = vst.msk [vmem:[%s240 + $0x388] sm:$0xff] %vm31, %v228
    %294 = vst.msk [vmem:[%s240 + $0x390] sm:$0xff] %vm31, %v229
    %295 = vst.msk [vmem:[%s240 + $0x3a8] sm:$0xff] %vm31, %v230
    %296 = vst.msk [vmem:[%s240 + $0x3b0] sm:$0xff] %vm31, %v231
    %297 = vst.msk [vmem:[%s240 + $0x3c8] sm:$0xff] %vm31, %v232
    %298 = vst.msk [vmem:[%s240 + $0x3d0] sm:$0xff] %vm31, %v233
    %299 = vst.msk [vmem:[%s240 + $0x3e8] sm:$0xff] %vm31, %v234
    %300 = vst.msk [vmem:[%s240 + $0x3f0] sm:$0xff] %vm31, %v235
    %301 = vst.msk [vmem:[%s240 + $0x408] sm:$0xff] %vm31, %v236
    %302 = vst.msk [vmem:[%s240 + $0x410] sm:$0xff] %vm31, %v237
    %303 = vst.msk [vmem:[%s240 + $0x428] sm:$0xff] %vm31, %v238
    %304 = vst.msk [vmem:[%s240 + $0x430] sm:$0xff] %vm31, %v239
    %v305 = vld [vmem:[#allocation2 + $0x7] sm:$0xff]
    %v306 = vld [vmem:[#allocation2 + $0xf] sm:$0xff]
    %v307 = vld [vmem:[#allocation2 + $0x27] sm:$0xff]
    %v308 = vld [vmem:[#allocation2 + $0x2f] sm:$0xff]
    %v309 = vld [vmem:[#allocation2 + $0x47] sm:$0xff]
    %v310 = vld [vmem:[#allocation2 + $0x4f] sm:$0xff]
    %v311 = vld [vmem:[#allocation2 + $0x67] sm:$0xff]
    %v312 = vld [vmem:[#allocation2 + $0x6f] sm:$0xff]
    %v313 = vld [vmem:[#allocation2 + $0x87] sm:$0xff]
    %v314 = vld [vmem:[#allocation2 + $0x8f] sm:$0xff]
    %v315 = vld [vmem:[#allocation2 + $0xa7] sm:$0xff]
    %v316 = vld [vmem:[#allocation2 + $0xaf] sm:$0xff]
    %v317 = vld [vmem:[#allocation2 + $0xc7] sm:$0xff]
    %v318 = vld [vmem:[#allocation2 + $0xcf] sm:$0xff]
    %v319 = vld [vmem:[#allocation2 + $0xe7] sm:$0xff]
    %v320 = vld [vmem:[#allocation2 + $0xef] sm:$0xff]
    %v321 = vld [vmem:[#allocation2 + $0x107] sm:$0xff]
    %v322 = vld [vmem:[#allocation2 + $0x10f] sm:$0xff]
    %v323 = vld [vmem:[#allocation2 + $0x127] sm:$0xff]
    %v324 = vld [vmem:[#allocation2 + $0x12f] sm:$0xff]
    %v325 = vld [vmem:[#allocation2 + $0x147] sm:$0xff]
    %v326 = vld [vmem:[#allocation2 + $0x14f] sm:$0xff]
    %v327 = vld [vmem:[#allocation2 + $0x167] sm:$0xff]
    %v328 = vld [vmem:[#allocation2 + $0x16f] sm:$0xff]
    %v329 = vld [vmem:[#allocation2 + $0x187] sm:$0xff]
    %v330 = vld [vmem:[#allocation2 + $0x18f] sm:$0xff]
    %v331 = vld [vmem:[#allocation2 + $0x1a7] sm:$0xff]
    %v332 = vld [vmem:[#allocation2 + $0x1af] sm:$0xff]
    %v333 = vld [vmem:[#allocation2 + $0x1c7] sm:$0xff]
    %v334 = vld [vmem:[#allocation2 + $0x1cf] sm:$0xff]
    %v335 = vld [vmem:[#allocation2 + $0x1e7] sm:$0xff]
    %v336 = vld [vmem:[#allocation2 + $0x1ef] sm:$0xff]
    %v337 = vld [vmem:[#allocation2 + $0x247] sm:$0xff]
    %v338 = vld [vmem:[#allocation2 + $0x24f] sm:$0xff]
    %v339 = vld [vmem:[#allocation2 + $0x267] sm:$0xff]
    %v340 = vld [vmem:[#allocation2 + $0x26f] sm:$0xff]
    %v341 = vld [vmem:[#allocation2 + $0x287] sm:$0xff]
    %v342 = vld [vmem:[#allocation2 + $0x28f] sm:$0xff]
    %v343 = vld [vmem:[#allocation2 + $0x2a7] sm:$0xff]
    %v344 = vld [vmem:[#allocation2 + $0x2af] sm:$0xff]
    %v345 = vld [vmem:[#allocation2 + $0x2c7] sm:$0xff]
    %v346 = vld [vmem:[#allocation2 + $0x2cf] sm:$0xff]
    %v347 = vld [vmem:[#allocation2 + $0x2e7] sm:$0xff]
    %v348 = vld [vmem:[#allocation2 + $0x2ef] sm:$0xff]
    %v349 = vld [vmem:[#allocation2 + $0x307] sm:$0xff]
    %v350 = vld [vmem:[#allocation2 + $0x30f] sm:$0xff]
    %v351 = vld [vmem:[#allocation2 + $0x327] sm:$0xff]
    %v352 = vld [vmem:[#allocation2 + $0x32f] sm:$0xff]
    %v353 = vld [vmem:[#allocation2 + $0x347] sm:$0xff]
    %v354 = vld [vmem:[#allocation2 + $0x34f] sm:$0xff]
    %v355 = vld [vmem:[#allocation2 + $0x367] sm:$0xff]
    %v356 = vld [vmem:[#allocation2 + $0x36f] sm:$0xff]
    %v357 = vld [vmem:[#allocation2 + $0x387] sm:$0xff]
    %v358 = vld [vmem:[#allocation2 + $0x38f] sm:$0xff]
    %v359 = vld [vmem:[#allocation2 + $0x3a7] sm:$0xff]
    %v360 = vld [vmem:[#allocation2 + $0x3af] sm:$0xff]
    %v361 = vld [vmem:[#allocation2 + $0x3c7] sm:$0xff]
    %v362 = vld [vmem:[#allocation2 + $0x3cf] sm:$0xff]
    %v363 = vld [vmem:[#allocation2 + $0x3e7] sm:$0xff]
    %v364 = vld [vmem:[#allocation2 + $0x3ef] sm:$0xff]
    %v365 = vld [vmem:[#allocation2 + $0x407] sm:$0xff]
    %v366 = vld [vmem:[#allocation2 + $0x40f] sm:$0xff]
    %v367 = vld [vmem:[#allocation2 + $0x427] sm:$0xff]
    %v368 = vld [vmem:[#allocation2 + $0x42f] sm:$0xff]
    %v369 = vld [vmem:[#allocation2 + $0x8] sm:$0xff]
    %v370 = vld [vmem:[#allocation2 + $0x10] sm:$0xff]
    %v371 = vld [vmem:[#allocation2 + $0x28] sm:$0xff]
    %v372 = vld [vmem:[#allocation2 + $0x30] sm:$0xff]
    %v373 = vld [vmem:[#allocation2 + $0x48] sm:$0xff]
    %v374 = vld [vmem:[#allocation2 + $0x50] sm:$0xff]
    %v375 = vld [vmem:[#allocation2 + $0x68] sm:$0xff]
    %v376 = vld [vmem:[#allocation2 + $0x70] sm:$0xff]
    %v377 = vld [vmem:[#allocation2 + $0x88] sm:$0xff]
    %v378 = vld [vmem:[#allocation2 + $0x90] sm:$0xff]
    %v379 = vld [vmem:[#allocation2 + $0xa8] sm:$0xff]
    %v380 = vld [vmem:[#allocation2 + $0xb0] sm:$0xff]
    %v381 = vld [vmem:[#allocation2 + $0xc8] sm:$0xff]
    %v382 = vld [vmem:[#allocation2 + $0xd0] sm:$0xff]
    %v383 = vld [vmem:[#allocation2 + $0xe8] sm:$0xff]
    %v384 = vld [vmem:[#allocation2 + $0xf0] sm:$0xff]
    %v385 = vld [vmem:[#allocation2 + $0x108] sm:$0xff]
    %v386 = vld [vmem:[#allocation2 + $0x110] sm:$0xff]
    %v387 = vld [vmem:[#allocation2 + $0x128] sm:$0xff]
    %v388 = vld [vmem:[#allocation2 + $0x130] sm:$0xff]
    %v389 = vld [vmem:[#allocation2 + $0x148] sm:$0xff]
    %v390 = vld [vmem:[#allocation2 + $0x150] sm:$0xff]
    %v391 = vld [vmem:[#allocation2 + $0x168] sm:$0xff]
    %v392 = vld [vmem:[#allocation2 + $0x170] sm:$0xff]
    %v393 = vld [vmem:[#allocation2 + $0x188] sm:$0xff]
    %v394 = vld [vmem:[#allocation2 + $0x190] sm:$0xff]
    %v395 = vld [vmem:[#allocation2 + $0x1a8] sm:$0xff]
    %v396 = vld [vmem:[#allocation2 + $0x1b0] sm:$0xff]
    %v397 = vld [vmem:[#allocation2 + $0x1c8] sm:$0xff]
    %v398 = vld [vmem:[#allocation2 + $0x1d0] sm:$0xff]
    %v399 = vld [vmem:[#allocation2 + $0x1e8] sm:$0xff]
    %v400 = vld [vmem:[#allocation2 + $0x1f0] sm:$0xff]
    %v401 = vld [vmem:[#allocation2 + $0x248] sm:$0xff]
    %v402 = vld [vmem:[#allocation2 + $0x250] sm:$0xff]
    %v403 = vld [vmem:[#allocation2 + $0x268] sm:$0xff]
    %v404 = vld [vmem:[#allocation2 + $0x270] sm:$0xff]
    %v405 = vld [vmem:[#allocation2 + $0x288] sm:$0xff]
    %v406 = vld [vmem:[#allocation2 + $0x290] sm:$0xff]
    %v407 = vld [vmem:[#allocation2 + $0x2a8] sm:$0xff]
    %v408 = vld [vmem:[#allocation2 + $0x2b0] sm:$0xff]
    %v409 = vld [vmem:[#allocation2 + $0x2c8] sm:$0xff]
    %v410 = vld [vmem:[#allocation2 + $0x2d0] sm:$0xff]
    %v411 = vld [vmem:[#allocation2 + $0x2e8] sm:$0xff]
    %v412 = vld [vmem:[#allocation2 + $0x2f0] sm:$0xff]
    %v413 = vld [vmem:[#allocation2 + $0x308] sm:$0xff]
    %v414 = vld [vmem:[#allocation2 + $0x310] sm:$0xff]
    %v415 = vld [vmem:[#allocation2 + $0x328] sm:$0xff]
    %v416 = vld [vmem:[#allocation2 + $0x330] sm:$0xff]
    %v417 = vld [vmem:[#allocation2 + $0x348] sm:$0xff]
    %v418 = vld [vmem:[#allocation2 + $0x350] sm:$0xff]
    %v419 = vld [vmem:[#allocation2 + $0x368] sm:$0xff]
    %v420 = vld [vmem:[#allocation2 + $0x370] sm:$0xff]
    %v421 = vld [vmem:[#allocation2 + $0x388] sm:$0xff]
    %v422 = vld [vmem:[#allocation2 + $0x390] sm:$0xff]
    %v423 = vld [vmem:[#allocation2 + $0x3a8] sm:$0xff]
    %v424 = vld [vmem:[#allocation2 + $0x3b0] sm:$0xff]
    %v425 = vld [vmem:[#allocation2 + $0x3c8] sm:$0xff]
    %v426 = vld [vmem:[#allocation2 + $0x3d0] sm:$0xff]
    %v427 = vld [vmem:[#allocation2 + $0x3e8] sm:$0xff]
    %v428 = vld [vmem:[#allocation2 + $0x3f0] sm:$0xff]
    %v429 = vld [vmem:[#allocation2 + $0x408] sm:$0xff]
    %v430 = vld [vmem:[#allocation2 + $0x410] sm:$0xff]
    %v431 = vld [vmem:[#allocation2 + $0x428] sm:$0xff]
    %v432 = vld [vmem:[#allocation2 + $0x430] sm:$0xff]
    %v433 = vld [vmem:[#allocation2 + $0x9] sm:$0xff]
    %v434 = vld [vmem:[#allocation2 + $0x11] sm:$0xff]
    %v435 = vld [vmem:[#allocation2 + $0x29] sm:$0xff]
    %v436 = vld [vmem:[#allocation2 + $0x31] sm:$0xff]
    %v437 = vld [vmem:[#allocation2 + $0x49] sm:$0xff]
    %v438 = vld [vmem:[#allocation2 + $0x51] sm:$0xff]
    %v439 = vld [vmem:[#allocation2 + $0x69] sm:$0xff]
    %v440 = vld [vmem:[#allocation2 + $0x71] sm:$0xff]
    %v441 = vld [vmem:[#allocation2 + $0x89] sm:$0xff]
    %v442 = vld [vmem:[#allocation2 + $0x91] sm:$0xff]
    %v443 = vld [vmem:[#allocation2 + $0xa9] sm:$0xff]
    %v444 = vld [vmem:[#allocation2 + $0xb1] sm:$0xff]
    %v445 = vld [vmem:[#allocation2 + $0xc9] sm:$0xff]
    %v446 = vld [vmem:[#allocation2 + $0xd1] sm:$0xff]
    %v447 = vld [vmem:[#allocation2 + $0xe9] sm:$0xff]
    %v448 = vld [vmem:[#allocation2 + $0xf1] sm:$0xff]
    %v449 = vld [vmem:[#allocation2 + $0x109] sm:$0xff]
    %v450 = vld [vmem:[#allocation2 + $0x111] sm:$0xff]
    %v451 = vld [vmem:[#allocation2 + $0x129] sm:$0xff]
    %v452 = vld [vmem:[#allocation2 + $0x131] sm:$0xff]
    %v453 = vld [vmem:[#allocation2 + $0x149] sm:$0xff]
    %v454 = vld [vmem:[#allocation2 + $0x151] sm:$0xff]
    %v455 = vld [vmem:[#allocation2 + $0x169] sm:$0xff]
    %v456 = vld [vmem:[#allocation2 + $0x171] sm:$0xff]
    %v457 = vld [vmem:[#allocation2 + $0x189] sm:$0xff]
    %v458 = vld [vmem:[#allocation2 + $0x191] sm:$0xff]
    %v459 = vld [vmem:[#allocation2 + $0x1a9] sm:$0xff]
    %v460 = vld [vmem:[#allocation2 + $0x1b1] sm:$0xff]
    %v461 = vld [vmem:[#allocation2 + $0x1c9] sm:$0xff]
    %v462 = vld [vmem:[#allocation2 + $0x1d1] sm:$0xff]
    %v463 = vld [vmem:[#allocation2 + $0x1e9] sm:$0xff]
    %v464 = vld [vmem:[#allocation2 + $0x1f1] sm:$0xff]
    %v465 = vld [vmem:[#allocation2 + $0x249] sm:$0xff]
    %v466 = vld [vmem:[#allocation2 + $0x251] sm:$0xff]
    %v467 = vld [vmem:[#allocation2 + $0x269] sm:$0xff]
    %v468 = vld [vmem:[#allocation2 + $0x271] sm:$0xff]
    %v469 = vld [vmem:[#allocation2 + $0x289] sm:$0xff]
    %v470 = vld [vmem:[#allocation2 + $0x291] sm:$0xff]
    %v471 = vld [vmem:[#allocation2 + $0x2a9] sm:$0xff]
    %v472 = vld [vmem:[#allocation2 + $0x2b1] sm:$0xff]
    %v473 = vld [vmem:[#allocation2 + $0x2c9] sm:$0xff]
    %v474 = vld [vmem:[#allocation2 + $0x2d1] sm:$0xff]
    %v475 = vld [vmem:[#allocation2 + $0x2e9] sm:$0xff]
    %v476 = vld [vmem:[#allocation2 + $0x2f1] sm:$0xff]
    %v477 = vld [vmem:[#allocation2 + $0x309] sm:$0xff]
    %v478 = vld [vmem:[#allocation2 + $0x311] sm:$0xff]
    %v479 = vld [vmem:[#allocation2 + $0x329] sm:$0xff]
    %v480 = vld [vmem:[#allocation2 + $0x331] sm:$0xff]
    %v481 = vld [vmem:[#allocation2 + $0x349] sm:$0xff]
    %v482 = vld [vmem:[#allocation2 + $0x351] sm:$0xff]
    %v483 = vld [vmem:[#allocation2 + $0x369] sm:$0xff]
    %v484 = vld [vmem:[#allocation2 + $0x371] sm:$0xff]
    %v485 = vld [vmem:[#allocation2 + $0x389] sm:$0xff]
    %v486 = vld [vmem:[#allocation2 + $0x391] sm:$0xff]
    %v487 = vld [vmem:[#allocation2 + $0x3a9] sm:$0xff]
    %v488 = vld [vmem:[#allocation2 + $0x3b1] sm:$0xff]
    %v489 = vld [vmem:[#allocation2 + $0x3c9] sm:$0xff]
    %v490 = vld [vmem:[#allocation2 + $0x3d1] sm:$0xff]
    %v491 = vld [vmem:[#allocation2 + $0x3e9] sm:$0xff]
    %v492 = vld [vmem:[#allocation2 + $0x3f1] sm:$0xff]
    %v493 = vld [vmem:[#allocation2 + $0x409] sm:$0xff]
    %v494 = vld [vmem:[#allocation2 + $0x411] sm:$0xff]
    %v495 = vld [vmem:[#allocation2 + $0x429] sm:$0xff]
    %v496 = vld [vmem:[#allocation2 + $0x431] sm:$0xff]
    %v497 = vld [vmem:[%s240 + $0x7] sm:$0xff]
    %v498 = vld [vmem:[%s240 + $0xf] sm:$0xff]
    %v499 = vld [vmem:[%s240 + $0x27] sm:$0xff]
    %v500 = vld [vmem:[%s240 + $0x2f] sm:$0xff]
    %v501 = vld [vmem:[%s240 + $0x47] sm:$0xff]
    %v502 = vld [vmem:[%s240 + $0x4f] sm:$0xff]
    %v503 = vld [vmem:[%s240 + $0x67] sm:$0xff]
    %v504 = vld [vmem:[%s240 + $0x6f] sm:$0xff]
    %v505 = vld [vmem:[%s240 + $0x87] sm:$0xff]
    %v506 = vld [vmem:[%s240 + $0x8f] sm:$0xff]
    %v507 = vld [vmem:[%s240 + $0xa7] sm:$0xff]
    %v508 = vld [vmem:[%s240 + $0xaf] sm:$0xff]
    %v509 = vld [vmem:[%s240 + $0xc7] sm:$0xff]
    %v510 = vld [vmem:[%s240 + $0xcf] sm:$0xff]
    %v511 = vld [vmem:[%s240 + $0xe7] sm:$0xff]
    %v512 = vld [vmem:[%s240 + $0xef] sm:$0xff]
    %v513 = vld [vmem:[%s240 + $0x107] sm:$0xff]
    %v514 = vld [vmem:[%s240 + $0x10f] sm:$0xff]
    %v515 = vld [vmem:[%s240 + $0x127] sm:$0xff]
    %v516 = vld [vmem:[%s240 + $0x12f] sm:$0xff]
    %v517 = vld [vmem:[%s240 + $0x147] sm:$0xff]
    %v518 = vld [vmem:[%s240 + $0x14f] sm:$0xff]
    %v519 = vld [vmem:[%s240 + $0x167] sm:$0xff]
    %v520 = vld [vmem:[%s240 + $0x16f] sm:$0xff]
    %v521 = vld [vmem:[%s240 + $0x187] sm:$0xff]
    %v522 = vld [vmem:[%s240 + $0x18f] sm:$0xff]
    %v523 = vld [vmem:[%s240 + $0x1a7] sm:$0xff]
    %v524 = vld [vmem:[%s240 + $0x1af] sm:$0xff]
    %v525 = vld [vmem:[%s240 + $0x1c7] sm:$0xff]
    %v526 = vld [vmem:[%s240 + $0x1cf] sm:$0xff]
    %v527 = vld [vmem:[%s240 + $0x1e7] sm:$0xff]
    %v528 = vld [vmem:[%s240 + $0x1ef] sm:$0xff]
    %v529 = vld [vmem:[%s240 + $0x247] sm:$0xff]
    %v530 = vld [vmem:[%s240 + $0x24f] sm:$0xff]
    %v531 = vld [vmem:[%s240 + $0x267] sm:$0xff]
    %v532 = vld [vmem:[%s240 + $0x26f] sm:$0xff]
    %v533 = vld [vmem:[%s240 + $0x287] sm:$0xff]
    %v534 = vld [vmem:[%s240 + $0x28f] sm:$0xff]
    %v535 = vld [vmem:[%s240 + $0x2a7] sm:$0xff]
    %v536 = vld [vmem:[%s240 + $0x2af] sm:$0xff]
    %v537 = vld [vmem:[%s240 + $0x2c7] sm:$0xff]
    %v538 = vld [vmem:[%s240 + $0x2cf] sm:$0xff]
    %v539 = vld [vmem:[%s240 + $0x2e7] sm:$0xff]
    %v540 = vld [vmem:[%s240 + $0x2ef] sm:$0xff]
    %v541 = vld [vmem:[%s240 + $0x307] sm:$0xff]
    %v542 = vld [vmem:[%s240 + $0x30f] sm:$0xff]
    %v543 = vld [vmem:[%s240 + $0x327] sm:$0xff]
    %v544 = vld [vmem:[%s240 + $0x32f] sm:$0xff]
    %v545 = vld [vmem:[%s240 + $0x347] sm:$0xff]
    %v546 = vld [vmem:[%s240 + $0x34f] sm:$0xff]
    %v547 = vld [vmem:[%s240 + $0x367] sm:$0xff]
    %v548 = vld [vmem:[%s240 + $0x36f] sm:$0xff]
    %v549 = vld [vmem:[%s240 + $0x387] sm:$0xff]
    %v550 = vld [vmem:[%s240 + $0x38f] sm:$0xff]
    %v551 = vld [vmem:[%s240 + $0x3a7] sm:$0xff]
    %v552 = vld [vmem:[%s240 + $0x3af] sm:$0xff]
    %v553 = vld [vmem:[%s240 + $0x3c7] sm:$0xff]
    %v554 = vld [vmem:[%s240 + $0x3cf] sm:$0xff]
    %v555 = vld [vmem:[%s240 + $0x3e7] sm:$0xff]
    %v556 = vld [vmem:[%s240 + $0x3ef] sm:$0xff]
    %v557 = vld [vmem:[%s240 + $0x407] sm:$0xff]
    %v558 = vld [vmem:[%s240 + $0x40f] sm:$0xff]
    %v559 = vld [vmem:[%s240 + $0x427] sm:$0xff]
    %v560 = vld [vmem:[%s240 + $0x42f] sm:$0xff]
    %v561 = vld [vmem:[%s240 + $0x8] sm:$0xff]
    %v562 = vld [vmem:[%s240 + $0x10] sm:$0xff]
    %v563 = vld [vmem:[%s240 + $0x28] sm:$0xff]
    %v564 = vld [vmem:[%s240 + $0x30] sm:$0xff]
    %v565 = vld [vmem:[%s240 + $0x48] sm:$0xff]
    %v566 = vld [vmem:[%s240 + $0x50] sm:$0xff]
    %v567 = vld [vmem:[%s240 + $0x68] sm:$0xff]
    %v568 = vld [vmem:[%s240 + $0x70] sm:$0xff]
    %v569 = vld [vmem:[%s240 + $0x88] sm:$0xff]
    %v570 = vld [vmem:[%s240 + $0x90] sm:$0xff]
    %v571 = vld [vmem:[%s240 + $0xa8] sm:$0xff]
    %v572 = vld [vmem:[%s240 + $0xb0] sm:$0xff]
    %v573 = vld [vmem:[%s240 + $0xc8] sm:$0xff]
    %v574 = vld [vmem:[%s240 + $0xd0] sm:$0xff]
    %v575 = vld [vmem:[%s240 + $0xe8] sm:$0xff]
    %v576 = vld [vmem:[%s240 + $0xf0] sm:$0xff]
    %v577 = vld [vmem:[%s240 + $0x108] sm:$0xff]
    %v578 = vld [vmem:[%s240 + $0x110] sm:$0xff]
    %v579 = vld [vmem:[%s240 + $0x128] sm:$0xff]
    %v580 = vld [vmem:[%s240 + $0x130] sm:$0xff]
    %v581 = vld [vmem:[%s240 + $0x148] sm:$0xff]
    %v582 = vld [vmem:[%s240 + $0x150] sm:$0xff]
    %v583 = vld [vmem:[%s240 + $0x168] sm:$0xff]
    %v584 = vld [vmem:[%s240 + $0x170] sm:$0xff]
    %v585 = vld [vmem:[%s240 + $0x188] sm:$0xff]
    %v586 = vld [vmem:[%s240 + $0x190] sm:$0xff]
    %v587 = vld [vmem:[%s240 + $0x1a8] sm:$0xff]
    %v588 = vld [vmem:[%s240 + $0x1b0] sm:$0xff]
    %v589 = vld [vmem:[%s240 + $0x1c8] sm:$0xff]
    %v590 = vld [vmem:[%s240 + $0x1d0] sm:$0xff]
    %v591 = vld [vmem:[%s240 + $0x1e8] sm:$0xff]
    %v592 = vld [vmem:[%s240 + $0x1f0] sm:$0xff]
    %v593 = vld [vmem:[%s240 + $0x248] sm:$0xff]
    %v594 = vld [vmem:[%s240 + $0x250] sm:$0xff]
    %v595 = vld [vmem:[%s240 + $0x268] sm:$0xff]
    %v596 = vld [vmem:[%s240 + $0x270] sm:$0xff]
    %v597 = vld [vmem:[%s240 + $0x288] sm:$0xff]
    %v598 = vld [vmem:[%s240 + $0x290] sm:$0xff]
    %v599 = vld [vmem:[%s240 + $0x2a8] sm:$0xff]
    %v600 = vld [vmem:[%s240 + $0x2b0] sm:$0xff]
    %v601 = vld [vmem:[%s240 + $0x2c8] sm:$0xff]
    %v602 = vld [vmem:[%s240 + $0x2d0] sm:$0xff]
    %v603 = vld [vmem:[%s240 + $0x2e8] sm:$0xff]
    %v604 = vld [vmem:[%s240 + $0x2f0] sm:$0xff]
    %v605 = vld [vmem:[%s240 + $0x308] sm:$0xff]
    %v606 = vld [vmem:[%s240 + $0x310] sm:$0xff]
    %v607 = vld [vmem:[%s240 + $0x328] sm:$0xff]
    %v608 = vld [vmem:[%s240 + $0x330] sm:$0xff]
    %v609 = vld [vmem:[%s240 + $0x348] sm:$0xff]
    %v610 = vld [vmem:[%s240 + $0x350] sm:$0xff]
    %v611 = vld [vmem:[%s240 + $0x368] sm:$0xff]
    %v612 = vld [vmem:[%s240 + $0x370] sm:$0xff]
    %v613 = vld [vmem:[%s240 + $0x388] sm:$0xff]
    %v614 = vld [vmem:[%s240 + $0x390] sm:$0xff]
    %v615 = vld [vmem:[%s240 + $0x3a8] sm:$0xff]
    %v616 = vld [vmem:[%s240 + $0x3b0] sm:$0xff]
    %v617 = vld [vmem:[%s240 + $0x3c8] sm:$0xff]
    %v618 = vld [vmem:[%s240 + $0x3d0] sm:$0xff]
    %v619 = vld [vmem:[%s240 + $0x3e8] sm:$0xff]
    %v620 = vld [vmem:[%s240 + $0x3f0] sm:$0xff]
    %v621 = vld [vmem:[%s240 + $0x408] sm:$0xff]
    %v622 = vld [vmem:[%s240 + $0x410] sm:$0xff]
    %v623 = vld [vmem:[%s240 + $0x428] sm:$0xff]
    %v624 = vld [vmem:[%s240 + $0x430] sm:$0xff]
    %v625 = vld [vmem:[%s240 + $0x9] sm:$0xff]
    %v626 = vld [vmem:[%s240 + $0x11] sm:$0xff]
    %v627 = vld [vmem:[%s240 + $0x29] sm:$0xff]
    %v628 = vld [vmem:[%s240 + $0x31] sm:$0xff]
    %v629 = vld [vmem:[%s240 + $0x49] sm:$0xff]
    %v630 = vld [vmem:[%s240 + $0x51] sm:$0xff]
    %v631 = vld [vmem:[%s240 + $0x69] sm:$0xff]
    %v632 = vld [vmem:[%s240 + $0x71] sm:$0xff]
    %v633 = vld [vmem:[%s240 + $0x89] sm:$0xff]
    %v634 = vld [vmem:[%s240 + $0x91] sm:$0xff]
    %v635 = vld [vmem:[%s240 + $0xa9] sm:$0xff]
    %v636 = vld [vmem:[%s240 + $0xb1] sm:$0xff]
    %v637 = vld [vmem:[%s240 + $0xc9] sm:$0xff]
    %v638 = vld [vmem:[%s240 + $0xd1] sm:$0xff]
    %v639 = vld [vmem:[%s240 + $0xe9] sm:$0xff]
    %v640 = vld [vmem:[%s240 + $0xf1] sm:$0xff]
    %v641 = vld [vmem:[%s240 + $0x109] sm:$0xff]
    %v642 = vld [vmem:[%s240 + $0x111] sm:$0xff]
    %v643 = vld [vmem:[%s240 + $0x129] sm:$0xff]
    %v644 = vld [vmem:[%s240 + $0x131] sm:$0xff]
    %v645 = vld [vmem:[%s240 + $0x149] sm:$0xff]
    %v646 = vld [vmem:[%s240 + $0x151] sm:$0xff]
    %v647 = vld [vmem:[%s240 + $0x169] sm:$0xff]
    %v648 = vld [vmem:[%s240 + $0x171] sm:$0xff]
    %v649 = vld [vmem:[%s240 + $0x189] sm:$0xff]
    %v650 = vld [vmem:[%s240 + $0x191] sm:$0xff]
    %v651 = vld [vmem:[%s240 + $0x1a9] sm:$0xff]
    %v652 = vld [vmem:[%s240 + $0x1b1] sm:$0xff]
    %v653 = vld [vmem:[%s240 + $0x1c9] sm:$0xff]
    %v654 = vld [vmem:[%s240 + $0x1d1] sm:$0xff]
    %v655 = vld [vmem:[%s240 + $0x1e9] sm:$0xff]
    %v656 = vld [vmem:[%s240 + $0x1f1] sm:$0xff]
    %v657 = vld [vmem:[%s240 + $0x249] sm:$0xff]
    %v658 = vld [vmem:[%s240 + $0x251] sm:$0xff]
    %v659 = vld [vmem:[%s240 + $0x269] sm:$0xff]
    %v660 = vld [vmem:[%s240 + $0x271] sm:$0xff]
    %v661 = vld [vmem:[%s240 + $0x289] sm:$0xff]
    %v662 = vld [vmem:[%s240 + $0x291] sm:$0xff]
    %v663 = vld [vmem:[%s240 + $0x2a9] sm:$0xff]
    %v664 = vld [vmem:[%s240 + $0x2b1] sm:$0xff]
    %v665 = vld [vmem:[%s240 + $0x2c9] sm:$0xff]
    %v666 = vld [vmem:[%s240 + $0x2d1] sm:$0xff]
    %v667 = vld [vmem:[%s240 + $0x2e9] sm:$0xff]
    %v668 = vld [vmem:[%s240 + $0x2f1] sm:$0xff]
    %v669 = vld [vmem:[%s240 + $0x309] sm:$0xff]
    %v670 = vld [vmem:[%s240 + $0x311] sm:$0xff]
    %v671 = vld [vmem:[%s240 + $0x329] sm:$0xff]
    %v672 = vld [vmem:[%s240 + $0x331] sm:$0xff]
    %v673 = vld [vmem:[%s240 + $0x349] sm:$0xff]
    %v674 = vld [vmem:[%s240 + $0x351] sm:$0xff]
    %v675 = vld [vmem:[%s240 + $0x369] sm:$0xff]
    %v676 = vld [vmem:[%s240 + $0x371] sm:$0xff]
    %v677 = vld [vmem:[%s240 + $0x389] sm:$0xff]
    %v678 = vld [vmem:[%s240 + $0x391] sm:$0xff]
    %v679 = vld [vmem:[%s240 + $0x3a9] sm:$0xff]
    %v680 = vld [vmem:[%s240 + $0x3b1] sm:$0xff]
    %v681 = vld [vmem:[%s240 + $0x3c9] sm:$0xff]
    %v682 = vld [vmem:[%s240 + $0x3d1] sm:$0xff]
    %v683 = vld [vmem:[%s240 + $0x3e9] sm:$0xff]
    %v684 = vld [vmem:[%s240 + $0x3f1] sm:$0xff]
    %v685 = vld [vmem:[%s240 + $0x409] sm:$0xff]
    %v686 = vld [vmem:[%s240 + $0x411] sm:$0xff]
    %v687 = vld [vmem:[%s240 + $0x429] sm:$0xff]
    %v688 = vld [vmem:[%s240 + $0x431] sm:$0xff]
    %s689 = scalar_lea.vmem [#allocation2], 64
    %v690 = vld [vmem:[%s689 + $0x7] sm:$0xff]
    %v691 = vld [vmem:[%s689 + $0xf] sm:$0xff]
    %v692 = vld [vmem:[%s689 + $0x27] sm:$0xff]
    %v693 = vld [vmem:[%s689 + $0x2f] sm:$0xff]
    %v694 = vld [vmem:[%s689 + $0x47] sm:$0xff]
    %v695 = vld [vmem:[%s689 + $0x4f] sm:$0xff]
    %v696 = vld [vmem:[%s689 + $0x67] sm:$0xff]
    %v697 = vld [vmem:[%s689 + $0x6f] sm:$0xff]
    %v698 = vld [vmem:[%s689 + $0x87] sm:$0xff]
    %v699 = vld [vmem:[%s689 + $0x8f] sm:$0xff]
    %v700 = vld [vmem:[%s689 + $0xa7] sm:$0xff]
    %v701 = vld [vmem:[%s689 + $0xaf] sm:$0xff]
    %v702 = vld [vmem:[%s689 + $0xc7] sm:$0xff]
    %v703 = vld [vmem:[%s689 + $0xcf] sm:$0xff]
    %v704 = vld [vmem:[%s689 + $0xe7] sm:$0xff]
    %v705 = vld [vmem:[%s689 + $0xef] sm:$0xff]
    %v706 = vld [vmem:[%s689 + $0x107] sm:$0xff]
    %v707 = vld [vmem:[%s689 + $0x10f] sm:$0xff]
    %v708 = vld [vmem:[%s689 + $0x127] sm:$0xff]
    %v709 = vld [vmem:[%s689 + $0x12f] sm:$0xff]
    %v710 = vld [vmem:[%s689 + $0x147] sm:$0xff]
    %v711 = vld [vmem:[%s689 + $0x14f] sm:$0xff]
    %v712 = vld [vmem:[%s689 + $0x167] sm:$0xff]
    %v713 = vld [vmem:[%s689 + $0x16f] sm:$0xff]
    %v714 = vld [vmem:[%s689 + $0x187] sm:$0xff]
    %v715 = vld [vmem:[%s689 + $0x18f] sm:$0xff]
    %v716 = vld [vmem:[%s689 + $0x1a7] sm:$0xff]
    %v717 = vld [vmem:[%s689 + $0x1af] sm:$0xff]
    %v718 = vld [vmem:[%s689 + $0x1c7] sm:$0xff]
    %v719 = vld [vmem:[%s689 + $0x1cf] sm:$0xff]
    %v720 = vld [vmem:[%s689 + $0x1e7] sm:$0xff]
    %v721 = vld [vmem:[%s689 + $0x1ef] sm:$0xff]
    %v722 = vld [vmem:[%s689 + $0x247] sm:$0xff]
    %v723 = vld [vmem:[%s689 + $0x24f] sm:$0xff]
    %v724 = vld [vmem:[%s689 + $0x267] sm:$0xff]
    %v725 = vld [vmem:[%s689 + $0x26f] sm:$0xff]
    %v726 = vld [vmem:[%s689 + $0x287] sm:$0xff]
    %v727 = vld [vmem:[%s689 + $0x28f] sm:$0xff]
    %v728 = vld [vmem:[%s689 + $0x2a7] sm:$0xff]
    %v729 = vld [vmem:[%s689 + $0x2af] sm:$0xff]
    %v730 = vld [vmem:[%s689 + $0x2c7] sm:$0xff]
    %v731 = vld [vmem:[%s689 + $0x2cf] sm:$0xff]
    %v732 = vld [vmem:[%s689 + $0x2e7] sm:$0xff]
    %v733 = vld [vmem:[%s689 + $0x2ef] sm:$0xff]
    %v734 = vld [vmem:[%s689 + $0x307] sm:$0xff]
    %v735 = vld [vmem:[%s689 + $0x30f] sm:$0xff]
    %v736 = vld [vmem:[%s689 + $0x327] sm:$0xff]
    %v737 = vld [vmem:[%s689 + $0x32f] sm:$0xff]
    %v738 = vld [vmem:[%s689 + $0x347] sm:$0xff]
    %v739 = vld [vmem:[%s689 + $0x34f] sm:$0xff]
    %v740 = vld [vmem:[%s689 + $0x367] sm:$0xff]
    %v741 = vld [vmem:[%s689 + $0x36f] sm:$0xff]
    %v742 = vld [vmem:[%s689 + $0x387] sm:$0xff]
    %v743 = vld [vmem:[%s689 + $0x38f] sm:$0xff]
    %v744 = vld [vmem:[%s689 + $0x3a7] sm:$0xff]
    %v745 = vld [vmem:[%s689 + $0x3af] sm:$0xff]
    %v746 = vld [vmem:[%s689 + $0x3c7] sm:$0xff]
    %v747 = vld [vmem:[%s689 + $0x3cf] sm:$0xff]
    %v748 = vld [vmem:[%s689 + $0x3e7] sm:$0xff]
    %v749 = vld [vmem:[%s689 + $0x3ef] sm:$0xff]
    %v750 = vld [vmem:[%s689 + $0x407] sm:$0xff]
    %v751 = vld [vmem:[%s689 + $0x40f] sm:$0xff]
    %v752 = vld [vmem:[%s689 + $0x427] sm:$0xff]
    %v753 = vld [vmem:[%s689 + $0x42f] sm:$0xff]
    %v754 = vld [vmem:[%s689 + $0x8] sm:$0xff]
    %v755 = vld [vmem:[%s689 + $0x10] sm:$0xff]
    %v756 = vld [vmem:[%s689 + $0x28] sm:$0xff]
    %v757 = vld [vmem:[%s689 + $0x30] sm:$0xff]
    %v758 = vld [vmem:[%s689 + $0x48] sm:$0xff]
    %v759 = vld [vmem:[%s689 + $0x50] sm:$0xff]
    %v760 = vld [vmem:[%s689 + $0x68] sm:$0xff]
    %v761 = vld [vmem:[%s689 + $0x70] sm:$0xff]
    %v762 = vld [vmem:[%s689 + $0x88] sm:$0xff]
    %v763 = vld [vmem:[%s689 + $0x90] sm:$0xff]
    %v764 = vld [vmem:[%s689 + $0xa8] sm:$0xff]
    %v765 = vld [vmem:[%s689 + $0xb0] sm:$0xff]
    %v766 = vld [vmem:[%s689 + $0xc8] sm:$0xff]
    %v767 = vld [vmem:[%s689 + $0xd0] sm:$0xff]
    %v768 = vld [vmem:[%s689 + $0xe8] sm:$0xff]
    %v769 = vld [vmem:[%s689 + $0xf0] sm:$0xff]
    %v770 = vld [vmem:[%s689 + $0x108] sm:$0xff]
    %v771 = vld [vmem:[%s689 + $0x110] sm:$0xff]
    %v772 = vld [vmem:[%s689 + $0x128] sm:$0xff]
    %v773 = vld [vmem:[%s689 + $0x130] sm:$0xff]
    %v774 = vld [vmem:[%s689 + $0x148] sm:$0xff]
    %v775 = vld [vmem:[%s689 + $0x150] sm:$0xff]
    %v776 = vld [vmem:[%s689 + $0x168] sm:$0xff]
    %v777 = vld [vmem:[%s689 + $0x170] sm:$0xff]
    %v778 = vld [vmem:[%s689 + $0x188] sm:$0xff]
    %v779 = vld [vmem:[%s689 + $0x190] sm:$0xff]
    %v780 = vld [vmem:[%s689 + $0x1a8] sm:$0xff]
    %v781 = vld [vmem:[%s689 + $0x1b0] sm:$0xff]
    %v782 = vld [vmem:[%s689 + $0x1c8] sm:$0xff]
    %v783 = vld [vmem:[%s689 + $0x1d0] sm:$0xff]
    %v784 = vld [vmem:[%s689 + $0x1e8] sm:$0xff]
    %v785 = vld [vmem:[%s689 + $0x1f0] sm:$0xff]
    %v786 = vld [vmem:[%s689 + $0x248] sm:$0xff]
    %v787 = vld [vmem:[%s689 + $0x250] sm:$0xff]
    %v788 = vld [vmem:[%s689 + $0x268] sm:$0xff]
    %v789 = vld [vmem:[%s689 + $0x270] sm:$0xff]
    %v790 = vld [vmem:[%s689 + $0x288] sm:$0xff]
    %v791 = vld [vmem:[%s689 + $0x290] sm:$0xff]
    %v792 = vld [vmem:[%s689 + $0x2a8] sm:$0xff]
    %v793 = vld [vmem:[%s689 + $0x2b0] sm:$0xff]
    %v794 = vld [vmem:[%s689 + $0x2c8] sm:$0xff]
    %v795 = vld [vmem:[%s689 + $0x2d0] sm:$0xff]
    %v796 = vld [vmem:[%s689 + $0x2e8] sm:$0xff]
    %v797 = vld [vmem:[%s689 + $0x2f0] sm:$0xff]
    %v798 = vld [vmem:[%s689 + $0x308] sm:$0xff]
    %v799 = vld [vmem:[%s689 + $0x310] sm:$0xff]
    %v800 = vld [vmem:[%s689 + $0x328] sm:$0xff]
    %v801 = vld [vmem:[%s689 + $0x330] sm:$0xff]
    %v802 = vld [vmem:[%s689 + $0x348] sm:$0xff]
    %v803 = vld [vmem:[%s689 + $0x350] sm:$0xff]
    %v804 = vld [vmem:[%s689 + $0x368] sm:$0xff]
    %v805 = vld [vmem:[%s689 + $0x370] sm:$0xff]
    %v806 = vld [vmem:[%s689 + $0x388] sm:$0xff]
    %v807 = vld [vmem:[%s689 + $0x390] sm:$0xff]
    %v808 = vld [vmem:[%s689 + $0x3a8] sm:$0xff]
    %v809 = vld [vmem:[%s689 + $0x3b0] sm:$0xff]
    %v810 = vld [vmem:[%s689 + $0x3c8] sm:$0xff]
    %v811 = vld [vmem:[%s689 + $0x3d0] sm:$0xff]
    %v812 = vld [vmem:[%s689 + $0x3e8] sm:$0xff]
    %v813 = vld [vmem:[%s689 + $0x3f0] sm:$0xff]
    %v814 = vld [vmem:[%s689 + $0x408] sm:$0xff]
    %v815 = vld [vmem:[%s689 + $0x410] sm:$0xff]
    %v816 = vld [vmem:[%s689 + $0x428] sm:$0xff]
    %v817 = vld [vmem:[%s689 + $0x430] sm:$0xff]
    %v818 = vld [vmem:[%s689 + $0x9] sm:$0xff]
    %v819 = vld [vmem:[%s689 + $0x11] sm:$0xff]
    %v820 = vld [vmem:[%s689 + $0x29] sm:$0xff]
    %v821 = vld [vmem:[%s689 + $0x31] sm:$0xff]
    %v822 = vld [vmem:[%s689 + $0x49] sm:$0xff]
    %v823 = vld [vmem:[%s689 + $0x51] sm:$0xff]
    %v824 = vld [vmem:[%s689 + $0x69] sm:$0xff]
    %v825 = vld [vmem:[%s689 + $0x71] sm:$0xff]
    %v826 = vld [vmem:[%s689 + $0x89] sm:$0xff]
    %v827 = vld [vmem:[%s689 + $0x91] sm:$0xff]
    %v828 = vld [vmem:[%s689 + $0xa9] sm:$0xff]
    %v829 = vld [vmem:[%s689 + $0xb1] sm:$0xff]
    %v830 = vld [vmem:[%s689 + $0xc9] sm:$0xff]
    %v831 = vld [vmem:[%s689 + $0xd1] sm:$0xff]
    %v832 = vld [vmem:[%s689 + $0xe9] sm:$0xff]
    %v833 = vld [vmem:[%s689 + $0xf1] sm:$0xff]
    %v834 = vld [vmem:[%s689 + $0x109] sm:$0xff]
    %v835 = vld [vmem:[%s689 + $0x111] sm:$0xff]
    %v836 = vld [vmem:[%s689 + $0x129] sm:$0xff]
    %v837 = vld [vmem:[%s689 + $0x131] sm:$0xff]
    %v838 = vld [vmem:[%s689 + $0x149] sm:$0xff]
    %v839 = vld [vmem:[%s689 + $0x151] sm:$0xff]
    %v840 = vld [vmem:[%s689 + $0x169] sm:$0xff]
    %v841 = vld [vmem:[%s689 + $0x171] sm:$0xff]
    %v842 = vld [vmem:[%s689 + $0x189] sm:$0xff]
    %v843 = vld [vmem:[%s689 + $0x191] sm:$0xff]
    %v844 = vld [vmem:[%s689 + $0x1a9] sm:$0xff]
    %v845 = vld [vmem:[%s689 + $0x1b1] sm:$0xff]
    %v846 = vld [vmem:[%s689 + $0x1c9] sm:$0xff]
    %v847 = vld [vmem:[%s689 + $0x1d1] sm:$0xff]
    %v848 = vld [vmem:[%s689 + $0x1e9] sm:$0xff]
    %v849 = vld [vmem:[%s689 + $0x1f1] sm:$0xff]
    %v850 = vld [vmem:[%s689 + $0x249] sm:$0xff]
    %v851 = vld [vmem:[%s689 + $0x251] sm:$0xff]
    %v852 = vld [vmem:[%s689 + $0x269] sm:$0xff]
    %v853 = vld [vmem:[%s689 + $0x271] sm:$0xff]
    %v854 = vld [vmem:[%s689 + $0x289] sm:$0xff]
    %v855 = vld [vmem:[%s689 + $0x291] sm:$0xff]
    %v856 = vld [vmem:[%s689 + $0x2a9] sm:$0xff]
    %v857 = vld [vmem:[%s689 + $0x2b1] sm:$0xff]
    %v858 = vld [vmem:[%s689 + $0x2c9] sm:$0xff]
    %v859 = vld [vmem:[%s689 + $0x2d1] sm:$0xff]
    %v860 = vld [vmem:[%s689 + $0x2e9] sm:$0xff]
    %v861 = vld [vmem:[%s689 + $0x2f1] sm:$0xff]
    %v862 = vld [vmem:[%s689 + $0x309] sm:$0xff]
    %v863 = vld [vmem:[%s689 + $0x311] sm:$0xff]
    %v864 = vld [vmem:[%s689 + $0x329] sm:$0xff]
    %v865 = vld [vmem:[%s689 + $0x331] sm:$0xff]
    %v866 = vld [vmem:[%s689 + $0x349] sm:$0xff]
    %v867 = vld [vmem:[%s689 + $0x351] sm:$0xff]
    %v868 = vld [vmem:[%s689 + $0x369] sm:$0xff]
    %v869 = vld [vmem:[%s689 + $0x371] sm:$0xff]
    %v870 = vld [vmem:[%s689 + $0x389] sm:$0xff]
    %v871 = vld [vmem:[%s689 + $0x391] sm:$0xff]
    %v872 = vld [vmem:[%s689 + $0x3a9] sm:$0xff]
    %v873 = vld [vmem:[%s689 + $0x3b1] sm:$0xff]
    %v874 = vld [vmem:[%s689 + $0x3c9] sm:$0xff]
    %v875 = vld [vmem:[%s689 + $0x3d1] sm:$0xff]
    %v876 = vld [vmem:[%s689 + $0x3e9] sm:$0xff]
    %v877 = vld [vmem:[%s689 + $0x3f1] sm:$0xff]
    %v878 = vld [vmem:[%s689 + $0x409] sm:$0xff]
    %v879 = vld [vmem:[%s689 + $0x411] sm:$0xff]
    %v880 = vld [vmem:[%s689 + $0x429] sm:$0xff]
    %v881 = vld [vmem:[%s689 + $0x431] sm:$0xff]
    %946 = vrot.lane.b32.xlu0 %v369, 32
    %v947 = vpop.permute.xlu0 %946
    %948 = vrot.lane.b32.xlu0 %v370, 32
    %v949 = vpop.permute.xlu0 %948
    %950 = vrot.lane.b32.xlu0 %v371, 32
    %v951 = vpop.permute.xlu0 %950
    %952 = vrot.lane.b32.xlu0 %v372, 32
    %v953 = vpop.permute.xlu0 %952
    %954 = vrot.lane.b32.xlu0 %v373, 32
    %v955 = vpop.permute.xlu0 %954
    %956 = vrot.lane.b32.xlu0 %v374, 32
    %v957 = vpop.permute.xlu0 %956
    %958 = vrot.lane.b32.xlu0 %v375, 32
    %v959 = vpop.permute.xlu0 %958
    %960 = vrot.lane.b32.xlu0 %v376, 32
    %v961 = vpop.permute.xlu0 %960
    %962 = vrot.lane.b32.xlu0 %v377, 32
    %v963 = vpop.permute.xlu0 %962
    %964 = vrot.lane.b32.xlu0 %v378, 32
    %v965 = vpop.permute.xlu0 %964
    %966 = vrot.lane.b32.xlu0 %v379, 32
    %v967 = vpop.permute.xlu0 %966
    %968 = vrot.lane.b32.xlu0 %v380, 32
    %v969 = vpop.permute.xlu0 %968
    %970 = vrot.lane.b32.xlu0 %v381, 32
    %v971 = vpop.permute.xlu0 %970
    %972 = vrot.lane.b32.xlu0 %v382, 32
    %v973 = vpop.permute.xlu0 %972
    %974 = vrot.lane.b32.xlu0 %v383, 32
    %v975 = vpop.permute.xlu0 %974
    %976 = vrot.lane.b32.xlu0 %v384, 32
    %v977 = vpop.permute.xlu0 %976
    %978 = vrot.lane.b32.xlu0 %v385, 32
    %v979 = vpop.permute.xlu0 %978
    %980 = vrot.lane.b32.xlu0 %v386, 32
    %v981 = vpop.permute.xlu0 %980
    %982 = vrot.lane.b32.xlu0 %v387, 32
    %v983 = vpop.permute.xlu0 %982
    %984 = vrot.lane.b32.xlu0 %v388, 32
    %v985 = vpop.permute.xlu0 %984
    %986 = vrot.lane.b32.xlu0 %v389, 32
    %v987 = vpop.permute.xlu0 %986
    %988 = vrot.lane.b32.xlu0 %v390, 32
    %v989 = vpop.permute.xlu0 %988
    %990 = vrot.lane.b32.xlu0 %v391, 32
    %v991 = vpop.permute.xlu0 %990
    %992 = vrot.lane.b32.xlu0 %v392, 32
    %v993 = vpop.permute.xlu0 %992
    %994 = vrot.lane.b32.xlu0 %v393, 32
    %v995 = vpop.permute.xlu0 %994
    %996 = vrot.lane.b32.xlu0 %v394, 32
    %v997 = vpop.permute.xlu0 %996
    %998 = vrot.lane.b32.xlu0 %v395, 32
    %v999 = vpop.permute.xlu0 %998
    %1000 = vrot.lane.b32.xlu0 %v396, 32
    %v1001 = vpop.permute.xlu0 %1000
    %1002 = vrot.lane.b32.xlu0 %v397, 32
    %v1003 = vpop.permute.xlu0 %1002
    %1004 = vrot.lane.b32.xlu0 %v398, 32
    %v1005 = vpop.permute.xlu0 %1004
    %1006 = vrot.lane.b32.xlu0 %v399, 32
    %v1007 = vpop.permute.xlu0 %1006
    %1008 = vrot.lane.b32.xlu0 %v400, 32
    %v1009 = vpop.permute.xlu0 %1008
    %1010 = vrot.lane.b32.xlu0 %v401, 32
    %v1011 = vpop.permute.xlu0 %1010
    %1012 = vrot.lane.b32.xlu0 %v402, 32
    %v1013 = vpop.permute.xlu0 %1012
    %1014 = vrot.lane.b32.xlu0 %v403, 32
    %v1015 = vpop.permute.xlu0 %1014
    %1016 = vrot.lane.b32.xlu0 %v404, 32
    %v1017 = vpop.permute.xlu0 %1016
    %1018 = vrot.lane.b32.xlu0 %v405, 32
    %v1019 = vpop.permute.xlu0 %1018
    %1020 = vrot.lane.b32.xlu0 %v406, 32
    %v1021 = vpop.permute.xlu0 %1020
    %1022 = vrot.lane.b32.xlu0 %v407, 32
    %v1023 = vpop.permute.xlu0 %1022
    %1024 = vrot.lane.b32.xlu0 %v408, 32
    %v1025 = vpop.permute.xlu0 %1024
    %1026 = vrot.lane.b32.xlu0 %v409, 32
    %v1027 = vpop.permute.xlu0 %1026
    %1028 = vrot.lane.b32.xlu0 %v410, 32
    %v1029 = vpop.permute.xlu0 %1028
    %1030 = vrot.lane.b32.xlu0 %v411, 32
    %v1031 = vpop.permute.xlu0 %1030
    %1032 = vrot.lane.b32.xlu0 %v412, 32
    %v1033 = vpop.permute.xlu0 %1032
    %1034 = vrot.lane.b32.xlu0 %v413, 32
    %v1035 = vpop.permute.xlu0 %1034
    %1036 = vrot.lane.b32.xlu0 %v414, 32
    %v1037 = vpop.permute.xlu0 %1036
    %1038 = vrot.lane.b32.xlu0 %v415, 32
    %v1039 = vpop.permute.xlu0 %1038
    %1040 = vrot.lane.b32.xlu0 %v416, 32
    %v1041 = vpop.permute.xlu0 %1040
    %1042 = vrot.lane.b32.xlu0 %v417, 32
    %v1043 = vpop.permute.xlu0 %1042
    %1044 = vrot.lane.b32.xlu0 %v418, 32
    %v1045 = vpop.permute.xlu0 %1044
    %1046 = vrot.lane.b32.xlu0 %v419, 32
    %v1047 = vpop.permute.xlu0 %1046
    %1048 = vrot.lane.b32.xlu0 %v420, 32
    %v1049 = vpop.permute.xlu0 %1048
    %1050 = vrot.lane.b32.xlu0 %v421, 32
    %v1051 = vpop.permute.xlu0 %1050
    %1052 = vrot.lane.b32.xlu0 %v422, 32
    %v1053 = vpop.permute.xlu0 %1052
    %1054 = vrot.lane.b32.xlu0 %v423, 32
    %v1055 = vpop.permute.xlu0 %1054
    %1056 = vrot.lane.b32.xlu0 %v424, 32
    %v1057 = vpop.permute.xlu0 %1056
    %1058 = vrot.lane.b32.xlu0 %v425, 32
    %v1059 = vpop.permute.xlu0 %1058
    %1060 = vrot.lane.b32.xlu0 %v426, 32
    %v1061 = vpop.permute.xlu0 %1060
    %1062 = vrot.lane.b32.xlu0 %v427, 32
    %v1063 = vpop.permute.xlu0 %1062
    %1064 = vrot.lane.b32.xlu0 %v428, 32
    %v1065 = vpop.permute.xlu0 %1064
    %1066 = vrot.lane.b32.xlu0 %v429, 32
    %v1067 = vpop.permute.xlu0 %1066
    %1068 = vrot.lane.b32.xlu0 %v430, 32
    %v1069 = vpop.permute.xlu0 %1068
    %1070 = vrot.lane.b32.xlu0 %v431, 32
    %v1071 = vpop.permute.xlu0 %1070
    %1072 = vrot.lane.b32.xlu0 %v432, 32
    %v1073 = vpop.permute.xlu0 %1072
    %1202 = vrot.lane.b32.xlu0 %v433, 64
    %v1203 = vpop.permute.xlu0 %1202
    %1204 = vrot.lane.b32.xlu0 %v434, 64
    %v1205 = vpop.permute.xlu0 %1204
    %1206 = vrot.lane.b32.xlu0 %v435, 64
    %v1207 = vpop.permute.xlu0 %1206
    %1208 = vrot.lane.b32.xlu0 %v436, 64
    %v1209 = vpop.permute.xlu0 %1208
    %1210 = vrot.lane.b32.xlu0 %v437, 64
    %v1211 = vpop.permute.xlu0 %1210
    %1212 = vrot.lane.b32.xlu0 %v438, 64
    %v1213 = vpop.permute.xlu0 %1212
    %1214 = vrot.lane.b32.xlu0 %v439, 64
    %v1215 = vpop.permute.xlu0 %1214
    %1216 = vrot.lane.b32.xlu0 %v440, 64
    %v1217 = vpop.permute.xlu0 %1216
    %1218 = vrot.lane.b32.xlu0 %v441, 64
    %v1219 = vpop.permute.xlu0 %1218
    %1220 = vrot.lane.b32.xlu0 %v442, 64
    %v1221 = vpop.permute.xlu0 %1220
    %1222 = vrot.lane.b32.xlu0 %v443, 64
    %v1223 = vpop.permute.xlu0 %1222
    %1224 = vrot.lane.b32.xlu0 %v444, 64
    %v1225 = vpop.permute.xlu0 %1224
    %1226 = vrot.lane.b32.xlu0 %v445, 64
    %v1227 = vpop.permute.xlu0 %1226
    %1228 = vrot.lane.b32.xlu0 %v446, 64
    %v1229 = vpop.permute.xlu0 %1228
    %1230 = vrot.lane.b32.xlu0 %v447, 64
    %v1231 = vpop.permute.xlu0 %1230
    %1232 = vrot.lane.b32.xlu0 %v448, 64
    %v1233 = vpop.permute.xlu0 %1232
    %1234 = vrot.lane.b32.xlu0 %v449, 64
    %v1235 = vpop.permute.xlu0 %1234
    %1236 = vrot.lane.b32.xlu0 %v450, 64
    %v1237 = vpop.permute.xlu0 %1236
    %1238 = vrot.lane.b32.xlu0 %v451, 64
    %v1239 = vpop.permute.xlu0 %1238
    %1240 = vrot.lane.b32.xlu0 %v452, 64
    %v1241 = vpop.permute.xlu0 %1240
    %1242 = vrot.lane.b32.xlu0 %v453, 64
    %v1243 = vpop.permute.xlu0 %1242
    %1244 = vrot.lane.b32.xlu0 %v454, 64
    %v1245 = vpop.permute.xlu0 %1244
    %1246 = vrot.lane.b32.xlu0 %v455, 64
    %v1247 = vpop.permute.xlu0 %1246
    %1248 = vrot.lane.b32.xlu0 %v456, 64
    %v1249 = vpop.permute.xlu0 %1248
    %1250 = vrot.lane.b32.xlu0 %v457, 64
    %v1251 = vpop.permute.xlu0 %1250
    %1252 = vrot.lane.b32.xlu0 %v458, 64
    %v1253 = vpop.permute.xlu0 %1252
    %1254 = vrot.lane.b32.xlu0 %v459, 64
    %v1255 = vpop.permute.xlu0 %1254
    %1256 = vrot.lane.b32.xlu0 %v460, 64
    %v1257 = vpop.permute.xlu0 %1256
    %1258 = vrot.lane.b32.xlu0 %v461, 64
    %v1259 = vpop.permute.xlu0 %1258
    %1260 = vrot.lane.b32.xlu0 %v462, 64
    %v1261 = vpop.permute.xlu0 %1260
    %1262 = vrot.lane.b32.xlu0 %v463, 64
    %v1263 = vpop.permute.xlu0 %1262
    %1264 = vrot.lane.b32.xlu0 %v464, 64
    %v1265 = vpop.permute.xlu0 %1264
    %1266 = vrot.lane.b32.xlu0 %v465, 64
    %v1267 = vpop.permute.xlu0 %1266
    %1268 = vrot.lane.b32.xlu0 %v466, 64
    %v1269 = vpop.permute.xlu0 %1268
    %1270 = vrot.lane.b32.xlu0 %v467, 64
    %v1271 = vpop.permute.xlu0 %1270
    %1272 = vrot.lane.b32.xlu0 %v468, 64
    %v1273 = vpop.permute.xlu0 %1272
    %1274 = vrot.lane.b32.xlu0 %v469, 64
    %v1275 = vpop.permute.xlu0 %1274
    %1276 = vrot.lane.b32.xlu0 %v470, 64
    %v1277 = vpop.permute.xlu0 %1276
    %1278 = vrot.lane.b32.xlu0 %v471, 64
    %v1279 = vpop.permute.xlu0 %1278
    %1280 = vrot.lane.b32.xlu0 %v472, 64
    %v1281 = vpop.permute.xlu0 %1280
    %1282 = vrot.lane.b32.xlu0 %v473, 64
    %v1283 = vpop.permute.xlu0 %1282
    %1284 = vrot.lane.b32.xlu0 %v474, 64
    %v1285 = vpop.permute.xlu0 %1284
    %1286 = vrot.lane.b32.xlu0 %v475, 64
    %v1287 = vpop.permute.xlu0 %1286
    %1288 = vrot.lane.b32.xlu0 %v476, 64
    %v1289 = vpop.permute.xlu0 %1288
    %1290 = vrot.lane.b32.xlu0 %v477, 64
    %v1291 = vpop.permute.xlu0 %1290
    %1292 = vrot.lane.b32.xlu0 %v478, 64
    %v1293 = vpop.permute.xlu0 %1292
    %1294 = vrot.lane.b32.xlu0 %v479, 64
    %v1295 = vpop.permute.xlu0 %1294
    %1296 = vrot.lane.b32.xlu0 %v480, 64
    %v1297 = vpop.permute.xlu0 %1296
    %1298 = vrot.lane.b32.xlu0 %v481, 64
    %v1299 = vpop.permute.xlu0 %1298
    %1300 = vrot.lane.b32.xlu0 %v482, 64
    %v1301 = vpop.permute.xlu0 %1300
    %1302 = vrot.lane.b32.xlu0 %v483, 64
    %v1303 = vpop.permute.xlu0 %1302
    %1304 = vrot.lane.b32.xlu0 %v484, 64
    %v1305 = vpop.permute.xlu0 %1304
    %1306 = vrot.lane.b32.xlu0 %v485, 64
    %v1307 = vpop.permute.xlu0 %1306
    %1308 = vrot.lane.b32.xlu0 %v486, 64
    %v1309 = vpop.permute.xlu0 %1308
    %1310 = vrot.lane.b32.xlu0 %v487, 64
    %v1311 = vpop.permute.xlu0 %1310
    %1312 = vrot.lane.b32.xlu0 %v488, 64
    %v1313 = vpop.permute.xlu0 %1312
    %1314 = vrot.lane.b32.xlu0 %v489, 64
    %v1315 = vpop.permute.xlu0 %1314
    %1316 = vrot.lane.b32.xlu0 %v490, 64
    %v1317 = vpop.permute.xlu0 %1316
    %1318 = vrot.lane.b32.xlu0 %v491, 64
    %v1319 = vpop.permute.xlu0 %1318
    %1320 = vrot.lane.b32.xlu0 %v492, 64
    %v1321 = vpop.permute.xlu0 %1320
    %1322 = vrot.lane.b32.xlu0 %v493, 64
    %v1323 = vpop.permute.xlu0 %1322
    %1324 = vrot.lane.b32.xlu0 %v494, 64
    %v1325 = vpop.permute.xlu0 %1324
    %1326 = vrot.lane.b32.xlu0 %v495, 64
    %v1327 = vpop.permute.xlu0 %1326
    %1328 = vrot.lane.b32.xlu0 %v496, 64
    %v1329 = vpop.permute.xlu0 %1328
    %1458 = vrot.lane.b32.xlu0 %v497, 96
    %v1459 = vpop.permute.xlu0 %1458
    %1460 = vrot.lane.b32.xlu0 %v498, 96
    %v1461 = vpop.permute.xlu0 %1460
    %1462 = vrot.lane.b32.xlu0 %v499, 96
    %v1463 = vpop.permute.xlu0 %1462
    %1464 = vrot.lane.b32.xlu0 %v500, 96
    %v1465 = vpop.permute.xlu0 %1464
    %1466 = vrot.lane.b32.xlu0 %v501, 96
    %v1467 = vpop.permute.xlu0 %1466
    %1468 = vrot.lane.b32.xlu0 %v502, 96
    %v1469 = vpop.permute.xlu0 %1468
    %1470 = vrot.lane.b32.xlu0 %v503, 96
    %v1471 = vpop.permute.xlu0 %1470
    %1472 = vrot.lane.b32.xlu0 %v504, 96
    %v1473 = vpop.permute.xlu0 %1472
    %1474 = vrot.lane.b32.xlu0 %v505, 96
    %v1475 = vpop.permute.xlu0 %1474
    %1476 = vrot.lane.b32.xlu0 %v506, 96
    %v1477 = vpop.permute.xlu0 %1476
    %1478 = vrot.lane.b32.xlu0 %v507, 96
    %v1479 = vpop.permute.xlu0 %1478
    %1480 = vrot.lane.b32.xlu0 %v508, 96
    %v1481 = vpop.permute.xlu0 %1480
    %1482 = vrot.lane.b32.xlu0 %v509, 96
    %v1483 = vpop.permute.xlu0 %1482
    %1484 = vrot.lane.b32.xlu0 %v510, 96
    %v1485 = vpop.permute.xlu0 %1484
    %1486 = vrot.lane.b32.xlu0 %v511, 96
    %v1487 = vpop.permute.xlu0 %1486
    %1488 = vrot.lane.b32.xlu0 %v512, 96
    %v1489 = vpop.permute.xlu0 %1488
    %1490 = vrot.lane.b32.xlu0 %v513, 96
    %v1491 = vpop.permute.xlu0 %1490
    %1492 = vrot.lane.b32.xlu0 %v514, 96
    %v1493 = vpop.permute.xlu0 %1492
    %1494 = vrot.lane.b32.xlu0 %v515, 96
    %v1495 = vpop.permute.xlu0 %1494
    %1496 = vrot.lane.b32.xlu0 %v516, 96
    %v1497 = vpop.permute.xlu0 %1496
    %1498 = vrot.lane.b32.xlu0 %v517, 96
    %v1499 = vpop.permute.xlu0 %1498
    %1500 = vrot.lane.b32.xlu0 %v518, 96
    %v1501 = vpop.permute.xlu0 %1500
    %1502 = vrot.lane.b32.xlu0 %v519, 96
    %v1503 = vpop.permute.xlu0 %1502
    %1504 = vrot.lane.b32.xlu0 %v520, 96
    %v1505 = vpop.permute.xlu0 %1504
    %1506 = vrot.lane.b32.xlu0 %v521, 96
    %v1507 = vpop.permute.xlu0 %1506
    %1508 = vrot.lane.b32.xlu0 %v522, 96
    %v1509 = vpop.permute.xlu0 %1508
    %1510 = vrot.lane.b32.xlu0 %v523, 96
    %v1511 = vpop.permute.xlu0 %1510
    %1512 = vrot.lane.b32.xlu0 %v524, 96
    %v1513 = vpop.permute.xlu0 %1512
    %1514 = vrot.lane.b32.xlu0 %v525, 96
    %v1515 = vpop.permute.xlu0 %1514
    %1516 = vrot.lane.b32.xlu0 %v526, 96
    %v1517 = vpop.permute.xlu0 %1516
    %1518 = vrot.lane.b32.xlu0 %v527, 96
    %v1519 = vpop.permute.xlu0 %1518
    %1520 = vrot.lane.b32.xlu0 %v528, 96
    %v1521 = vpop.permute.xlu0 %1520
    %1522 = vrot.lane.b32.xlu0 %v529, 96
    %v1523 = vpop.permute.xlu0 %1522
    %1524 = vrot.lane.b32.xlu0 %v530, 96
    %v1525 = vpop.permute.xlu0 %1524
    %1526 = vrot.lane.b32.xlu0 %v531, 96
    %v1527 = vpop.permute.xlu0 %1526
    %1528 = vrot.lane.b32.xlu0 %v532, 96
    %v1529 = vpop.permute.xlu0 %1528
    %1530 = vrot.lane.b32.xlu0 %v533, 96
    %v1531 = vpop.permute.xlu0 %1530
    %1532 = vrot.lane.b32.xlu0 %v534, 96
    %v1533 = vpop.permute.xlu0 %1532
    %1534 = vrot.lane.b32.xlu0 %v535, 96
    %v1535 = vpop.permute.xlu0 %1534
    %1536 = vrot.lane.b32.xlu0 %v536, 96
    %v1537 = vpop.permute.xlu0 %1536
    %1538 = vrot.lane.b32.xlu0 %v537, 96
    %v1539 = vpop.permute.xlu0 %1538
    %1540 = vrot.lane.b32.xlu0 %v538, 96
    %v1541 = vpop.permute.xlu0 %1540
    %1542 = vrot.lane.b32.xlu0 %v539, 96
    %v1543 = vpop.permute.xlu0 %1542
    %1544 = vrot.lane.b32.xlu0 %v540, 96
    %v1545 = vpop.permute.xlu0 %1544
    %1546 = vrot.lane.b32.xlu0 %v541, 96
    %v1547 = vpop.permute.xlu0 %1546
    %1548 = vrot.lane.b32.xlu0 %v542, 96
    %v1549 = vpop.permute.xlu0 %1548
    %1550 = vrot.lane.b32.xlu0 %v543, 96
    %v1551 = vpop.permute.xlu0 %1550
    %1552 = vrot.lane.b32.xlu0 %v544, 96
    %v1553 = vpop.permute.xlu0 %1552
    %1554 = vrot.lane.b32.xlu0 %v545, 96
    %v1555 = vpop.permute.xlu0 %1554
    %1556 = vrot.lane.b32.xlu0 %v546, 96
    %v1557 = vpop.permute.xlu0 %1556
    %1558 = vrot.lane.b32.xlu0 %v547, 96
    %v1559 = vpop.permute.xlu0 %1558
    %1560 = vrot.lane.b32.xlu0 %v548, 96
    %v1561 = vpop.permute.xlu0 %1560
    %1562 = vrot.lane.b32.xlu0 %v549, 96
    %v1563 = vpop.permute.xlu0 %1562
    %1564 = vrot.lane.b32.xlu0 %v550, 96
    %v1565 = vpop.permute.xlu0 %1564
    %1566 = vrot.lane.b32.xlu0 %v551, 96
    %v1567 = vpop.permute.xlu0 %1566
    %1568 = vrot.lane.b32.xlu0 %v552, 96
    %v1569 = vpop.permute.xlu0 %1568
    %1570 = vrot.lane.b32.xlu0 %v553, 96
    %v1571 = vpop.permute.xlu0 %1570
    %1572 = vrot.lane.b32.xlu0 %v554, 96
    %v1573 = vpop.permute.xlu0 %1572
    %1574 = vrot.lane.b32.xlu0 %v555, 96
    %v1575 = vpop.permute.xlu0 %1574
    %1576 = vrot.lane.b32.xlu0 %v556, 96
    %v1577 = vpop.permute.xlu0 %1576
    %1578 = vrot.lane.b32.xlu0 %v557, 96
    %v1579 = vpop.permute.xlu0 %1578
    %1580 = vrot.lane.b32.xlu0 %v558, 96
    %v1581 = vpop.permute.xlu0 %1580
    %1582 = vrot.lane.b32.xlu0 %v559, 96
    %v1583 = vpop.permute.xlu0 %1582
    %1584 = vrot.lane.b32.xlu0 %v560, 96
    %v1585 = vpop.permute.xlu0 %1584
    %1714 = vrot.lane.b32.xlu0 %v625, 32
    %v1715 = vpop.permute.xlu0 %1714
    %1716 = vrot.lane.b32.xlu0 %v626, 32
    %v1717 = vpop.permute.xlu0 %1716
    %1718 = vrot.lane.b32.xlu0 %v627, 32
    %v1719 = vpop.permute.xlu0 %1718
    %1720 = vrot.lane.b32.xlu0 %v628, 32
    %v1721 = vpop.permute.xlu0 %1720
    %1722 = vrot.lane.b32.xlu0 %v629, 32
    %v1723 = vpop.permute.xlu0 %1722
    %1724 = vrot.lane.b32.xlu0 %v630, 32
    %v1725 = vpop.permute.xlu0 %1724
    %1726 = vrot.lane.b32.xlu0 %v631, 32
    %v1727 = vpop.permute.xlu0 %1726
    %1728 = vrot.lane.b32.xlu0 %v632, 32
    %v1729 = vpop.permute.xlu0 %1728
    %1730 = vrot.lane.b32.xlu0 %v633, 32
    %v1731 = vpop.permute.xlu0 %1730
    %1732 = vrot.lane.b32.xlu0 %v634, 32
    %v1733 = vpop.permute.xlu0 %1732
    %1734 = vrot.lane.b32.xlu0 %v635, 32
    %v1735 = vpop.permute.xlu0 %1734
    %1736 = vrot.lane.b32.xlu0 %v636, 32
    %v1737 = vpop.permute.xlu0 %1736
    %1738 = vrot.lane.b32.xlu0 %v637, 32
    %v1739 = vpop.permute.xlu0 %1738
    %1740 = vrot.lane.b32.xlu0 %v638, 32
    %v1741 = vpop.permute.xlu0 %1740
    %1742 = vrot.lane.b32.xlu0 %v639, 32
    %v1743 = vpop.permute.xlu0 %1742
    %1744 = vrot.lane.b32.xlu0 %v640, 32
    %v1745 = vpop.permute.xlu0 %1744
    %1746 = vrot.lane.b32.xlu0 %v641, 32
    %v1747 = vpop.permute.xlu0 %1746
    %1748 = vrot.lane.b32.xlu0 %v642, 32
    %v1749 = vpop.permute.xlu0 %1748
    %1750 = vrot.lane.b32.xlu0 %v643, 32
    %v1751 = vpop.permute.xlu0 %1750
    %1752 = vrot.lane.b32.xlu0 %v644, 32
    %v1753 = vpop.permute.xlu0 %1752
    %1754 = vrot.lane.b32.xlu0 %v645, 32
    %v1755 = vpop.permute.xlu0 %1754
    %1756 = vrot.lane.b32.xlu0 %v646, 32
    %v1757 = vpop.permute.xlu0 %1756
    %1758 = vrot.lane.b32.xlu0 %v647, 32
    %v1759 = vpop.permute.xlu0 %1758
    %1760 = vrot.lane.b32.xlu0 %v648, 32
    %v1761 = vpop.permute.xlu0 %1760
    %1762 = vrot.lane.b32.xlu0 %v649, 32
    %v1763 = vpop.permute.xlu0 %1762
    %1764 = vrot.lane.b32.xlu0 %v650, 32
    %v1765 = vpop.permute.xlu0 %1764
    %1766 = vrot.lane.b32.xlu0 %v651, 32
    %v1767 = vpop.permute.xlu0 %1766
    %1768 = vrot.lane.b32.xlu0 %v652, 32
    %v1769 = vpop.permute.xlu0 %1768
    %1770 = vrot.lane.b32.xlu0 %v653, 32
    %v1771 = vpop.permute.xlu0 %1770
    %1772 = vrot.lane.b32.xlu0 %v654, 32
    %v1773 = vpop.permute.xlu0 %1772
    %1774 = vrot.lane.b32.xlu0 %v655, 32
    %v1775 = vpop.permute.xlu0 %1774
    %1776 = vrot.lane.b32.xlu0 %v656, 32
    %v1777 = vpop.permute.xlu0 %1776
    %1778 = vrot.lane.b32.xlu0 %v657, 32
    %v1779 = vpop.permute.xlu0 %1778
    %1780 = vrot.lane.b32.xlu0 %v658, 32
    %v1781 = vpop.permute.xlu0 %1780
    %1782 = vrot.lane.b32.xlu0 %v659, 32
    %v1783 = vpop.permute.xlu0 %1782
    %1784 = vrot.lane.b32.xlu0 %v660, 32
    %v1785 = vpop.permute.xlu0 %1784
    %1786 = vrot.lane.b32.xlu0 %v661, 32
    %v1787 = vpop.permute.xlu0 %1786
    %1788 = vrot.lane.b32.xlu0 %v662, 32
    %v1789 = vpop.permute.xlu0 %1788
    %1790 = vrot.lane.b32.xlu0 %v663, 32
    %v1791 = vpop.permute.xlu0 %1790
    %1792 = vrot.lane.b32.xlu0 %v664, 32
    %v1793 = vpop.permute.xlu0 %1792
    %1794 = vrot.lane.b32.xlu0 %v665, 32
    %v1795 = vpop.permute.xlu0 %1794
    %1796 = vrot.lane.b32.xlu0 %v666, 32
    %v1797 = vpop.permute.xlu0 %1796
    %1798 = vrot.lane.b32.xlu0 %v667, 32
    %v1799 = vpop.permute.xlu0 %1798
    %1800 = vrot.lane.b32.xlu0 %v668, 32
    %v1801 = vpop.permute.xlu0 %1800
    %1802 = vrot.lane.b32.xlu0 %v669, 32
    %v1803 = vpop.permute.xlu0 %1802
    %1804 = vrot.lane.b32.xlu0 %v670, 32
    %v1805 = vpop.permute.xlu0 %1804
    %1806 = vrot.lane.b32.xlu0 %v671, 32
    %v1807 = vpop.permute.xlu0 %1806
    %1808 = vrot.lane.b32.xlu0 %v672, 32
    %v1809 = vpop.permute.xlu0 %1808
    %1810 = vrot.lane.b32.xlu0 %v673, 32
    %v1811 = vpop.permute.xlu0 %1810
    %1812 = vrot.lane.b32.xlu0 %v674, 32
    %v1813 = vpop.permute.xlu0 %1812
    %1814 = vrot.lane.b32.xlu0 %v675, 32
    %v1815 = vpop.permute.xlu0 %1814
    %1816 = vrot.lane.b32.xlu0 %v676, 32
    %v1817 = vpop.permute.xlu0 %1816
    %1818 = vrot.lane.b32.xlu0 %v677, 32
    %v1819 = vpop.permute.xlu0 %1818
    %1820 = vrot.lane.b32.xlu0 %v678, 32
    %v1821 = vpop.permute.xlu0 %1820
    %1822 = vrot.lane.b32.xlu0 %v679, 32
    %v1823 = vpop.permute.xlu0 %1822
    %1824 = vrot.lane.b32.xlu0 %v680, 32
    %v1825 = vpop.permute.xlu0 %1824
    %1826 = vrot.lane.b32.xlu0 %v681, 32
    %v1827 = vpop.permute.xlu0 %1826
    %1828 = vrot.lane.b32.xlu0 %v682, 32
    %v1829 = vpop.permute.xlu0 %1828
    %1830 = vrot.lane.b32.xlu0 %v683, 32
    %v1831 = vpop.permute.xlu0 %1830
    %1832 = vrot.lane.b32.xlu0 %v684, 32
    %v1833 = vpop.permute.xlu0 %1832
    %1834 = vrot.lane.b32.xlu0 %v685, 32
    %v1835 = vpop.permute.xlu0 %1834
    %1836 = vrot.lane.b32.xlu0 %v686, 32
    %v1837 = vpop.permute.xlu0 %1836
    %1838 = vrot.lane.b32.xlu0 %v687, 32
    %v1839 = vpop.permute.xlu0 %1838
    %1840 = vrot.lane.b32.xlu0 %v688, 32
    %v1841 = vpop.permute.xlu0 %1840
    %1970 = vrot.lane.b32.xlu0 %v690, 64
    %v1971 = vpop.permute.xlu0 %1970
    %1972 = vrot.lane.b32.xlu0 %v691, 64
    %v1973 = vpop.permute.xlu0 %1972
    %1974 = vrot.lane.b32.xlu0 %v692, 64
    %v1975 = vpop.permute.xlu0 %1974
    %1976 = vrot.lane.b32.xlu0 %v693, 64
    %v1977 = vpop.permute.xlu0 %1976
    %1978 = vrot.lane.b32.xlu0 %v694, 64
    %v1979 = vpop.permute.xlu0 %1978
    %1980 = vrot.lane.b32.xlu0 %v695, 64
    %v1981 = vpop.permute.xlu0 %1980
    %1982 = vrot.lane.b32.xlu0 %v696, 64
    %v1983 = vpop.permute.xlu0 %1982
    %1984 = vrot.lane.b32.xlu0 %v697, 64
    %v1985 = vpop.permute.xlu0 %1984
    %1986 = vrot.lane.b32.xlu0 %v698, 64
    %v1987 = vpop.permute.xlu0 %1986
    %1988 = vrot.lane.b32.xlu0 %v699, 64
    %v1989 = vpop.permute.xlu0 %1988
    %1990 = vrot.lane.b32.xlu0 %v700, 64
    %v1991 = vpop.permute.xlu0 %1990
    %1992 = vrot.lane.b32.xlu0 %v701, 64
    %v1993 = vpop.permute.xlu0 %1992
    %1994 = vrot.lane.b32.xlu0 %v702, 64
    %v1995 = vpop.permute.xlu0 %1994
    %1996 = vrot.lane.b32.xlu0 %v703, 64
    %v1997 = vpop.permute.xlu0 %1996
    %1998 = vrot.lane.b32.xlu0 %v704, 64
    %v1999 = vpop.permute.xlu0 %1998
    %2000 = vrot.lane.b32.xlu0 %v705, 64
    %v2001 = vpop.permute.xlu0 %2000
    %2002 = vrot.lane.b32.xlu0 %v706, 64
    %v2003 = vpop.permute.xlu0 %2002
    %2004 = vrot.lane.b32.xlu0 %v707, 64
    %v2005 = vpop.permute.xlu0 %2004
    %2006 = vrot.lane.b32.xlu0 %v708, 64
    %v2007 = vpop.permute.xlu0 %2006
    %2008 = vrot.lane.b32.xlu0 %v709, 64
    %v2009 = vpop.permute.xlu0 %2008
    %2010 = vrot.lane.b32.xlu0 %v710, 64
    %v2011 = vpop.permute.xlu0 %2010
    %2012 = vrot.lane.b32.xlu0 %v711, 64
    %v2013 = vpop.permute.xlu0 %2012
    %2014 = vrot.lane.b32.xlu0 %v712, 64
    %v2015 = vpop.permute.xlu0 %2014
    %2016 = vrot.lane.b32.xlu0 %v713, 64
    %v2017 = vpop.permute.xlu0 %2016
    %2018 = vrot.lane.b32.xlu0 %v714, 64
    %v2019 = vpop.permute.xlu0 %2018
    %2020 = vrot.lane.b32.xlu0 %v715, 64
    %v2021 = vpop.permute.xlu0 %2020
    %2022 = vrot.lane.b32.xlu0 %v716, 64
    %v2023 = vpop.permute.xlu0 %2022
    %2024 = vrot.lane.b32.xlu0 %v717, 64
    %v2025 = vpop.permute.xlu0 %2024
    %2026 = vrot.lane.b32.xlu0 %v718, 64
    %v2027 = vpop.permute.xlu0 %2026
    %2028 = vrot.lane.b32.xlu0 %v719, 64
    %v2029 = vpop.permute.xlu0 %2028
    %2030 = vrot.lane.b32.xlu0 %v720, 64
    %v2031 = vpop.permute.xlu0 %2030
    %2032 = vrot.lane.b32.xlu0 %v721, 64
    %v2033 = vpop.permute.xlu0 %2032
    %2034 = vrot.lane.b32.xlu0 %v722, 64
    %v2035 = vpop.permute.xlu0 %2034
    %2036 = vrot.lane.b32.xlu0 %v723, 64
    %v2037 = vpop.permute.xlu0 %2036
    %2038 = vrot.lane.b32.xlu0 %v724, 64
    %v2039 = vpop.permute.xlu0 %2038
    %2040 = vrot.lane.b32.xlu0 %v725, 64
    %v2041 = vpop.permute.xlu0 %2040
    %2042 = vrot.lane.b32.xlu0 %v726, 64
    %v2043 = vpop.permute.xlu0 %2042
    %2044 = vrot.lane.b32.xlu0 %v727, 64
    %v2045 = vpop.permute.xlu0 %2044
    %2046 = vrot.lane.b32.xlu0 %v728, 64
    %v2047 = vpop.permute.xlu0 %2046
    %2048 = vrot.lane.b32.xlu0 %v729, 64
    %v2049 = vpop.permute.xlu0 %2048
    %2050 = vrot.lane.b32.xlu0 %v730, 64
    %v2051 = vpop.permute.xlu0 %2050
    %2052 = vrot.lane.b32.xlu0 %v731, 64
    %v2053 = vpop.permute.xlu0 %2052
    %2054 = vrot.lane.b32.xlu0 %v732, 64
    %v2055 = vpop.permute.xlu0 %2054
    %2056 = vrot.lane.b32.xlu0 %v733, 64
    %v2057 = vpop.permute.xlu0 %2056
    %2058 = vrot.lane.b32.xlu0 %v734, 64
    %v2059 = vpop.permute.xlu0 %2058
    %2060 = vrot.lane.b32.xlu0 %v735, 64
    %v2061 = vpop.permute.xlu0 %2060
    %2062 = vrot.lane.b32.xlu0 %v736, 64
    %v2063 = vpop.permute.xlu0 %2062
    %2064 = vrot.lane.b32.xlu0 %v737, 64
    %v2065 = vpop.permute.xlu0 %2064
    %2066 = vrot.lane.b32.xlu0 %v738, 64
    %v2067 = vpop.permute.xlu0 %2066
    %2068 = vrot.lane.b32.xlu0 %v739, 64
    %v2069 = vpop.permute.xlu0 %2068
    %2070 = vrot.lane.b32.xlu0 %v740, 64
    %v2071 = vpop.permute.xlu0 %2070
    %2072 = vrot.lane.b32.xlu0 %v741, 64
    %v2073 = vpop.permute.xlu0 %2072
    %2074 = vrot.lane.b32.xlu0 %v742, 64
    %v2075 = vpop.permute.xlu0 %2074
    %2076 = vrot.lane.b32.xlu0 %v743, 64
    %v2077 = vpop.permute.xlu0 %2076
    %2078 = vrot.lane.b32.xlu0 %v744, 64
    %v2079 = vpop.permute.xlu0 %2078
    %2080 = vrot.lane.b32.xlu0 %v745, 64
    %v2081 = vpop.permute.xlu0 %2080
    %2082 = vrot.lane.b32.xlu0 %v746, 64
    %v2083 = vpop.permute.xlu0 %2082
    %2084 = vrot.lane.b32.xlu0 %v747, 64
    %v2085 = vpop.permute.xlu0 %2084
    %2086 = vrot.lane.b32.xlu0 %v748, 64
    %v2087 = vpop.permute.xlu0 %2086
    %2088 = vrot.lane.b32.xlu0 %v749, 64
    %v2089 = vpop.permute.xlu0 %2088
    %2090 = vrot.lane.b32.xlu0 %v750, 64
    %v2091 = vpop.permute.xlu0 %2090
    %2092 = vrot.lane.b32.xlu0 %v751, 64
    %v2093 = vpop.permute.xlu0 %2092
    %2094 = vrot.lane.b32.xlu0 %v752, 64
    %v2095 = vpop.permute.xlu0 %2094
    %2096 = vrot.lane.b32.xlu0 %v753, 64
    %v2097 = vpop.permute.xlu0 %2096
    %2226 = vrot.lane.b32.xlu0 %v754, 96
    %v2227 = vpop.permute.xlu0 %2226
    %2228 = vrot.lane.b32.xlu0 %v755, 96
    %v2229 = vpop.permute.xlu0 %2228
    %2230 = vrot.lane.b32.xlu0 %v756, 96
    %v2231 = vpop.permute.xlu0 %2230
    %2232 = vrot.lane.b32.xlu0 %v757, 96
    %v2233 = vpop.permute.xlu0 %2232
    %2234 = vrot.lane.b32.xlu0 %v758, 96
    %v2235 = vpop.permute.xlu0 %2234
    %2236 = vrot.lane.b32.xlu0 %v759, 96
    %v2237 = vpop.permute.xlu0 %2236
    %2238 = vrot.lane.b32.xlu0 %v760, 96
    %v2239 = vpop.permute.xlu0 %2238
    %2240 = vrot.lane.b32.xlu0 %v761, 96
    %v2241 = vpop.permute.xlu0 %2240
    %2242 = vrot.lane.b32.xlu0 %v762, 96
    %v2243 = vpop.permute.xlu0 %2242
    %2244 = vrot.lane.b32.xlu0 %v763, 96
    %v2245 = vpop.permute.xlu0 %2244
    %2246 = vrot.lane.b32.xlu0 %v764, 96
    %v2247 = vpop.permute.xlu0 %2246
    %2248 = vrot.lane.b32.xlu0 %v765, 96
    %v2249 = vpop.permute.xlu0 %2248
    %2250 = vrot.lane.b32.xlu0 %v766, 96
    %v2251 = vpop.permute.xlu0 %2250
    %2252 = vrot.lane.b32.xlu0 %v767, 96
    %v2253 = vpop.permute.xlu0 %2252
    %2254 = vrot.lane.b32.xlu0 %v768, 96
    %v2255 = vpop.permute.xlu0 %2254
    %2256 = vrot.lane.b32.xlu0 %v769, 96
    %v2257 = vpop.permute.xlu0 %2256
    %2258 = vrot.lane.b32.xlu0 %v770, 96
    %v2259 = vpop.permute.xlu0 %2258
    %2260 = vrot.lane.b32.xlu0 %v771, 96
    %v2261 = vpop.permute.xlu0 %2260
    %2262 = vrot.lane.b32.xlu0 %v772, 96
    %v2263 = vpop.permute.xlu0 %2262
    %2264 = vrot.lane.b32.xlu0 %v773, 96
    %v2265 = vpop.permute.xlu0 %2264
    %2266 = vrot.lane.b32.xlu0 %v774, 96
    %v2267 = vpop.permute.xlu0 %2266
    %2268 = vrot.lane.b32.xlu0 %v775, 96
    %v2269 = vpop.permute.xlu0 %2268
    %2270 = vrot.lane.b32.xlu0 %v776, 96
    %v2271 = vpop.permute.xlu0 %2270
    %2272 = vrot.lane.b32.xlu0 %v777, 96
    %v2273 = vpop.permute.xlu0 %2272
    %2274 = vrot.lane.b32.xlu0 %v778, 96
    %v2275 = vpop.permute.xlu0 %2274
    %2276 = vrot.lane.b32.xlu0 %v779, 96
    %v2277 = vpop.permute.xlu0 %2276
    %2278 = vrot.lane.b32.xlu0 %v780, 96
    %v2279 = vpop.permute.xlu0 %2278
    %2280 = vrot.lane.b32.xlu0 %v781, 96
    %v2281 = vpop.permute.xlu0 %2280
    %2282 = vrot.lane.b32.xlu0 %v782, 96
    %v2283 = vpop.permute.xlu0 %2282
    %2284 = vrot.lane.b32.xlu0 %v783, 96
    %v2285 = vpop.permute.xlu0 %2284
    %2286 = vrot.lane.b32.xlu0 %v784, 96
    %v2287 = vpop.permute.xlu0 %2286
    %2288 = vrot.lane.b32.xlu0 %v785, 96
    %v2289 = vpop.permute.xlu0 %2288
    %2290 = vrot.lane.b32.xlu0 %v786, 96
    %v2291 = vpop.permute.xlu0 %2290
    %2292 = vrot.lane.b32.xlu0 %v787, 96
    %v2293 = vpop.permute.xlu0 %2292
    %2294 = vrot.lane.b32.xlu0 %v788, 96
    %v2295 = vpop.permute.xlu0 %2294
    %2296 = vrot.lane.b32.xlu0 %v789, 96
    %v2297 = vpop.permute.xlu0 %2296
    %2298 = vrot.lane.b32.xlu0 %v790, 96
    %v2299 = vpop.permute.xlu0 %2298
    %2300 = vrot.lane.b32.xlu0 %v791, 96
    %v2301 = vpop.permute.xlu0 %2300
    %2302 = vrot.lane.b32.xlu0 %v792, 96
    %v2303 = vpop.permute.xlu0 %2302
    %2304 = vrot.lane.b32.xlu0 %v793, 96
    %v2305 = vpop.permute.xlu0 %2304
    %2306 = vrot.lane.b32.xlu0 %v794, 96
    %v2307 = vpop.permute.xlu0 %2306
    %2308 = vrot.lane.b32.xlu0 %v795, 96
    %v2309 = vpop.permute.xlu0 %2308
    %2310 = vrot.lane.b32.xlu0 %v796, 96
    %v2311 = vpop.permute.xlu0 %2310
    %2312 = vrot.lane.b32.xlu0 %v797, 96
    %v2313 = vpop.permute.xlu0 %2312
    %2314 = vrot.lane.b32.xlu0 %v798, 96
    %v2315 = vpop.permute.xlu0 %2314
    %2316 = vrot.lane.b32.xlu0 %v799, 96
    %v2317 = vpop.permute.xlu0 %2316
    %2318 = vrot.lane.b32.xlu0 %v800, 96
    %v2319 = vpop.permute.xlu0 %2318
    %2320 = vrot.lane.b32.xlu0 %v801, 96
    %v2321 = vpop.permute.xlu0 %2320
    %2322 = vrot.lane.b32.xlu0 %v802, 96
    %v2323 = vpop.permute.xlu0 %2322
    %2324 = vrot.lane.b32.xlu0 %v803, 96
    %v2325 = vpop.permute.xlu0 %2324
    %2326 = vrot.lane.b32.xlu0 %v804, 96
    %v2327 = vpop.permute.xlu0 %2326
    %2328 = vrot.lane.b32.xlu0 %v805, 96
    %v2329 = vpop.permute.xlu0 %2328
    %2330 = vrot.lane.b32.xlu0 %v806, 96
    %v2331 = vpop.permute.xlu0 %2330
    %2332 = vrot.lane.b32.xlu0 %v807, 96
    %v2333 = vpop.permute.xlu0 %2332
    %2334 = vrot.lane.b32.xlu0 %v808, 96
    %v2335 = vpop.permute.xlu0 %2334
    %2336 = vrot.lane.b32.xlu0 %v809, 96
    %v2337 = vpop.permute.xlu0 %2336
    %2338 = vrot.lane.b32.xlu0 %v810, 96
    %v2339 = vpop.permute.xlu0 %2338
    %2340 = vrot.lane.b32.xlu0 %v811, 96
    %v2341 = vpop.permute.xlu0 %2340
    %2342 = vrot.lane.b32.xlu0 %v812, 96
    %v2343 = vpop.permute.xlu0 %2342
    %2344 = vrot.lane.b32.xlu0 %v813, 96
    %v2345 = vpop.permute.xlu0 %2344
    %2346 = vrot.lane.b32.xlu0 %v814, 96
    %v2347 = vpop.permute.xlu0 %2346
    %2348 = vrot.lane.b32.xlu0 %v815, 96
    %v2349 = vpop.permute.xlu0 %2348
    %2350 = vrot.lane.b32.xlu0 %v816, 96
    %v2351 = vpop.permute.xlu0 %2350
    %2352 = vrot.lane.b32.xlu0 %v817, 96
    %v2353 = vpop.permute.xlu0 %2352
    %v2418 = vsel %vm31, %v305, %v947
    %v2419 = vsel %vm31, %v306, %v949
    %v2420 = vsel %vm31, %v307, %v951
    %v2421 = vsel %vm31, %v308, %v953
    %v2422 = vsel %vm31, %v309, %v955
    %v2423 = vsel %vm31, %v310, %v957
    %v2424 = vsel %vm31, %v311, %v959
    %v2425 = vsel %vm31, %v312, %v961
    %v2426 = vsel %vm31, %v313, %v963
    %v2427 = vsel %vm31, %v314, %v965
    %v2428 = vsel %vm31, %v315, %v967
    %v2429 = vsel %vm31, %v316, %v969
    %v2430 = vsel %vm31, %v317, %v971
    %v2431 = vsel %vm31, %v318, %v973
    %v2432 = vsel %vm31, %v319, %v975
    %v2433 = vsel %vm31, %v320, %v977
    %v2434 = vsel %vm31, %v321, %v979
    %v2435 = vsel %vm31, %v322, %v981
    %v2436 = vsel %vm31, %v323, %v983
    %v2437 = vsel %vm31, %v324, %v985
    %v2438 = vsel %vm31, %v325, %v987
    %v2439 = vsel %vm31, %v326, %v989
    %v2440 = vsel %vm31, %v327, %v991
    %v2441 = vsel %vm31, %v328, %v993
    %v2442 = vsel %vm31, %v329, %v995
    %v2443 = vsel %vm31, %v330, %v997
    %v2444 = vsel %vm31, %v331, %v999
    %v2445 = vsel %vm31, %v332, %v1001
    %v2446 = vsel %vm31, %v333, %v1003
    %v2447 = vsel %vm31, %v334, %v1005
    %v2448 = vsel %vm31, %v335, %v1007
    %v2449 = vsel %vm31, %v336, %v1009
    %v2450 = vsel %vm31, %v337, %v1011
    %v2451 = vsel %vm31, %v338, %v1013
    %v2452 = vsel %vm31, %v339, %v1015
    %v2453 = vsel %vm31, %v340, %v1017
    %v2454 = vsel %vm31, %v341, %v1019
    %v2455 = vsel %vm31, %v342, %v1021
    %v2456 = vsel %vm31, %v343, %v1023
    %v2457 = vsel %vm31, %v344, %v1025
    %v2458 = vsel %vm31, %v345, %v1027
    %v2459 = vsel %vm31, %v346, %v1029
    %v2460 = vsel %vm31, %v347, %v1031
    %v2461 = vsel %vm31, %v348, %v1033
    %v2462 = vsel %vm31, %v349, %v1035
    %v2463 = vsel %vm31, %v350, %v1037
    %v2464 = vsel %vm31, %v351, %v1039
    %v2465 = vsel %vm31, %v352, %v1041
    %v2466 = vsel %vm31, %v353, %v1043
    %v2467 = vsel %vm31, %v354, %v1045
    %v2468 = vsel %vm31, %v355, %v1047
    %v2469 = vsel %vm31, %v356, %v1049
    %v2470 = vsel %vm31, %v357, %v1051
    %v2471 = vsel %vm31, %v358, %v1053
    %v2472 = vsel %vm31, %v359, %v1055
    %v2473 = vsel %vm31, %v360, %v1057
    %v2474 = vsel %vm31, %v361, %v1059
    %v2475 = vsel %vm31, %v362, %v1061
    %v2476 = vsel %vm31, %v363, %v1063
    %v2477 = vsel %vm31, %v364, %v1065
    %v2478 = vsel %vm31, %v365, %v1067
    %v2479 = vsel %vm31, %v366, %v1069
    %v2480 = vsel %vm31, %v367, %v1071
    %v2481 = vsel %vm31, %v368, %v1073
    %vm2482 = vcmask 523264
    %v2483 = vsel %vm2482, %v2418, %v1203
    %v2484 = vsel %vm2482, %v2419, %v1205
    %v2485 = vsel %vm2482, %v2420, %v1207
    %v2486 = vsel %vm2482, %v2421, %v1209
    %v2487 = vsel %vm2482, %v2422, %v1211
    %v2488 = vsel %vm2482, %v2423, %v1213
    %v2489 = vsel %vm2482, %v2424, %v1215
    %v2490 = vsel %vm2482, %v2425, %v1217
    %v2491 = vsel %vm2482, %v2426, %v1219
    %v2492 = vsel %vm2482, %v2427, %v1221
    %v2493 = vsel %vm2482, %v2428, %v1223
    %v2494 = vsel %vm2482, %v2429, %v1225
    %v2495 = vsel %vm2482, %v2430, %v1227
    %v2496 = vsel %vm2482, %v2431, %v1229
    %v2497 = vsel %vm2482, %v2432, %v1231
    %v2498 = vsel %vm2482, %v2433, %v1233
    %v2499 = vsel %vm2482, %v2434, %v1235
    %v2500 = vsel %vm2482, %v2435, %v1237
    %v2501 = vsel %vm2482, %v2436, %v1239
    %v2502 = vsel %vm2482, %v2437, %v1241
    %v2503 = vsel %vm2482, %v2438, %v1243
    %v2504 = vsel %vm2482, %v2439, %v1245
    %v2505 = vsel %vm2482, %v2440, %v1247
    %v2506 = vsel %vm2482, %v2441, %v1249
    %v2507 = vsel %vm2482, %v2442, %v1251
    %v2508 = vsel %vm2482, %v2443, %v1253
    %v2509 = vsel %vm2482, %v2444, %v1255
    %v2510 = vsel %vm2482, %v2445, %v1257
    %v2511 = vsel %vm2482, %v2446, %v1259
    %v2512 = vsel %vm2482, %v2447, %v1261
    %v2513 = vsel %vm2482, %v2448, %v1263
    %v2514 = vsel %vm2482, %v2449, %v1265
    %v2515 = vsel %vm2482, %v2450, %v1267
    %v2516 = vsel %vm2482, %v2451, %v1269
    %v2517 = vsel %vm2482, %v2452, %v1271
    %v2518 = vsel %vm2482, %v2453, %v1273
    %v2519 = vsel %vm2482, %v2454, %v1275
    %v2520 = vsel %vm2482, %v2455, %v1277
    %v2521 = vsel %vm2482, %v2456, %v1279
    %v2522 = vsel %vm2482, %v2457, %v1281
    %v2523 = vsel %vm2482, %v2458, %v1283
    %v2524 = vsel %vm2482, %v2459, %v1285
    %v2525 = vsel %vm2482, %v2460, %v1287
    %v2526 = vsel %vm2482, %v2461, %v1289
    %v2527 = vsel %vm2482, %v2462, %v1291
    %v2528 = vsel %vm2482, %v2463, %v1293
    %v2529 = vsel %vm2482, %v2464, %v1295
    %v2530 = vsel %vm2482, %v2465, %v1297
    %v2531 = vsel %vm2482, %v2466, %v1299
    %v2532 = vsel %vm2482, %v2467, %v1301
    %v2533 = vsel %vm2482, %v2468, %v1303
    %v2534 = vsel %vm2482, %v2469, %v1305
    %v2535 = vsel %vm2482, %v2470, %v1307
    %v2536 = vsel %vm2482, %v2471, %v1309
    %v2537 = vsel %vm2482, %v2472, %v1311
    %v2538 = vsel %vm2482, %v2473, %v1313
    %v2539 = vsel %vm2482, %v2474, %v1315
    %v2540 = vsel %vm2482, %v2475, %v1317
    %v2541 = vsel %vm2482, %v2476, %v1319
    %v2542 = vsel %vm2482, %v2477, %v1321
    %v2543 = vsel %vm2482, %v2478, %v1323
    %v2544 = vsel %vm2482, %v2479, %v1325
    %v2545 = vsel %vm2482, %v2480, %v1327
    %v2546 = vsel %vm2482, %v2481, %v1329
    %vm2547 = vcmask 785408
    %v2548 = vsel %vm2547, %v2483, %v1459
    %v2549 = vsel %vm2547, %v2484, %v1461
    %v2550 = vsel %vm2547, %v2485, %v1463
    %v2551 = vsel %vm2547, %v2486, %v1465
    %v2552 = vsel %vm2547, %v2487, %v1467
    %v2553 = vsel %vm2547, %v2488, %v1469
    %v2554 = vsel %vm2547, %v2489, %v1471
    %v2555 = vsel %vm2547, %v2490, %v1473
    %v2556 = vsel %vm2547, %v2491, %v1475
    %v2557 = vsel %vm2547, %v2492, %v1477
    %v2558 = vsel %vm2547, %v2493, %v1479
    %v2559 = vsel %vm2547, %v2494, %v1481
    %v2560 = vsel %vm2547, %v2495, %v1483
    %v2561 = vsel %vm2547, %v2496, %v1485
    %v2562 = vsel %vm2547, %v2497, %v1487
    %v2563 = vsel %vm2547, %v2498, %v1489
    %v2564 = vsel %vm2547, %v2499, %v1491
    %v2565 = vsel %vm2547, %v2500, %v1493
    %v2566 = vsel %vm2547, %v2501, %v1495
    %v2567 = vsel %vm2547, %v2502, %v1497
    %v2568 = vsel %vm2547, %v2503, %v1499
    %v2569 = vsel %vm2547, %v2504, %v1501
    %v2570 = vsel %vm2547, %v2505, %v1503
    %v2571 = vsel %vm2547, %v2506, %v1505
    %v2572 = vsel %vm2547, %v2507, %v1507
    %v2573 = vsel %vm2547, %v2508, %v1509
    %v2574 = vsel %vm2547, %v2509, %v1511
    %v2575 = vsel %vm2547, %v2510, %v1513
    %v2576 = vsel %vm2547, %v2511, %v1515
    %v2577 = vsel %vm2547, %v2512, %v1517
    %v2578 = vsel %vm2547, %v2513, %v1519
    %v2579 = vsel %vm2547, %v2514, %v1521
    %v2580 = vsel %vm2547, %v2515, %v1523
    %v2581 = vsel %vm2547, %v2516, %v1525
    %v2582 = vsel %vm2547, %v2517, %v1527
    %v2583 = vsel %vm2547, %v2518, %v1529
    %v2584 = vsel %vm2547, %v2519, %v1531
    %v2585 = vsel %vm2547, %v2520, %v1533
    %v2586 = vsel %vm2547, %v2521, %v1535
    %v2587 = vsel %vm2547, %v2522, %v1537
    %v2588 = vsel %vm2547, %v2523, %v1539
    %v2589 = vsel %vm2547, %v2524, %v1541
    %v2590 = vsel %vm2547, %v2525, %v1543
    %v2591 = vsel %vm2547, %v2526, %v1545
    %v2592 = vsel %vm2547, %v2527, %v1547
    %v2593 = vsel %vm2547, %v2528, %v1549
    %v2594 = vsel %vm2547, %v2529, %v1551
    %v2595 = vsel %vm2547, %v2530, %v1553
    %v2596 = vsel %vm2547, %v2531, %v1555
    %v2597 = vsel %vm2547, %v2532, %v1557
    %v2598 = vsel %vm2547, %v2533, %v1559
    %v2599 = vsel %vm2547, %v2534, %v1561
    %v2600 = vsel %vm2547, %v2535, %v1563
    %v2601 = vsel %vm2547, %v2536, %v1565
    %v2602 = vsel %vm2547, %v2537, %v1567
    %v2603 = vsel %vm2547, %v2538, %v1569
    %v2604 = vsel %vm2547, %v2539, %v1571
    %v2605 = vsel %vm2547, %v2540, %v1573
    %v2606 = vsel %vm2547, %v2541, %v1575
    %v2607 = vsel %vm2547, %v2542, %v1577
    %v2608 = vsel %vm2547, %v2543, %v1579
    %v2609 = vsel %vm2547, %v2544, %v1581
    %v2610 = vsel %vm2547, %v2545, %v1583
    %v2611 = vsel %vm2547, %v2546, %v1585
    %v2612 = vsel %vm31, %v561, %v1715
    %v2613 = vsel %vm31, %v562, %v1717
    %v2614 = vsel %vm31, %v563, %v1719
    %v2615 = vsel %vm31, %v564, %v1721
    %v2616 = vsel %vm31, %v565, %v1723
    %v2617 = vsel %vm31, %v566, %v1725
    %v2618 = vsel %vm31, %v567, %v1727
    %v2619 = vsel %vm31, %v568, %v1729
    %v2620 = vsel %vm31, %v569, %v1731
    %v2621 = vsel %vm31, %v570, %v1733
    %v2622 = vsel %vm31, %v571, %v1735
    %v2623 = vsel %vm31, %v572, %v1737
    %v2624 = vsel %vm31, %v573, %v1739
    %v2625 = vsel %vm31, %v574, %v1741
    %v2626 = vsel %vm31, %v575, %v1743
    %v2627 = vsel %vm31, %v576, %v1745
    %v2628 = vsel %vm31, %v577, %v1747
    %v2629 = vsel %vm31, %v578, %v1749
    %v2630 = vsel %vm31, %v579, %v1751
    %v2631 = vsel %vm31, %v580, %v1753
    %v2632 = vsel %vm31, %v581, %v1755
    %v2633 = vsel %vm31, %v582, %v1757
    %v2634 = vsel %vm31, %v583, %v1759
    %v2635 = vsel %vm31, %v584, %v1761
    %v2636 = vsel %vm31, %v585, %v1763
    %v2637 = vsel %vm31, %v586, %v1765
    %v2638 = vsel %vm31, %v587, %v1767
    %v2639 = vsel %vm31, %v588, %v1769
    %v2640 = vsel %vm31, %v589, %v1771
    %v2641 = vsel %vm31, %v590, %v1773
    %v2642 = vsel %vm31, %v591, %v1775
    %v2643 = vsel %vm31, %v592, %v1777
    %v2644 = vsel %vm31, %v593, %v1779
    %v2645 = vsel %vm31, %v594, %v1781
    %v2646 = vsel %vm31, %v595, %v1783
    %v2647 = vsel %vm31, %v596, %v1785
    %v2648 = vsel %vm31, %v597, %v1787
    %v2649 = vsel %vm31, %v598, %v1789
    %v2650 = vsel %vm31, %v599, %v1791
    %v2651 = vsel %vm31, %v600, %v1793
    %v2652 = vsel %vm31, %v601, %v1795
    %v2653 = vsel %vm31, %v602, %v1797
    %v2654 = vsel %vm31, %v603, %v1799
    %v2655 = vsel %vm31, %v604, %v1801
    %v2656 = vsel %vm31, %v605, %v1803
    %v2657 = vsel %vm31, %v606, %v1805
    %v2658 = vsel %vm31, %v607, %v1807
    %v2659 = vsel %vm31, %v608, %v1809
    %v2660 = vsel %vm31, %v609, %v1811
    %v2661 = vsel %vm31, %v610, %v1813
    %v2662 = vsel %vm31, %v611, %v1815
    %v2663 = vsel %vm31, %v612, %v1817
    %v2664 = vsel %vm31, %v613, %v1819
    %v2665 = vsel %vm31, %v614, %v1821
    %v2666 = vsel %vm31, %v615, %v1823
    %v2667 = vsel %vm31, %v616, %v1825
    %v2668 = vsel %vm31, %v617, %v1827
    %v2669 = vsel %vm31, %v618, %v1829
    %v2670 = vsel %vm31, %v619, %v1831
    %v2671 = vsel %vm31, %v620, %v1833
    %v2672 = vsel %vm31, %v621, %v1835
    %v2673 = vsel %vm31, %v622, %v1837
    %v2674 = vsel %vm31, %v623, %v1839
    %v2675 = vsel %vm31, %v624, %v1841
    %v2676 = vsel %vm2482, %v2612, %v1971
    %v2677 = vsel %vm2482, %v2613, %v1973
    %v2678 = vsel %vm2482, %v2614, %v1975
    %v2679 = vsel %vm2482, %v2615, %v1977
    %v2680 = vsel %vm2482, %v2616, %v1979
    %v2681 = vsel %vm2482, %v2617, %v1981
    %v2682 = vsel %vm2482, %v2618, %v1983
    %v2683 = vsel %vm2482, %v2619, %v1985
    %v2684 = vsel %vm2482, %v2620, %v1987
    %v2685 = vsel %vm2482, %v2621, %v1989
    %v2686 = vsel %vm2482, %v2622, %v1991
    %v2687 = vsel %vm2482, %v2623, %v1993
    %v2688 = vsel %vm2482, %v2624, %v1995
    %v2689 = vsel %vm2482, %v2625, %v1997
    %v2690 = vsel %vm2482, %v2626, %v1999
    %v2691 = vsel %vm2482, %v2627, %v2001
    %v2692 = vsel %vm2482, %v2628, %v2003
    %v2693 = vsel %vm2482, %v2629, %v2005
    %v2694 = vsel %vm2482, %v2630, %v2007
    %v2695 = vsel %vm2482, %v2631, %v2009
    %v2696 = vsel %vm2482, %v2632, %v2011
    %v2697 = vsel %vm2482, %v2633, %v2013
    %v2698 = vsel %vm2482, %v2634, %v2015
    %v2699 = vsel %vm2482, %v2635, %v2017
    %v2700 = vsel %vm2482, %v2636, %v2019
    %v2701 = vsel %vm2482, %v2637, %v2021
    %v2702 = vsel %vm2482, %v2638, %v2023
    %v2703 = vsel %vm2482, %v2639, %v2025
    %v2704 = vsel %vm2482, %v2640, %v2027
    %v2705 = vsel %vm2482, %v2641, %v2029
    %v2706 = vsel %vm2482, %v2642, %v2031
    %v2707 = vsel %vm2482, %v2643, %v2033
    %v2708 = vsel %vm2482, %v2644, %v2035
    %v2709 = vsel %vm2482, %v2645, %v2037
    %v2710 = vsel %vm2482, %v2646, %v2039
    %v2711 = vsel %vm2482, %v2647, %v2041
    %v2712 = vsel %vm2482, %v2648, %v2043
    %v2713 = vsel %vm2482, %v2649, %v2045
    %v2714 = vsel %vm2482, %v2650, %v2047
    %v2715 = vsel %vm2482, %v2651, %v2049
    %v2716 = vsel %vm2482, %v2652, %v2051
    %v2717 = vsel %vm2482, %v2653, %v2053
    %v2718 = vsel %vm2482, %v2654, %v2055
    %v2719 = vsel %vm2482, %v2655, %v2057
    %v2720 = vsel %vm2482, %v2656, %v2059
    %v2721 = vsel %vm2482, %v2657, %v2061
    %v2722 = vsel %vm2482, %v2658, %v2063
    %v2723 = vsel %vm2482, %v2659, %v2065
    %v2724 = vsel %vm2482, %v2660, %v2067
    %v2725 = vsel %vm2482, %v2661, %v2069
    %v2726 = vsel %vm2482, %v2662, %v2071
    %v2727 = vsel %vm2482, %v2663, %v2073
    %v2728 = vsel %vm2482, %v2664, %v2075
    %v2729 = vsel %vm2482, %v2665, %v2077
    %v2730 = vsel %vm2482, %v2666, %v2079
    %v2731 = vsel %vm2482, %v2667, %v2081
    %v2732 = vsel %vm2482, %v2668, %v2083
    %v2733 = vsel %vm2482, %v2669, %v2085
    %v2734 = vsel %vm2482, %v2670, %v2087
    %v2735 = vsel %vm2482, %v2671, %v2089
    %v2736 = vsel %vm2482, %v2672, %v2091
    %v2737 = vsel %vm2482, %v2673, %v2093
    %v2738 = vsel %vm2482, %v2674, %v2095
    %v2739 = vsel %vm2482, %v2675, %v2097
    %v2740 = vsel %vm2547, %v2676, %v2227
    %v2741 = vsel %vm2547, %v2677, %v2229
    %v2742 = vsel %vm2547, %v2678, %v2231
    %v2743 = vsel %vm2547, %v2679, %v2233
    %v2744 = vsel %vm2547, %v2680, %v2235
    %v2745 = vsel %vm2547, %v2681, %v2237
    %v2746 = vsel %vm2547, %v2682, %v2239
    %v2747 = vsel %vm2547, %v2683, %v2241
    %v2748 = vsel %vm2547, %v2684, %v2243
    %v2749 = vsel %vm2547, %v2685, %v2245
    %v2750 = vsel %vm2547, %v2686, %v2247
    %v2751 = vsel %vm2547, %v2687, %v2249
    %v2752 = vsel %vm2547, %v2688, %v2251
    %v2753 = vsel %vm2547, %v2689, %v2253
    %v2754 = vsel %vm2547, %v2690, %v2255
    %v2755 = vsel %vm2547, %v2691, %v2257
    %v2756 = vsel %vm2547, %v2692, %v2259
    %v2757 = vsel %vm2547, %v2693, %v2261
    %v2758 = vsel %vm2547, %v2694, %v2263
    %v2759 = vsel %vm2547, %v2695, %v2265
    %v2760 = vsel %vm2547, %v2696, %v2267
    %v2761 = vsel %vm2547, %v2697, %v2269
    %v2762 = vsel %vm2547, %v2698, %v2271
    %v2763 = vsel %vm2547, %v2699, %v2273
    %v2764 = vsel %vm2547, %v2700, %v2275
    %v2765 = vsel %vm2547, %v2701, %v2277
    %v2766 = vsel %vm2547, %v2702, %v2279
    %v2767 = vsel %vm2547, %v2703, %v2281
    %v2768 = vsel %vm2547, %v2704, %v2283
    %v2769 = vsel %vm2547, %v2705, %v2285
    %v2770 = vsel %vm2547, %v2706, %v2287
    %v2771 = vsel %vm2547, %v2707, %v2289
    %v2772 = vsel %vm2547, %v2708, %v2291
    %v2773 = vsel %vm2547, %v2709, %v2293
    %v2774 = vsel %vm2547, %v2710, %v2295
    %v2775 = vsel %vm2547, %v2711, %v2297
    %v2776 = vsel %vm2547, %v2712, %v2299
    %v2777 = vsel %vm2547, %v2713, %v2301
    %v2778 = vsel %vm2547, %v2714, %v2303
    %v2779 = vsel %vm2547, %v2715, %v2305
    %v2780 = vsel %vm2547, %v2716, %v2307
    %v2781 = vsel %vm2547, %v2717, %v2309
    %v2782 = vsel %vm2547, %v2718, %v2311
    %v2783 = vsel %vm2547, %v2719, %v2313
    %v2784 = vsel %vm2547, %v2720, %v2315
    %v2785 = vsel %vm2547, %v2721, %v2317
    %v2786 = vsel %vm2547, %v2722, %v2319
    %v2787 = vsel %vm2547, %v2723, %v2321
    %v2788 = vsel %vm2547, %v2724, %v2323
    %v2789 = vsel %vm2547, %v2725, %v2325
    %v2790 = vsel %vm2547, %v2726, %v2327
    %v2791 = vsel %vm2547, %v2727, %v2329
    %v2792 = vsel %vm2547, %v2728, %v2331
    %v2793 = vsel %vm2547, %v2729, %v2333
    %v2794 = vsel %vm2547, %v2730, %v2335
    %v2795 = vsel %vm2547, %v2731, %v2337
    %v2796 = vsel %vm2547, %v2732, %v2339
    %v2797 = vsel %vm2547, %v2733, %v2341
    %v2798 = vsel %vm2547, %v2734, %v2343
    %v2799 = vsel %vm2547, %v2735, %v2345
    %v2800 = vsel %vm2547, %v2736, %v2347
    %v2801 = vsel %vm2547, %v2737, %v2349
    %v2802 = vsel %vm2547, %v2738, %v2351
    %v2803 = vsel %vm2547, %v2739, %v2353
    %v2804 = vpack.c.bf16 %v2549, %v2548
    %v2805 = vpack.c.bf16 %v2741, %v2740
    %v2806 = vpack.c.bf16 %v819, %v818
    %v2807 = vpack.c.bf16 %v2551, %v2550
    %v2808 = vpack.c.bf16 %v2743, %v2742
    %v2809 = vpack.c.bf16 %v821, %v820
    %v2810 = vpack.c.bf16 %v2553, %v2552
    %v2811 = vpack.c.bf16 %v2745, %v2744
    %v2812 = vpack.c.bf16 %v823, %v822
    %v2813 = vpack.c.bf16 %v2555, %v2554
    %v2814 = vpack.c.bf16 %v2747, %v2746
    %v2815 = vpack.c.bf16 %v825, %v824
    %v2816 = vpack.c.bf16 %v2557, %v2556
    %v2817 = vpack.c.bf16 %v2749, %v2748
    %v2818 = vpack.c.bf16 %v827, %v826
    %v2819 = vpack.c.bf16 %v2559, %v2558
    %v2820 = vpack.c.bf16 %v2751, %v2750
    %v2821 = vpack.c.bf16 %v829, %v828
    %v2822 = vpack.c.bf16 %v2561, %v2560
    %v2823 = vpack.c.bf16 %v2753, %v2752
    %v2824 = vpack.c.bf16 %v831, %v830
    %v2825 = vpack.c.bf16 %v2563, %v2562
    %v2826 = vpack.c.bf16 %v2755, %v2754
    %v2827 = vpack.c.bf16 %v833, %v832
    %v2828 = vpack.c.bf16 %v2565, %v2564
    %v2829 = vpack.c.bf16 %v2757, %v2756
    %v2830 = vpack.c.bf16 %v835, %v834
    %v2831 = vpack.c.bf16 %v2567, %v2566
    %v2832 = vpack.c.bf16 %v2759, %v2758
    %v2833 = vpack.c.bf16 %v837, %v836
    %v2834 = vpack.c.bf16 %v2569, %v2568
    %v2835 = vpack.c.bf16 %v2761, %v2760
    %v2836 = vpack.c.bf16 %v839, %v838
    %v2837 = vpack.c.bf16 %v2571, %v2570
    %v2838 = vpack.c.bf16 %v2763, %v2762
    %v2839 = vpack.c.bf16 %v841, %v840
    %v2840 = vpack.c.bf16 %v2573, %v2572
    %v2841 = vpack.c.bf16 %v2765, %v2764
    %v2842 = vpack.c.bf16 %v843, %v842
    %v2843 = vpack.c.bf16 %v2575, %v2574
    %v2844 = vpack.c.bf16 %v2767, %v2766
    %v2845 = vpack.c.bf16 %v845, %v844
    %v2846 = vpack.c.bf16 %v2577, %v2576
    %v2847 = vpack.c.bf16 %v2769, %v2768
    %v2848 = vpack.c.bf16 %v847, %v846
    %v2849 = vpack.c.bf16 %v2579, %v2578
    %v2850 = vpack.c.bf16 %v2771, %v2770
    %v2851 = vpack.c.bf16 %v849, %v848
    %v2852 = vpack.c.bf16 %v2581, %v2580
    %v2853 = vpack.c.bf16 %v2773, %v2772
    %v2854 = vpack.c.bf16 %v851, %v850
    %v2855 = vpack.c.bf16 %v2583, %v2582
    %v2856 = vpack.c.bf16 %v2775, %v2774
    %v2857 = vpack.c.bf16 %v853, %v852
    %v2858 = vpack.c.bf16 %v2585, %v2584
    %v2859 = vpack.c.bf16 %v2777, %v2776
    %v2860 = vpack.c.bf16 %v855, %v854
    %v2861 = vpack.c.bf16 %v2587, %v2586
    %v2862 = vpack.c.bf16 %v2779, %v2778
    %v2863 = vpack.c.bf16 %v857, %v856
    %v2864 = vpack.c.bf16 %v2589, %v2588
    %v2865 = vpack.c.bf16 %v2781, %v2780
    %v2866 = vpack.c.bf16 %v859, %v858
    %v2867 = vpack.c.bf16 %v2591, %v2590
    %v2868 = vpack.c.bf16 %v2783, %v2782
    %v2869 = vpack.c.bf16 %v861, %v860
    %v2870 = vpack.c.bf16 %v2593, %v2592
    %v2871 = vpack.c.bf16 %v2785, %v2784
    %v2872 = vpack.c.bf16 %v863, %v862
    %v2873 = vpack.c.bf16 %v2595, %v2594
    %v2874 = vpack.c.bf16 %v2787, %v2786
    %v2875 = vpack.c.bf16 %v865, %v864
    %v2876 = vpack.c.bf16 %v2597, %v2596
    %v2877 = vpack.c.bf16 %v2789, %v2788
    %v2878 = vpack.c.bf16 %v867, %v866
    %v2879 = vpack.c.bf16 %v2599, %v2598
    %v2880 = vpack.c.bf16 %v2791, %v2790
    %v2881 = vpack.c.bf16 %v869, %v868
    %v2882 = vpack.c.bf16 %v2601, %v2600
    %v2883 = vpack.c.bf16 %v2793, %v2792
    %v2884 = vpack.c.bf16 %v871, %v870
    %v2885 = vpack.c.bf16 %v2603, %v2602
    %v2886 = vpack.c.bf16 %v2795, %v2794
    %v2887 = vpack.c.bf16 %v873, %v872
    %v2888 = vpack.c.bf16 %v2605, %v2604
    %v2889 = vpack.c.bf16 %v2797, %v2796
    %v2890 = vpack.c.bf16 %v875, %v874
    %v2891 = vpack.c.bf16 %v2607, %v2606
    %v2892 = vpack.c.bf16 %v2799, %v2798
    %v2893 = vpack.c.bf16 %v877, %v876
    %v2894 = vpack.c.bf16 %v2609, %v2608
    %v2895 = vpack.c.bf16 %v2801, %v2800
    %v2896 = vpack.c.bf16 %v879, %v878
    %v2897 = vpack.c.bf16 %v2611, %v2610
    %v2898 = vpack.c.bf16 %v2803, %v2802
    %v2899 = vpack.c.bf16 %v881, %v880
    %v2900 = vld [vmem:[%s1] sm:$0xf]
    %v2901 = vld [vmem:[%s1 + $0x4] sm:$0xf]
    %v2902 = vld [vmem:[%s1 + $0x8] sm:$0xf]
    %v2903 = vld [vmem:[%s1 + $0xc] sm:$0xf]
    %v2904 = vld [vmem:[%s1 + $0x10] sm:$0xf]
    %v2905 = vld [vmem:[%s1 + $0x14] sm:$0xf]
    %v2906 = vld [vmem:[%s1 + $0x18] sm:$0xf]
    %v2907 = vld [vmem:[%s1 + $0x1c] sm:$0xf]
    %v2908 = vld [vmem:[%s1 + $0x20] sm:$0xf]
    %v2909 = vld [vmem:[%s1 + $0x24] sm:$0xf]
    %v2910 = vld [vmem:[%s1 + $0x28] sm:$0xf]
    %v2911 = vld [vmem:[%s1 + $0x2c] sm:$0xf]
    %v2912 = vld [vmem:[%s1 + $0x30] sm:$0xf]
    %v2913 = vld [vmem:[%s1 + $0x34] sm:$0xf]
    %v2914 = vld [vmem:[%s1 + $0x38] sm:$0xf]
    %v2915 = vld [vmem:[%s1 + $0x3c] sm:$0xf]
    %v2916 = vld [vmem:[%s1 + $0x40] sm:$0xf]
    %v2917 = vld [vmem:[%s1 + $0x44] sm:$0xf]
    %v2918 = vld [vmem:[%s1 + $0x48] sm:$0xf]
    %v2919 = vld [vmem:[%s1 + $0x4c] sm:$0xf]
    %v2920 = vld [vmem:[%s1 + $0x50] sm:$0xf]
    %v2921 = vld [vmem:[%s1 + $0x54] sm:$0xf]
    %v2922 = vld [vmem:[%s1 + $0x58] sm:$0xf]
    %v2923 = vld [vmem:[%s1 + $0x5c] sm:$0xf]
    %v2924 = vld [vmem:[%s1 + $0x60] sm:$0xf]
    %v2925 = vld [vmem:[%s1 + $0x64] sm:$0xf]
    %v2926 = vld [vmem:[%s1 + $0x68] sm:$0xf]
    %v2927 = vld [vmem:[%s1 + $0x6c] sm:$0xf]
    %v2928 = vld [vmem:[%s1 + $0x70] sm:$0xf]
    %v2929 = vld [vmem:[%s1 + $0x74] sm:$0xf]
    %v2930 = vld [vmem:[%s1 + $0x78] sm:$0xf]
    %v2931 = vld [vmem:[%s1 + $0x7c] sm:$0xf]
    %v2932 = vld [vmem:[%s1 + $0x80] sm:$0xf]
    %v2933 = vld [vmem:[%s1 + $0x84] sm:$0xf]
    %v2934 = vld [vmem:[%s1 + $0x88] sm:$0xf]
    %v2935 = vld [vmem:[%s1 + $0x8c] sm:$0xf]
    %v2936 = vld [vmem:[%s2] sm:$0x1]
    %v2938 = vperm.slane %v2936, 0
    %v2976 = vunpack.c.l.b16 %v2900
    %v2977 = vunpack.c.l.b16 %v2901
    %v2978 = vunpack.c.l.b16 %v2902
    %v2979 = vunpack.c.l.b16 %v2903
    %v2980 = vunpack.c.l.b16 %v2904
    %v2981 = vunpack.c.l.b16 %v2905
    %v2982 = vunpack.c.l.b16 %v2906
    %v2983 = vunpack.c.l.b16 %v2907
    %v2984 = vunpack.c.l.b16 %v2908
    %v2985 = vunpack.c.l.b16 %v2909
    %v2986 = vunpack.c.l.b16 %v2910
    %v2987 = vunpack.c.l.b16 %v2911
    %v2988 = vunpack.c.l.b16 %v2912
    %v2989 = vunpack.c.l.b16 %v2913
    %v2990 = vunpack.c.l.b16 %v2914
    %v2991 = vunpack.c.l.b16 %v2915
    %v2992 = vunpack.c.l.b16 %v2916
    %v2993 = vunpack.c.l.b16 %v2917
    %v2994 = vunpack.c.l.b16 %v2918
    %v2995 = vunpack.c.l.b16 %v2919
    %v2996 = vunpack.c.l.b16 %v2920
    %v2997 = vunpack.c.l.b16 %v2921
    %v2998 = vunpack.c.l.b16 %v2922
    %v2999 = vunpack.c.l.b16 %v2923
    %v3000 = vunpack.c.l.b16 %v2924
    %v3001 = vunpack.c.l.b16 %v2925
    %v3002 = vunpack.c.l.b16 %v2926
    %v3003 = vunpack.c.l.b16 %v2927
    %v3004 = vunpack.c.l.b16 %v2928
    %v3005 = vunpack.c.l.b16 %v2929
    %v3006 = vunpack.c.l.b16 %v2930
    %v3007 = vunpack.c.l.b16 %v2931
    %v3008 = vunpack.c.l.b16 %v2932
    %v3009 = vunpack.c.l.b16 %v2933
    %v3010 = vunpack.c.l.b16 %v2934
    %v3011 = vunpack.c.l.b16 %v2935
    %v3012 = vpack.c.b16 %v2977, %v2976
    %v3013 = vpack.c.b16 %v2979, %v2978
    %v3014 = vpack.c.b16 %v2981, %v2980
    %v3015 = vpack.c.b16 %v2983, %v2982
    %v3016 = vpack.c.b16 %v2985, %v2984
    %v3017 = vpack.c.b16 %v2987, %v2986
    %v3018 = vpack.c.b16 %v2989, %v2988
    %v3019 = vpack.c.b16 %v2991, %v2990
    %v3020 = vpack.c.b16 %v2993, %v2992
    %v3021 = vpack.c.b16 %v2995, %v2994
    %v3022 = vpack.c.b16 %v2997, %v2996
    %v3023 = vpack.c.b16 %v2999, %v2998
    %v3024 = vpack.c.b16 %v3001, %v3000
    %v3025 = vpack.c.b16 %v3003, %v3002
    %v3026 = vpack.c.b16 %v3005, %v3004
    %v3027 = vpack.c.b16 %v3007, %v3006
    %v3028 = vpack.c.b16 %v3009, %v3008
    %v3029 = vpack.c.b16 %v3011, %v3010
    %v3049 = vsel %vm31, %v2806, 0
    %v3052 = vsel %vm31, %v2809, 0
    %v3055 = vsel %vm31, %v2812, 0
    %v3058 = vsel %vm31, %v2815, 0
    %v3061 = vsel %vm31, %v2818, 0
    %v3064 = vsel %vm31, %v2821, 0
    %v3067 = vsel %vm31, %v2824, 0
    %v3070 = vsel %vm31, %v2827, 0
    %v3073 = vsel %vm31, %v2830, 0
    %v3076 = vsel %vm31, %v2833, 0
    %v3079 = vsel %vm31, %v2836, 0
    %v3082 = vsel %vm31, %v2839, 0
    %v3085 = vsel %vm31, %v2842, 0
    %v3088 = vsel %vm31, %v2845, 0
    %v3091 = vsel %vm31, %v2848, 0
    %v3094 = vsel %vm31, %v2851, 0
    %v3097 = vsel %vm31, %v2854, 0
    %v3100 = vsel %vm31, %v2857, 0
    %v3103 = vsel %vm31, %v2860, 0
    %v3106 = vsel %vm31, %v2863, 0
    %v3109 = vsel %vm31, %v2866, 0
    %v3112 = vsel %vm31, %v2869, 0
    %v3115 = vsel %vm31, %v2872, 0
    %v3118 = vsel %vm31, %v2875, 0
    %v3121 = vsel %vm31, %v2878, 0
    %v3124 = vsel %vm31, %v2881, 0
    %v3127 = vsel %vm31, %v2884, 0
    %v3130 = vsel %vm31, %v2887, 0
    %v3133 = vsel %vm31, %v2890, 0
    %v3136 = vsel %vm31, %v2893, 0
    %v3139 = vsel %vm31, %v2896, 0
    %v3142 = vsel %vm31, %v2899, 0
    %3144 = vmatpush.bf16.msra.mxu0 %v3019
    %3145 = vmatpush.bf16.msra.mxu0 %v3018
    %3146 = vmatpush.bf16.msra.mxu0 %v3017
    %3147 = vmatpush.bf16.msra.mxu0 %v3016
    %3148 = vmatpush.bf16.msra.mxu0 %v3015
    %3149 = vmatpush.bf16.msra.mxu0 %v3014
    %3150 = vmatpush.bf16.msra.mxu0 %v3013
    %3151 = vmatpush.bf16.msra.mxu0 %v3012
    %3152 = vmatmul.bf16.gmra.mxu0 %v2804
    %v3153 = vpop.f32.mrf.mxu0
    %v3154 = vadd.f32 %v2938, %v3153
    %v3155 = vpop.f32.mrf.mxu0
    %v3156 = vadd.f32 %v2938, %v3155
    %3157 = vmatmul.bf16.gmra.mxu0 %v2807
    %v3158 = vpop.f32.mrf.mxu0
    %v3159 = vadd.f32 %v2938, %v3158
    %v3160 = vpop.f32.mrf.mxu0
    %v3161 = vadd.f32 %v2938, %v3160
    %3162 = vmatmul.bf16.gmra.mxu0 %v2810
    %v3163 = vpop.f32.mrf.mxu0
    %v3164 = vadd.f32 %v2938, %v3163
    %v3165 = vpop.f32.mrf.mxu0
    %v3166 = vadd.f32 %v2938, %v3165
    %3167 = vmatmul.bf16.gmra.mxu0 %v2813
    %v3168 = vpop.f32.mrf.mxu0
    %v3169 = vadd.f32 %v2938, %v3168
    %v3170 = vpop.f32.mrf.mxu0
    %v3171 = vadd.f32 %v2938, %v3170
    %3172 = vmatmul.bf16.gmra.mxu0 %v2816
    %v3173 = vpop.f32.mrf.mxu0
    %v3174 = vadd.f32 %v2938, %v3173
    %v3175 = vpop.f32.mrf.mxu0
    %v3176 = vadd.f32 %v2938, %v3175
    %3177 = vmatmul.bf16.gmra.mxu0 %v2819
    %v3178 = vpop.f32.mrf.mxu0
    %v3179 = vadd.f32 %v2938, %v3178
    %v3180 = vpop.f32.mrf.mxu0
    %v3181 = vadd.f32 %v2938, %v3180
    %3182 = vmatmul.bf16.gmra.mxu0 %v2822
    %v3183 = vpop.f32.mrf.mxu0
    %v3184 = vadd.f32 %v2938, %v3183
    %v3185 = vpop.f32.mrf.mxu0
    %v3186 = vadd.f32 %v2938, %v3185
    %3187 = vmatmul.bf16.gmra.mxu0 %v2825
    %v3188 = vpop.f32.mrf.mxu0
    %v3189 = vadd.f32 %v2938, %v3188
    %v3190 = vpop.f32.mrf.mxu0
    %v3191 = vadd.f32 %v2938, %v3190
    %3192 = vmatmul.bf16.gmra.mxu0 %v2828
    %v3193 = vpop.f32.mrf.mxu0
    %v3194 = vadd.f32 %v2938, %v3193
    %v3195 = vpop.f32.mrf.mxu0
    %v3196 = vadd.f32 %v2938, %v3195
    %3197 = vmatmul.bf16.gmra.mxu0 %v2831
    %v3198 = vpop.f32.mrf.mxu0
    %v3199 = vadd.f32 %v2938, %v3198
    %v3200 = vpop.f32.mrf.mxu0
    %v3201 = vadd.f32 %v2938, %v3200
    %3202 = vmatmul.bf16.gmra.mxu0 %v2834
    %v3203 = vpop.f32.mrf.mxu0
    %v3204 = vadd.f32 %v2938, %v3203
    %v3205 = vpop.f32.mrf.mxu0
    %v3206 = vadd.f32 %v2938, %v3205
    %3207 = vmatmul.bf16.gmra.mxu0 %v2837
    %v3208 = vpop.f32.mrf.mxu0
    %v3209 = vadd.f32 %v2938, %v3208
    %v3210 = vpop.f32.mrf.mxu0
    %v3211 = vadd.f32 %v2938, %v3210
    %3212 = vmatmul.bf16.gmra.mxu0 %v2840
    %v3213 = vpop.f32.mrf.mxu0
    %v3214 = vadd.f32 %v2938, %v3213
    %v3215 = vpop.f32.mrf.mxu0
    %v3216 = vadd.f32 %v2938, %v3215
    %3217 = vmatmul.bf16.gmra.mxu0 %v2843
    %v3218 = vpop.f32.mrf.mxu0
    %v3219 = vadd.f32 %v2938, %v3218
    %v3220 = vpop.f32.mrf.mxu0
    %v3221 = vadd.f32 %v2938, %v3220
    %3222 = vmatmul.bf16.gmra.mxu0 %v2846
    %v3223 = vpop.f32.mrf.mxu0
    %v3224 = vadd.f32 %v2938, %v3223
    %v3225 = vpop.f32.mrf.mxu0
    %v3226 = vadd.f32 %v2938, %v3225
    %3227 = vmatmul.bf16.gmra.mxu0 %v2849
    %v3228 = vpop.f32.mrf.mxu0
    %v3229 = vadd.f32 %v2938, %v3228
    %v3230 = vpop.f32.mrf.mxu0
    %v3231 = vadd.f32 %v2938, %v3230
    %3232 = vmatmul.bf16.gmra.mxu0 %v2852
    %v3233 = vpop.f32.mrf.mxu0
    %v3234 = vadd.f32 %v2938, %v3233
    %v3235 = vpop.f32.mrf.mxu0
    %v3236 = vadd.f32 %v2938, %v3235
    %3237 = vmatmul.bf16.gmra.mxu0 %v2855
    %v3238 = vpop.f32.mrf.mxu0
    %v3239 = vadd.f32 %v2938, %v3238
    %v3240 = vpop.f32.mrf.mxu0
    %v3241 = vadd.f32 %v2938, %v3240
    %3242 = vmatmul.bf16.gmra.mxu0 %v2858
    %v3243 = vpop.f32.mrf.mxu0
    %v3244 = vadd.f32 %v2938, %v3243
    %v3245 = vpop.f32.mrf.mxu0
    %v3246 = vadd.f32 %v2938, %v3245
    %3247 = vmatmul.bf16.gmra.mxu0 %v2861
    %v3248 = vpop.f32.mrf.mxu0
    %v3249 = vadd.f32 %v2938, %v3248
    %v3250 = vpop.f32.mrf.mxu0
    %v3251 = vadd.f32 %v2938, %v3250
    %3252 = vmatmul.bf16.gmra.mxu0 %v2864
    %v3253 = vpop.f32.mrf.mxu0
    %v3254 = vadd.f32 %v2938, %v3253
    %v3255 = vpop.f32.mrf.mxu0
    %v3256 = vadd.f32 %v2938, %v3255
    %3257 = vmatmul.bf16.gmra.mxu0 %v2867
    %v3258 = vpop.f32.mrf.mxu0
    %v3259 = vadd.f32 %v2938, %v3258
    %v3260 = vpop.f32.mrf.mxu0
    %v3261 = vadd.f32 %v2938, %v3260
    %3262 = vmatmul.bf16.gmra.mxu0 %v2870
    %v3263 = vpop.f32.mrf.mxu0
    %v3264 = vadd.f32 %v2938, %v3263
    %v3265 = vpop.f32.mrf.mxu0
    %v3266 = vadd.f32 %v2938, %v3265
    %3267 = vmatmul.bf16.gmra.mxu0 %v2873
    %v3268 = vpop.f32.mrf.mxu0
    %v3269 = vadd.f32 %v2938, %v3268
    %v3270 = vpop.f32.mrf.mxu0
    %v3271 = vadd.f32 %v2938, %v3270
    %3272 = vmatmul.bf16.gmra.mxu0 %v2876
    %v3273 = vpop.f32.mrf.mxu0
    %v3274 = vadd.f32 %v2938, %v3273
    %v3275 = vpop.f32.mrf.mxu0
    %v3276 = vadd.f32 %v2938, %v3275
    %3277 = vmatmul.bf16.gmra.mxu0 %v2879
    %v3278 = vpop.f32.mrf.mxu0
    %v3279 = vadd.f32 %v2938, %v3278
    %v3280 = vpop.f32.mrf.mxu0
    %v3281 = vadd.f32 %v2938, %v3280
    %3282 = vmatmul.bf16.gmra.mxu0 %v2882
    %v3283 = vpop.f32.mrf.mxu0
    %v3284 = vadd.f32 %v2938, %v3283
    %v3285 = vpop.f32.mrf.mxu0
    %v3286 = vadd.f32 %v2938, %v3285
    %3287 = vmatmul.bf16.gmra.mxu0 %v2885
    %v3288 = vpop.f32.mrf.mxu0
    %v3289 = vadd.f32 %v2938, %v3288
    %v3290 = vpop.f32.mrf.mxu0
    %v3291 = vadd.f32 %v2938, %v3290
    %3292 = vmatmul.bf16.gmra.mxu0 %v2888
    %v3293 = vpop.f32.mrf.mxu0
    %v3294 = vadd.f32 %v2938, %v3293
    %v3295 = vpop.f32.mrf.mxu0
    %v3296 = vadd.f32 %v2938, %v3295
    %3297 = vmatmul.bf16.gmra.mxu0 %v2891
    %v3298 = vpop.f32.mrf.mxu0
    %v3299 = vadd.f32 %v2938, %v3298
    %v3300 = vpop.f32.mrf.mxu0
    %v3301 = vadd.f32 %v2938, %v3300
    %3302 = vmatmul.bf16.gmra.mxu0 %v2894
    %v3303 = vpop.f32.mrf.mxu0
    %v3304 = vadd.f32 %v2938, %v3303
    %v3305 = vpop.f32.mrf.mxu0
    %v3306 = vadd.f32 %v2938, %v3305
    %3307 = vmatmul.bf16.gmra.mxu0 %v2897
    %v3308 = vpop.f32.mrf.mxu0
    %v3309 = vadd.f32 %v2938, %v3308
    %v3310 = vpop.f32.mrf.mxu0
    %v3311 = vadd.f32 %v2938, %v3310
    %3312 = vdwg.mxu0
    %3313 = vmatpush.bf16.msra.mxu0 %v3027
    %3314 = vmatpush.bf16.msra.mxu0 %v3026
    %3315 = vmatpush.bf16.msra.mxu0 %v3025
    %3316 = vmatpush.bf16.msra.mxu0 %v3024
    %3317 = vmatpush.bf16.msra.mxu0 %v3023
    %3318 = vmatpush.bf16.msra.mxu0 %v3022
    %3319 = vmatpush.bf16.msra.mxu0 %v3021
    %3320 = vmatpush.bf16.msra.mxu0 %v3020
    %3321 = vmatmul.bf16.gmra.mxu0 %v2805
    %v3322 = vpop.f32.mrf.mxu0
    %v3323 = vadd.f32 %v3154, %v3322
    %v3324 = vpop.f32.mrf.mxu0
    %v3325 = vadd.f32 %v3156, %v3324
    %3326 = vmatmul.bf16.gmra.mxu0 %v2808
    %v3327 = vpop.f32.mrf.mxu0
    %v3328 = vadd.f32 %v3159, %v3327
    %v3329 = vpop.f32.mrf.mxu0
    %v3330 = vadd.f32 %v3161, %v3329
    %3331 = vmatmul.bf16.gmra.mxu0 %v2811
    %v3332 = vpop.f32.mrf.mxu0
    %v3333 = vadd.f32 %v3164, %v3332
    %v3334 = vpop.f32.mrf.mxu0
    %v3335 = vadd.f32 %v3166, %v3334
    %3336 = vmatmul.bf16.gmra.mxu0 %v2814
    %v3337 = vpop.f32.mrf.mxu0
    %v3338 = vadd.f32 %v3169, %v3337
    %v3339 = vpop.f32.mrf.mxu0
    %v3340 = vadd.f32 %v3171, %v3339
    %3341 = vmatmul.bf16.gmra.mxu0 %v2817
    %v3342 = vpop.f32.mrf.mxu0
    %v3343 = vadd.f32 %v3174, %v3342
    %v3344 = vpop.f32.mrf.mxu0
    %v3345 = vadd.f32 %v3176, %v3344
    %3346 = vmatmul.bf16.gmra.mxu0 %v2820
    %v3347 = vpop.f32.mrf.mxu0
    %v3348 = vadd.f32 %v3179, %v3347
    %v3349 = vpop.f32.mrf.mxu0
    %v3350 = vadd.f32 %v3181, %v3349
    %3351 = vmatmul.bf16.gmra.mxu0 %v2823
    %v3352 = vpop.f32.mrf.mxu0
    %v3353 = vadd.f32 %v3184, %v3352
    %v3354 = vpop.f32.mrf.mxu0
    %v3355 = vadd.f32 %v3186, %v3354
    %3356 = vmatmul.bf16.gmra.mxu0 %v2826
    %v3357 = vpop.f32.mrf.mxu0
    %v3358 = vadd.f32 %v3189, %v3357
    %v3359 = vpop.f32.mrf.mxu0
    %v3360 = vadd.f32 %v3191, %v3359
    %3361 = vmatmul.bf16.gmra.mxu0 %v2829
    %v3362 = vpop.f32.mrf.mxu0
    %v3363 = vadd.f32 %v3194, %v3362
    %v3364 = vpop.f32.mrf.mxu0
    %v3365 = vadd.f32 %v3196, %v3364
    %3366 = vmatmul.bf16.gmra.mxu0 %v2832
    %v3367 = vpop.f32.mrf.mxu0
    %v3368 = vadd.f32 %v3199, %v3367
    %v3369 = vpop.f32.mrf.mxu0
    %v3370 = vadd.f32 %v3201, %v3369
    %3371 = vmatmul.bf16.gmra.mxu0 %v2835
    %v3372 = vpop.f32.mrf.mxu0
    %v3373 = vadd.f32 %v3204, %v3372
    %v3374 = vpop.f32.mrf.mxu0
    %v3375 = vadd.f32 %v3206, %v3374
    %3376 = vmatmul.bf16.gmra.mxu0 %v2838
    %v3377 = vpop.f32.mrf.mxu0
    %v3378 = vadd.f32 %v3209, %v3377
    %v3379 = vpop.f32.mrf.mxu0
    %v3380 = vadd.f32 %v3211, %v3379
    %3381 = vmatmul.bf16.gmra.mxu0 %v2841
    %v3382 = vpop.f32.mrf.mxu0
    %v3383 = vadd.f32 %v3214, %v3382
    %v3384 = vpop.f32.mrf.mxu0
    %v3385 = vadd.f32 %v3216, %v3384
    %3386 = vmatmul.bf16.gmra.mxu0 %v2844
    %v3387 = vpop.f32.mrf.mxu0
    %v3388 = vadd.f32 %v3219, %v3387
    %v3389 = vpop.f32.mrf.mxu0
    %v3390 = vadd.f32 %v3221, %v3389
    %3391 = vmatmul.bf16.gmra.mxu0 %v2847
    %v3392 = vpop.f32.mrf.mxu0
    %v3393 = vadd.f32 %v3224, %v3392
    %v3394 = vpop.f32.mrf.mxu0
    %v3395 = vadd.f32 %v3226, %v3394
    %3396 = vmatmul.bf16.gmra.mxu0 %v2850
    %v3397 = vpop.f32.mrf.mxu0
    %v3398 = vadd.f32 %v3229, %v3397
    %v3399 = vpop.f32.mrf.mxu0
    %v3400 = vadd.f32 %v3231, %v3399
    %3401 = vmatmul.bf16.gmra.mxu0 %v2853
    %v3402 = vpop.f32.mrf.mxu0
    %v3403 = vadd.f32 %v3234, %v3402
    %v3404 = vpop.f32.mrf.mxu0
    %v3405 = vadd.f32 %v3236, %v3404
    %3406 = vmatmul.bf16.gmra.mxu0 %v2856
    %v3407 = vpop.f32.mrf.mxu0
    %v3408 = vadd.f32 %v3239, %v3407
    %v3409 = vpop.f32.mrf.mxu0
    %v3410 = vadd.f32 %v3241, %v3409
    %3411 = vmatmul.bf16.gmra.mxu0 %v2859
    %v3412 = vpop.f32.mrf.mxu0
    %v3413 = vadd.f32 %v3244, %v3412
    %v3414 = vpop.f32.mrf.mxu0
    %v3415 = vadd.f32 %v3246, %v3414
    %3416 = vmatmul.bf16.gmra.mxu0 %v2862
    %v3417 = vpop.f32.mrf.mxu0
    %v3418 = vadd.f32 %v3249, %v3417
    %v3419 = vpop.f32.mrf.mxu0
    %v3420 = vadd.f32 %v3251, %v3419
    %3421 = vmatmul.bf16.gmra.mxu0 %v2865
    %v3422 = vpop.f32.mrf.mxu0
    %v3423 = vadd.f32 %v3254, %v3422
    %v3424 = vpop.f32.mrf.mxu0
    %v3425 = vadd.f32 %v3256, %v3424
    %3426 = vmatmul.bf16.gmra.mxu0 %v2868
    %v3427 = vpop.f32.mrf.mxu0
    %v3428 = vadd.f32 %v3259, %v3427
    %v3429 = vpop.f32.mrf.mxu0
    %v3430 = vadd.f32 %v3261, %v3429
    %3431 = vmatmul.bf16.gmra.mxu0 %v2871
    %v3432 = vpop.f32.mrf.mxu0
    %v3433 = vadd.f32 %v3264, %v3432
    %v3434 = vpop.f32.mrf.mxu0
    %v3435 = vadd.f32 %v3266, %v3434
    %3436 = vmatmul.bf16.gmra.mxu0 %v2874
    %v3437 = vpop.f32.mrf.mxu0
    %v3438 = vadd.f32 %v3269, %v3437
    %v3439 = vpop.f32.mrf.mxu0
    %v3440 = vadd.f32 %v3271, %v3439
    %3441 = vmatmul.bf16.gmra.mxu0 %v2877
    %v3442 = vpop.f32.mrf.mxu0
    %v3443 = vadd.f32 %v3274, %v3442
    %v3444 = vpop.f32.mrf.mxu0
    %v3445 = vadd.f32 %v3276, %v3444
    %3446 = vmatmul.bf16.gmra.mxu0 %v2880
    %v3447 = vpop.f32.mrf.mxu0
    %v3448 = vadd.f32 %v3279, %v3447
    %v3449 = vpop.f32.mrf.mxu0
    %v3450 = vadd.f32 %v3281, %v3449
    %3451 = vmatmul.bf16.gmra.mxu0 %v2883
    %v3452 = vpop.f32.mrf.mxu0
    %v3453 = vadd.f32 %v3284, %v3452
    %v3454 = vpop.f32.mrf.mxu0
    %v3455 = vadd.f32 %v3286, %v3454
    %3456 = vmatmul.bf16.gmra.mxu0 %v2886
    %v3457 = vpop.f32.mrf.mxu0
    %v3458 = vadd.f32 %v3289, %v3457
    %v3459 = vpop.f32.mrf.mxu0
    %v3460 = vadd.f32 %v3291, %v3459
    %3461 = vmatmul.bf16.gmra.mxu0 %v2889
    %v3462 = vpop.f32.mrf.mxu0
    %v3463 = vadd.f32 %v3294, %v3462
    %v3464 = vpop.f32.mrf.mxu0
    %v3465 = vadd.f32 %v3296, %v3464
    %3466 = vmatmul.bf16.gmra.mxu0 %v2892
    %v3467 = vpop.f32.mrf.mxu0
    %v3468 = vadd.f32 %v3299, %v3467
    %v3469 = vpop.f32.mrf.mxu0
    %v3470 = vadd.f32 %v3301, %v3469
    %3471 = vmatmul.bf16.gmra.mxu0 %v2895
    %v3472 = vpop.f32.mrf.mxu0
    %v3473 = vadd.f32 %v3304, %v3472
    %v3474 = vpop.f32.mrf.mxu0
    %v3475 = vadd.f32 %v3306, %v3474
    %3476 = vmatmul.bf16.gmra.mxu0 %v2898
    %v3477 = vpop.f32.mrf.mxu0
    %v3478 = vadd.f32 %v3309, %v3477
    %v3479 = vpop.f32.mrf.mxu0
    %v3480 = vadd.f32 %v3311, %v3479
    %3481 = vdwg.mxu0
    %3482 = vmatpush.bf16.msra.mxu0 0
    %3483 = vmatpush.bf16.msra.mxu0 0
    %3484 = vmatpush.bf16.msra.mxu0 0
    %3485 = vmatpush.bf16.msra.mxu0 0
    %3486 = vmatpush.bf16.msra.mxu0 0
    %3487 = vmatpush.bf16.msra.mxu0 0
    %3488 = vmatpush.bf16.msra.mxu0 %v3029
    %3489 = vmatpush.bf16.msra.mxu0 %v3028
    %3490 = vmatmul.bf16.gmra.mxu0 %v3049
    %v3491 = vpop.f32.mrf.mxu0
    %v3492 = vadd.f32 %v3323, %v3491
    %v3493 = vpop.f32.mrf.mxu0
    %v3494 = vadd.f32 %v3325, %v3493
    %3495 = vmatmul.bf16.gmra.mxu0 %v3052
    %v3496 = vpop.f32.mrf.mxu0
    %v3497 = vadd.f32 %v3328, %v3496
    %v3498 = vpop.f32.mrf.mxu0
    %v3499 = vadd.f32 %v3330, %v3498
    %3500 = vmatmul.bf16.gmra.mxu0 %v3055
    %v3501 = vpop.f32.mrf.mxu0
    %v3502 = vadd.f32 %v3333, %v3501
    %v3503 = vpop.f32.mrf.mxu0
    %v3504 = vadd.f32 %v3335, %v3503
    %3505 = vmatmul.bf16.gmra.mxu0 %v3058
    %v3506 = vpop.f32.mrf.mxu0
    %v3507 = vadd.f32 %v3338, %v3506
    %v3508 = vpop.f32.mrf.mxu0
    %v3509 = vadd.f32 %v3340, %v3508
    %3510 = vmatmul.bf16.gmra.mxu0 %v3061
    %v3511 = vpop.f32.mrf.mxu0
    %v3512 = vadd.f32 %v3343, %v3511
    %v3513 = vpop.f32.mrf.mxu0
    %v3514 = vadd.f32 %v3345, %v3513
    %3515 = vmatmul.bf16.gmra.mxu0 %v3064
    %v3516 = vpop.f32.mrf.mxu0
    %v3517 = vadd.f32 %v3348, %v3516
    %v3518 = vpop.f32.mrf.mxu0
    %v3519 = vadd.f32 %v3350, %v3518
    %3520 = vmatmul.bf16.gmra.mxu0 %v3067
    %v3521 = vpop.f32.mrf.mxu0
    %v3522 = vadd.f32 %v3353, %v3521
    %v3523 = vpop.f32.mrf.mxu0
    %v3524 = vadd.f32 %v3355, %v3523
    %3525 = vmatmul.bf16.gmra.mxu0 %v3070
    %v3526 = vpop.f32.mrf.mxu0
    %v3527 = vadd.f32 %v3358, %v3526
    %v3528 = vpop.f32.mrf.mxu0
    %v3529 = vadd.f32 %v3360, %v3528
    %3530 = vmatmul.bf16.gmra.mxu0 %v3073
    %v3531 = vpop.f32.mrf.mxu0
    %v3532 = vadd.f32 %v3363, %v3531
    %v3533 = vpop.f32.mrf.mxu0
    %v3534 = vadd.f32 %v3365, %v3533
    %3535 = vmatmul.bf16.gmra.mxu0 %v3076
    %v3536 = vpop.f32.mrf.mxu0
    %v3537 = vadd.f32 %v3368, %v3536
    %v3538 = vpop.f32.mrf.mxu0
    %v3539 = vadd.f32 %v3370, %v3538
    %3540 = vmatmul.bf16.gmra.mxu0 %v3079
    %v3541 = vpop.f32.mrf.mxu0
    %v3542 = vadd.f32 %v3373, %v3541
    %v3543 = vpop.f32.mrf.mxu0
    %v3544 = vadd.f32 %v3375, %v3543
    %3545 = vmatmul.bf16.gmra.mxu0 %v3082
    %v3546 = vpop.f32.mrf.mxu0
    %v3547 = vadd.f32 %v3378, %v3546
    %v3548 = vpop.f32.mrf.mxu0
    %v3549 = vadd.f32 %v3380, %v3548
    %3550 = vmatmul.bf16.gmra.mxu0 %v3085
    %v3551 = vpop.f32.mrf.mxu0
    %v3552 = vadd.f32 %v3383, %v3551
    %v3553 = vpop.f32.mrf.mxu0
    %v3554 = vadd.f32 %v3385, %v3553
    %3555 = vmatmul.bf16.gmra.mxu0 %v3088
    %v3556 = vpop.f32.mrf.mxu0
    %v3557 = vadd.f32 %v3388, %v3556
    %v3558 = vpop.f32.mrf.mxu0
    %v3559 = vadd.f32 %v3390, %v3558
    %3560 = vmatmul.bf16.gmra.mxu0 %v3091
    %v3561 = vpop.f32.mrf.mxu0
    %v3562 = vadd.f32 %v3393, %v3561
    %v3563 = vpop.f32.mrf.mxu0
    %v3564 = vadd.f32 %v3395, %v3563
    %3565 = vmatmul.bf16.gmra.mxu0 %v3094
    %v3566 = vpop.f32.mrf.mxu0
    %v3567 = vadd.f32 %v3398, %v3566
    %v3568 = vpop.f32.mrf.mxu0
    %v3569 = vadd.f32 %v3400, %v3568
    %3570 = vmatmul.bf16.gmra.mxu0 %v3097
    %v3571 = vpop.f32.mrf.mxu0
    %v3572 = vadd.f32 %v3403, %v3571
    %v3573 = vpop.f32.mrf.mxu0
    %v3574 = vadd.f32 %v3405, %v3573
    %3575 = vmatmul.bf16.gmra.mxu0 %v3100
    %v3576 = vpop.f32.mrf.mxu0
    %v3577 = vadd.f32 %v3408, %v3576
    %v3578 = vpop.f32.mrf.mxu0
    %v3579 = vadd.f32 %v3410, %v3578
    %3580 = vmatmul.bf16.gmra.mxu0 %v3103
    %v3581 = vpop.f32.mrf.mxu0
    %v3582 = vadd.f32 %v3413, %v3581
    %v3583 = vpop.f32.mrf.mxu0
    %v3584 = vadd.f32 %v3415, %v3583
    %3585 = vmatmul.bf16.gmra.mxu0 %v3106
    %v3586 = vpop.f32.mrf.mxu0
    %v3587 = vadd.f32 %v3418, %v3586
    %v3588 = vpop.f32.mrf.mxu0
    %v3589 = vadd.f32 %v3420, %v3588
    %3590 = vmatmul.bf16.gmra.mxu0 %v3109
    %v3591 = vpop.f32.mrf.mxu0
    %v3592 = vadd.f32 %v3423, %v3591
    %v3593 = vpop.f32.mrf.mxu0
    %v3594 = vadd.f32 %v3425, %v3593
    %3595 = vmatmul.bf16.gmra.mxu0 %v3112
    %v3596 = vpop.f32.mrf.mxu0
    %v3597 = vadd.f32 %v3428, %v3596
    %v3598 = vpop.f32.mrf.mxu0
    %v3599 = vadd.f32 %v3430, %v3598
    %3600 = vmatmul.bf16.gmra.mxu0 %v3115
    %v3601 = vpop.f32.mrf.mxu0
    %v3602 = vadd.f32 %v3433, %v3601
    %v3603 = vpop.f32.mrf.mxu0
    %v3604 = vadd.f32 %v3435, %v3603
    %3605 = vmatmul.bf16.gmra.mxu0 %v3118
    %v3606 = vpop.f32.mrf.mxu0
    %v3607 = vadd.f32 %v3438, %v3606
    %v3608 = vpop.f32.mrf.mxu0
    %v3609 = vadd.f32 %v3440, %v3608
    %3610 = vmatmul.bf16.gmra.mxu0 %v3121
    %v3611 = vpop.f32.mrf.mxu0
    %v3612 = vadd.f32 %v3443, %v3611
    %v3613 = vpop.f32.mrf.mxu0
    %v3614 = vadd.f32 %v3445, %v3613
    %3615 = vmatmul.bf16.gmra.mxu0 %v3124
    %v3616 = vpop.f32.mrf.mxu0
    %v3617 = vadd.f32 %v3448, %v3616
    %v3618 = vpop.f32.mrf.mxu0
    %v3619 = vadd.f32 %v3450, %v3618
    %3620 = vmatmul.bf16.gmra.mxu0 %v3127
    %v3621 = vpop.f32.mrf.mxu0
    %v3622 = vadd.f32 %v3453, %v3621
    %v3623 = vpop.f32.mrf.mxu0
    %v3624 = vadd.f32 %v3455, %v3623
    %3625 = vmatmul.bf16.gmra.mxu0 %v3130
    %v3626 = vpop.f32.mrf.mxu0
    %v3627 = vadd.f32 %v3458, %v3626
    %v3628 = vpop.f32.mrf.mxu0
    %v3629 = vadd.f32 %v3460, %v3628
    %3630 = vmatmul.bf16.gmra.mxu0 %v3133
    %v3631 = vpop.f32.mrf.mxu0
    %v3632 = vadd.f32 %v3463, %v3631
    %v3633 = vpop.f32.mrf.mxu0
    %v3634 = vadd.f32 %v3465, %v3633
    %3635 = vmatmul.bf16.gmra.mxu0 %v3136
    %v3636 = vpop.f32.mrf.mxu0
    %v3637 = vadd.f32 %v3468, %v3636
    %v3638 = vpop.f32.mrf.mxu0
    %v3639 = vadd.f32 %v3470, %v3638
    %3640 = vmatmul.bf16.gmra.mxu0 %v3139
    %v3641 = vpop.f32.mrf.mxu0
    %v3642 = vadd.f32 %v3473, %v3641
    %v3643 = vpop.f32.mrf.mxu0
    %v3644 = vadd.f32 %v3475, %v3643
    %3645 = vmatmul.bf16.gmra.mxu0 %v3142
    %v3646 = vpop.f32.mrf.mxu0
    %v3647 = vadd.f32 %v3478, %v3646
    %v3648 = vpop.f32.mrf.mxu0
    %v3649 = vadd.f32 %v3480, %v3648
    %3650 = vdwg.mxu0
    %v3651 = vmax.f32 %v3492, 0.0
    %v3652 = vmax.f32 %v3494, 0.0
    %v3653 = vmax.f32 %v3497, 0.0
    %v3654 = vmax.f32 %v3499, 0.0
    %v3655 = vmax.f32 %v3502, 0.0
    %v3656 = vmax.f32 %v3504, 0.0
    %v3657 = vmax.f32 %v3507, 0.0
    %v3658 = vmax.f32 %v3509, 0.0
    %v3659 = vmax.f32 %v3512, 0.0
    %v3660 = vmax.f32 %v3514, 0.0
    %v3661 = vmax.f32 %v3517, 0.0
    %v3662 = vmax.f32 %v3519, 0.0
    %v3663 = vmax.f32 %v3522, 0.0
    %v3664 = vmax.f32 %v3524, 0.0
    %v3665 = vmax.f32 %v3527, 0.0
    %v3666 = vmax.f32 %v3529, 0.0
    %v3667 = vmax.f32 %v3532, 0.0
    %v3668 = vmax.f32 %v3534, 0.0
    %v3669 = vmax.f32 %v3537, 0.0
    %v3670 = vmax.f32 %v3539, 0.0
    %v3671 = vmax.f32 %v3542, 0.0
    %v3672 = vmax.f32 %v3544, 0.0
    %v3673 = vmax.f32 %v3547, 0.0
    %v3674 = vmax.f32 %v3549, 0.0
    %v3675 = vmax.f32 %v3552, 0.0
    %v3676 = vmax.f32 %v3554, 0.0
    %v3677 = vmax.f32 %v3557, 0.0
    %v3678 = vmax.f32 %v3559, 0.0
    %v3679 = vmax.f32 %v3562, 0.0
    %v3680 = vmax.f32 %v3564, 0.0
    %v3681 = vmax.f32 %v3567, 0.0
    %v3682 = vmax.f32 %v3569, 0.0
    %v3683 = vmax.f32 %v3572, 0.0
    %v3684 = vmax.f32 %v3574, 0.0
    %v3685 = vmax.f32 %v3577, 0.0
    %v3686 = vmax.f32 %v3579, 0.0
    %v3687 = vmax.f32 %v3582, 0.0
    %v3688 = vmax.f32 %v3584, 0.0
    %v3689 = vmax.f32 %v3587, 0.0
    %v3690 = vmax.f32 %v3589, 0.0
    %v3691 = vmax.f32 %v3592, 0.0
    %v3692 = vmax.f32 %v3594, 0.0
    %v3693 = vmax.f32 %v3597, 0.0
    %v3694 = vmax.f32 %v3599, 0.0
    %v3695 = vmax.f32 %v3602, 0.0
    %v3696 = vmax.f32 %v3604, 0.0
    %v3697 = vmax.f32 %v3607, 0.0
    %v3698 = vmax.f32 %v3609, 0.0
    %v3699 = vmax.f32 %v3612, 0.0
    %v3700 = vmax.f32 %v3614, 0.0
    %v3701 = vmax.f32 %v3617, 0.0
    %v3702 = vmax.f32 %v3619, 0.0
    %v3703 = vmax.f32 %v3622, 0.0
    %v3704 = vmax.f32 %v3624, 0.0
    %v3705 = vmax.f32 %v3627, 0.0
    %v3706 = vmax.f32 %v3629, 0.0
    %v3707 = vmax.f32 %v3632, 0.0
    %v3708 = vmax.f32 %v3634, 0.0
    %v3709 = vmax.f32 %v3637, 0.0
    %v3710 = vmax.f32 %v3639, 0.0
    %v3711 = vmax.f32 %v3642, 0.0
    %v3712 = vmax.f32 %v3644, 0.0
    %v3713 = vmax.f32 %v3647, 0.0
    %v3714 = vmax.f32 %v3649, 0.0
    %v3715 = vld [vmem:[%s3] sm:$0x1]
    %v3716 = vld [vmem:[%s4] sm:$0x1]
    %v3717 = vsel %vm31, %v3651, 0.0
    %v3718 = vsel %vm31, %v3652, 0.0
    %v3719 = vadd.f32 %v3717, %v3718
    %v3720 = vsel %vm31, %v3653, 0.0
    %v3721 = vadd.f32 %v3719, %v3720
    %v3722 = vsel %vm31, %v3654, 0.0
    %v3723 = vadd.f32 %v3721, %v3722
    %v3724 = vsel %vm31, %v3655, 0.0
    %v3725 = vadd.f32 %v3723, %v3724
    %v3726 = vsel %vm31, %v3656, 0.0
    %v3727 = vadd.f32 %v3725, %v3726
    %v3728 = vsel %vm31, %v3657, 0.0
    %v3729 = vadd.f32 %v3727, %v3728
    %v3730 = vsel %vm31, %v3658, 0.0
    %v3731 = vadd.f32 %v3729, %v3730
    %v3732 = vsel %vm31, %v3659, 0.0
    %v3733 = vadd.f32 %v3731, %v3732
    %v3734 = vsel %vm31, %v3660, 0.0
    %v3735 = vadd.f32 %v3733, %v3734
    %v3736 = vsel %vm31, %v3661, 0.0
    %v3737 = vadd.f32 %v3735, %v3736
    %v3738 = vsel %vm31, %v3662, 0.0
    %v3739 = vadd.f32 %v3737, %v3738
    %v3740 = vsel %vm31, %v3663, 0.0
    %v3741 = vadd.f32 %v3739, %v3740
    %v3742 = vsel %vm31, %v3664, 0.0
    %v3743 = vadd.f32 %v3741, %v3742
    %v3744 = vsel %vm31, %v3665, 0.0
    %v3745 = vadd.f32 %v3743, %v3744
    %v3746 = vsel %vm31, %v3666, 0.0
    %v3747 = vadd.f32 %v3745, %v3746
    %v3748 = vsel %vm31, %v3667, 0.0
    %v3749 = vadd.f32 %v3747, %v3748
    %v3750 = vsel %vm31, %v3668, 0.0
    %v3751 = vadd.f32 %v3749, %v3750
    %v3752 = vsel %vm31, %v3669, 0.0
    %v3753 = vadd.f32 %v3751, %v3752
    %v3754 = vsel %vm31, %v3670, 0.0
    %v3755 = vadd.f32 %v3753, %v3754
    %v3756 = vsel %vm31, %v3671, 0.0
    %v3757 = vadd.f32 %v3755, %v3756
    %v3758 = vsel %vm31, %v3672, 0.0
    %v3759 = vadd.f32 %v3757, %v3758
    %v3760 = vsel %vm31, %v3673, 0.0
    %v3761 = vadd.f32 %v3759, %v3760
    %v3762 = vsel %vm31, %v3674, 0.0
    %v3763 = vadd.f32 %v3761, %v3762
    %v3764 = vsel %vm31, %v3675, 0.0
    %v3765 = vadd.f32 %v3763, %v3764
    %v3766 = vsel %vm31, %v3676, 0.0
    %v3767 = vadd.f32 %v3765, %v3766
    %v3768 = vsel %vm31, %v3677, 0.0
    %v3769 = vadd.f32 %v3767, %v3768
    %v3770 = vsel %vm31, %v3678, 0.0
    %v3771 = vadd.f32 %v3769, %v3770
    %v3772 = vsel %vm31, %v3679, 0.0
    %v3773 = vadd.f32 %v3771, %v3772
    %v3774 = vsel %vm31, %v3680, 0.0
    %v3775 = vadd.f32 %v3773, %v3774
    %v3776 = vsel %vm31, %v3681, 0.0
    %v3777 = vadd.f32 %v3775, %v3776
    %v3778 = vsel %vm31, %v3682, 0.0
    %v3779 = vadd.f32 %v3777, %v3778
    %v3780 = vsel %vm31, %v3683, 0.0
    %v3781 = vadd.f32 %v3779, %v3780
    %v3782 = vsel %vm31, %v3684, 0.0
    %v3783 = vadd.f32 %v3781, %v3782
    %v3784 = vsel %vm31, %v3685, 0.0
    %v3785 = vadd.f32 %v3783, %v3784
    %v3786 = vsel %vm31, %v3686, 0.0
    %v3787 = vadd.f32 %v3785, %v3786
    %v3788 = vsel %vm31, %v3687, 0.0
    %v3789 = vadd.f32 %v3787, %v3788
    %v3790 = vsel %vm31, %v3688, 0.0
    %v3791 = vadd.f32 %v3789, %v3790
    %v3792 = vsel %vm31, %v3689, 0.0
    %v3793 = vadd.f32 %v3791, %v3792
    %v3794 = vsel %vm31, %v3690, 0.0
    %v3795 = vadd.f32 %v3793, %v3794
    %v3796 = vsel %vm31, %v3691, 0.0
    %v3797 = vadd.f32 %v3795, %v3796
    %v3798 = vsel %vm31, %v3692, 0.0
    %v3799 = vadd.f32 %v3797, %v3798
    %v3800 = vsel %vm31, %v3693, 0.0
    %v3801 = vadd.f32 %v3799, %v3800
    %v3802 = vsel %vm31, %v3694, 0.0
    %v3803 = vadd.f32 %v3801, %v3802
    %v3804 = vsel %vm31, %v3695, 0.0
    %v3805 = vadd.f32 %v3803, %v3804
    %v3806 = vsel %vm31, %v3696, 0.0
    %v3807 = vadd.f32 %v3805, %v3806
    %v3808 = vsel %vm31, %v3697, 0.0
    %v3809 = vadd.f32 %v3807, %v3808
    %v3810 = vsel %vm31, %v3698, 0.0
    %v3811 = vadd.f32 %v3809, %v3810
    %v3812 = vsel %vm31, %v3699, 0.0
    %v3813 = vadd.f32 %v3811, %v3812
    %v3814 = vsel %vm31, %v3700, 0.0
    %v3815 = vadd.f32 %v3813, %v3814
    %v3816 = vsel %vm31, %v3701, 0.0
    %v3817 = vadd.f32 %v3815, %v3816
    %v3818 = vsel %vm31, %v3702, 0.0
    %v3819 = vadd.f32 %v3817, %v3818
    %v3820 = vsel %vm31, %v3703, 0.0
    %v3821 = vadd.f32 %v3819, %v3820
    %v3822 = vsel %vm31, %v3704, 0.0
    %v3823 = vadd.f32 %v3821, %v3822
    %v3824 = vsel %vm31, %v3705, 0.0
    %v3825 = vadd.f32 %v3823, %v3824
    %v3826 = vsel %vm31, %v3706, 0.0
    %v3827 = vadd.f32 %v3825, %v3826
    %v3828 = vsel %vm31, %v3707, 0.0
    %v3829 = vadd.f32 %v3827, %v3828
    %v3830 = vsel %vm31, %v3708, 0.0
    %v3831 = vadd.f32 %v3829, %v3830
    %v3832 = vsel %vm31, %v3709, 0.0
    %v3833 = vadd.f32 %v3831, %v3832
    %v3834 = vsel %vm31, %v3710, 0.0
    %v3835 = vadd.f32 %v3833, %v3834
    %v3836 = vsel %vm31, %v3711, 0.0
    %v3837 = vadd.f32 %v3835, %v3836
    %v3838 = vsel %vm31, %v3712, 0.0
    %v3839 = vadd.f32 %v3837, %v3838
    %v3840 = vsel %vm31, %v3713, 0.0
    %v3841 = vadd.f32 %v3839, %v3840
    %v3842 = vsel %vm31, %v3714, 0.0
    %v3843 = vadd.f32 %v3841, %v3842
    %v3844 = vrot.slane %v3843, 4
    %v3845 = vadd.f32 %v3843, %v3844
    %v3846 = vrot.slane %v3845, 2
    %v3847 = vadd.f32 %v3845, %v3846
    %v3848 = vrot.slane %v3847, 1
    %v3849 = vadd.f32 %v3847, %v3848
    %v3850 = vrcp.pop 512.0
    %v3851 = vmul.f32 512.0, %v3850
    %v3852 = vsub.f32 1.0, %v3851
    %v3853 = vmul.f32 %v3850, %v3852
    %v3854 = vadd.f32 %v3850, %v3853
    %vm3855 = vweird.f32 %v3850
    %v3856 = vsel %vm3855, %v3850, %v3854
    %v3857 = vmul.f32 %v3849, %v3856
    %v3858 = vsub.f32 %v3651, %v3857
    %v3859 = vsub.f32 %v3652, %v3857
    %v3860 = vsub.f32 %v3653, %v3857
    %v3861 = vsub.f32 %v3654, %v3857
    %v3862 = vsub.f32 %v3655, %v3857
    %v3863 = vsub.f32 %v3656, %v3857
    %v3864 = vsub.f32 %v3657, %v3857
    %v3865 = vsub.f32 %v3658, %v3857
    %v3866 = vsub.f32 %v3659, %v3857
    %v3867 = vsub.f32 %v3660, %v3857
    %v3868 = vsub.f32 %v3661, %v3857
    %v3869 = vsub.f32 %v3662, %v3857
    %v3870 = vsub.f32 %v3663, %v3857
    %v3871 = vsub.f32 %v3664, %v3857
    %v3872 = vsub.f32 %v3665, %v3857
    %v3873 = vsub.f32 %v3666, %v3857
    %v3874 = vsub.f32 %v3667, %v3857
    %v3875 = vsub.f32 %v3668, %v3857
    %v3876 = vsub.f32 %v3669, %v3857
    %v3877 = vsub.f32 %v3670, %v3857
    %v3878 = vsub.f32 %v3671, %v3857
    %v3879 = vsub.f32 %v3672, %v3857
    %v3880 = vsub.f32 %v3673, %v3857
    %v3881 = vsub.f32 %v3674, %v3857
    %v3882 = vsub.f32 %v3675, %v3857
    %v3883 = vsub.f32 %v3676, %v3857
    %v3884 = vsub.f32 %v3677, %v3857
    %v3885 = vsub.f32 %v3678, %v3857
    %v3886 = vsub.f32 %v3679, %v3857
    %v3887 = vsub.f32 %v3680, %v3857
    %v3888 = vsub.f32 %v3681, %v3857
    %v3889 = vsub.f32 %v3682, %v3857
    %v3890 = vsub.f32 %v3683, %v3857
    %v3891 = vsub.f32 %v3684, %v3857
    %v3892 = vsub.f32 %v3685, %v3857
    %v3893 = vsub.f32 %v3686, %v3857
    %v3894 = vsub.f32 %v3687, %v3857
    %v3895 = vsub.f32 %v3688, %v3857
    %v3896 = vsub.f32 %v3689, %v3857
    %v3897 = vsub.f32 %v3690, %v3857
    %v3898 = vsub.f32 %v3691, %v3857
    %v3899 = vsub.f32 %v3692, %v3857
    %v3900 = vsub.f32 %v3693, %v3857
    %v3901 = vsub.f32 %v3694, %v3857
    %v3902 = vsub.f32 %v3695, %v3857
    %v3903 = vsub.f32 %v3696, %v3857
    %v3904 = vsub.f32 %v3697, %v3857
    %v3905 = vsub.f32 %v3698, %v3857
    %v3906 = vsub.f32 %v3699, %v3857
    %v3907 = vsub.f32 %v3700, %v3857
    %v3908 = vsub.f32 %v3701, %v3857
    %v3909 = vsub.f32 %v3702, %v3857
    %v3910 = vsub.f32 %v3703, %v3857
    %v3911 = vsub.f32 %v3704, %v3857
    %v3912 = vsub.f32 %v3705, %v3857
    %v3913 = vsub.f32 %v3706, %v3857
    %v3914 = vsub.f32 %v3707, %v3857
    %v3915 = vsub.f32 %v3708, %v3857
    %v3916 = vsub.f32 %v3709, %v3857
    %v3917 = vsub.f32 %v3710, %v3857
    %v3918 = vsub.f32 %v3711, %v3857
    %v3919 = vsub.f32 %v3712, %v3857
    %v3920 = vsub.f32 %v3713, %v3857
    %v3921 = vsub.f32 %v3714, %v3857
    %v3922 = vmul.f32 %v3858, %v3858
    %v3923 = vmul.f32 %v3859, %v3859
    %v3924 = vmul.f32 %v3860, %v3860
    %v3925 = vmul.f32 %v3861, %v3861
    %v3926 = vmul.f32 %v3862, %v3862
    %v3927 = vmul.f32 %v3863, %v3863
    %v3928 = vmul.f32 %v3864, %v3864
    %v3929 = vmul.f32 %v3865, %v3865
    %v3930 = vmul.f32 %v3866, %v3866
    %v3931 = vmul.f32 %v3867, %v3867
    %v3932 = vmul.f32 %v3868, %v3868
    %v3933 = vmul.f32 %v3869, %v3869
    %v3934 = vmul.f32 %v3870, %v3870
    %v3935 = vmul.f32 %v3871, %v3871
    %v3936 = vmul.f32 %v3872, %v3872
    %v3937 = vmul.f32 %v3873, %v3873
    %v3938 = vmul.f32 %v3874, %v3874
    %v3939 = vmul.f32 %v3875, %v3875
    %v3940 = vmul.f32 %v3876, %v3876
    %v3941 = vmul.f32 %v3877, %v3877
    %v3942 = vmul.f32 %v3878, %v3878
    %v3943 = vmul.f32 %v3879, %v3879
    %v3944 = vmul.f32 %v3880, %v3880
    %v3945 = vmul.f32 %v3881, %v3881
    %v3946 = vmul.f32 %v3882, %v3882
    %v3947 = vmul.f32 %v3883, %v3883
    %v3948 = vmul.f32 %v3884, %v3884
    %v3949 = vmul.f32 %v3885, %v3885
    %v3950 = vmul.f32 %v3886, %v3886
    %v3951 = vmul.f32 %v3887, %v3887
    %v3952 = vmul.f32 %v3888, %v3888
    %v3953 = vmul.f32 %v3889, %v3889
    %v3954 = vmul.f32 %v3890, %v3890
    %v3955 = vmul.f32 %v3891, %v3891
    %v3956 = vmul.f32 %v3892, %v3892
    %v3957 = vmul.f32 %v3893, %v3893
    %v3958 = vmul.f32 %v3894, %v3894
    %v3959 = vmul.f32 %v3895, %v3895
    %v3960 = vmul.f32 %v3896, %v3896
    %v3961 = vmul.f32 %v3897, %v3897
    %v3962 = vmul.f32 %v3898, %v3898
    %v3963 = vmul.f32 %v3899, %v3899
    %v3964 = vmul.f32 %v3900, %v3900
    %v3965 = vmul.f32 %v3901, %v3901
    %v3966 = vmul.f32 %v3902, %v3902
    %v3967 = vmul.f32 %v3903, %v3903
    %v3968 = vmul.f32 %v3904, %v3904
    %v3969 = vmul.f32 %v3905, %v3905
    %v3970 = vmul.f32 %v3906, %v3906
    %v3971 = vmul.f32 %v3907, %v3907
    %v3972 = vmul.f32 %v3908, %v3908
    %v3973 = vmul.f32 %v3909, %v3909
    %v3974 = vmul.f32 %v3910, %v3910
    %v3975 = vmul.f32 %v3911, %v3911
    %v3976 = vmul.f32 %v3912, %v3912
    %v3977 = vmul.f32 %v3913, %v3913
    %v3978 = vmul.f32 %v3914, %v3914
    %v3979 = vmul.f32 %v3915, %v3915
    %v3980 = vmul.f32 %v3916, %v3916
    %v3981 = vmul.f32 %v3917, %v3917
    %v3982 = vmul.f32 %v3918, %v3918
    %v3983 = vmul.f32 %v3919, %v3919
    %v3984 = vmul.f32 %v3920, %v3920
    %v3985 = vmul.f32 %v3921, %v3921
    %v3986 = vsel %vm31, %v3922, 0.0
    %v3987 = vsel %vm31, %v3923, 0.0
    %v3988 = vadd.f32 %v3986, %v3987
    %v3989 = vsel %vm31, %v3924, 0.0
    %v3990 = vadd.f32 %v3988, %v3989
    %v3991 = vsel %vm31, %v3925, 0.0
    %v3992 = vadd.f32 %v3990, %v3991
    %v3993 = vsel %vm31, %v3926, 0.0
    %v3994 = vadd.f32 %v3992, %v3993
    %v3995 = vsel %vm31, %v3927, 0.0
    %v3996 = vadd.f32 %v3994, %v3995
    %v3997 = vsel %vm31, %v3928, 0.0
    %v3998 = vadd.f32 %v3996, %v3997
    %v3999 = vsel %vm31, %v3929, 0.0
    %v4000 = vadd.f32 %v3998, %v3999
    %v4001 = vsel %vm31, %v3930, 0.0
    %v4002 = vadd.f32 %v4000, %v4001
    %v4003 = vsel %vm31, %v3931, 0.0
    %v4004 = vadd.f32 %v4002, %v4003
    %v4005 = vsel %vm31, %v3932, 0.0
    %v4006 = vadd.f32 %v4004, %v4005
    %v4007 = vsel %vm31, %v3933, 0.0
    %v4008 = vadd.f32 %v4006, %v4007
    %v4009 = vsel %vm31, %v3934, 0.0
    %v4010 = vadd.f32 %v4008, %v4009
    %v4011 = vsel %vm31, %v3935, 0.0
    %v4012 = vadd.f32 %v4010, %v4011
    %v4013 = vsel %vm31, %v3936, 0.0
    %v4014 = vadd.f32 %v4012, %v4013
    %v4015 = vsel %vm31, %v3937, 0.0
    %v4016 = vadd.f32 %v4014, %v4015
    %v4017 = vsel %vm31, %v3938, 0.0
    %v4018 = vadd.f32 %v4016, %v4017
    %v4019 = vsel %vm31, %v3939, 0.0
    %v4020 = vadd.f32 %v4018, %v4019
    %v4021 = vsel %vm31, %v3940, 0.0
    %v4022 = vadd.f32 %v4020, %v4021
    %v4023 = vsel %vm31, %v3941, 0.0
    %v4024 = vadd.f32 %v4022, %v4023
    %v4025 = vsel %vm31, %v3942, 0.0
    %v4026 = vadd.f32 %v4024, %v4025
    %v4027 = vsel %vm31, %v3943, 0.0
    %v4028 = vadd.f32 %v4026, %v4027
    %v4029 = vsel %vm31, %v3944, 0.0
    %v4030 = vadd.f32 %v4028, %v4029
    %v4031 = vsel %vm31, %v3945, 0.0
    %v4032 = vadd.f32 %v4030, %v4031
    %v4033 = vsel %vm31, %v3946, 0.0
    %v4034 = vadd.f32 %v4032, %v4033
    %v4035 = vsel %vm31, %v3947, 0.0
    %v4036 = vadd.f32 %v4034, %v4035
    %v4037 = vsel %vm31, %v3948, 0.0
    %v4038 = vadd.f32 %v4036, %v4037
    %v4039 = vsel %vm31, %v3949, 0.0
    %v4040 = vadd.f32 %v4038, %v4039
    %v4041 = vsel %vm31, %v3950, 0.0
    %v4042 = vadd.f32 %v4040, %v4041
    %v4043 = vsel %vm31, %v3951, 0.0
    %v4044 = vadd.f32 %v4042, %v4043
    %v4045 = vsel %vm31, %v3952, 0.0
    %v4046 = vadd.f32 %v4044, %v4045
    %v4047 = vsel %vm31, %v3953, 0.0
    %v4048 = vadd.f32 %v4046, %v4047
    %v4049 = vsel %vm31, %v3954, 0.0
    %v4050 = vadd.f32 %v4048, %v4049
    %v4051 = vsel %vm31, %v3955, 0.0
    %v4052 = vadd.f32 %v4050, %v4051
    %v4053 = vsel %vm31, %v3956, 0.0
    %v4054 = vadd.f32 %v4052, %v4053
    %v4055 = vsel %vm31, %v3957, 0.0
    %v4056 = vadd.f32 %v4054, %v4055
    %v4057 = vsel %vm31, %v3958, 0.0
    %v4058 = vadd.f32 %v4056, %v4057
    %v4059 = vsel %vm31, %v3959, 0.0
    %v4060 = vadd.f32 %v4058, %v4059
    %v4061 = vsel %vm31, %v3960, 0.0
    %v4062 = vadd.f32 %v4060, %v4061
    %v4063 = vsel %vm31, %v3961, 0.0
    %v4064 = vadd.f32 %v4062, %v4063
    %v4065 = vsel %vm31, %v3962, 0.0
    %v4066 = vadd.f32 %v4064, %v4065
    %v4067 = vsel %vm31, %v3963, 0.0
    %v4068 = vadd.f32 %v4066, %v4067
    %v4069 = vsel %vm31, %v3964, 0.0
    %v4070 = vadd.f32 %v4068, %v4069
    %v4071 = vsel %vm31, %v3965, 0.0
    %v4072 = vadd.f32 %v4070, %v4071
    %v4073 = vsel %vm31, %v3966, 0.0
    %v4074 = vadd.f32 %v4072, %v4073
    %v4075 = vsel %vm31, %v3967, 0.0
    %v4076 = vadd.f32 %v4074, %v4075
    %v4077 = vsel %vm31, %v3968, 0.0
    %v4078 = vadd.f32 %v4076, %v4077
    %v4079 = vsel %vm31, %v3969, 0.0
    %v4080 = vadd.f32 %v4078, %v4079
    %v4081 = vsel %vm31, %v3970, 0.0
    %v4082 = vadd.f32 %v4080, %v4081
    %v4083 = vsel %vm31, %v3971, 0.0
    %v4084 = vadd.f32 %v4082, %v4083
    %v4085 = vsel %vm31, %v3972, 0.0
    %v4086 = vadd.f32 %v4084, %v4085
    %v4087 = vsel %vm31, %v3973, 0.0
    %v4088 = vadd.f32 %v4086, %v4087
    %v4089 = vsel %vm31, %v3974, 0.0
    %v4090 = vadd.f32 %v4088, %v4089
    %v4091 = vsel %vm31, %v3975, 0.0
    %v4092 = vadd.f32 %v4090, %v4091
    %v4093 = vsel %vm31, %v3976, 0.0
    %v4094 = vadd.f32 %v4092, %v4093
    %v4095 = vsel %vm31, %v3977, 0.0
    %v4096 = vadd.f32 %v4094, %v4095
    %v4097 = vsel %vm31, %v3978, 0.0
    %v4098 = vadd.f32 %v4096, %v4097
    %v4099 = vsel %vm31, %v3979, 0.0
    %v4100 = vadd.f32 %v4098, %v4099
    %v4101 = vsel %vm31, %v3980, 0.0
    %v4102 = vadd.f32 %v4100, %v4101
    %v4103 = vsel %vm31, %v3981, 0.0
    %v4104 = vadd.f32 %v4102, %v4103
    %v4105 = vsel %vm31, %v3982, 0.0
    %v4106 = vadd.f32 %v4104, %v4105
    %v4107 = vsel %vm31, %v3983, 0.0
    %v4108 = vadd.f32 %v4106, %v4107
    %v4109 = vsel %vm31, %v3984, 0.0
    %v4110 = vadd.f32 %v4108, %v4109
    %v4111 = vsel %vm31, %v3985, 0.0
    %v4112 = vadd.f32 %v4110, %v4111
    %v4113 = vrot.slane %v4112, 4
    %v4114 = vadd.f32 %v4112, %v4113
    %v4115 = vrot.slane %v4114, 2
    %v4116 = vadd.f32 %v4114, %v4115
    %v4117 = vrot.slane %v4116, 1
    %v4118 = vadd.f32 %v4116, %v4117
    %v4119 = vmul.f32 %v4118, %v3856
    %v4120 = vadd.f32 %v4119, 1e-05
    %v4121 = vrsqrt.pop %v4120
    %v4122 = vmul.f32 %v4121, %v4120
    %v4123 = vmul.f32 %v4122, %v4121
    %v4124 = vmul.f32 0.5, %v4123
    %v4125 = vsub.f32 1.5, %v4124
    %v4126 = vmul.f32 %v4121, %v4125
    %vm4127 = vweird.f32 %v4120
    %vm4128 = vweird.f32 %v4121
    %vm4129 = vmor %vm4127, %vm4128
    %v4130 = vsel %vm4129, %v4121, %v4126
    %v4131 = vmul.f32 %v3858, %v4130
    %v4132 = vmul.f32 %v3859, %v4130
    %v4133 = vmul.f32 %v3860, %v4130
    %v4134 = vmul.f32 %v3861, %v4130
    %v4135 = vmul.f32 %v3862, %v4130
    %v4136 = vmul.f32 %v3863, %v4130
    %v4137 = vmul.f32 %v3864, %v4130
    %v4138 = vmul.f32 %v3865, %v4130
    %v4139 = vmul.f32 %v3866, %v4130
    %v4140 = vmul.f32 %v3867, %v4130
    %v4141 = vmul.f32 %v3868, %v4130
    %v4142 = vmul.f32 %v3869, %v4130
    %v4143 = vmul.f32 %v3870, %v4130
    %v4144 = vmul.f32 %v3871, %v4130
    %v4145 = vmul.f32 %v3872, %v4130
    %v4146 = vmul.f32 %v3873, %v4130
    %v4147 = vmul.f32 %v3874, %v4130
    %v4148 = vmul.f32 %v3875, %v4130
    %v4149 = vmul.f32 %v3876, %v4130
    %v4150 = vmul.f32 %v3877, %v4130
    %v4151 = vmul.f32 %v3878, %v4130
    %v4152 = vmul.f32 %v3879, %v4130
    %v4153 = vmul.f32 %v3880, %v4130
    %v4154 = vmul.f32 %v3881, %v4130
    %v4155 = vmul.f32 %v3882, %v4130
    %v4156 = vmul.f32 %v3883, %v4130
    %v4157 = vmul.f32 %v3884, %v4130
    %v4158 = vmul.f32 %v3885, %v4130
    %v4159 = vmul.f32 %v3886, %v4130
    %v4160 = vmul.f32 %v3887, %v4130
    %v4161 = vmul.f32 %v3888, %v4130
    %v4162 = vmul.f32 %v3889, %v4130
    %v4163 = vmul.f32 %v3890, %v4130
    %v4164 = vmul.f32 %v3891, %v4130
    %v4165 = vmul.f32 %v3892, %v4130
    %v4166 = vmul.f32 %v3893, %v4130
    %v4167 = vmul.f32 %v3894, %v4130
    %v4168 = vmul.f32 %v3895, %v4130
    %v4169 = vmul.f32 %v3896, %v4130
    %v4170 = vmul.f32 %v3897, %v4130
    %v4171 = vmul.f32 %v3898, %v4130
    %v4172 = vmul.f32 %v3899, %v4130
    %v4173 = vmul.f32 %v3900, %v4130
    %v4174 = vmul.f32 %v3901, %v4130
    %v4175 = vmul.f32 %v3902, %v4130
    %v4176 = vmul.f32 %v3903, %v4130
    %v4177 = vmul.f32 %v3904, %v4130
    %v4178 = vmul.f32 %v3905, %v4130
    %v4179 = vmul.f32 %v3906, %v4130
    %v4180 = vmul.f32 %v3907, %v4130
    %v4181 = vmul.f32 %v3908, %v4130
    %v4182 = vmul.f32 %v3909, %v4130
    %v4183 = vmul.f32 %v3910, %v4130
    %v4184 = vmul.f32 %v3911, %v4130
    %v4185 = vmul.f32 %v3912, %v4130
    %v4186 = vmul.f32 %v3913, %v4130
    %v4187 = vmul.f32 %v3914, %v4130
    %v4188 = vmul.f32 %v3915, %v4130
    %v4189 = vmul.f32 %v3916, %v4130
    %v4190 = vmul.f32 %v3917, %v4130
    %v4191 = vmul.f32 %v3918, %v4130
    %v4192 = vmul.f32 %v3919, %v4130
    %v4193 = vmul.f32 %v3920, %v4130
    %v4194 = vmul.f32 %v3921, %v4130
    %v4196 = vperm.slane %v3715, 0
    %v4198 = vmul.f32 %v4131, %v4196
    %v4199 = vmul.f32 %v4132, %v4196
    %v4200 = vmul.f32 %v4133, %v4196
    %v4201 = vmul.f32 %v4134, %v4196
    %v4202 = vmul.f32 %v4135, %v4196
    %v4203 = vmul.f32 %v4136, %v4196
    %v4204 = vmul.f32 %v4137, %v4196
    %v4205 = vmul.f32 %v4138, %v4196
    %v4206 = vmul.f32 %v4139, %v4196
    %v4207 = vmul.f32 %v4140, %v4196
    %v4208 = vmul.f32 %v4141, %v4196
    %v4209 = vmul.f32 %v4142, %v4196
    %v4210 = vmul.f32 %v4143, %v4196
    %v4211 = vmul.f32 %v4144, %v4196
    %v4212 = vmul.f32 %v4145, %v4196
    %v4213 = vmul.f32 %v4146, %v4196
    %v4214 = vmul.f32 %v4147, %v4196
    %v4215 = vmul.f32 %v4148, %v4196
    %v4216 = vmul.f32 %v4149, %v4196
    %v4217 = vmul.f32 %v4150, %v4196
    %v4218 = vmul.f32 %v4151, %v4196
    %v4219 = vmul.f32 %v4152, %v4196
    %v4220 = vmul.f32 %v4153, %v4196
    %v4221 = vmul.f32 %v4154, %v4196
    %v4222 = vmul.f32 %v4155, %v4196
    %v4223 = vmul.f32 %v4156, %v4196
    %v4224 = vmul.f32 %v4157, %v4196
    %v4225 = vmul.f32 %v4158, %v4196
    %v4226 = vmul.f32 %v4159, %v4196
    %v4227 = vmul.f32 %v4160, %v4196
    %v4228 = vmul.f32 %v4161, %v4196
    %v4229 = vmul.f32 %v4162, %v4196
    %v4230 = vmul.f32 %v4163, %v4196
    %v4231 = vmul.f32 %v4164, %v4196
    %v4232 = vmul.f32 %v4165, %v4196
    %v4233 = vmul.f32 %v4166, %v4196
    %v4234 = vmul.f32 %v4167, %v4196
    %v4235 = vmul.f32 %v4168, %v4196
    %v4236 = vmul.f32 %v4169, %v4196
    %v4237 = vmul.f32 %v4170, %v4196
    %v4238 = vmul.f32 %v4171, %v4196
    %v4239 = vmul.f32 %v4172, %v4196
    %v4240 = vmul.f32 %v4173, %v4196
    %v4241 = vmul.f32 %v4174, %v4196
    %v4242 = vmul.f32 %v4175, %v4196
    %v4243 = vmul.f32 %v4176, %v4196
    %v4244 = vmul.f32 %v4177, %v4196
    %v4245 = vmul.f32 %v4178, %v4196
    %v4246 = vmul.f32 %v4179, %v4196
    %v4247 = vmul.f32 %v4180, %v4196
    %v4248 = vmul.f32 %v4181, %v4196
    %v4249 = vmul.f32 %v4182, %v4196
    %v4250 = vmul.f32 %v4183, %v4196
    %v4251 = vmul.f32 %v4184, %v4196
    %v4252 = vmul.f32 %v4185, %v4196
    %v4253 = vmul.f32 %v4186, %v4196
    %v4254 = vmul.f32 %v4187, %v4196
    %v4255 = vmul.f32 %v4188, %v4196
    %v4256 = vmul.f32 %v4189, %v4196
    %v4257 = vmul.f32 %v4190, %v4196
    %v4258 = vmul.f32 %v4191, %v4196
    %v4259 = vmul.f32 %v4192, %v4196
    %v4260 = vmul.f32 %v4193, %v4196
    %v4261 = vmul.f32 %v4194, %v4196
    %v4263 = vperm.slane %v3716, 0
    %v4265 = vadd.f32 %v4198, %v4263
    %v4266 = vadd.f32 %v4199, %v4263
    %v4267 = vadd.f32 %v4200, %v4263
    %v4268 = vadd.f32 %v4201, %v4263
    %v4269 = vadd.f32 %v4202, %v4263
    %v4270 = vadd.f32 %v4203, %v4263
    %v4271 = vadd.f32 %v4204, %v4263
    %v4272 = vadd.f32 %v4205, %v4263
    %v4273 = vadd.f32 %v4206, %v4263
    %v4274 = vadd.f32 %v4207, %v4263
    %v4275 = vadd.f32 %v4208, %v4263
    %v4276 = vadd.f32 %v4209, %v4263
    %v4277 = vadd.f32 %v4210, %v4263
    %v4278 = vadd.f32 %v4211, %v4263
    %v4279 = vadd.f32 %v4212, %v4263
    %v4280 = vadd.f32 %v4213, %v4263
    %v4281 = vadd.f32 %v4214, %v4263
    %v4282 = vadd.f32 %v4215, %v4263
    %v4283 = vadd.f32 %v4216, %v4263
    %v4284 = vadd.f32 %v4217, %v4263
    %v4285 = vadd.f32 %v4218, %v4263
    %v4286 = vadd.f32 %v4219, %v4263
    %v4287 = vadd.f32 %v4220, %v4263
    %v4288 = vadd.f32 %v4221, %v4263
    %v4289 = vadd.f32 %v4222, %v4263
    %v4290 = vadd.f32 %v4223, %v4263
    %v4291 = vadd.f32 %v4224, %v4263
    %v4292 = vadd.f32 %v4225, %v4263
    %v4293 = vadd.f32 %v4226, %v4263
    %v4294 = vadd.f32 %v4227, %v4263
    %v4295 = vadd.f32 %v4228, %v4263
    %v4296 = vadd.f32 %v4229, %v4263
    %v4297 = vadd.f32 %v4230, %v4263
    %v4298 = vadd.f32 %v4231, %v4263
    %v4299 = vadd.f32 %v4232, %v4263
    %v4300 = vadd.f32 %v4233, %v4263
    %v4301 = vadd.f32 %v4234, %v4263
    %v4302 = vadd.f32 %v4235, %v4263
    %v4303 = vadd.f32 %v4236, %v4263
    %v4304 = vadd.f32 %v4237, %v4263
    %v4305 = vadd.f32 %v4238, %v4263
    %v4306 = vadd.f32 %v4239, %v4263
    %v4307 = vadd.f32 %v4240, %v4263
    %v4308 = vadd.f32 %v4241, %v4263
    %v4309 = vadd.f32 %v4242, %v4263
    %v4310 = vadd.f32 %v4243, %v4263
    %v4311 = vadd.f32 %v4244, %v4263
    %v4312 = vadd.f32 %v4245, %v4263
    %v4313 = vadd.f32 %v4246, %v4263
    %v4314 = vadd.f32 %v4247, %v4263
    %v4315 = vadd.f32 %v4248, %v4263
    %v4316 = vadd.f32 %v4249, %v4263
    %v4317 = vadd.f32 %v4250, %v4263
    %v4318 = vadd.f32 %v4251, %v4263
    %v4319 = vadd.f32 %v4252, %v4263
    %v4320 = vadd.f32 %v4253, %v4263
    %v4321 = vadd.f32 %v4254, %v4263
    %v4322 = vadd.f32 %v4255, %v4263
    %v4323 = vadd.f32 %v4256, %v4263
    %v4324 = vadd.f32 %v4257, %v4263
    %v4325 = vadd.f32 %v4258, %v4263
    %v4326 = vadd.f32 %v4259, %v4263
    %v4327 = vadd.f32 %v4260, %v4263
    %v4328 = vadd.f32 %v4261, %v4263
    %4329 = vst.msk [vmem:[%s240 + $0x8] sm:$0xff] %vm31, %v4265
    %4330 = vst.msk [vmem:[%s240 + $0x10] sm:$0xff] %vm31, %v4266
    %4331 = vst.msk [vmem:[%s240 + $0x28] sm:$0xff] %vm31, %v4267
    %4332 = vst.msk [vmem:[%s240 + $0x30] sm:$0xff] %vm31, %v4268
    %4333 = vst.msk [vmem:[%s240 + $0x48] sm:$0xff] %vm31, %v4269
    %4334 = vst.msk [vmem:[%s240 + $0x50] sm:$0xff] %vm31, %v4270
    %4335 = vst.msk [vmem:[%s240 + $0x68] sm:$0xff] %vm31, %v4271
    %4336 = vst.msk [vmem:[%s240 + $0x70] sm:$0xff] %vm31, %v4272
    %4337 = vst.msk [vmem:[%s240 + $0x88] sm:$0xff] %vm31, %v4273
    %4338 = vst.msk [vmem:[%s240 + $0x90] sm:$0xff] %vm31, %v4274
    %4339 = vst.msk [vmem:[%s240 + $0xa8] sm:$0xff] %vm31, %v4275
    %4340 = vst.msk [vmem:[%s240 + $0xb0] sm:$0xff] %vm31, %v4276
    %4341 = vst.msk [vmem:[%s240 + $0xc8] sm:$0xff] %vm31, %v4277
    %4342 = vst.msk [vmem:[%s240 + $0xd0] sm:$0xff] %vm31, %v4278
    %4343 = vst.msk [vmem:[%s240 + $0xe8] sm:$0xff] %vm31, %v4279
    %4344 = vst.msk [vmem:[%s240 + $0xf0] sm:$0xff] %vm31, %v4280
    %4345 = vst.msk [vmem:[%s240 + $0x108] sm:$0xff] %vm31, %v4281
    %4346 = vst.msk [vmem:[%s240 + $0x110] sm:$0xff] %vm31, %v4282
    %4347 = vst.msk [vmem:[%s240 + $0x128] sm:$0xff] %vm31, %v4283
    %4348 = vst.msk [vmem:[%s240 + $0x130] sm:$0xff] %vm31, %v4284
    %4349 = vst.msk [vmem:[%s240 + $0x148] sm:$0xff] %vm31, %v4285
    %4350 = vst.msk [vmem:[%s240 + $0x150] sm:$0xff] %vm31, %v4286
    %4351 = vst.msk [vmem:[%s240 + $0x168] sm:$0xff] %vm31, %v4287
    %4352 = vst.msk [vmem:[%s240 + $0x170] sm:$0xff] %vm31, %v4288
    %4353 = vst.msk [vmem:[%s240 + $0x188] sm:$0xff] %vm31, %v4289
    %4354 = vst.msk [vmem:[%s240 + $0x190] sm:$0xff] %vm31, %v4290
    %4355 = vst.msk [vmem:[%s240 + $0x1a8] sm:$0xff] %vm31, %v4291
    %4356 = vst.msk [vmem:[%s240 + $0x1b0] sm:$0xff] %vm31, %v4292
    %4357 = vst.msk [vmem:[%s240 + $0x1c8] sm:$0xff] %vm31, %v4293
    %4358 = vst.msk [vmem:[%s240 + $0x1d0] sm:$0xff] %vm31, %v4294
    %4359 = vst.msk [vmem:[%s240 + $0x1e8] sm:$0xff] %vm31, %v4295
    %4360 = vst.msk [vmem:[%s240 + $0x1f0] sm:$0xff] %vm31, %v4296
    %4361 = vst.msk [vmem:[%s240 + $0x248] sm:$0xff] %vm31, %v4297
    %4362 = vst.msk [vmem:[%s240 + $0x250] sm:$0xff] %vm31, %v4298
    %4363 = vst.msk [vmem:[%s240 + $0x268] sm:$0xff] %vm31, %v4299
    %4364 = vst.msk [vmem:[%s240 + $0x270] sm:$0xff] %vm31, %v4300
    %4365 = vst.msk [vmem:[%s240 + $0x288] sm:$0xff] %vm31, %v4301
    %4366 = vst.msk [vmem:[%s240 + $0x290] sm:$0xff] %vm31, %v4302
    %4367 = vst.msk [vmem:[%s240 + $0x2a8] sm:$0xff] %vm31, %v4303
    %4368 = vst.msk [vmem:[%s240 + $0x2b0] sm:$0xff] %vm31, %v4304
    %4369 = vst.msk [vmem:[%s240 + $0x2c8] sm:$0xff] %vm31, %v4305
    %4370 = vst.msk [vmem:[%s240 + $0x2d0] sm:$0xff] %vm31, %v4306
    %4371 = vst.msk [vmem:[%s240 + $0x2e8] sm:$0xff] %vm31, %v4307
    %4372 = vst.msk [vmem:[%s240 + $0x2f0] sm:$0xff] %vm31, %v4308
    %4373 = vst.msk [vmem:[%s240 + $0x308] sm:$0xff] %vm31, %v4309
    %4374 = vst.msk [vmem:[%s240 + $0x310] sm:$0xff] %vm31, %v4310
    %4375 = vst.msk [vmem:[%s240 + $0x328] sm:$0xff] %vm31, %v4311
    %4376 = vst.msk [vmem:[%s240 + $0x330] sm:$0xff] %vm31, %v4312
    %4377 = vst.msk [vmem:[%s240 + $0x348] sm:$0xff] %vm31, %v4313
    %4378 = vst.msk [vmem:[%s240 + $0x350] sm:$0xff] %vm31, %v4314
    %4379 = vst.msk [vmem:[%s240 + $0x368] sm:$0xff] %vm31, %v4315
    %4380 = vst.msk [vmem:[%s240 + $0x370] sm:$0xff] %vm31, %v4316
    %4381 = vst.msk [vmem:[%s240 + $0x388] sm:$0xff] %vm31, %v4317
    %4382 = vst.msk [vmem:[%s240 + $0x390] sm:$0xff] %vm31, %v4318
    %4383 = vst.msk [vmem:[%s240 + $0x3a8] sm:$0xff] %vm31, %v4319
    %4384 = vst.msk [vmem:[%s240 + $0x3b0] sm:$0xff] %vm31, %v4320
    %4385 = vst.msk [vmem:[%s240 + $0x3c8] sm:$0xff] %vm31, %v4321
    %4386 = vst.msk [vmem:[%s240 + $0x3d0] sm:$0xff] %vm31, %v4322
    %4387 = vst.msk [vmem:[%s240 + $0x3e8] sm:$0xff] %vm31, %v4323
    %4388 = vst.msk [vmem:[%s240 + $0x3f0] sm:$0xff] %vm31, %v4324
    %4389 = vst.msk [vmem:[%s240 + $0x408] sm:$0xff] %vm31, %v4325
    %4390 = vst.msk [vmem:[%s240 + $0x410] sm:$0xff] %vm31, %v4326
    %4391 = vst.msk [vmem:[%s240 + $0x428] sm:$0xff] %vm31, %v4327
    %4392 = vst.msk [vmem:[%s240 + $0x430] sm:$0xff] %vm31, %v4328
    %v4393 = vld [vmem:[#allocation2 + $0x7] sm:$0xff]
    %v4394 = vld [vmem:[#allocation2 + $0xf] sm:$0xff]
    %v4395 = vld [vmem:[#allocation2 + $0x27] sm:$0xff]
    %v4396 = vld [vmem:[#allocation2 + $0x2f] sm:$0xff]
    %v4397 = vld [vmem:[#allocation2 + $0x47] sm:$0xff]
    %v4398 = vld [vmem:[#allocation2 + $0x4f] sm:$0xff]
    %v4399 = vld [vmem:[#allocation2 + $0x67] sm:$0xff]
    %v4400 = vld [vmem:[#allocation2 + $0x6f] sm:$0xff]
    %v4401 = vld [vmem:[#allocation2 + $0x87] sm:$0xff]
    %v4402 = vld [vmem:[#allocation2 + $0x8f] sm:$0xff]
    %v4403 = vld [vmem:[#allocation2 + $0xa7] sm:$0xff]
    %v4404 = vld [vmem:[#allocation2 + $0xaf] sm:$0xff]
    %v4405 = vld [vmem:[#allocation2 + $0xc7] sm:$0xff]
    %v4406 = vld [vmem:[#allocation2 + $0xcf] sm:$0xff]
    %v4407 = vld [vmem:[#allocation2 + $0xe7] sm:$0xff]
    %v4408 = vld [vmem:[#allocation2 + $0xef] sm:$0xff]
    %v4409 = vld [vmem:[#allocation2 + $0x107] sm:$0xff]
    %v4410 = vld [vmem:[#allocation2 + $0x10f] sm:$0xff]
    %v4411 = vld [vmem:[#allocation2 + $0x127] sm:$0xff]
    %v4412 = vld [vmem:[#allocation2 + $0x12f] sm:$0xff]
    %v4413 = vld [vmem:[#allocation2 + $0x147] sm:$0xff]
    %v4414 = vld [vmem:[#allocation2 + $0x14f] sm:$0xff]
    %v4415 = vld [vmem:[#allocation2 + $0x167] sm:$0xff]
    %v4416 = vld [vmem:[#allocation2 + $0x16f] sm:$0xff]
    %v4417 = vld [vmem:[#allocation2 + $0x187] sm:$0xff]
    %v4418 = vld [vmem:[#allocation2 + $0x18f] sm:$0xff]
    %v4419 = vld [vmem:[#allocation2 + $0x1a7] sm:$0xff]
    %v4420 = vld [vmem:[#allocation2 + $0x1af] sm:$0xff]
    %v4421 = vld [vmem:[#allocation2 + $0x1c7] sm:$0xff]
    %v4422 = vld [vmem:[#allocation2 + $0x1cf] sm:$0xff]
    %v4423 = vld [vmem:[#allocation2 + $0x1e7] sm:$0xff]
    %v4424 = vld [vmem:[#allocation2 + $0x1ef] sm:$0xff]
    %v4425 = vld [vmem:[#allocation2 + $0x247] sm:$0xff]
    %v4426 = vld [vmem:[#allocation2 + $0x24f] sm:$0xff]
    %v4427 = vld [vmem:[#allocation2 + $0x267] sm:$0xff]
    %v4428 = vld [vmem:[#allocation2 + $0x26f] sm:$0xff]
    %v4429 = vld [vmem:[#allocation2 + $0x287] sm:$0xff]
    %v4430 = vld [vmem:[#allocation2 + $0x28f] sm:$0xff]
    %v4431 = vld [vmem:[#allocation2 + $0x2a7] sm:$0xff]
    %v4432 = vld [vmem:[#allocation2 + $0x2af] sm:$0xff]
    %v4433 = vld [vmem:[#allocation2 + $0x2c7] sm:$0xff]
    %v4434 = vld [vmem:[#allocation2 + $0x2cf] sm:$0xff]
    %v4435 = vld [vmem:[#allocation2 + $0x2e7] sm:$0xff]
    %v4436 = vld [vmem:[#allocation2 + $0x2ef] sm:$0xff]
    %v4437 = vld [vmem:[#allocation2 + $0x307] sm:$0xff]
    %v4438 = vld [vmem:[#allocation2 + $0x30f] sm:$0xff]
    %v4439 = vld [vmem:[#allocation2 + $0x327] sm:$0xff]
    %v4440 = vld [vmem:[#allocation2 + $0x32f] sm:$0xff]
    %v4441 = vld [vmem:[#allocation2 + $0x347] sm:$0xff]
    %v4442 = vld [vmem:[#allocation2 + $0x34f] sm:$0xff]
    %v4443 = vld [vmem:[#allocation2 + $0x367] sm:$0xff]
    %v4444 = vld [vmem:[#allocation2 + $0x36f] sm:$0xff]
    %v4445 = vld [vmem:[#allocation2 + $0x387] sm:$0xff]
    %v4446 = vld [vmem:[#allocation2 + $0x38f] sm:$0xff]
    %v4447 = vld [vmem:[#allocation2 + $0x3a7] sm:$0xff]
    %v4448 = vld [vmem:[#allocation2 + $0x3af] sm:$0xff]
    %v4449 = vld [vmem:[#allocation2 + $0x3c7] sm:$0xff]
    %v4450 = vld [vmem:[#allocation2 + $0x3cf] sm:$0xff]
    %v4451 = vld [vmem:[#allocation2 + $0x3e7] sm:$0xff]
    %v4452 = vld [vmem:[#allocation2 + $0x3ef] sm:$0xff]
    %v4453 = vld [vmem:[#allocation2 + $0x407] sm:$0xff]
    %v4454 = vld [vmem:[#allocation2 + $0x40f] sm:$0xff]
    %v4455 = vld [vmem:[#allocation2 + $0x427] sm:$0xff]
    %v4456 = vld [vmem:[#allocation2 + $0x42f] sm:$0xff]
    %v4457 = vld [vmem:[#allocation2 + $0x8] sm:$0xff]
    %v4458 = vld [vmem:[#allocation2 + $0x10] sm:$0xff]
    %v4459 = vld [vmem:[#allocation2 + $0x28] sm:$0xff]
    %v4460 = vld [vmem:[#allocation2 + $0x30] sm:$0xff]
    %v4461 = vld [vmem:[#allocation2 + $0x48] sm:$0xff]
    %v4462 = vld [vmem:[#allocation2 + $0x50] sm:$0xff]
    %v4463 = vld [vmem:[#allocation2 + $0x68] sm:$0xff]
    %v4464 = vld [vmem:[#allocation2 + $0x70] sm:$0xff]
    %v4465 = vld [vmem:[#allocation2 + $0x88] sm:$0xff]
    %v4466 = vld [vmem:[#allocation2 + $0x90] sm:$0xff]
    %v4467 = vld [vmem:[#allocation2 + $0xa8] sm:$0xff]
    %v4468 = vld [vmem:[#allocation2 + $0xb0] sm:$0xff]
    %v4469 = vld [vmem:[#allocation2 + $0xc8] sm:$0xff]
    %v4470 = vld [vmem:[#allocation2 + $0xd0] sm:$0xff]
    %v4471 = vld [vmem:[#allocation2 + $0xe8] sm:$0xff]
    %v4472 = vld [vmem:[#allocation2 + $0xf0] sm:$0xff]
    %v4473 = vld [vmem:[#allocation2 + $0x108] sm:$0xff]
    %v4474 = vld [vmem:[#allocation2 + $0x110] sm:$0xff]
    %v4475 = vld [vmem:[#allocation2 + $0x128] sm:$0xff]
    %v4476 = vld [vmem:[#allocation2 + $0x130] sm:$0xff]
    %v4477 = vld [vmem:[#allocation2 + $0x148] sm:$0xff]
    %v4478 = vld [vmem:[#allocation2 + $0x150] sm:$0xff]
    %v4479 = vld [vmem:[#allocation2 + $0x168] sm:$0xff]
    %v4480 = vld [vmem:[#allocation2 + $0x170] sm:$0xff]
    %v4481 = vld [vmem:[#allocation2 + $0x188] sm:$0xff]
    %v4482 = vld [vmem:[#allocation2 + $0x190] sm:$0xff]
    %v4483 = vld [vmem:[#allocation2 + $0x1a8] sm:$0xff]
    %v4484 = vld [vmem:[#allocation2 + $0x1b0] sm:$0xff]
    %v4485 = vld [vmem:[#allocation2 + $0x1c8] sm:$0xff]
    %v4486 = vld [vmem:[#allocation2 + $0x1d0] sm:$0xff]
    %v4487 = vld [vmem:[#allocation2 + $0x1e8] sm:$0xff]
    %v4488 = vld [vmem:[#allocation2 + $0x1f0] sm:$0xff]
    %v4489 = vld [vmem:[#allocation2 + $0x248] sm:$0xff]
    %v4490 = vld [vmem:[#allocation2 + $0x250] sm:$0xff]
    %v4491 = vld [vmem:[#allocation2 + $0x268] sm:$0xff]
    %v4492 = vld [vmem:[#allocation2 + $0x270] sm:$0xff]
    %v4493 = vld [vmem:[#allocation2 + $0x288] sm:$0xff]
    %v4494 = vld [vmem:[#allocation2 + $0x290] sm:$0xff]
    %v4495 = vld [vmem:[#allocation2 + $0x2a8] sm:$0xff]
    %v4496 = vld [vmem:[#allocation2 + $0x2b0] sm:$0xff]
    %v4497 = vld [vmem:[#allocation2 + $0x2c8] sm:$0xff]
    %v4498 = vld [vmem:[#allocation2 + $0x2d0] sm:$0xff]
    %v4499 = vld [vmem:[#allocation2 + $0x2e8] sm:$0xff]
    %v4500 = vld [vmem:[#allocation2 + $0x2f0] sm:$0xff]
    %v4501 = vld [vmem:[#allocation2 + $0x308] sm:$0xff]
    %v4502 = vld [vmem:[#allocation2 + $0x310] sm:$0xff]
    %v4503 = vld [vmem:[#allocation2 + $0x328] sm:$0xff]
    %v4504 = vld [vmem:[#allocation2 + $0x330] sm:$0xff]
    %v4505 = vld [vmem:[#allocation2 + $0x348] sm:$0xff]
    %v4506 = vld [vmem:[#allocation2 + $0x350] sm:$0xff]
    %v4507 = vld [vmem:[#allocation2 + $0x368] sm:$0xff]
    %v4508 = vld [vmem:[#allocation2 + $0x370] sm:$0xff]
    %v4509 = vld [vmem:[#allocation2 + $0x388] sm:$0xff]
    %v4510 = vld [vmem:[#allocation2 + $0x390] sm:$0xff]
    %v4511 = vld [vmem:[#allocation2 + $0x3a8] sm:$0xff]
    %v4512 = vld [vmem:[#allocation2 + $0x3b0] sm:$0xff]
    %v4513 = vld [vmem:[#allocation2 + $0x3c8] sm:$0xff]
    %v4514 = vld [vmem:[#allocation2 + $0x3d0] sm:$0xff]
    %v4515 = vld [vmem:[#allocation2 + $0x3e8] sm:$0xff]
    %v4516 = vld [vmem:[#allocation2 + $0x3f0] sm:$0xff]
    %v4517 = vld [vmem:[#allocation2 + $0x408] sm:$0xff]
    %v4518 = vld [vmem:[#allocation2 + $0x410] sm:$0xff]
    %v4519 = vld [vmem:[#allocation2 + $0x428] sm:$0xff]
    %v4520 = vld [vmem:[#allocation2 + $0x430] sm:$0xff]
    %v4521 = vld [vmem:[#allocation2 + $0x9] sm:$0xff]
    %v4522 = vld [vmem:[#allocation2 + $0x11] sm:$0xff]
    %v4523 = vld [vmem:[#allocation2 + $0x29] sm:$0xff]
    %v4524 = vld [vmem:[#allocation2 + $0x31] sm:$0xff]
    %v4525 = vld [vmem:[#allocation2 + $0x49] sm:$0xff]
    %v4526 = vld [vmem:[#allocation2 + $0x51] sm:$0xff]
    %v4527 = vld [vmem:[#allocation2 + $0x69] sm:$0xff]
    %v4528 = vld [vmem:[#allocation2 + $0x71] sm:$0xff]
    %v4529 = vld [vmem:[#allocation2 + $0x89] sm:$0xff]
    %v4530 = vld [vmem:[#allocation2 + $0x91] sm:$0xff]
    %v4531 = vld [vmem:[#allocation2 + $0xa9] sm:$0xff]
    %v4532 = vld [vmem:[#allocation2 + $0xb1] sm:$0xff]
    %v4533 = vld [vmem:[#allocation2 + $0xc9] sm:$0xff]
    %v4534 = vld [vmem:[#allocation2 + $0xd1] sm:$0xff]
    %v4535 = vld [vmem:[#allocation2 + $0xe9] sm:$0xff]
    %v4536 = vld [vmem:[#allocation2 + $0xf1] sm:$0xff]
    %v4537 = vld [vmem:[#allocation2 + $0x109] sm:$0xff]
    %v4538 = vld [vmem:[#allocation2 + $0x111] sm:$0xff]
    %v4539 = vld [vmem:[#allocation2 + $0x129] sm:$0xff]
    %v4540 = vld [vmem:[#allocation2 + $0x131] sm:$0xff]
    %v4541 = vld [vmem:[#allocation2 + $0x149] sm:$0xff]
    %v4542 = vld [vmem:[#allocation2 + $0x151] sm:$0xff]
    %v4543 = vld [vmem:[#allocation2 + $0x169] sm:$0xff]
    %v4544 = vld [vmem:[#allocation2 + $0x171] sm:$0xff]
    %v4545 = vld [vmem:[#allocation2 + $0x189] sm:$0xff]
    %v4546 = vld [vmem:[#allocation2 + $0x191] sm:$0xff]
    %v4547 = vld [vmem:[#allocation2 + $0x1a9] sm:$0xff]
    %v4548 = vld [vmem:[#allocation2 + $0x1b1] sm:$0xff]
    %v4549 = vld [vmem:[#allocation2 + $0x1c9] sm:$0xff]
    %v4550 = vld [vmem:[#allocation2 + $0x1d1] sm:$0xff]
    %v4551 = vld [vmem:[#allocation2 + $0x1e9] sm:$0xff]
    %v4552 = vld [vmem:[#allocation2 + $0x1f1] sm:$0xff]
    %v4553 = vld [vmem:[#allocation2 + $0x249] sm:$0xff]
    %v4554 = vld [vmem:[#allocation2 + $0x251] sm:$0xff]
    %v4555 = vld [vmem:[#allocation2 + $0x269] sm:$0xff]
    %v4556 = vld [vmem:[#allocation2 + $0x271] sm:$0xff]
    %v4557 = vld [vmem:[#allocation2 + $0x289] sm:$0xff]
    %v4558 = vld [vmem:[#allocation2 + $0x291] sm:$0xff]
    %v4559 = vld [vmem:[#allocation2 + $0x2a9] sm:$0xff]
    %v4560 = vld [vmem:[#allocation2 + $0x2b1] sm:$0xff]
    %v4561 = vld [vmem:[#allocation2 + $0x2c9] sm:$0xff]
    %v4562 = vld [vmem:[#allocation2 + $0x2d1] sm:$0xff]
    %v4563 = vld [vmem:[#allocation2 + $0x2e9] sm:$0xff]
    %v4564 = vld [vmem:[#allocation2 + $0x2f1] sm:$0xff]
    %v4565 = vld [vmem:[#allocation2 + $0x309] sm:$0xff]
    %v4566 = vld [vmem:[#allocation2 + $0x311] sm:$0xff]
    %v4567 = vld [vmem:[#allocation2 + $0x329] sm:$0xff]
    %v4568 = vld [vmem:[#allocation2 + $0x331] sm:$0xff]
    %v4569 = vld [vmem:[#allocation2 + $0x349] sm:$0xff]
    %v4570 = vld [vmem:[#allocation2 + $0x351] sm:$0xff]
    %v4571 = vld [vmem:[#allocation2 + $0x369] sm:$0xff]
    %v4572 = vld [vmem:[#allocation2 + $0x371] sm:$0xff]
    %v4573 = vld [vmem:[#allocation2 + $0x389] sm:$0xff]
    %v4574 = vld [vmem:[#allocation2 + $0x391] sm:$0xff]
    %v4575 = vld [vmem:[#allocation2 + $0x3a9] sm:$0xff]
    %v4576 = vld [vmem:[#allocation2 + $0x3b1] sm:$0xff]
    %v4577 = vld [vmem:[#allocation2 + $0x3c9] sm:$0xff]
    %v4578 = vld [vmem:[#allocation2 + $0x3d1] sm:$0xff]
    %v4579 = vld [vmem:[#allocation2 + $0x3e9] sm:$0xff]
    %v4580 = vld [vmem:[#allocation2 + $0x3f1] sm:$0xff]
    %v4581 = vld [vmem:[#allocation2 + $0x409] sm:$0xff]
    %v4582 = vld [vmem:[#allocation2 + $0x411] sm:$0xff]
    %v4583 = vld [vmem:[#allocation2 + $0x429] sm:$0xff]
    %v4584 = vld [vmem:[#allocation2 + $0x431] sm:$0xff]
    %v4585 = vld [vmem:[%s240 + $0x7] sm:$0xff]
    %v4586 = vld [vmem:[%s240 + $0xf] sm:$0xff]
    %v4587 = vld [vmem:[%s240 + $0x27] sm:$0xff]
    %v4588 = vld [vmem:[%s240 + $0x2f] sm:$0xff]
    %v4589 = vld [vmem:[%s240 + $0x47] sm:$0xff]
    %v4590 = vld [vmem:[%s240 + $0x4f] sm:$0xff]
    %v4591 = vld [vmem:[%s240 + $0x67] sm:$0xff]
    %v4592 = vld [vmem:[%s240 + $0x6f] sm:$0xff]
    %v4593 = vld [vmem:[%s240 + $0x87] sm:$0xff]
    %v4594 = vld [vmem:[%s240 + $0x8f] sm:$0xff]
    %v4595 = vld [vmem:[%s240 + $0xa7] sm:$0xff]
    %v4596 = vld [vmem:[%s240 + $0xaf] sm:$0xff]
    %v4597 = vld [vmem:[%s240 + $0xc7] sm:$0xff]
    %v4598 = vld [vmem:[%s240 + $0xcf] sm:$0xff]
    %v4599 = vld [vmem:[%s240 + $0xe7] sm:$0xff]
    %v4600 = vld [vmem:[%s240 + $0xef] sm:$0xff]
    %v4601 = vld [vmem:[%s240 + $0x107] sm:$0xff]
    %v4602 = vld [vmem:[%s240 + $0x10f] sm:$0xff]
    %v4603 = vld [vmem:[%s240 + $0x127] sm:$0xff]
    %v4604 = vld [vmem:[%s240 + $0x12f] sm:$0xff]
    %v4605 = vld [vmem:[%s240 + $0x147] sm:$0xff]
    %v4606 = vld [vmem:[%s240 + $0x14f] sm:$0xff]
    %v4607 = vld [vmem:[%s240 + $0x167] sm:$0xff]
    %v4608 = vld [vmem:[%s240 + $0x16f] sm:$0xff]
    %v4609 = vld [vmem:[%s240 + $0x187] sm:$0xff]
    %v4610 = vld [vmem:[%s240 + $0x18f] sm:$0xff]
    %v4611 = vld [vmem:[%s240 + $0x1a7] sm:$0xff]
    %v4612 = vld [vmem:[%s240 + $0x1af] sm:$0xff]
    %v4613 = vld [vmem:[%s240 + $0x1c7] sm:$0xff]
    %v4614 = vld [vmem:[%s240 + $0x1cf] sm:$0xff]
    %v4615 = vld [vmem:[%s240 + $0x1e7] sm:$0xff]
    %v4616 = vld [vmem:[%s240 + $0x1ef] sm:$0xff]
    %v4617 = vld [vmem:[%s240 + $0x247] sm:$0xff]
    %v4618 = vld [vmem:[%s240 + $0x24f] sm:$0xff]
    %v4619 = vld [vmem:[%s240 + $0x267] sm:$0xff]
    %v4620 = vld [vmem:[%s240 + $0x26f] sm:$0xff]
    %v4621 = vld [vmem:[%s240 + $0x287] sm:$0xff]
    %v4622 = vld [vmem:[%s240 + $0x28f] sm:$0xff]
    %v4623 = vld [vmem:[%s240 + $0x2a7] sm:$0xff]
    %v4624 = vld [vmem:[%s240 + $0x2af] sm:$0xff]
    %v4625 = vld [vmem:[%s240 + $0x2c7] sm:$0xff]
    %v4626 = vld [vmem:[%s240 + $0x2cf] sm:$0xff]
    %v4627 = vld [vmem:[%s240 + $0x2e7] sm:$0xff]
    %v4628 = vld [vmem:[%s240 + $0x2ef] sm:$0xff]
    %v4629 = vld [vmem:[%s240 + $0x307] sm:$0xff]
    %v4630 = vld [vmem:[%s240 + $0x30f] sm:$0xff]
    %v4631 = vld [vmem:[%s240 + $0x327] sm:$0xff]
    %v4632 = vld [vmem:[%s240 + $0x32f] sm:$0xff]
    %v4633 = vld [vmem:[%s240 + $0x347] sm:$0xff]
    %v4634 = vld [vmem:[%s240 + $0x34f] sm:$0xff]
    %v4635 = vld [vmem:[%s240 + $0x367] sm:$0xff]
    %v4636 = vld [vmem:[%s240 + $0x36f] sm:$0xff]
    %v4637 = vld [vmem:[%s240 + $0x387] sm:$0xff]
    %v4638 = vld [vmem:[%s240 + $0x38f] sm:$0xff]
    %v4639 = vld [vmem:[%s240 + $0x3a7] sm:$0xff]
    %v4640 = vld [vmem:[%s240 + $0x3af] sm:$0xff]
    %v4641 = vld [vmem:[%s240 + $0x3c7] sm:$0xff]
    %v4642 = vld [vmem:[%s240 + $0x3cf] sm:$0xff]
    %v4643 = vld [vmem:[%s240 + $0x3e7] sm:$0xff]
    %v4644 = vld [vmem:[%s240 + $0x3ef] sm:$0xff]
    %v4645 = vld [vmem:[%s240 + $0x407] sm:$0xff]
    %v4646 = vld [vmem:[%s240 + $0x40f] sm:$0xff]
    %v4647 = vld [vmem:[%s240 + $0x427] sm:$0xff]
    %v4648 = vld [vmem:[%s240 + $0x42f] sm:$0xff]
    %v4649 = vld [vmem:[%s240 + $0x8] sm:$0xff]
    %v4650 = vld [vmem:[%s240 + $0x10] sm:$0xff]
    %v4651 = vld [vmem:[%s240 + $0x28] sm:$0xff]
    %v4652 = vld [vmem:[%s240 + $0x30] sm:$0xff]
    %v4653 = vld [vmem:[%s240 + $0x48] sm:$0xff]
    %v4654 = vld [vmem:[%s240 + $0x50] sm:$0xff]
    %v4655 = vld [vmem:[%s240 + $0x68] sm:$0xff]
    %v4656 = vld [vmem:[%s240 + $0x70] sm:$0xff]
    %v4657 = vld [vmem:[%s240 + $0x88] sm:$0xff]
    %v4658 = vld [vmem:[%s240 + $0x90] sm:$0xff]
    %v4659 = vld [vmem:[%s240 + $0xa8] sm:$0xff]
    %v4660 = vld [vmem:[%s240 + $0xb0] sm:$0xff]
    %v4661 = vld [vmem:[%s240 + $0xc8] sm:$0xff]
    %v4662 = vld [vmem:[%s240 + $0xd0] sm:$0xff]
    %v4663 = vld [vmem:[%s240 + $0xe8] sm:$0xff]
    %v4664 = vld [vmem:[%s240 + $0xf0] sm:$0xff]
    %v4665 = vld [vmem:[%s240 + $0x108] sm:$0xff]
    %v4666 = vld [vmem:[%s240 + $0x110] sm:$0xff]
    %v4667 = vld [vmem:[%s240 + $0x128] sm:$0xff]
    %v4668 = vld [vmem:[%s240 + $0x130] sm:$0xff]
    %v4669 = vld [vmem:[%s240 + $0x148] sm:$0xff]
    %v4670 = vld [vmem:[%s240 + $0x150] sm:$0xff]
    %v4671 = vld [vmem:[%s240 + $0x168] sm:$0xff]
    %v4672 = vld [vmem:[%s240 + $0x170] sm:$0xff]
    %v4673 = vld [vmem:[%s240 + $0x188] sm:$0xff]
    %v4674 = vld [vmem:[%s240 + $0x190] sm:$0xff]
    %v4675 = vld [vmem:[%s240 + $0x1a8] sm:$0xff]
    %v4676 = vld [vmem:[%s240 + $0x1b0] sm:$0xff]
    %v4677 = vld [vmem:[%s240 + $0x1c8] sm:$0xff]
    %v4678 = vld [vmem:[%s240 + $0x1d0] sm:$0xff]
    %v4679 = vld [vmem:[%s240 + $0x1e8] sm:$0xff]
    %v4680 = vld [vmem:[%s240 + $0x1f0] sm:$0xff]
    %v4681 = vld [vmem:[%s240 + $0x248] sm:$0xff]
    %v4682 = vld [vmem:[%s240 + $0x250] sm:$0xff]
    %v4683 = vld [vmem:[%s240 + $0x268] sm:$0xff]
    %v4684 = vld [vmem:[%s240 + $0x270] sm:$0xff]
    %v4685 = vld [vmem:[%s240 + $0x288] sm:$0xff]
    %v4686 = vld [vmem:[%s240 + $0x290] sm:$0xff]
    %v4687 = vld [vmem:[%s240 + $0x2a8] sm:$0xff]
    %v4688 = vld [vmem:[%s240 + $0x2b0] sm:$0xff]
    %v4689 = vld [vmem:[%s240 + $0x2c8] sm:$0xff]
    %v4690 = vld [vmem:[%s240 + $0x2d0] sm:$0xff]
    %v4691 = vld [vmem:[%s240 + $0x2e8] sm:$0xff]
    %v4692 = vld [vmem:[%s240 + $0x2f0] sm:$0xff]
    %v4693 = vld [vmem:[%s240 + $0x308] sm:$0xff]
    %v4694 = vld [vmem:[%s240 + $0x310] sm:$0xff]
    %v4695 = vld [vmem:[%s240 + $0x328] sm:$0xff]
    %v4696 = vld [vmem:[%s240 + $0x330] sm:$0xff]
    %v4697 = vld [vmem:[%s240 + $0x348] sm:$0xff]
    %v4698 = vld [vmem:[%s240 + $0x350] sm:$0xff]
    %v4699 = vld [vmem:[%s240 + $0x368] sm:$0xff]
    %v4700 = vld [vmem:[%s240 + $0x370] sm:$0xff]
    %v4701 = vld [vmem:[%s240 + $0x388] sm:$0xff]
    %v4702 = vld [vmem:[%s240 + $0x390] sm:$0xff]
    %v4703 = vld [vmem:[%s240 + $0x3a8] sm:$0xff]
    %v4704 = vld [vmem:[%s240 + $0x3b0] sm:$0xff]
    %v4705 = vld [vmem:[%s240 + $0x3c8] sm:$0xff]
    %v4706 = vld [vmem:[%s240 + $0x3d0] sm:$0xff]
    %v4707 = vld [vmem:[%s240 + $0x3e8] sm:$0xff]
    %v4708 = vld [vmem:[%s240 + $0x3f0] sm:$0xff]
    %v4709 = vld [vmem:[%s240 + $0x408] sm:$0xff]
    %v4710 = vld [vmem:[%s240 + $0x410] sm:$0xff]
    %v4711 = vld [vmem:[%s240 + $0x428] sm:$0xff]
    %v4712 = vld [vmem:[%s240 + $0x430] sm:$0xff]
    %v4713 = vld [vmem:[%s240 + $0x9] sm:$0xff]
    %v4714 = vld [vmem:[%s240 + $0x11] sm:$0xff]
    %v4715 = vld [vmem:[%s240 + $0x29] sm:$0xff]
    %v4716 = vld [vmem:[%s240 + $0x31] sm:$0xff]
    %v4717 = vld [vmem:[%s240 + $0x49] sm:$0xff]
    %v4718 = vld [vmem:[%s240 + $0x51] sm:$0xff]
    %v4719 = vld [vmem:[%s240 + $0x69] sm:$0xff]
    %v4720 = vld [vmem:[%s240 + $0x71] sm:$0xff]
    %v4721 = vld [vmem:[%s240 + $0x89] sm:$0xff]
    %v4722 = vld [vmem:[%s240 + $0x91] sm:$0xff]
    %v4723 = vld [vmem:[%s240 + $0xa9] sm:$0xff]
    %v4724 = vld [vmem:[%s240 + $0xb1] sm:$0xff]
    %v4725 = vld [vmem:[%s240 + $0xc9] sm:$0xff]
    %v4726 = vld [vmem:[%s240 + $0xd1] sm:$0xff]
    %v4727 = vld [vmem:[%s240 + $0xe9] sm:$0xff]
    %v4728 = vld [vmem:[%s240 + $0xf1] sm:$0xff]
    %v4729 = vld [vmem:[%s240 + $0x109] sm:$0xff]
    %v4730 = vld [vmem:[%s240 + $0x111] sm:$0xff]
    %v4731 = vld [vmem:[%s240 + $0x129] sm:$0xff]
    %v4732 = vld [vmem:[%s240 + $0x131] sm:$0xff]
    %v4733 = vld [vmem:[%s240 + $0x149] sm:$0xff]
    %v4734 = vld [vmem:[%s240 + $0x151] sm:$0xff]
    %v4735 = vld [vmem:[%s240 + $0x169] sm:$0xff]
    %v4736 = vld [vmem:[%s240 + $0x171] sm:$0xff]
    %v4737 = vld [vmem:[%s240 + $0x189] sm:$0xff]
    %v4738 = vld [vmem:[%s240 + $0x191] sm:$0xff]
    %v4739 = vld [vmem:[%s240 + $0x1a9] sm:$0xff]
    %v4740 = vld [vmem:[%s240 + $0x1b1] sm:$0xff]
    %v4741 = vld [vmem:[%s240 + $0x1c9] sm:$0xff]
    %v4742 = vld [vmem:[%s240 + $0x1d1] sm:$0xff]
    %v4743 = vld [vmem:[%s240 + $0x1e9] sm:$0xff]
    %v4744 = vld [vmem:[%s240 + $0x1f1] sm:$0xff]
    %v4745 = vld [vmem:[%s240 + $0x249] sm:$0xff]
    %v4746 = vld [vmem:[%s240 + $0x251] sm:$0xff]
    %v4747 = vld [vmem:[%s240 + $0x269] sm:$0xff]
    %v4748 = vld [vmem:[%s240 + $0x271] sm:$0xff]
    %v4749 = vld [vmem:[%s240 + $0x289] sm:$0xff]
    %v4750 = vld [vmem:[%s240 + $0x291] sm:$0xff]
    %v4751 = vld [vmem:[%s240 + $0x2a9] sm:$0xff]
    %v4752 = vld [vmem:[%s240 + $0x2b1] sm:$0xff]
    %v4753 = vld [vmem:[%s240 + $0x2c9] sm:$0xff]
    %v4754 = vld [vmem:[%s240 + $0x2d1] sm:$0xff]
    %v4755 = vld [vmem:[%s240 + $0x2e9] sm:$0xff]
    %v4756 = vld [vmem:[%s240 + $0x2f1] sm:$0xff]
    %v4757 = vld [vmem:[%s240 + $0x309] sm:$0xff]
    %v4758 = vld [vmem:[%s240 + $0x311] sm:$0xff]
    %v4759 = vld [vmem:[%s240 + $0x329] sm:$0xff]
    %v4760 = vld [vmem:[%s240 + $0x331] sm:$0xff]
    %v4761 = vld [vmem:[%s240 + $0x349] sm:$0xff]
    %v4762 = vld [vmem:[%s240 + $0x351] sm:$0xff]
    %v4763 = vld [vmem:[%s240 + $0x369] sm:$0xff]
    %v4764 = vld [vmem:[%s240 + $0x371] sm:$0xff]
    %v4765 = vld [vmem:[%s240 + $0x389] sm:$0xff]
    %v4766 = vld [vmem:[%s240 + $0x391] sm:$0xff]
    %v4767 = vld [vmem:[%s240 + $0x3a9] sm:$0xff]
    %v4768 = vld [vmem:[%s240 + $0x3b1] sm:$0xff]
    %v4769 = vld [vmem:[%s240 + $0x3c9] sm:$0xff]
    %v4770 = vld [vmem:[%s240 + $0x3d1] sm:$0xff]
    %v4771 = vld [vmem:[%s240 + $0x3e9] sm:$0xff]
    %v4772 = vld [vmem:[%s240 + $0x3f1] sm:$0xff]
    %v4773 = vld [vmem:[%s240 + $0x409] sm:$0xff]
    %v4774 = vld [vmem:[%s240 + $0x411] sm:$0xff]
    %v4775 = vld [vmem:[%s240 + $0x429] sm:$0xff]
    %v4776 = vld [vmem:[%s240 + $0x431] sm:$0xff]
    %v4777 = vld [vmem:[%s689 + $0x7] sm:$0xff]
    %v4778 = vld [vmem:[%s689 + $0xf] sm:$0xff]
    %v4779 = vld [vmem:[%s689 + $0x27] sm:$0xff]
    %v4780 = vld [vmem:[%s689 + $0x2f] sm:$0xff]
    %v4781 = vld [vmem:[%s689 + $0x47] sm:$0xff]
    %v4782 = vld [vmem:[%s689 + $0x4f] sm:$0xff]
    %v4783 = vld [vmem:[%s689 + $0x67] sm:$0xff]
    %v4784 = vld [vmem:[%s689 + $0x6f] sm:$0xff]
    %v4785 = vld [vmem:[%s689 + $0x87] sm:$0xff]
    %v4786 = vld [vmem:[%s689 + $0x8f] sm:$0xff]
    %v4787 = vld [vmem:[%s689 + $0xa7] sm:$0xff]
    %v4788 = vld [vmem:[%s689 + $0xaf] sm:$0xff]
    %v4789 = vld [vmem:[%s689 + $0xc7] sm:$0xff]
    %v4790 = vld [vmem:[%s689 + $0xcf] sm:$0xff]
    %v4791 = vld [vmem:[%s689 + $0xe7] sm:$0xff]
    %v4792 = vld [vmem:[%s689 + $0xef] sm:$0xff]
    %v4793 = vld [vmem:[%s689 + $0x107] sm:$0xff]
    %v4794 = vld [vmem:[%s689 + $0x10f] sm:$0xff]
    %v4795 = vld [vmem:[%s689 + $0x127] sm:$0xff]
    %v4796 = vld [vmem:[%s689 + $0x12f] sm:$0xff]
    %v4797 = vld [vmem:[%s689 + $0x147] sm:$0xff]
    %v4798 = vld [vmem:[%s689 + $0x14f] sm:$0xff]
    %v4799 = vld [vmem:[%s689 + $0x167] sm:$0xff]
    %v4800 = vld [vmem:[%s689 + $0x16f] sm:$0xff]
    %v4801 = vld [vmem:[%s689 + $0x187] sm:$0xff]
    %v4802 = vld [vmem:[%s689 + $0x18f] sm:$0xff]
    %v4803 = vld [vmem:[%s689 + $0x1a7] sm:$0xff]
    %v4804 = vld [vmem:[%s689 + $0x1af] sm:$0xff]
    %v4805 = vld [vmem:[%s689 + $0x1c7] sm:$0xff]
    %v4806 = vld [vmem:[%s689 + $0x1cf] sm:$0xff]
    %v4807 = vld [vmem:[%s689 + $0x1e7] sm:$0xff]
    %v4808 = vld [vmem:[%s689 + $0x1ef] sm:$0xff]
    %v4809 = vld [vmem:[%s689 + $0x247] sm:$0xff]
    %v4810 = vld [vmem:[%s689 + $0x24f] sm:$0xff]
    %v4811 = vld [vmem:[%s689 + $0x267] sm:$0xff]
    %v4812 = vld [vmem:[%s689 + $0x26f] sm:$0xff]
    %v4813 = vld [vmem:[%s689 + $0x287] sm:$0xff]
    %v4814 = vld [vmem:[%s689 + $0x28f] sm:$0xff]
    %v4815 = vld [vmem:[%s689 + $0x2a7] sm:$0xff]
    %v4816 = vld [vmem:[%s689 + $0x2af] sm:$0xff]
    %v4817 = vld [vmem:[%s689 + $0x2c7] sm:$0xff]
    %v4818 = vld [vmem:[%s689 + $0x2cf] sm:$0xff]
    %v4819 = vld [vmem:[%s689 + $0x2e7] sm:$0xff]
    %v4820 = vld [vmem:[%s689 + $0x2ef] sm:$0xff]
    %v4821 = vld [vmem:[%s689 + $0x307] sm:$0xff]
    %v4822 = vld [vmem:[%s689 + $0x30f] sm:$0xff]
    %v4823 = vld [vmem:[%s689 + $0x327] sm:$0xff]
    %v4824 = vld [vmem:[%s689 + $0x32f] sm:$0xff]
    %v4825 = vld [vmem:[%s689 + $0x347] sm:$0xff]
    %v4826 = vld [vmem:[%s689 + $0x34f] sm:$0xff]
    %v4827 = vld [vmem:[%s689 + $0x367] sm:$0xff]
    %v4828 = vld [vmem:[%s689 + $0x36f] sm:$0xff]
    %v4829 = vld [vmem:[%s689 + $0x387] sm:$0xff]
    %v4830 = vld [vmem:[%s689 + $0x38f] sm:$0xff]
    %v4831 = vld [vmem:[%s689 + $0x3a7] sm:$0xff]
    %v4832 = vld [vmem:[%s689 + $0x3af] sm:$0xff]
    %v4833 = vld [vmem:[%s689 + $0x3c7] sm:$0xff]
    %v4834 = vld [vmem:[%s689 + $0x3cf] sm:$0xff]
    %v4835 = vld [vmem:[%s689 + $0x3e7] sm:$0xff]
    %v4836 = vld [vmem:[%s689 + $0x3ef] sm:$0xff]
    %v4837 = vld [vmem:[%s689 + $0x407] sm:$0xff]
    %v4838 = vld [vmem:[%s689 + $0x40f] sm:$0xff]
    %v4839 = vld [vmem:[%s689 + $0x427] sm:$0xff]
    %v4840 = vld [vmem:[%s689 + $0x42f] sm:$0xff]
    %v4841 = vld [vmem:[%s689 + $0x8] sm:$0xff]
    %v4842 = vld [vmem:[%s689 + $0x10] sm:$0xff]
    %v4843 = vld [vmem:[%s689 + $0x28] sm:$0xff]
    %v4844 = vld [vmem:[%s689 + $0x30] sm:$0xff]
    %v4845 = vld [vmem:[%s689 + $0x48] sm:$0xff]
    %v4846 = vld [vmem:[%s689 + $0x50] sm:$0xff]
    %v4847 = vld [vmem:[%s689 + $0x68] sm:$0xff]
    %v4848 = vld [vmem:[%s689 + $0x70] sm:$0xff]
    %v4849 = vld [vmem:[%s689 + $0x88] sm:$0xff]
    %v4850 = vld [vmem:[%s689 + $0x90] sm:$0xff]
    %v4851 = vld [vmem:[%s689 + $0xa8] sm:$0xff]
    %v4852 = vld [vmem:[%s689 + $0xb0] sm:$0xff]
    %v4853 = vld [vmem:[%s689 + $0xc8] sm:$0xff]
    %v4854 = vld [vmem:[%s689 + $0xd0] sm:$0xff]
    %v4855 = vld [vmem:[%s689 + $0xe8] sm:$0xff]
    %v4856 = vld [vmem:[%s689 + $0xf0] sm:$0xff]
    %v4857 = vld [vmem:[%s689 + $0x108] sm:$0xff]
    %v4858 = vld [vmem:[%s689 + $0x110] sm:$0xff]
    %v4859 = vld [vmem:[%s689 + $0x128] sm:$0xff]
    %v4860 = vld [vmem:[%s689 + $0x130] sm:$0xff]
    %v4861 = vld [vmem:[%s689 + $0x148] sm:$0xff]
    %v4862 = vld [vmem:[%s689 + $0x150] sm:$0xff]
    %v4863 = vld [vmem:[%s689 + $0x168] sm:$0xff]
    %v4864 = vld [vmem:[%s689 + $0x170] sm:$0xff]
    %v4865 = vld [vmem:[%s689 + $0x188] sm:$0xff]
    %v4866 = vld [vmem:[%s689 + $0x190] sm:$0xff]
    %v4867 = vld [vmem:[%s689 + $0x1a8] sm:$0xff]
    %v4868 = vld [vmem:[%s689 + $0x1b0] sm:$0xff]
    %v4869 = vld [vmem:[%s689 + $0x1c8] sm:$0xff]
    %v4870 = vld [vmem:[%s689 + $0x1d0] sm:$0xff]
    %v4871 = vld [vmem:[%s689 + $0x1e8] sm:$0xff]
    %v4872 = vld [vmem:[%s689 + $0x1f0] sm:$0xff]
    %v4873 = vld [vmem:[%s689 + $0x248] sm:$0xff]
    %v4874 = vld [vmem:[%s689 + $0x250] sm:$0xff]
    %v4875 = vld [vmem:[%s689 + $0x268] sm:$0xff]
    %v4876 = vld [vmem:[%s689 + $0x270] sm:$0xff]
    %v4877 = vld [vmem:[%s689 + $0x288] sm:$0xff]
    %v4878 = vld [vmem:[%s689 + $0x290] sm:$0xff]
    %v4879 = vld [vmem:[%s689 + $0x2a8] sm:$0xff]
    %v4880 = vld [vmem:[%s689 + $0x2b0] sm:$0xff]
    %v4881 = vld [vmem:[%s689 + $0x2c8] sm:$0xff]
    %v4882 = vld [vmem:[%s689 + $0x2d0] sm:$0xff]
    %v4883 = vld [vmem:[%s689 + $0x2e8] sm:$0xff]
    %v4884 = vld [vmem:[%s689 + $0x2f0] sm:$0xff]
    %v4885 = vld [vmem:[%s689 + $0x308] sm:$0xff]
    %v4886 = vld [vmem:[%s689 + $0x310] sm:$0xff]
    %v4887 = vld [vmem:[%s689 + $0x328] sm:$0xff]
    %v4888 = vld [vmem:[%s689 + $0x330] sm:$0xff]
    %v4889 = vld [vmem:[%s689 + $0x348] sm:$0xff]
    %v4890 = vld [vmem:[%s689 + $0x350] sm:$0xff]
    %v4891 = vld [vmem:[%s689 + $0x368] sm:$0xff]
    %v4892 = vld [vmem:[%s689 + $0x370] sm:$0xff]
    %v4893 = vld [vmem:[%s689 + $0x388] sm:$0xff]
    %v4894 = vld [vmem:[%s689 + $0x390] sm:$0xff]
    %v4895 = vld [vmem:[%s689 + $0x3a8] sm:$0xff]
    %v4896 = vld [vmem:[%s689 + $0x3b0] sm:$0xff]
    %v4897 = vld [vmem:[%s689 + $0x3c8] sm:$0xff]
    %v4898 = vld [vmem:[%s689 + $0x3d0] sm:$0xff]
    %v4899 = vld [vmem:[%s689 + $0x3e8] sm:$0xff]
    %v4900 = vld [vmem:[%s689 + $0x3f0] sm:$0xff]
    %v4901 = vld [vmem:[%s689 + $0x408] sm:$0xff]
    %v4902 = vld [vmem:[%s689 + $0x410] sm:$0xff]
    %v4903 = vld [vmem:[%s689 + $0x428] sm:$0xff]
    %v4904 = vld [vmem:[%s689 + $0x430] sm:$0xff]
    %v4905 = vld [vmem:[%s689 + $0x9] sm:$0xff]
    %v4906 = vld [vmem:[%s689 + $0x11] sm:$0xff]
    %v4907 = vld [vmem:[%s689 + $0x29] sm:$0xff]
    %v4908 = vld [vmem:[%s689 + $0x31] sm:$0xff]
    %v4909 = vld [vmem:[%s689 + $0x49] sm:$0xff]
    %v4910 = vld [vmem:[%s689 + $0x51] sm:$0xff]
    %v4911 = vld [vmem:[%s689 + $0x69] sm:$0xff]
    %v4912 = vld [vmem:[%s689 + $0x71] sm:$0xff]
    %v4913 = vld [vmem:[%s689 + $0x89] sm:$0xff]
    %v4914 = vld [vmem:[%s689 + $0x91] sm:$0xff]
    %v4915 = vld [vmem:[%s689 + $0xa9] sm:$0xff]
    %v4916 = vld [vmem:[%s689 + $0xb1] sm:$0xff]
    %v4917 = vld [vmem:[%s689 + $0xc9] sm:$0xff]
    %v4918 = vld [vmem:[%s689 + $0xd1] sm:$0xff]
    %v4919 = vld [vmem:[%s689 + $0xe9] sm:$0xff]
    %v4920 = vld [vmem:[%s689 + $0xf1] sm:$0xff]
    %v4921 = vld [vmem:[%s689 + $0x109] sm:$0xff]
    %v4922 = vld [vmem:[%s689 + $0x111] sm:$0xff]
    %v4923 = vld [vmem:[%s689 + $0x129] sm:$0xff]
    %v4924 = vld [vmem:[%s689 + $0x131] sm:$0xff]
    %v4925 = vld [vmem:[%s689 + $0x149] sm:$0xff]
    %v4926 = vld [vmem:[%s689 + $0x151] sm:$0xff]
    %v4927 = vld [vmem:[%s689 + $0x169] sm:$0xff]
    %v4928 = vld [vmem:[%s689 + $0x171] sm:$0xff]
    %v4929 = vld [vmem:[%s689 + $0x189] sm:$0xff]
    %v4930 = vld [vmem:[%s689 + $0x191] sm:$0xff]
    %v4931 = vld [vmem:[%s689 + $0x1a9] sm:$0xff]
    %v4932 = vld [vmem:[%s689 + $0x1b1] sm:$0xff]
    %v4933 = vld [vmem:[%s689 + $0x1c9] sm:$0xff]
    %v4934 = vld [vmem:[%s689 + $0x1d1] sm:$0xff]
    %v4935 = vld [vmem:[%s689 + $0x1e9] sm:$0xff]
    %v4936 = vld [vmem:[%s689 + $0x1f1] sm:$0xff]
    %v4937 = vld [vmem:[%s689 + $0x249] sm:$0xff]
    %v4938 = vld [vmem:[%s689 + $0x251] sm:$0xff]
    %v4939 = vld [vmem:[%s689 + $0x269] sm:$0xff]
    %v4940 = vld [vmem:[%s689 + $0x271] sm:$0xff]
    %v4941 = vld [vmem:[%s689 + $0x289] sm:$0xff]
    %v4942 = vld [vmem:[%s689 + $0x291] sm:$0xff]
    %v4943 = vld [vmem:[%s689 + $0x2a9] sm:$0xff]
    %v4944 = vld [vmem:[%s689 + $0x2b1] sm:$0xff]
    %v4945 = vld [vmem:[%s689 + $0x2c9] sm:$0xff]
    %v4946 = vld [vmem:[%s689 + $0x2d1] sm:$0xff]
    %v4947 = vld [vmem:[%s689 + $0x2e9] sm:$0xff]
    %v4948 = vld [vmem:[%s689 + $0x2f1] sm:$0xff]
    %v4949 = vld [vmem:[%s689 + $0x309] sm:$0xff]
    %v4950 = vld [vmem:[%s689 + $0x311] sm:$0xff]
    %v4951 = vld [vmem:[%s689 + $0x329] sm:$0xff]
    %v4952 = vld [vmem:[%s689 + $0x331] sm:$0xff]
    %v4953 = vld [vmem:[%s689 + $0x349] sm:$0xff]
    %v4954 = vld [vmem:[%s689 + $0x351] sm:$0xff]
    %v4955 = vld [vmem:[%s689 + $0x369] sm:$0xff]
    %v4956 = vld [vmem:[%s689 + $0x371] sm:$0xff]
    %v4957 = vld [vmem:[%s689 + $0x389] sm:$0xff]
    %v4958 = vld [vmem:[%s689 + $0x391] sm:$0xff]
    %v4959 = vld [vmem:[%s689 + $0x3a9] sm:$0xff]
    %v4960 = vld [vmem:[%s689 + $0x3b1] sm:$0xff]
    %v4961 = vld [vmem:[%s689 + $0x3c9] sm:$0xff]
    %v4962 = vld [vmem:[%s689 + $0x3d1] sm:$0xff]
    %v4963 = vld [vmem:[%s689 + $0x3e9] sm:$0xff]
    %v4964 = vld [vmem:[%s689 + $0x3f1] sm:$0xff]
    %v4965 = vld [vmem:[%s689 + $0x409] sm:$0xff]
    %v4966 = vld [vmem:[%s689 + $0x411] sm:$0xff]
    %v4967 = vld [vmem:[%s689 + $0x429] sm:$0xff]
    %v4968 = vld [vmem:[%s689 + $0x431] sm:$0xff]
    %5033 = vrot.lane.b32.xlu0 %v4457, 32
    %v5034 = vpop.permute.xlu0 %5033
    %5035 = vrot.lane.b32.xlu0 %v4458, 32
    %v5036 = vpop.permute.xlu0 %5035
    %5037 = vrot.lane.b32.xlu0 %v4459, 32
    %v5038 = vpop.permute.xlu0 %5037
    %5039 = vrot.lane.b32.xlu0 %v4460, 32
    %v5040 = vpop.permute.xlu0 %5039
    %5041 = vrot.lane.b32.xlu0 %v4461, 32
    %v5042 = vpop.permute.xlu0 %5041
    %5043 = vrot.lane.b32.xlu0 %v4462, 32
    %v5044 = vpop.permute.xlu0 %5043
    %5045 = vrot.lane.b32.xlu0 %v4463, 32
    %v5046 = vpop.permute.xlu0 %5045
    %5047 = vrot.lane.b32.xlu0 %v4464, 32
    %v5048 = vpop.permute.xlu0 %5047
    %5049 = vrot.lane.b32.xlu0 %v4465, 32
    %v5050 = vpop.permute.xlu0 %5049
    %5051 = vrot.lane.b32.xlu0 %v4466, 32
    %v5052 = vpop.permute.xlu0 %5051
    %5053 = vrot.lane.b32.xlu0 %v4467, 32
    %v5054 = vpop.permute.xlu0 %5053
    %5055 = vrot.lane.b32.xlu0 %v4468, 32
    %v5056 = vpop.permute.xlu0 %5055
    %5057 = vrot.lane.b32.xlu0 %v4469, 32
    %v5058 = vpop.permute.xlu0 %5057
    %5059 = vrot.lane.b32.xlu0 %v4470, 32
    %v5060 = vpop.permute.xlu0 %5059
    %5061 = vrot.lane.b32.xlu0 %v4471, 32
    %v5062 = vpop.permute.xlu0 %5061
    %5063 = vrot.lane.b32.xlu0 %v4472, 32
    %v5064 = vpop.permute.xlu0 %5063
    %5065 = vrot.lane.b32.xlu0 %v4473, 32
    %v5066 = vpop.permute.xlu0 %5065
    %5067 = vrot.lane.b32.xlu0 %v4474, 32
    %v5068 = vpop.permute.xlu0 %5067
    %5069 = vrot.lane.b32.xlu0 %v4475, 32
    %v5070 = vpop.permute.xlu0 %5069
    %5071 = vrot.lane.b32.xlu0 %v4476, 32
    %v5072 = vpop.permute.xlu0 %5071
    %5073 = vrot.lane.b32.xlu0 %v4477, 32
    %v5074 = vpop.permute.xlu0 %5073
    %5075 = vrot.lane.b32.xlu0 %v4478, 32
    %v5076 = vpop.permute.xlu0 %5075
    %5077 = vrot.lane.b32.xlu0 %v4479, 32
    %v5078 = vpop.permute.xlu0 %5077
    %5079 = vrot.lane.b32.xlu0 %v4480, 32
    %v5080 = vpop.permute.xlu0 %5079
    %5081 = vrot.lane.b32.xlu0 %v4481, 32
    %v5082 = vpop.permute.xlu0 %5081
    %5083 = vrot.lane.b32.xlu0 %v4482, 32
    %v5084 = vpop.permute.xlu0 %5083
    %5085 = vrot.lane.b32.xlu0 %v4483, 32
    %v5086 = vpop.permute.xlu0 %5085
    %5087 = vrot.lane.b32.xlu0 %v4484, 32
    %v5088 = vpop.permute.xlu0 %5087
    %5089 = vrot.lane.b32.xlu0 %v4485, 32
    %v5090 = vpop.permute.xlu0 %5089
    %5091 = vrot.lane.b32.xlu0 %v4486, 32
    %v5092 = vpop.permute.xlu0 %5091
    %5093 = vrot.lane.b32.xlu0 %v4487, 32
    %v5094 = vpop.permute.xlu0 %5093
    %5095 = vrot.lane.b32.xlu0 %v4488, 32
    %v5096 = vpop.permute.xlu0 %5095
    %5097 = vrot.lane.b32.xlu0 %v4489, 32
    %v5098 = vpop.permute.xlu0 %5097
    %5099 = vrot.lane.b32.xlu0 %v4490, 32
    %v5100 = vpop.permute.xlu0 %5099
    %5101 = vrot.lane.b32.xlu0 %v4491, 32
    %v5102 = vpop.permute.xlu0 %5101
    %5103 = vrot.lane.b32.xlu0 %v4492, 32
    %v5104 = vpop.permute.xlu0 %5103
    %5105 = vrot.lane.b32.xlu0 %v4493, 32
    %v5106 = vpop.permute.xlu0 %5105
    %5107 = vrot.lane.b32.xlu0 %v4494, 32
    %v5108 = vpop.permute.xlu0 %5107
    %5109 = vrot.lane.b32.xlu0 %v4495, 32
    %v5110 = vpop.permute.xlu0 %5109
    %5111 = vrot.lane.b32.xlu0 %v4496, 32
    %v5112 = vpop.permute.xlu0 %5111
    %5113 = vrot.lane.b32.xlu0 %v4497, 32
    %v5114 = vpop.permute.xlu0 %5113
    %5115 = vrot.lane.b32.xlu0 %v4498, 32
    %v5116 = vpop.permute.xlu0 %5115
    %5117 = vrot.lane.b32.xlu0 %v4499, 32
    %v5118 = vpop.permute.xlu0 %5117
    %5119 = vrot.lane.b32.xlu0 %v4500, 32
    %v5120 = vpop.permute.xlu0 %5119
    %5121 = vrot.lane.b32.xlu0 %v4501, 32
    %v5122 = vpop.permute.xlu0 %5121
    %5123 = vrot.lane.b32.xlu0 %v4502, 32
    %v5124 = vpop.permute.xlu0 %5123
    %5125 = vrot.lane.b32.xlu0 %v4503, 32
    %v5126 = vpop.permute.xlu0 %5125
    %5127 = vrot.lane.b32.xlu0 %v4504, 32
    %v5128 = vpop.permute.xlu0 %5127
    %5129 = vrot.lane.b32.xlu0 %v4505, 32
    %v5130 = vpop.permute.xlu0 %5129
    %5131 = vrot.lane.b32.xlu0 %v4506, 32
    %v5132 = vpop.permute.xlu0 %5131
    %5133 = vrot.lane.b32.xlu0 %v4507, 32
    %v5134 = vpop.permute.xlu0 %5133
    %5135 = vrot.lane.b32.xlu0 %v4508, 32
    %v5136 = vpop.permute.xlu0 %5135
    %5137 = vrot.lane.b32.xlu0 %v4509, 32
    %v5138 = vpop.permute.xlu0 %5137
    %5139 = vrot.lane.b32.xlu0 %v4510, 32
    %v5140 = vpop.permute.xlu0 %5139
    %5141 = vrot.lane.b32.xlu0 %v4511, 32
    %v5142 = vpop.permute.xlu0 %5141
    %5143 = vrot.lane.b32.xlu0 %v4512, 32
    %v5144 = vpop.permute.xlu0 %5143
    %5145 = vrot.lane.b32.xlu0 %v4513, 32
    %v5146 = vpop.permute.xlu0 %5145
    %5147 = vrot.lane.b32.xlu0 %v4514, 32
    %v5148 = vpop.permute.xlu0 %5147
    %5149 = vrot.lane.b32.xlu0 %v4515, 32
    %v5150 = vpop.permute.xlu0 %5149
    %5151 = vrot.lane.b32.xlu0 %v4516, 32
    %v5152 = vpop.permute.xlu0 %5151
    %5153 = vrot.lane.b32.xlu0 %v4517, 32
    %v5154 = vpop.permute.xlu0 %5153
    %5155 = vrot.lane.b32.xlu0 %v4518, 32
    %v5156 = vpop.permute.xlu0 %5155
    %5157 = vrot.lane.b32.xlu0 %v4519, 32
    %v5158 = vpop.permute.xlu0 %5157
    %5159 = vrot.lane.b32.xlu0 %v4520, 32
    %v5160 = vpop.permute.xlu0 %5159
    %5289 = vrot.lane.b32.xlu0 %v4521, 64
    %v5290 = vpop.permute.xlu0 %5289
    %5291 = vrot.lane.b32.xlu0 %v4522, 64
    %v5292 = vpop.permute.xlu0 %5291
    %5293 = vrot.lane.b32.xlu0 %v4523, 64
    %v5294 = vpop.permute.xlu0 %5293
    %5295 = vrot.lane.b32.xlu0 %v4524, 64
    %v5296 = vpop.permute.xlu0 %5295
    %5297 = vrot.lane.b32.xlu0 %v4525, 64
    %v5298 = vpop.permute.xlu0 %5297
    %5299 = vrot.lane.b32.xlu0 %v4526, 64
    %v5300 = vpop.permute.xlu0 %5299
    %5301 = vrot.lane.b32.xlu0 %v4527, 64
    %v5302 = vpop.permute.xlu0 %5301
    %5303 = vrot.lane.b32.xlu0 %v4528, 64
    %v5304 = vpop.permute.xlu0 %5303
    %5305 = vrot.lane.b32.xlu0 %v4529, 64
    %v5306 = vpop.permute.xlu0 %5305
    %5307 = vrot.lane.b32.xlu0 %v4530, 64
    %v5308 = vpop.permute.xlu0 %5307
    %5309 = vrot.lane.b32.xlu0 %v4531, 64
    %v5310 = vpop.permute.xlu0 %5309
    %5311 = vrot.lane.b32.xlu0 %v4532, 64
    %v5312 = vpop.permute.xlu0 %5311
    %5313 = vrot.lane.b32.xlu0 %v4533, 64
    %v5314 = vpop.permute.xlu0 %5313
    %5315 = vrot.lane.b32.xlu0 %v4534, 64
    %v5316 = vpop.permute.xlu0 %5315
    %5317 = vrot.lane.b32.xlu0 %v4535, 64
    %v5318 = vpop.permute.xlu0 %5317
    %5319 = vrot.lane.b32.xlu0 %v4536, 64
    %v5320 = vpop.permute.xlu0 %5319
    %5321 = vrot.lane.b32.xlu0 %v4537, 64
    %v5322 = vpop.permute.xlu0 %5321
    %5323 = vrot.lane.b32.xlu0 %v4538, 64
    %v5324 = vpop.permute.xlu0 %5323
    %5325 = vrot.lane.b32.xlu0 %v4539, 64
    %v5326 = vpop.permute.xlu0 %5325
    %5327 = vrot.lane.b32.xlu0 %v4540, 64
    %v5328 = vpop.permute.xlu0 %5327
    %5329 = vrot.lane.b32.xlu0 %v4541, 64
    %v5330 = vpop.permute.xlu0 %5329
    %5331 = vrot.lane.b32.xlu0 %v4542, 64
    %v5332 = vpop.permute.xlu0 %5331
    %5333 = vrot.lane.b32.xlu0 %v4543, 64
    %v5334 = vpop.permute.xlu0 %5333
    %5335 = vrot.lane.b32.xlu0 %v4544, 64
    %v5336 = vpop.permute.xlu0 %5335
    %5337 = vrot.lane.b32.xlu0 %v4545, 64
    %v5338 = vpop.permute.xlu0 %5337
    %5339 = vrot.lane.b32.xlu0 %v4546, 64
    %v5340 = vpop.permute.xlu0 %5339
    %5341 = vrot.lane.b32.xlu0 %v4547, 64
    %v5342 = vpop.permute.xlu0 %5341
    %5343 = vrot.lane.b32.xlu0 %v4548, 64
    %v5344 = vpop.permute.xlu0 %5343
    %5345 = vrot.lane.b32.xlu0 %v4549, 64
    %v5346 = vpop.permute.xlu0 %5345
    %5347 = vrot.lane.b32.xlu0 %v4550, 64
    %v5348 = vpop.permute.xlu0 %5347
    %5349 = vrot.lane.b32.xlu0 %v4551, 64
    %v5350 = vpop.permute.xlu0 %5349
    %5351 = vrot.lane.b32.xlu0 %v4552, 64
    %v5352 = vpop.permute.xlu0 %5351
    %5353 = vrot.lane.b32.xlu0 %v4553, 64
    %v5354 = vpop.permute.xlu0 %5353
    %5355 = vrot.lane.b32.xlu0 %v4554, 64
    %v5356 = vpop.permute.xlu0 %5355
    %5357 = vrot.lane.b32.xlu0 %v4555, 64
    %v5358 = vpop.permute.xlu0 %5357
    %5359 = vrot.lane.b32.xlu0 %v4556, 64
    %v5360 = vpop.permute.xlu0 %5359
    %5361 = vrot.lane.b32.xlu0 %v4557, 64
    %v5362 = vpop.permute.xlu0 %5361
    %5363 = vrot.lane.b32.xlu0 %v4558, 64
    %v5364 = vpop.permute.xlu0 %5363
    %5365 = vrot.lane.b32.xlu0 %v4559, 64
    %v5366 = vpop.permute.xlu0 %5365
    %5367 = vrot.lane.b32.xlu0 %v4560, 64
    %v5368 = vpop.permute.xlu0 %5367
    %5369 = vrot.lane.b32.xlu0 %v4561, 64
    %v5370 = vpop.permute.xlu0 %5369
    %5371 = vrot.lane.b32.xlu0 %v4562, 64
    %v5372 = vpop.permute.xlu0 %5371
    %5373 = vrot.lane.b32.xlu0 %v4563, 64
    %v5374 = vpop.permute.xlu0 %5373
    %5375 = vrot.lane.b32.xlu0 %v4564, 64
    %v5376 = vpop.permute.xlu0 %5375
    %5377 = vrot.lane.b32.xlu0 %v4565, 64
    %v5378 = vpop.permute.xlu0 %5377
    %5379 = vrot.lane.b32.xlu0 %v4566, 64
    %v5380 = vpop.permute.xlu0 %5379
    %5381 = vrot.lane.b32.xlu0 %v4567, 64
    %v5382 = vpop.permute.xlu0 %5381
    %5383 = vrot.lane.b32.xlu0 %v4568, 64
    %v5384 = vpop.permute.xlu0 %5383
    %5385 = vrot.lane.b32.xlu0 %v4569, 64
    %v5386 = vpop.permute.xlu0 %5385
    %5387 = vrot.lane.b32.xlu0 %v4570, 64
    %v5388 = vpop.permute.xlu0 %5387
    %5389 = vrot.lane.b32.xlu0 %v4571, 64
    %v5390 = vpop.permute.xlu0 %5389
    %5391 = vrot.lane.b32.xlu0 %v4572, 64
    %v5392 = vpop.permute.xlu0 %5391
    %5393 = vrot.lane.b32.xlu0 %v4573, 64
    %v5394 = vpop.permute.xlu0 %5393
    %5395 = vrot.lane.b32.xlu0 %v4574, 64
    %v5396 = vpop.permute.xlu0 %5395
    %5397 = vrot.lane.b32.xlu0 %v4575, 64
    %v5398 = vpop.permute.xlu0 %5397
    %5399 = vrot.lane.b32.xlu0 %v4576, 64
    %v5400 = vpop.permute.xlu0 %5399
    %5401 = vrot.lane.b32.xlu0 %v4577, 64
    %v5402 = vpop.permute.xlu0 %5401
    %5403 = vrot.lane.b32.xlu0 %v4578, 64
    %v5404 = vpop.permute.xlu0 %5403
    %5405 = vrot.lane.b32.xlu0 %v4579, 64
    %v5406 = vpop.permute.xlu0 %5405
    %5407 = vrot.lane.b32.xlu0 %v4580, 64
    %v5408 = vpop.permute.xlu0 %5407
    %5409 = vrot.lane.b32.xlu0 %v4581, 64
    %v5410 = vpop.permute.xlu0 %5409
    %5411 = vrot.lane.b32.xlu0 %v4582, 64
    %v5412 = vpop.permute.xlu0 %5411
    %5413 = vrot.lane.b32.xlu0 %v4583, 64
    %v5414 = vpop.permute.xlu0 %5413
    %5415 = vrot.lane.b32.xlu0 %v4584, 64
    %v5416 = vpop.permute.xlu0 %5415
    %5545 = vrot.lane.b32.xlu0 %v4585, 96
    %v5546 = vpop.permute.xlu0 %5545
    %5547 = vrot.lane.b32.xlu0 %v4586, 96
    %v5548 = vpop.permute.xlu0 %5547
    %5549 = vrot.lane.b32.xlu0 %v4587, 96
    %v5550 = vpop.permute.xlu0 %5549
    %5551 = vrot.lane.b32.xlu0 %v4588, 96
    %v5552 = vpop.permute.xlu0 %5551
    %5553 = vrot.lane.b32.xlu0 %v4589, 96
    %v5554 = vpop.permute.xlu0 %5553
    %5555 = vrot.lane.b32.xlu0 %v4590, 96
    %v5556 = vpop.permute.xlu0 %5555
    %5557 = vrot.lane.b32.xlu0 %v4591, 96
    %v5558 = vpop.permute.xlu0 %5557
    %5559 = vrot.lane.b32.xlu0 %v4592, 96
    %v5560 = vpop.permute.xlu0 %5559
    %5561 = vrot.lane.b32.xlu0 %v4593, 96
    %v5562 = vpop.permute.xlu0 %5561
    %5563 = vrot.lane.b32.xlu0 %v4594, 96
    %v5564 = vpop.permute.xlu0 %5563
    %5565 = vrot.lane.b32.xlu0 %v4595, 96
    %v5566 = vpop.permute.xlu0 %5565
    %5567 = vrot.lane.b32.xlu0 %v4596, 96
    %v5568 = vpop.permute.xlu0 %5567
    %5569 = vrot.lane.b32.xlu0 %v4597, 96
    %v5570 = vpop.permute.xlu0 %5569
    %5571 = vrot.lane.b32.xlu0 %v4598, 96
    %v5572 = vpop.permute.xlu0 %5571
    %5573 = vrot.lane.b32.xlu0 %v4599, 96
    %v5574 = vpop.permute.xlu0 %5573
    %5575 = vrot.lane.b32.xlu0 %v4600, 96
    %v5576 = vpop.permute.xlu0 %5575
    %5577 = vrot.lane.b32.xlu0 %v4601, 96
    %v5578 = vpop.permute.xlu0 %5577
    %5579 = vrot.lane.b32.xlu0 %v4602, 96
    %v5580 = vpop.permute.xlu0 %5579
    %5581 = vrot.lane.b32.xlu0 %v4603, 96
    %v5582 = vpop.permute.xlu0 %5581
    %5583 = vrot.lane.b32.xlu0 %v4604, 96
    %v5584 = vpop.permute.xlu0 %5583
    %5585 = vrot.lane.b32.xlu0 %v4605, 96
    %v5586 = vpop.permute.xlu0 %5585
    %5587 = vrot.lane.b32.xlu0 %v4606, 96
    %v5588 = vpop.permute.xlu0 %5587
    %5589 = vrot.lane.b32.xlu0 %v4607, 96
    %v5590 = vpop.permute.xlu0 %5589
    %5591 = vrot.lane.b32.xlu0 %v4608, 96
    %v5592 = vpop.permute.xlu0 %5591
    %5593 = vrot.lane.b32.xlu0 %v4609, 96
    %v5594 = vpop.permute.xlu0 %5593
    %5595 = vrot.lane.b32.xlu0 %v4610, 96
    %v5596 = vpop.permute.xlu0 %5595
    %5597 = vrot.lane.b32.xlu0 %v4611, 96
    %v5598 = vpop.permute.xlu0 %5597
    %5599 = vrot.lane.b32.xlu0 %v4612, 96
    %v5600 = vpop.permute.xlu0 %5599
    %5601 = vrot.lane.b32.xlu0 %v4613, 96
    %v5602 = vpop.permute.xlu0 %5601
    %5603 = vrot.lane.b32.xlu0 %v4614, 96
    %v5604 = vpop.permute.xlu0 %5603
    %5605 = vrot.lane.b32.xlu0 %v4615, 96
    %v5606 = vpop.permute.xlu0 %5605
    %5607 = vrot.lane.b32.xlu0 %v4616, 96
    %v5608 = vpop.permute.xlu0 %5607
    %5609 = vrot.lane.b32.xlu0 %v4617, 96
    %v5610 = vpop.permute.xlu0 %5609
    %5611 = vrot.lane.b32.xlu0 %v4618, 96
    %v5612 = vpop.permute.xlu0 %5611
    %5613 = vrot.lane.b32.xlu0 %v4619, 96
    %v5614 = vpop.permute.xlu0 %5613
    %5615 = vrot.lane.b32.xlu0 %v4620, 96
    %v5616 = vpop.permute.xlu0 %5615
    %5617 = vrot.lane.b32.xlu0 %v4621, 96
    %v5618 = vpop.permute.xlu0 %5617
    %5619 = vrot.lane.b32.xlu0 %v4622, 96
    %v5620 = vpop.permute.xlu0 %5619
    %5621 = vrot.lane.b32.xlu0 %v4623, 96
    %v5622 = vpop.permute.xlu0 %5621
    %5623 = vrot.lane.b32.xlu0 %v4624, 96
    %v5624 = vpop.permute.xlu0 %5623
    %5625 = vrot.lane.b32.xlu0 %v4625, 96
    %v5626 = vpop.permute.xlu0 %5625
    %5627 = vrot.lane.b32.xlu0 %v4626, 96
    %v5628 = vpop.permute.xlu0 %5627
    %5629 = vrot.lane.b32.xlu0 %v4627, 96
    %v5630 = vpop.permute.xlu0 %5629
    %5631 = vrot.lane.b32.xlu0 %v4628, 96
    %v5632 = vpop.permute.xlu0 %5631
    %5633 = vrot.lane.b32.xlu0 %v4629, 96
    %v5634 = vpop.permute.xlu0 %5633
    %5635 = vrot.lane.b32.xlu0 %v4630, 96
    %v5636 = vpop.permute.xlu0 %5635
    %5637 = vrot.lane.b32.xlu0 %v4631, 96
    %v5638 = vpop.permute.xlu0 %5637
    %5639 = vrot.lane.b32.xlu0 %v4632, 96
    %v5640 = vpop.permute.xlu0 %5639
    %5641 = vrot.lane.b32.xlu0 %v4633, 96
    %v5642 = vpop.permute.xlu0 %5641
    %5643 = vrot.lane.b32.xlu0 %v4634, 96
    %v5644 = vpop.permute.xlu0 %5643
    %5645 = vrot.lane.b32.xlu0 %v4635, 96
    %v5646 = vpop.permute.xlu0 %5645
    %5647 = vrot.lane.b32.xlu0 %v4636, 96
    %v5648 = vpop.permute.xlu0 %5647
    %5649 = vrot.lane.b32.xlu0 %v4637, 96
    %v5650 = vpop.permute.xlu0 %5649
    %5651 = vrot.lane.b32.xlu0 %v4638, 96
    %v5652 = vpop.permute.xlu0 %5651
    %5653 = vrot.lane.b32.xlu0 %v4639, 96
    %v5654 = vpop.permute.xlu0 %5653
    %5655 = vrot.lane.b32.xlu0 %v4640, 96
    %v5656 = vpop.permute.xlu0 %5655
    %5657 = vrot.lane.b32.xlu0 %v4641, 96
    %v5658 = vpop.permute.xlu0 %5657
    %5659 = vrot.lane.b32.xlu0 %v4642, 96
    %v5660 = vpop.permute.xlu0 %5659
    %5661 = vrot.lane.b32.xlu0 %v4643, 96
    %v5662 = vpop.permute.xlu0 %5661
    %5663 = vrot.lane.b32.xlu0 %v4644, 96
    %v5664 = vpop.permute.xlu0 %5663
    %5665 = vrot.lane.b32.xlu0 %v4645, 96
    %v5666 = vpop.permute.xlu0 %5665
    %5667 = vrot.lane.b32.xlu0 %v4646, 96
    %v5668 = vpop.permute.xlu0 %5667
    %5669 = vrot.lane.b32.xlu0 %v4647, 96
    %v5670 = vpop.permute.xlu0 %5669
    %5671 = vrot.lane.b32.xlu0 %v4648, 96
    %v5672 = vpop.permute.xlu0 %5671
    %5801 = vrot.lane.b32.xlu0 %v4713, 32
    %v5802 = vpop.permute.xlu0 %5801
    %5803 = vrot.lane.b32.xlu0 %v4714, 32
    %v5804 = vpop.permute.xlu0 %5803
    %5805 = vrot.lane.b32.xlu0 %v4715, 32
    %v5806 = vpop.permute.xlu0 %5805
    %5807 = vrot.lane.b32.xlu0 %v4716, 32
    %v5808 = vpop.permute.xlu0 %5807
    %5809 = vrot.lane.b32.xlu0 %v4717, 32
    %v5810 = vpop.permute.xlu0 %5809
    %5811 = vrot.lane.b32.xlu0 %v4718, 32
    %v5812 = vpop.permute.xlu0 %5811
    %5813 = vrot.lane.b32.xlu0 %v4719, 32
    %v5814 = vpop.permute.xlu0 %5813
    %5815 = vrot.lane.b32.xlu0 %v4720, 32
    %v5816 = vpop.permute.xlu0 %5815
    %5817 = vrot.lane.b32.xlu0 %v4721, 32
    %v5818 = vpop.permute.xlu0 %5817
    %5819 = vrot.lane.b32.xlu0 %v4722, 32
    %v5820 = vpop.permute.xlu0 %5819
    %5821 = vrot.lane.b32.xlu0 %v4723, 32
    %v5822 = vpop.permute.xlu0 %5821
    %5823 = vrot.lane.b32.xlu0 %v4724, 32
    %v5824 = vpop.permute.xlu0 %5823
    %5825 = vrot.lane.b32.xlu0 %v4725, 32
    %v5826 = vpop.permute.xlu0 %5825
    %5827 = vrot.lane.b32.xlu0 %v4726, 32
    %v5828 = vpop.permute.xlu0 %5827
    %5829 = vrot.lane.b32.xlu0 %v4727, 32
    %v5830 = vpop.permute.xlu0 %5829
    %5831 = vrot.lane.b32.xlu0 %v4728, 32
    %v5832 = vpop.permute.xlu0 %5831
    %5833 = vrot.lane.b32.xlu0 %v4729, 32
    %v5834 = vpop.permute.xlu0 %5833
    %5835 = vrot.lane.b32.xlu0 %v4730, 32
    %v5836 = vpop.permute.xlu0 %5835
    %5837 = vrot.lane.b32.xlu0 %v4731, 32
    %v5838 = vpop.permute.xlu0 %5837
    %5839 = vrot.lane.b32.xlu0 %v4732, 32
    %v5840 = vpop.permute.xlu0 %5839
    %5841 = vrot.lane.b32.xlu0 %v4733, 32
    %v5842 = vpop.permute.xlu0 %5841
    %5843 = vrot.lane.b32.xlu0 %v4734, 32
    %v5844 = vpop.permute.xlu0 %5843
    %5845 = vrot.lane.b32.xlu0 %v4735, 32
    %v5846 = vpop.permute.xlu0 %5845
    %5847 = vrot.lane.b32.xlu0 %v4736, 32
    %v5848 = vpop.permute.xlu0 %5847
    %5849 = vrot.lane.b32.xlu0 %v4737, 32
    %v5850 = vpop.permute.xlu0 %5849
    %5851 = vrot.lane.b32.xlu0 %v4738, 32
    %v5852 = vpop.permute.xlu0 %5851
    %5853 = vrot.lane.b32.xlu0 %v4739, 32
    %v5854 = vpop.permute.xlu0 %5853
    %5855 = vrot.lane.b32.xlu0 %v4740, 32
    %v5856 = vpop.permute.xlu0 %5855
    %5857 = vrot.lane.b32.xlu0 %v4741, 32
    %v5858 = vpop.permute.xlu0 %5857
    %5859 = vrot.lane.b32.xlu0 %v4742, 32
    %v5860 = vpop.permute.xlu0 %5859
    %5861 = vrot.lane.b32.xlu0 %v4743, 32
    %v5862 = vpop.permute.xlu0 %5861
    %5863 = vrot.lane.b32.xlu0 %v4744, 32
    %v5864 = vpop.permute.xlu0 %5863
    %5865 = vrot.lane.b32.xlu0 %v4745, 32
    %v5866 = vpop.permute.xlu0 %5865
    %5867 = vrot.lane.b32.xlu0 %v4746, 32
    %v5868 = vpop.permute.xlu0 %5867
    %5869 = vrot.lane.b32.xlu0 %v4747, 32
    %v5870 = vpop.permute.xlu0 %5869
    %5871 = vrot.lane.b32.xlu0 %v4748, 32
    %v5872 = vpop.permute.xlu0 %5871
    %5873 = vrot.lane.b32.xlu0 %v4749, 32
    %v5874 = vpop.permute.xlu0 %5873
    %5875 = vrot.lane.b32.xlu0 %v4750, 32
    %v5876 = vpop.permute.xlu0 %5875
    %5877 = vrot.lane.b32.xlu0 %v4751, 32
    %v5878 = vpop.permute.xlu0 %5877
    %5879 = vrot.lane.b32.xlu0 %v4752, 32
    %v5880 = vpop.permute.xlu0 %5879
    %5881 = vrot.lane.b32.xlu0 %v4753, 32
    %v5882 = vpop.permute.xlu0 %5881
    %5883 = vrot.lane.b32.xlu0 %v4754, 32
    %v5884 = vpop.permute.xlu0 %5883
    %5885 = vrot.lane.b32.xlu0 %v4755, 32
    %v5886 = vpop.permute.xlu0 %5885
    %5887 = vrot.lane.b32.xlu0 %v4756, 32
    %v5888 = vpop.permute.xlu0 %5887
    %5889 = vrot.lane.b32.xlu0 %v4757, 32
    %v5890 = vpop.permute.xlu0 %5889
    %5891 = vrot.lane.b32.xlu0 %v4758, 32
    %v5892 = vpop.permute.xlu0 %5891
    %5893 = vrot.lane.b32.xlu0 %v4759, 32
    %v5894 = vpop.permute.xlu0 %5893
    %5895 = vrot.lane.b32.xlu0 %v4760, 32
    %v5896 = vpop.permute.xlu0 %5895
    %5897 = vrot.lane.b32.xlu0 %v4761, 32
    %v5898 = vpop.permute.xlu0 %5897
    %5899 = vrot.lane.b32.xlu0 %v4762, 32
    %v5900 = vpop.permute.xlu0 %5899
    %5901 = vrot.lane.b32.xlu0 %v4763, 32
    %v5902 = vpop.permute.xlu0 %5901
    %5903 = vrot.lane.b32.xlu0 %v4764, 32
    %v5904 = vpop.permute.xlu0 %5903
    %5905 = vrot.lane.b32.xlu0 %v4765, 32
    %v5906 = vpop.permute.xlu0 %5905
    %5907 = vrot.lane.b32.xlu0 %v4766, 32
    %v5908 = vpop.permute.xlu0 %5907
    %5909 = vrot.lane.b32.xlu0 %v4767, 32
    %v5910 = vpop.permute.xlu0 %5909
    %5911 = vrot.lane.b32.xlu0 %v4768, 32
    %v5912 = vpop.permute.xlu0 %5911
    %5913 = vrot.lane.b32.xlu0 %v4769, 32
    %v5914 = vpop.permute.xlu0 %5913
    %5915 = vrot.lane.b32.xlu0 %v4770, 32
    %v5916 = vpop.permute.xlu0 %5915
    %5917 = vrot.lane.b32.xlu0 %v4771, 32
    %v5918 = vpop.permute.xlu0 %5917
    %5919 = vrot.lane.b32.xlu0 %v4772, 32
    %v5920 = vpop.permute.xlu0 %5919
    %5921 = vrot.lane.b32.xlu0 %v4773, 32
    %v5922 = vpop.permute.xlu0 %5921
    %5923 = vrot.lane.b32.xlu0 %v4774, 32
    %v5924 = vpop.permute.xlu0 %5923
    %5925 = vrot.lane.b32.xlu0 %v4775, 32
    %v5926 = vpop.permute.xlu0 %5925
    %5927 = vrot.lane.b32.xlu0 %v4776, 32
    %v5928 = vpop.permute.xlu0 %5927
    %6057 = vrot.lane.b32.xlu0 %v4777, 64
    %v6058 = vpop.permute.xlu0 %6057
    %6059 = vrot.lane.b32.xlu0 %v4778, 64
    %v6060 = vpop.permute.xlu0 %6059
    %6061 = vrot.lane.b32.xlu0 %v4779, 64
    %v6062 = vpop.permute.xlu0 %6061
    %6063 = vrot.lane.b32.xlu0 %v4780, 64
    %v6064 = vpop.permute.xlu0 %6063
    %6065 = vrot.lane.b32.xlu0 %v4781, 64
    %v6066 = vpop.permute.xlu0 %6065
    %6067 = vrot.lane.b32.xlu0 %v4782, 64
    %v6068 = vpop.permute.xlu0 %6067
    %6069 = vrot.lane.b32.xlu0 %v4783, 64
    %v6070 = vpop.permute.xlu0 %6069
    %6071 = vrot.lane.b32.xlu0 %v4784, 64
    %v6072 = vpop.permute.xlu0 %6071
    %6073 = vrot.lane.b32.xlu0 %v4785, 64
    %v6074 = vpop.permute.xlu0 %6073
    %6075 = vrot.lane.b32.xlu0 %v4786, 64
    %v6076 = vpop.permute.xlu0 %6075
    %6077 = vrot.lane.b32.xlu0 %v4787, 64
    %v6078 = vpop.permute.xlu0 %6077
    %6079 = vrot.lane.b32.xlu0 %v4788, 64
    %v6080 = vpop.permute.xlu0 %6079
    %6081 = vrot.lane.b32.xlu0 %v4789, 64
    %v6082 = vpop.permute.xlu0 %6081
    %6083 = vrot.lane.b32.xlu0 %v4790, 64
    %v6084 = vpop.permute.xlu0 %6083
    %6085 = vrot.lane.b32.xlu0 %v4791, 64
    %v6086 = vpop.permute.xlu0 %6085
    %6087 = vrot.lane.b32.xlu0 %v4792, 64
    %v6088 = vpop.permute.xlu0 %6087
    %6089 = vrot.lane.b32.xlu0 %v4793, 64
    %v6090 = vpop.permute.xlu0 %6089
    %6091 = vrot.lane.b32.xlu0 %v4794, 64
    %v6092 = vpop.permute.xlu0 %6091
    %6093 = vrot.lane.b32.xlu0 %v4795, 64
    %v6094 = vpop.permute.xlu0 %6093
    %6095 = vrot.lane.b32.xlu0 %v4796, 64
    %v6096 = vpop.permute.xlu0 %6095
    %6097 = vrot.lane.b32.xlu0 %v4797, 64
    %v6098 = vpop.permute.xlu0 %6097
    %6099 = vrot.lane.b32.xlu0 %v4798, 64
    %v6100 = vpop.permute.xlu0 %6099
    %6101 = vrot.lane.b32.xlu0 %v4799, 64
    %v6102 = vpop.permute.xlu0 %6101
    %6103 = vrot.lane.b32.xlu0 %v4800, 64
    %v6104 = vpop.permute.xlu0 %6103
    %6105 = vrot.lane.b32.xlu0 %v4801, 64
    %v6106 = vpop.permute.xlu0 %6105
    %6107 = vrot.lane.b32.xlu0 %v4802, 64
    %v6108 = vpop.permute.xlu0 %6107
    %6109 = vrot.lane.b32.xlu0 %v4803, 64
    %v6110 = vpop.permute.xlu0 %6109
    %6111 = vrot.lane.b32.xlu0 %v4804, 64
    %v6112 = vpop.permute.xlu0 %6111
    %6113 = vrot.lane.b32.xlu0 %v4805, 64
    %v6114 = vpop.permute.xlu0 %6113
    %6115 = vrot.lane.b32.xlu0 %v4806, 64
    %v6116 = vpop.permute.xlu0 %6115
    %6117 = vrot.lane.b32.xlu0 %v4807, 64
    %v6118 = vpop.permute.xlu0 %6117
    %6119 = vrot.lane.b32.xlu0 %v4808, 64
    %v6120 = vpop.permute.xlu0 %6119
    %6121 = vrot.lane.b32.xlu0 %v4809, 64
    %v6122 = vpop.permute.xlu0 %6121
    %6123 = vrot.lane.b32.xlu0 %v4810, 64
    %v6124 = vpop.permute.xlu0 %6123
    %6125 = vrot.lane.b32.xlu0 %v4811, 64
    %v6126 = vpop.permute.xlu0 %6125
    %6127 = vrot.lane.b32.xlu0 %v4812, 64
    %v6128 = vpop.permute.xlu0 %6127
    %6129 = vrot.lane.b32.xlu0 %v4813, 64
    %v6130 = vpop.permute.xlu0 %6129
    %6131 = vrot.lane.b32.xlu0 %v4814, 64
    %v6132 = vpop.permute.xlu0 %6131
    %6133 = vrot.lane.b32.xlu0 %v4815, 64
    %v6134 = vpop.permute.xlu0 %6133
    %6135 = vrot.lane.b32.xlu0 %v4816, 64
    %v6136 = vpop.permute.xlu0 %6135
    %6137 = vrot.lane.b32.xlu0 %v4817, 64
    %v6138 = vpop.permute.xlu0 %6137
    %6139 = vrot.lane.b32.xlu0 %v4818, 64
    %v6140 = vpop.permute.xlu0 %6139
    %6141 = vrot.lane.b32.xlu0 %v4819, 64
    %v6142 = vpop.permute.xlu0 %6141
    %6143 = vrot.lane.b32.xlu0 %v4820, 64
    %v6144 = vpop.permute.xlu0 %6143
    %6145 = vrot.lane.b32.xlu0 %v4821, 64
    %v6146 = vpop.permute.xlu0 %6145
    %6147 = vrot.lane.b32.xlu0 %v4822, 64
    %v6148 = vpop.permute.xlu0 %6147
    %6149 = vrot.lane.b32.xlu0 %v4823, 64
    %v6150 = vpop.permute.xlu0 %6149
    %6151 = vrot.lane.b32.xlu0 %v4824, 64
    %v6152 = vpop.permute.xlu0 %6151
    %6153 = vrot.lane.b32.xlu0 %v4825, 64
    %v6154 = vpop.permute.xlu0 %6153
    %6155 = vrot.lane.b32.xlu0 %v4826, 64
    %v6156 = vpop.permute.xlu0 %6155
    %6157 = vrot.lane.b32.xlu0 %v4827, 64
    %v6158 = vpop.permute.xlu0 %6157
    %6159 = vrot.lane.b32.xlu0 %v4828, 64
    %v6160 = vpop.permute.xlu0 %6159
    %6161 = vrot.lane.b32.xlu0 %v4829, 64
    %v6162 = vpop.permute.xlu0 %6161
    %6163 = vrot.lane.b32.xlu0 %v4830, 64
    %v6164 = vpop.permute.xlu0 %6163
    %6165 = vrot.lane.b32.xlu0 %v4831, 64
    %v6166 = vpop.permute.xlu0 %6165
    %6167 = vrot.lane.b32.xlu0 %v4832, 64
    %v6168 = vpop.permute.xlu0 %6167
    %6169 = vrot.lane.b32.xlu0 %v4833, 64
    %v6170 = vpop.permute.xlu0 %6169
    %6171 = vrot.lane.b32.xlu0 %v4834, 64
    %v6172 = vpop.permute.xlu0 %6171
    %6173 = vrot.lane.b32.xlu0 %v4835, 64
    %v6174 = vpop.permute.xlu0 %6173
    %6175 = vrot.lane.b32.xlu0 %v4836, 64
    %v6176 = vpop.permute.xlu0 %6175
    %6177 = vrot.lane.b32.xlu0 %v4837, 64
    %v6178 = vpop.permute.xlu0 %6177
    %6179 = vrot.lane.b32.xlu0 %v4838, 64
    %v6180 = vpop.permute.xlu0 %6179
    %6181 = vrot.lane.b32.xlu0 %v4839, 64
    %v6182 = vpop.permute.xlu0 %6181
    %6183 = vrot.lane.b32.xlu0 %v4840, 64
    %v6184 = vpop.permute.xlu0 %6183
    %6313 = vrot.lane.b32.xlu0 %v4841, 96
    %v6314 = vpop.permute.xlu0 %6313
    %6315 = vrot.lane.b32.xlu0 %v4842, 96
    %v6316 = vpop.permute.xlu0 %6315
    %6317 = vrot.lane.b32.xlu0 %v4843, 96
    %v6318 = vpop.permute.xlu0 %6317
    %6319 = vrot.lane.b32.xlu0 %v4844, 96
    %v6320 = vpop.permute.xlu0 %6319
    %6321 = vrot.lane.b32.xlu0 %v4845, 96
    %v6322 = vpop.permute.xlu0 %6321
    %6323 = vrot.lane.b32.xlu0 %v4846, 96
    %v6324 = vpop.permute.xlu0 %6323
    %6325 = vrot.lane.b32.xlu0 %v4847, 96
    %v6326 = vpop.permute.xlu0 %6325
    %6327 = vrot.lane.b32.xlu0 %v4848, 96
    %v6328 = vpop.permute.xlu0 %6327
    %6329 = vrot.lane.b32.xlu0 %v4849, 96
    %v6330 = vpop.permute.xlu0 %6329
    %6331 = vrot.lane.b32.xlu0 %v4850, 96
    %v6332 = vpop.permute.xlu0 %6331
    %6333 = vrot.lane.b32.xlu0 %v4851, 96
    %v6334 = vpop.permute.xlu0 %6333
    %6335 = vrot.lane.b32.xlu0 %v4852, 96
    %v6336 = vpop.permute.xlu0 %6335
    %6337 = vrot.lane.b32.xlu0 %v4853, 96
    %v6338 = vpop.permute.xlu0 %6337
    %6339 = vrot.lane.b32.xlu0 %v4854, 96
    %v6340 = vpop.permute.xlu0 %6339
    %6341 = vrot.lane.b32.xlu0 %v4855, 96
    %v6342 = vpop.permute.xlu0 %6341
    %6343 = vrot.lane.b32.xlu0 %v4856, 96
    %v6344 = vpop.permute.xlu0 %6343
    %6345 = vrot.lane.b32.xlu0 %v4857, 96
    %v6346 = vpop.permute.xlu0 %6345
    %6347 = vrot.lane.b32.xlu0 %v4858, 96
    %v6348 = vpop.permute.xlu0 %6347
    %6349 = vrot.lane.b32.xlu0 %v4859, 96
    %v6350 = vpop.permute.xlu0 %6349
    %6351 = vrot.lane.b32.xlu0 %v4860, 96
    %v6352 = vpop.permute.xlu0 %6351
    %6353 = vrot.lane.b32.xlu0 %v4861, 96
    %v6354 = vpop.permute.xlu0 %6353
    %6355 = vrot.lane.b32.xlu0 %v4862, 96
    %v6356 = vpop.permute.xlu0 %6355
    %6357 = vrot.lane.b32.xlu0 %v4863, 96
    %v6358 = vpop.permute.xlu0 %6357
    %6359 = vrot.lane.b32.xlu0 %v4864, 96
    %v6360 = vpop.permute.xlu0 %6359
    %6361 = vrot.lane.b32.xlu0 %v4865, 96
    %v6362 = vpop.permute.xlu0 %6361
    %6363 = vrot.lane.b32.xlu0 %v4866, 96
    %v6364 = vpop.permute.xlu0 %6363
    %6365 = vrot.lane.b32.xlu0 %v4867, 96
    %v6366 = vpop.permute.xlu0 %6365
    %6367 = vrot.lane.b32.xlu0 %v4868, 96
    %v6368 = vpop.permute.xlu0 %6367
    %6369 = vrot.lane.b32.xlu0 %v4869, 96
    %v6370 = vpop.permute.xlu0 %6369
    %6371 = vrot.lane.b32.xlu0 %v4870, 96
    %v6372 = vpop.permute.xlu0 %6371
    %6373 = vrot.lane.b32.xlu0 %v4871, 96
    %v6374 = vpop.permute.xlu0 %6373
    %6375 = vrot.lane.b32.xlu0 %v4872, 96
    %v6376 = vpop.permute.xlu0 %6375
    %6377 = vrot.lane.b32.xlu0 %v4873, 96
    %v6378 = vpop.permute.xlu0 %6377
    %6379 = vrot.lane.b32.xlu0 %v4874, 96
    %v6380 = vpop.permute.xlu0 %6379
    %6381 = vrot.lane.b32.xlu0 %v4875, 96
    %v6382 = vpop.permute.xlu0 %6381
    %6383 = vrot.lane.b32.xlu0 %v4876, 96
    %v6384 = vpop.permute.xlu0 %6383
    %6385 = vrot.lane.b32.xlu0 %v4877, 96
    %v6386 = vpop.permute.xlu0 %6385
    %6387 = vrot.lane.b32.xlu0 %v4878, 96
    %v6388 = vpop.permute.xlu0 %6387
    %6389 = vrot.lane.b32.xlu0 %v4879, 96
    %v6390 = vpop.permute.xlu0 %6389
    %6391 = vrot.lane.b32.xlu0 %v4880, 96
    %v6392 = vpop.permute.xlu0 %6391
    %6393 = vrot.lane.b32.xlu0 %v4881, 96
    %v6394 = vpop.permute.xlu0 %6393
    %6395 = vrot.lane.b32.xlu0 %v4882, 96
    %v6396 = vpop.permute.xlu0 %6395
    %6397 = vrot.lane.b32.xlu0 %v4883, 96
    %v6398 = vpop.permute.xlu0 %6397
    %6399 = vrot.lane.b32.xlu0 %v4884, 96
    %v6400 = vpop.permute.xlu0 %6399
    %6401 = vrot.lane.b32.xlu0 %v4885, 96
    %v6402 = vpop.permute.xlu0 %6401
    %6403 = vrot.lane.b32.xlu0 %v4886, 96
    %v6404 = vpop.permute.xlu0 %6403
    %6405 = vrot.lane.b32.xlu0 %v4887, 96
    %v6406 = vpop.permute.xlu0 %6405
    %6407 = vrot.lane.b32.xlu0 %v4888, 96
    %v6408 = vpop.permute.xlu0 %6407
    %6409 = vrot.lane.b32.xlu0 %v4889, 96
    %v6410 = vpop.permute.xlu0 %6409
    %6411 = vrot.lane.b32.xlu0 %v4890, 96
    %v6412 = vpop.permute.xlu0 %6411
    %6413 = vrot.lane.b32.xlu0 %v4891, 96
    %v6414 = vpop.permute.xlu0 %6413
    %6415 = vrot.lane.b32.xlu0 %v4892, 96
    %v6416 = vpop.permute.xlu0 %6415
    %6417 = vrot.lane.b32.xlu0 %v4893, 96
    %v6418 = vpop.permute.xlu0 %6417
    %6419 = vrot.lane.b32.xlu0 %v4894, 96
    %v6420 = vpop.permute.xlu0 %6419
    %6421 = vrot.lane.b32.xlu0 %v4895, 96
    %v6422 = vpop.permute.xlu0 %6421
    %6423 = vrot.lane.b32.xlu0 %v4896, 96
    %v6424 = vpop.permute.xlu0 %6423
    %6425 = vrot.lane.b32.xlu0 %v4897, 96
    %v6426 = vpop.permute.xlu0 %6425
    %6427 = vrot.lane.b32.xlu0 %v4898, 96
    %v6428 = vpop.permute.xlu0 %6427
    %6429 = vrot.lane.b32.xlu0 %v4899, 96
    %v6430 = vpop.permute.xlu0 %6429
    %6431 = vrot.lane.b32.xlu0 %v4900, 96
    %v6432 = vpop.permute.xlu0 %6431
    %6433 = vrot.lane.b32.xlu0 %v4901, 96
    %v6434 = vpop.permute.xlu0 %6433
    %6435 = vrot.lane.b32.xlu0 %v4902, 96
    %v6436 = vpop.permute.xlu0 %6435
    %6437 = vrot.lane.b32.xlu0 %v4903, 96
    %v6438 = vpop.permute.xlu0 %6437
    %6439 = vrot.lane.b32.xlu0 %v4904, 96
    %v6440 = vpop.permute.xlu0 %6439
    %v6505 = vsel %vm31, %v4393, %v5034
    %v6506 = vsel %vm31, %v4394, %v5036
    %v6507 = vsel %vm31, %v4395, %v5038
    %v6508 = vsel %vm31, %v4396, %v5040
    %v6509 = vsel %vm31, %v4397, %v5042
    %v6510 = vsel %vm31, %v4398, %v5044
    %v6511 = vsel %vm31, %v4399, %v5046
    %v6512 = vsel %vm31, %v4400, %v5048
    %v6513 = vsel %vm31, %v4401, %v5050
    %v6514 = vsel %vm31, %v4402, %v5052
    %v6515 = vsel %vm31, %v4403, %v5054
    %v6516 = vsel %vm31, %v4404, %v5056
    %v6517 = vsel %vm31, %v4405, %v5058
    %v6518 = vsel %vm31, %v4406, %v5060
    %v6519 = vsel %vm31, %v4407, %v5062
    %v6520 = vsel %vm31, %v4408, %v5064
    %v6521 = vsel %vm31, %v4409, %v5066
    %v6522 = vsel %vm31, %v4410, %v5068
    %v6523 = vsel %vm31, %v4411, %v5070
    %v6524 = vsel %vm31, %v4412, %v5072
    %v6525 = vsel %vm31, %v4413, %v5074
    %v6526 = vsel %vm31, %v4414, %v5076
    %v6527 = vsel %vm31, %v4415, %v5078
    %v6528 = vsel %vm31, %v4416, %v5080
    %v6529 = vsel %vm31, %v4417, %v5082
    %v6530 = vsel %vm31, %v4418, %v5084
    %v6531 = vsel %vm31, %v4419, %v5086
    %v6532 = vsel %vm31, %v4420, %v5088
    %v6533 = vsel %vm31, %v4421, %v5090
    %v6534 = vsel %vm31, %v4422, %v5092
    %v6535 = vsel %vm31, %v4423, %v5094
    %v6536 = vsel %vm31, %v4424, %v5096
    %v6537 = vsel %vm31, %v4425, %v5098
    %v6538 = vsel %vm31, %v4426, %v5100
    %v6539 = vsel %vm31, %v4427, %v5102
    %v6540 = vsel %vm31, %v4428, %v5104
    %v6541 = vsel %vm31, %v4429, %v5106
    %v6542 = vsel %vm31, %v4430, %v5108
    %v6543 = vsel %vm31, %v4431, %v5110
    %v6544 = vsel %vm31, %v4432, %v5112
    %v6545 = vsel %vm31, %v4433, %v5114
    %v6546 = vsel %vm31, %v4434, %v5116
    %v6547 = vsel %vm31, %v4435, %v5118
    %v6548 = vsel %vm31, %v4436, %v5120
    %v6549 = vsel %vm31, %v4437, %v5122
    %v6550 = vsel %vm31, %v4438, %v5124
    %v6551 = vsel %vm31, %v4439, %v5126
    %v6552 = vsel %vm31, %v4440, %v5128
    %v6553 = vsel %vm31, %v4441, %v5130
    %v6554 = vsel %vm31, %v4442, %v5132
    %v6555 = vsel %vm31, %v4443, %v5134
    %v6556 = vsel %vm31, %v4444, %v5136
    %v6557 = vsel %vm31, %v4445, %v5138
    %v6558 = vsel %vm31, %v4446, %v5140
    %v6559 = vsel %vm31, %v4447, %v5142
    %v6560 = vsel %vm31, %v4448, %v5144
    %v6561 = vsel %vm31, %v4449, %v5146
    %v6562 = vsel %vm31, %v4450, %v5148
    %v6563 = vsel %vm31, %v4451, %v5150
    %v6564 = vsel %vm31, %v4452, %v5152
    %v6565 = vsel %vm31, %v4453, %v5154
    %v6566 = vsel %vm31, %v4454, %v5156
    %v6567 = vsel %vm31, %v4455, %v5158
    %v6568 = vsel %vm31, %v4456, %v5160
    %v6569 = vsel %vm2482, %v6505, %v5290
    %v6570 = vsel %vm2482, %v6506, %v5292
    %v6571 = vsel %vm2482, %v6507, %v5294
    %v6572 = vsel %vm2482, %v6508, %v5296
    %v6573 = vsel %vm2482, %v6509, %v5298
    %v6574 = vsel %vm2482, %v6510, %v5300
    %v6575 = vsel %vm2482, %v6511, %v5302
    %v6576 = vsel %vm2482, %v6512, %v5304
    %v6577 = vsel %vm2482, %v6513, %v5306
    %v6578 = vsel %vm2482, %v6514, %v5308
    %v6579 = vsel %vm2482, %v6515, %v5310
    %v6580 = vsel %vm2482, %v6516, %v5312
    %v6581 = vsel %vm2482, %v6517, %v5314
    %v6582 = vsel %vm2482, %v6518, %v5316
    %v6583 = vsel %vm2482, %v6519, %v5318
    %v6584 = vsel %vm2482, %v6520, %v5320
    %v6585 = vsel %vm2482, %v6521, %v5322
    %v6586 = vsel %vm2482, %v6522, %v5324
    %v6587 = vsel %vm2482, %v6523, %v5326
    %v6588 = vsel %vm2482, %v6524, %v5328
    %v6589 = vsel %vm2482, %v6525, %v5330
    %v6590 = vsel %vm2482, %v6526, %v5332
    %v6591 = vsel %vm2482, %v6527, %v5334
    %v6592 = vsel %vm2482, %v6528, %v5336
    %v6593 = vsel %vm2482, %v6529, %v5338
    %v6594 = vsel %vm2482, %v6530, %v5340
    %v6595 = vsel %vm2482, %v6531, %v5342
    %v6596 = vsel %vm2482, %v6532, %v5344
    %v6597 = vsel %vm2482, %v6533, %v5346
    %v6598 = vsel %vm2482, %v6534, %v5348
    %v6599 = vsel %vm2482, %v6535, %v5350
    %v6600 = vsel %vm2482, %v6536, %v5352
    %v6601 = vsel %vm2482, %v6537, %v5354
    %v6602 = vsel %vm2482, %v6538, %v5356
    %v6603 = vsel %vm2482, %v6539, %v5358
    %v6604 = vsel %vm2482, %v6540, %v5360
    %v6605 = vsel %vm2482, %v6541, %v5362
    %v6606 = vsel %vm2482, %v6542, %v5364
    %v6607 = vsel %vm2482, %v6543, %v5366
    %v6608 = vsel %vm2482, %v6544, %v5368
    %v6609 = vsel %vm2482, %v6545, %v5370
    %v6610 = vsel %vm2482, %v6546, %v5372
    %v6611 = vsel %vm2482, %v6547, %v5374
    %v6612 = vsel %vm2482, %v6548, %v5376
    %v6613 = vsel %vm2482, %v6549, %v5378
    %v6614 = vsel %vm2482, %v6550, %v5380
    %v6615 = vsel %vm2482, %v6551, %v5382
    %v6616 = vsel %vm2482, %v6552, %v5384
    %v6617 = vsel %vm2482, %v6553, %v5386
    %v6618 = vsel %vm2482, %v6554, %v5388
    %v6619 = vsel %vm2482, %v6555, %v5390
    %v6620 = vsel %vm2482, %v6556, %v5392
    %v6621 = vsel %vm2482, %v6557, %v5394
    %v6622 = vsel %vm2482, %v6558, %v5396
    %v6623 = vsel %vm2482, %v6559, %v5398
    %v6624 = vsel %vm2482, %v6560, %v5400
    %v6625 = vsel %vm2482, %v6561, %v5402
    %v6626 = vsel %vm2482, %v6562, %v5404
    %v6627 = vsel %vm2482, %v6563, %v5406
    %v6628 = vsel %vm2482, %v6564, %v5408
    %v6629 = vsel %vm2482, %v6565, %v5410
    %v6630 = vsel %vm2482, %v6566, %v5412
    %v6631 = vsel %vm2482, %v6567, %v5414
    %v6632 = vsel %vm2482, %v6568, %v5416
    %v6633 = vsel %vm2547, %v6569, %v5546
    %v6634 = vsel %vm2547, %v6570, %v5548
    %v6635 = vsel %vm2547, %v6571, %v5550
    %v6636 = vsel %vm2547, %v6572, %v5552
    %v6637 = vsel %vm2547, %v6573, %v5554
    %v6638 = vsel %vm2547, %v6574, %v5556
    %v6639 = vsel %vm2547, %v6575, %v5558
    %v6640 = vsel %vm2547, %v6576, %v5560
    %v6641 = vsel %vm2547, %v6577, %v5562
    %v6642 = vsel %vm2547, %v6578, %v5564
    %v6643 = vsel %vm2547, %v6579, %v5566
    %v6644 = vsel %vm2547, %v6580, %v5568
    %v6645 = vsel %vm2547, %v6581, %v5570
    %v6646 = vsel %vm2547, %v6582, %v5572
    %v6647 = vsel %vm2547, %v6583, %v5574
    %v6648 = vsel %vm2547, %v6584, %v5576
    %v6649 = vsel %vm2547, %v6585, %v5578
    %v6650 = vsel %vm2547, %v6586, %v5580
    %v6651 = vsel %vm2547, %v6587, %v5582
    %v6652 = vsel %vm2547, %v6588, %v5584
    %v6653 = vsel %vm2547, %v6589, %v5586
    %v6654 = vsel %vm2547, %v6590, %v5588
    %v6655 = vsel %vm2547, %v6591, %v5590
    %v6656 = vsel %vm2547, %v6592, %v5592
    %v6657 = vsel %vm2547, %v6593, %v5594
    %v6658 = vsel %vm2547, %v6594, %v5596
    %v6659 = vsel %vm2547, %v6595, %v5598
    %v6660 = vsel %vm2547, %v6596, %v5600
    %v6661 = vsel %vm2547, %v6597, %v5602
    %v6662 = vsel %vm2547, %v6598, %v5604
    %v6663 = vsel %vm2547, %v6599, %v5606
    %v6664 = vsel %vm2547, %v6600, %v5608
    %v6665 = vsel %vm2547, %v6601, %v5610
    %v6666 = vsel %vm2547, %v6602, %v5612
    %v6667 = vsel %vm2547, %v6603, %v5614
    %v6668 = vsel %vm2547, %v6604, %v5616
    %v6669 = vsel %vm2547, %v6605, %v5618
    %v6670 = vsel %vm2547, %v6606, %v5620
    %v6671 = vsel %vm2547, %v6607, %v5622
    %v6672 = vsel %vm2547, %v6608, %v5624
    %v6673 = vsel %vm2547, %v6609, %v5626
    %v6674 = vsel %vm2547, %v6610, %v5628
    %v6675 = vsel %vm2547, %v6611, %v5630
    %v6676 = vsel %vm2547, %v6612, %v5632
    %v6677 = vsel %vm2547, %v6613, %v5634
    %v6678 = vsel %vm2547, %v6614, %v5636
    %v6679 = vsel %vm2547, %v6615, %v5638
    %v6680 = vsel %vm2547, %v6616, %v5640
    %v6681 = vsel %vm2547, %v6617, %v5642
    %v6682 = vsel %vm2547, %v6618, %v5644
    %v6683 = vsel %vm2547, %v6619, %v5646
    %v6684 = vsel %vm2547, %v6620, %v5648
    %v6685 = vsel %vm2547, %v6621, %v5650
    %v6686 = vsel %vm2547, %v6622, %v5652
    %v6687 = vsel %vm2547, %v6623, %v5654
    %v6688 = vsel %vm2547, %v6624, %v5656
    %v6689 = vsel %vm2547, %v6625, %v5658
    %v6690 = vsel %vm2547, %v6626, %v5660
    %v6691 = vsel %vm2547, %v6627, %v5662
    %v6692 = vsel %vm2547, %v6628, %v5664
    %v6693 = vsel %vm2547, %v6629, %v5666
    %v6694 = vsel %vm2547, %v6630, %v5668
    %v6695 = vsel %vm2547, %v6631, %v5670
    %v6696 = vsel %vm2547, %v6632, %v5672
    %v6697 = vsel %vm31, %v4649, %v5802
    %v6698 = vsel %vm31, %v4650, %v5804
    %v6699 = vsel %vm31, %v4651, %v5806
    %v6700 = vsel %vm31, %v4652, %v5808
    %v6701 = vsel %vm31, %v4653, %v5810
    %v6702 = vsel %vm31, %v4654, %v5812
    %v6703 = vsel %vm31, %v4655, %v5814
    %v6704 = vsel %vm31, %v4656, %v5816
    %v6705 = vsel %vm31, %v4657, %v5818
    %v6706 = vsel %vm31, %v4658, %v5820
    %v6707 = vsel %vm31, %v4659, %v5822
    %v6708 = vsel %vm31, %v4660, %v5824
    %v6709 = vsel %vm31, %v4661, %v5826
    %v6710 = vsel %vm31, %v4662, %v5828
    %v6711 = vsel %vm31, %v4663, %v5830
    %v6712 = vsel %vm31, %v4664, %v5832
    %v6713 = vsel %vm31, %v4665, %v5834
    %v6714 = vsel %vm31, %v4666, %v5836
    %v6715 = vsel %vm31, %v4667, %v5838
    %v6716 = vsel %vm31, %v4668, %v5840
    %v6717 = vsel %vm31, %v4669, %v5842
    %v6718 = vsel %vm31, %v4670, %v5844
    %v6719 = vsel %vm31, %v4671, %v5846
    %v6720 = vsel %vm31, %v4672, %v5848
    %v6721 = vsel %vm31, %v4673, %v5850
    %v6722 = vsel %vm31, %v4674, %v5852
    %v6723 = vsel %vm31, %v4675, %v5854
    %v6724 = vsel %vm31, %v4676, %v5856
    %v6725 = vsel %vm31, %v4677, %v5858
    %v6726 = vsel %vm31, %v4678, %v5860
    %v6727 = vsel %vm31, %v4679, %v5862
    %v6728 = vsel %vm31, %v4680, %v5864
    %v6729 = vsel %vm31, %v4681, %v5866
    %v6730 = vsel %vm31, %v4682, %v5868
    %v6731 = vsel %vm31, %v4683, %v5870
    %v6732 = vsel %vm31, %v4684, %v5872
    %v6733 = vsel %vm31, %v4685, %v5874
    %v6734 = vsel %vm31, %v4686, %v5876
    %v6735 = vsel %vm31, %v4687, %v5878
    %v6736 = vsel %vm31, %v4688, %v5880
    %v6737 = vsel %vm31, %v4689, %v5882
    %v6738 = vsel %vm31, %v4690, %v5884
    %v6739 = vsel %vm31, %v4691, %v5886
    %v6740 = vsel %vm31, %v4692, %v5888
    %v6741 = vsel %vm31, %v4693, %v5890
    %v6742 = vsel %vm31, %v4694, %v5892
    %v6743 = vsel %vm31, %v4695, %v5894
    %v6744 = vsel %vm31, %v4696, %v5896
    %v6745 = vsel %vm31, %v4697, %v5898
    %v6746 = vsel %vm31, %v4698, %v5900
    %v6747 = vsel %vm31, %v4699, %v5902
    %v6748 = vsel %vm31, %v4700, %v5904
    %v6749 = vsel %vm31, %v4701, %v5906
    %v6750 = vsel %vm31, %v4702, %v5908
    %v6751 = vsel %vm31, %v4703, %v5910
    %v6752 = vsel %vm31, %v4704, %v5912
    %v6753 = vsel %vm31, %v4705, %v5914
    %v6754 = vsel %vm31, %v4706, %v5916
    %v6755 = vsel %vm31, %v4707, %v5918
    %v6756 = vsel %vm31, %v4708, %v5920
    %v6757 = vsel %vm31, %v4709, %v5922
    %v6758 = vsel %vm31, %v4710, %v5924
    %v6759 = vsel %vm31, %v4711, %v5926
    %v6760 = vsel %vm31, %v4712, %v5928
    %v6761 = vsel %vm2482, %v6697, %v6058
    %v6762 = vsel %vm2482, %v6698, %v6060
    %v6763 = vsel %vm2482, %v6699, %v6062
    %v6764 = vsel %vm2482, %v6700, %v6064
    %v6765 = vsel %vm2482, %v6701, %v6066
    %v6766 = vsel %vm2482, %v6702, %v6068
    %v6767 = vsel %vm2482, %v6703, %v6070
    %v6768 = vsel %vm2482, %v6704, %v6072
    %v6769 = vsel %vm2482, %v6705, %v6074
    %v6770 = vsel %vm2482, %v6706, %v6076
    %v6771 = vsel %vm2482, %v6707, %v6078
    %v6772 = vsel %vm2482, %v6708, %v6080
    %v6773 = vsel %vm2482, %v6709, %v6082
    %v6774 = vsel %vm2482, %v6710, %v6084
    %v6775 = vsel %vm2482, %v6711, %v6086
    %v6776 = vsel %vm2482, %v6712, %v6088
    %v6777 = vsel %vm2482, %v6713, %v6090
    %v6778 = vsel %vm2482, %v6714, %v6092
    %v6779 = vsel %vm2482, %v6715, %v6094
    %v6780 = vsel %vm2482, %v6716, %v6096
    %v6781 = vsel %vm2482, %v6717, %v6098
    %v6782 = vsel %vm2482, %v6718, %v6100
    %v6783 = vsel %vm2482, %v6719, %v6102
    %v6784 = vsel %vm2482, %v6720, %v6104
    %v6785 = vsel %vm2482, %v6721, %v6106
    %v6786 = vsel %vm2482, %v6722, %v6108
    %v6787 = vsel %vm2482, %v6723, %v6110
    %v6788 = vsel %vm2482, %v6724, %v6112
    %v6789 = vsel %vm2482, %v6725, %v6114
    %v6790 = vsel %vm2482, %v6726, %v6116
    %v6791 = vsel %vm2482, %v6727, %v6118
    %v6792 = vsel %vm2482, %v6728, %v6120
    %v6793 = vsel %vm2482, %v6729, %v6122
    %v6794 = vsel %vm2482, %v6730, %v6124
    %v6795 = vsel %vm2482, %v6731, %v6126
    %v6796 = vsel %vm2482, %v6732, %v6128
    %v6797 = vsel %vm2482, %v6733, %v6130
    %v6798 = vsel %vm2482, %v6734, %v6132
    %v6799 = vsel %vm2482, %v6735, %v6134
    %v6800 = vsel %vm2482, %v6736, %v6136
    %v6801 = vsel %vm2482, %v6737, %v6138
    %v6802 = vsel %vm2482, %v6738, %v6140
    %v6803 = vsel %vm2482, %v6739, %v6142
    %v6804 = vsel %vm2482, %v6740, %v6144
    %v6805 = vsel %vm2482, %v6741, %v6146
    %v6806 = vsel %vm2482, %v6742, %v6148
    %v6807 = vsel %vm2482, %v6743, %v6150
    %v6808 = vsel %vm2482, %v6744, %v6152
    %v6809 = vsel %vm2482, %v6745, %v6154
    %v6810 = vsel %vm2482, %v6746, %v6156
    %v6811 = vsel %vm2482, %v6747, %v6158
    %v6812 = vsel %vm2482, %v6748, %v6160
    %v6813 = vsel %vm2482, %v6749, %v6162
    %v6814 = vsel %vm2482, %v6750, %v6164
    %v6815 = vsel %vm2482, %v6751, %v6166
    %v6816 = vsel %vm2482, %v6752, %v6168
    %v6817 = vsel %vm2482, %v6753, %v6170
    %v6818 = vsel %vm2482, %v6754, %v6172
    %v6819 = vsel %vm2482, %v6755, %v6174
    %v6820 = vsel %vm2482, %v6756, %v6176
    %v6821 = vsel %vm2482, %v6757, %v6178
    %v6822 = vsel %vm2482, %v6758, %v6180
    %v6823 = vsel %vm2482, %v6759, %v6182
    %v6824 = vsel %vm2482, %v6760, %v6184
    %v6825 = vsel %vm2547, %v6761, %v6314
    %v6826 = vsel %vm2547, %v6762, %v6316
    %v6827 = vsel %vm2547, %v6763, %v6318
    %v6828 = vsel %vm2547, %v6764, %v6320
    %v6829 = vsel %vm2547, %v6765, %v6322
    %v6830 = vsel %vm2547, %v6766, %v6324
    %v6831 = vsel %vm2547, %v6767, %v6326
    %v6832 = vsel %vm2547, %v6768, %v6328
    %v6833 = vsel %vm2547, %v6769, %v6330
    %v6834 = vsel %vm2547, %v6770, %v6332
    %v6835 = vsel %vm2547, %v6771, %v6334
    %v6836 = vsel %vm2547, %v6772, %v6336
    %v6837 = vsel %vm2547, %v6773, %v6338
    %v6838 = vsel %vm2547, %v6774, %v6340
    %v6839 = vsel %vm2547, %v6775, %v6342
    %v6840 = vsel %vm2547, %v6776, %v6344
    %v6841 = vsel %vm2547, %v6777, %v6346
    %v6842 = vsel %vm2547, %v6778, %v6348
    %v6843 = vsel %vm2547, %v6779, %v6350
    %v6844 = vsel %vm2547, %v6780, %v6352
    %v6845 = vsel %vm2547, %v6781, %v6354
    %v6846 = vsel %vm2547, %v6782, %v6356
    %v6847 = vsel %vm2547, %v6783, %v6358
    %v6848 = vsel %vm2547, %v6784, %v6360
    %v6849 = vsel %vm2547, %v6785, %v6362
    %v6850 = vsel %vm2547, %v6786, %v6364
    %v6851 = vsel %vm2547, %v6787, %v6366
    %v6852 = vsel %vm2547, %v6788, %v6368
    %v6853 = vsel %vm2547, %v6789, %v6370
    %v6854 = vsel %vm2547, %v6790, %v6372
    %v6855 = vsel %vm2547, %v6791, %v6374
    %v6856 = vsel %vm2547, %v6792, %v6376
    %v6857 = vsel %vm2547, %v6793, %v6378
    %v6858 = vsel %vm2547, %v6794, %v6380
    %v6859 = vsel %vm2547, %v6795, %v6382
    %v6860 = vsel %vm2547, %v6796, %v6384
    %v6861 = vsel %vm2547, %v6797, %v6386
    %v6862 = vsel %vm2547, %v6798, %v6388
    %v6863 = vsel %vm2547, %v6799, %v6390
    %v6864 = vsel %vm2547, %v6800, %v6392
    %v6865 = vsel %vm2547, %v6801, %v6394
    %v6866 = vsel %vm2547, %v6802, %v6396
    %v6867 = vsel %vm2547, %v6803, %v6398
    %v6868 = vsel %vm2547, %v6804, %v6400
    %v6869 = vsel %vm2547, %v6805, %v6402
    %v6870 = vsel %vm2547, %v6806, %v6404
    %v6871 = vsel %vm2547, %v6807, %v6406
    %v6872 = vsel %vm2547, %v6808, %v6408
    %v6873 = vsel %vm2547, %v6809, %v6410
    %v6874 = vsel %vm2547, %v6810, %v6412
    %v6875 = vsel %vm2547, %v6811, %v6414
    %v6876 = vsel %vm2547, %v6812, %v6416
    %v6877 = vsel %vm2547, %v6813, %v6418
    %v6878 = vsel %vm2547, %v6814, %v6420
    %v6879 = vsel %vm2547, %v6815, %v6422
    %v6880 = vsel %vm2547, %v6816, %v6424
    %v6881 = vsel %vm2547, %v6817, %v6426
    %v6882 = vsel %vm2547, %v6818, %v6428
    %v6883 = vsel %vm2547, %v6819, %v6430
    %v6884 = vsel %vm2547, %v6820, %v6432
    %v6885 = vsel %vm2547, %v6821, %v6434
    %v6886 = vsel %vm2547, %v6822, %v6436
    %v6887 = vsel %vm2547, %v6823, %v6438
    %v6888 = vsel %vm2547, %v6824, %v6440
    %v6889 = vpack.c.bf16 %v6634, %v6633
    %v6890 = vpack.c.bf16 %v6826, %v6825
    %v6891 = vpack.c.bf16 %v4906, %v4905
    %v6892 = vpack.c.bf16 %v6636, %v6635
    %v6893 = vpack.c.bf16 %v6828, %v6827
    %v6894 = vpack.c.bf16 %v4908, %v4907
    %v6895 = vpack.c.bf16 %v6638, %v6637
    %v6896 = vpack.c.bf16 %v6830, %v6829
    %v6897 = vpack.c.bf16 %v4910, %v4909
    %v6898 = vpack.c.bf16 %v6640, %v6639
    %v6899 = vpack.c.bf16 %v6832, %v6831
    %v6900 = vpack.c.bf16 %v4912, %v4911
    %v6901 = vpack.c.bf16 %v6642, %v6641
    %v6902 = vpack.c.bf16 %v6834, %v6833
    %v6903 = vpack.c.bf16 %v4914, %v4913
    %v6904 = vpack.c.bf16 %v6644, %v6643
    %v6905 = vpack.c.bf16 %v6836, %v6835
    %v6906 = vpack.c.bf16 %v4916, %v4915
    %v6907 = vpack.c.bf16 %v6646, %v6645
    %v6908 = vpack.c.bf16 %v6838, %v6837
    %v6909 = vpack.c.bf16 %v4918, %v4917
    %v6910 = vpack.c.bf16 %v6648, %v6647
    %v6911 = vpack.c.bf16 %v6840, %v6839
    %v6912 = vpack.c.bf16 %v4920, %v4919
    %v6913 = vpack.c.bf16 %v6650, %v6649
    %v6914 = vpack.c.bf16 %v6842, %v6841
    %v6915 = vpack.c.bf16 %v4922, %v4921
    %v6916 = vpack.c.bf16 %v6652, %v6651
    %v6917 = vpack.c.bf16 %v6844, %v6843
    %v6918 = vpack.c.bf16 %v4924, %v4923
    %v6919 = vpack.c.bf16 %v6654, %v6653
    %v6920 = vpack.c.bf16 %v6846, %v6845
    %v6921 = vpack.c.bf16 %v4926, %v4925
    %v6922 = vpack.c.bf16 %v6656, %v6655
    %v6923 = vpack.c.bf16 %v6848, %v6847
    %v6924 = vpack.c.bf16 %v4928, %v4927
    %v6925 = vpack.c.bf16 %v6658, %v6657
    %v6926 = vpack.c.bf16 %v6850, %v6849
    %v6927 = vpack.c.bf16 %v4930, %v4929
    %v6928 = vpack.c.bf16 %v6660, %v6659
    %v6929 = vpack.c.bf16 %v6852, %v6851
    %v6930 = vpack.c.bf16 %v4932, %v4931
    %v6931 = vpack.c.bf16 %v6662, %v6661
    %v6932 = vpack.c.bf16 %v6854, %v6853
    %v6933 = vpack.c.bf16 %v4934, %v4933
    %v6934 = vpack.c.bf16 %v6664, %v6663
    %v6935 = vpack.c.bf16 %v6856, %v6855
    %v6936 = vpack.c.bf16 %v4936, %v4935
    %v6937 = vpack.c.bf16 %v6666, %v6665
    %v6938 = vpack.c.bf16 %v6858, %v6857
    %v6939 = vpack.c.bf16 %v4938, %v4937
    %v6940 = vpack.c.bf16 %v6668, %v6667
    %v6941 = vpack.c.bf16 %v6860, %v6859
    %v6942 = vpack.c.bf16 %v4940, %v4939
    %v6943 = vpack.c.bf16 %v6670, %v6669
    %v6944 = vpack.c.bf16 %v6862, %v6861
    %v6945 = vpack.c.bf16 %v4942, %v4941
    %v6946 = vpack.c.bf16 %v6672, %v6671
    %v6947 = vpack.c.bf16 %v6864, %v6863
    %v6948 = vpack.c.bf16 %v4944, %v4943
    %v6949 = vpack.c.bf16 %v6674, %v6673
    %v6950 = vpack.c.bf16 %v6866, %v6865
    %v6951 = vpack.c.bf16 %v4946, %v4945
    %v6952 = vpack.c.bf16 %v6676, %v6675
    %v6953 = vpack.c.bf16 %v6868, %v6867
    %v6954 = vpack.c.bf16 %v4948, %v4947
    %v6955 = vpack.c.bf16 %v6678, %v6677
    %v6956 = vpack.c.bf16 %v6870, %v6869
    %v6957 = vpack.c.bf16 %v4950, %v4949
    %v6958 = vpack.c.bf16 %v6680, %v6679
    %v6959 = vpack.c.bf16 %v6872, %v6871
    %v6960 = vpack.c.bf16 %v4952, %v4951
    %v6961 = vpack.c.bf16 %v6682, %v6681
    %v6962 = vpack.c.bf16 %v6874, %v6873
    %v6963 = vpack.c.bf16 %v4954, %v4953
    %v6964 = vpack.c.bf16 %v6684, %v6683
    %v6965 = vpack.c.bf16 %v6876, %v6875
    %v6966 = vpack.c.bf16 %v4956, %v4955
    %v6967 = vpack.c.bf16 %v6686, %v6685
    %v6968 = vpack.c.bf16 %v6878, %v6877
    %v6969 = vpack.c.bf16 %v4958, %v4957
    %v6970 = vpack.c.bf16 %v6688, %v6687
    %v6971 = vpack.c.bf16 %v6880, %v6879
    %v6972 = vpack.c.bf16 %v4960, %v4959
    %v6973 = vpack.c.bf16 %v6690, %v6689
    %v6974 = vpack.c.bf16 %v6882, %v6881
    %v6975 = vpack.c.bf16 %v4962, %v4961
    %v6976 = vpack.c.bf16 %v6692, %v6691
    %v6977 = vpack.c.bf16 %v6884, %v6883
    %v6978 = vpack.c.bf16 %v4964, %v4963
    %v6979 = vpack.c.bf16 %v6694, %v6693
    %v6980 = vpack.c.bf16 %v6886, %v6885
    %v6981 = vpack.c.bf16 %v4966, %v4965
    %v6982 = vpack.c.bf16 %v6696, %v6695
    %v6983 = vpack.c.bf16 %v6888, %v6887
    %v6984 = vpack.c.bf16 %v4968, %v4967
    %s6985 = scalar_lea.vmem %s1, 144
    %v6986 = vld [vmem:[%s6985] sm:$0xf]
    %v6987 = vld [vmem:[%s6985 + $0x4] sm:$0xf]
    %v6988 = vld [vmem:[%s6985 + $0x8] sm:$0xf]
    %v6989 = vld [vmem:[%s6985 + $0xc] sm:$0xf]
    %v6990 = vld [vmem:[%s6985 + $0x10] sm:$0xf]
    %v6991 = vld [vmem:[%s6985 + $0x14] sm:$0xf]
    %v6992 = vld [vmem:[%s6985 + $0x18] sm:$0xf]
    %v6993 = vld [vmem:[%s6985 + $0x1c] sm:$0xf]
    %v6994 = vld [vmem:[%s6985 + $0x20] sm:$0xf]
    %v6995 = vld [vmem:[%s6985 + $0x24] sm:$0xf]
    %v6996 = vld [vmem:[%s6985 + $0x28] sm:$0xf]
    %v6997 = vld [vmem:[%s6985 + $0x2c] sm:$0xf]
    %v6998 = vld [vmem:[%s6985 + $0x30] sm:$0xf]
    %v6999 = vld [vmem:[%s6985 + $0x34] sm:$0xf]
    %v7000 = vld [vmem:[%s6985 + $0x38] sm:$0xf]
    %v7001 = vld [vmem:[%s6985 + $0x3c] sm:$0xf]
    %v7002 = vld [vmem:[%s6985 + $0x40] sm:$0xf]
    %v7003 = vld [vmem:[%s6985 + $0x44] sm:$0xf]
    %v7004 = vld [vmem:[%s6985 + $0x48] sm:$0xf]
    %v7005 = vld [vmem:[%s6985 + $0x4c] sm:$0xf]
    %v7006 = vld [vmem:[%s6985 + $0x50] sm:$0xf]
    %v7007 = vld [vmem:[%s6985 + $0x54] sm:$0xf]
    %v7008 = vld [vmem:[%s6985 + $0x58] sm:$0xf]
    %v7009 = vld [vmem:[%s6985 + $0x5c] sm:$0xf]
    %v7010 = vld [vmem:[%s6985 + $0x60] sm:$0xf]
    %v7011 = vld [vmem:[%s6985 + $0x64] sm:$0xf]
    %v7012 = vld [vmem:[%s6985 + $0x68] sm:$0xf]
    %v7013 = vld [vmem:[%s6985 + $0x6c] sm:$0xf]
    %v7014 = vld [vmem:[%s6985 + $0x70] sm:$0xf]
    %v7015 = vld [vmem:[%s6985 + $0x74] sm:$0xf]
    %v7016 = vld [vmem:[%s6985 + $0x78] sm:$0xf]
    %v7017 = vld [vmem:[%s6985 + $0x7c] sm:$0xf]
    %v7018 = vld [vmem:[%s6985 + $0x80] sm:$0xf]
    %v7019 = vld [vmem:[%s6985 + $0x84] sm:$0xf]
    %v7020 = vld [vmem:[%s6985 + $0x88] sm:$0xf]
    %v7021 = vld [vmem:[%s6985 + $0x8c] sm:$0xf]
    %s7022 = scalar_lea.vmem %s2, 1
    %v7023 = vld [vmem:[%s7022] sm:$0x1]
    %v7025 = vperm.slane %v7023, 0
    %v7063 = vunpack.c.l.b16 %v6986
    %v7064 = vunpack.c.l.b16 %v6987
    %v7065 = vunpack.c.l.b16 %v6988
    %v7066 = vunpack.c.l.b16 %v6989
    %v7067 = vunpack.c.l.b16 %v6990
    %v7068 = vunpack.c.l.b16 %v6991
    %v7069 = vunpack.c.l.b16 %v6992
    %v7070 = vunpack.c.l.b16 %v6993
    %v7071 = vunpack.c.l.b16 %v6994
    %v7072 = vunpack.c.l.b16 %v6995
    %v7073 = vunpack.c.l.b16 %v6996
    %v7074 = vunpack.c.l.b16 %v6997
    %v7075 = vunpack.c.l.b16 %v6998
    %v7076 = vunpack.c.l.b16 %v6999
    %v7077 = vunpack.c.l.b16 %v7000
    %v7078 = vunpack.c.l.b16 %v7001
    %v7079 = vunpack.c.l.b16 %v7002
    %v7080 = vunpack.c.l.b16 %v7003
    %v7081 = vunpack.c.l.b16 %v7004
    %v7082 = vunpack.c.l.b16 %v7005
    %v7083 = vunpack.c.l.b16 %v7006
    %v7084 = vunpack.c.l.b16 %v7007
    %v7085 = vunpack.c.l.b16 %v7008
    %v7086 = vunpack.c.l.b16 %v7009
    %v7087 = vunpack.c.l.b16 %v7010
    %v7088 = vunpack.c.l.b16 %v7011
    %v7089 = vunpack.c.l.b16 %v7012
    %v7090 = vunpack.c.l.b16 %v7013
    %v7091 = vunpack.c.l.b16 %v7014
    %v7092 = vunpack.c.l.b16 %v7015
    %v7093 = vunpack.c.l.b16 %v7016
    %v7094 = vunpack.c.l.b16 %v7017
    %v7095 = vunpack.c.l.b16 %v7018
    %v7096 = vunpack.c.l.b16 %v7019
    %v7097 = vunpack.c.l.b16 %v7020
    %v7098 = vunpack.c.l.b16 %v7021
    %v7099 = vpack.c.b16 %v7064, %v7063
    %v7100 = vpack.c.b16 %v7066, %v7065
    %v7101 = vpack.c.b16 %v7068, %v7067
    %v7102 = vpack.c.b16 %v7070, %v7069
    %v7103 = vpack.c.b16 %v7072, %v7071
    %v7104 = vpack.c.b16 %v7074, %v7073
    %v7105 = vpack.c.b16 %v7076, %v7075
    %v7106 = vpack.c.b16 %v7078, %v7077
    %v7107 = vpack.c.b16 %v7080, %v7079
    %v7108 = vpack.c.b16 %v7082, %v7081
    %v7109 = vpack.c.b16 %v7084, %v7083
    %v7110 = vpack.c.b16 %v7086, %v7085
    %v7111 = vpack.c.b16 %v7088, %v7087
    %v7112 = vpack.c.b16 %v7090, %v7089
    %v7113 = vpack.c.b16 %v7092, %v7091
    %v7114 = vpack.c.b16 %v7094, %v7093
    %v7115 = vpack.c.b16 %v7096, %v7095
    %v7116 = vpack.c.b16 %v7098, %v7097
    %v7136 = vsel %vm31, %v6891, 0
    %v7139 = vsel %vm31, %v6894, 0
    %v7142 = vsel %vm31, %v6897, 0
    %v7145 = vsel %vm31, %v6900, 0
    %v7148 = vsel %vm31, %v6903, 0
    %v7151 = vsel %vm31, %v6906, 0
    %v7154 = vsel %vm31, %v6909, 0
    %v7157 = vsel %vm31, %v6912, 0
    %v7160 = vsel %vm31, %v6915, 0
    %v7163 = vsel %vm31, %v6918, 0
    %v7166 = vsel %vm31, %v6921, 0
    %v7169 = vsel %vm31, %v6924, 0
    %v7172 = vsel %vm31, %v6927, 0
    %v7175 = vsel %vm31, %v6930, 0
    %v7178 = vsel %vm31, %v6933, 0
    %v7181 = vsel %vm31, %v6936, 0
    %v7184 = vsel %vm31, %v6939, 0
    %v7187 = vsel %vm31, %v6942, 0
    %v7190 = vsel %vm31, %v6945, 0
    %v7193 = vsel %vm31, %v6948, 0
    %v7196 = vsel %vm31, %v6951, 0
    %v7199 = vsel %vm31, %v6954, 0
    %v7202 = vsel %vm31, %v6957, 0
    %v7205 = vsel %vm31, %v6960, 0
    %v7208 = vsel %vm31, %v6963, 0
    %v7211 = vsel %vm31, %v6966, 0
    %v7214 = vsel %vm31, %v6969, 0
    %v7217 = vsel %vm31, %v6972, 0
    %v7220 = vsel %vm31, %v6975, 0
    %v7223 = vsel %vm31, %v6978, 0
    %v7226 = vsel %vm31, %v6981, 0
    %v7229 = vsel %vm31, %v6984, 0
    %7231 = vmatpush.bf16.msra.mxu0 %v7106
    %7232 = vmatpush.bf16.msra.mxu0 %v7105
    %7233 = vmatpush.bf16.msra.mxu0 %v7104
    %7234 = vmatpush.bf16.msra.mxu0 %v7103
    %7235 = vmatpush.bf16.msra.mxu0 %v7102
    %7236 = vmatpush.bf16.msra.mxu0 %v7101
    %7237 = vmatpush.bf16.msra.mxu0 %v7100
    %7238 = vmatpush.bf16.msra.mxu0 %v7099
    %7239 = vmatmul.bf16.gmra.mxu0 %v6889
    %v7240 = vpop.f32.mrf.mxu0
    %v7241 = vadd.f32 %v7025, %v7240
    %v7242 = vpop.f32.mrf.mxu0
    %v7243 = vadd.f32 %v7025, %v7242
    %7244 = vmatmul.bf16.gmra.mxu0 %v6892
    %v7245 = vpop.f32.mrf.mxu0
    %v7246 = vadd.f32 %v7025, %v7245
    %v7247 = vpop.f32.mrf.mxu0
    %v7248 = vadd.f32 %v7025, %v7247
    %7249 = vmatmul.bf16.gmra.mxu0 %v6895
    %v7250 = vpop.f32.mrf.mxu0
    %v7251 = vadd.f32 %v7025, %v7250
    %v7252 = vpop.f32.mrf.mxu0
    %v7253 = vadd.f32 %v7025, %v7252
    %7254 = vmatmul.bf16.gmra.mxu0 %v6898
    %v7255 = vpop.f32.mrf.mxu0
    %v7256 = vadd.f32 %v7025, %v7255
    %v7257 = vpop.f32.mrf.mxu0
    %v7258 = vadd.f32 %v7025, %v7257
    %7259 = vmatmul.bf16.gmra.mxu0 %v6901
    %v7260 = vpop.f32.mrf.mxu0
    %v7261 = vadd.f32 %v7025, %v7260
    %v7262 = vpop.f32.mrf.mxu0
    %v7263 = vadd.f32 %v7025, %v7262
    %7264 = vmatmul.bf16.gmra.mxu0 %v6904
    %v7265 = vpop.f32.mrf.mxu0
    %v7266 = vadd.f32 %v7025, %v7265
    %v7267 = vpop.f32.mrf.mxu0
    %v7268 = vadd.f32 %v7025, %v7267
    %7269 = vmatmul.bf16.gmra.mxu0 %v6907
    %v7270 = vpop.f32.mrf.mxu0
    %v7271 = vadd.f32 %v7025, %v7270
    %v7272 = vpop.f32.mrf.mxu0
    %v7273 = vadd.f32 %v7025, %v7272
    %7274 = vmatmul.bf16.gmra.mxu0 %v6910
    %v7275 = vpop.f32.mrf.mxu0
    %v7276 = vadd.f32 %v7025, %v7275
    %v7277 = vpop.f32.mrf.mxu0
    %v7278 = vadd.f32 %v7025, %v7277
    %7279 = vmatmul.bf16.gmra.mxu0 %v6913
    %v7280 = vpop.f32.mrf.mxu0
    %v7281 = vadd.f32 %v7025, %v7280
    %v7282 = vpop.f32.mrf.mxu0
    %v7283 = vadd.f32 %v7025, %v7282
    %7284 = vmatmul.bf16.gmra.mxu0 %v6916
    %v7285 = vpop.f32.mrf.mxu0
    %v7286 = vadd.f32 %v7025, %v7285
    %v7287 = vpop.f32.mrf.mxu0
    %v7288 = vadd.f32 %v7025, %v7287
    %7289 = vmatmul.bf16.gmra.mxu0 %v6919
    %v7290 = vpop.f32.mrf.mxu0
    %v7291 = vadd.f32 %v7025, %v7290
    %v7292 = vpop.f32.mrf.mxu0
    %v7293 = vadd.f32 %v7025, %v7292
    %7294 = vmatmul.bf16.gmra.mxu0 %v6922
    %v7295 = vpop.f32.mrf.mxu0
    %v7296 = vadd.f32 %v7025, %v7295
    %v7297 = vpop.f32.mrf.mxu0
    %v7298 = vadd.f32 %v7025, %v7297
    %7299 = vmatmul.bf16.gmra.mxu0 %v6925
    %v7300 = vpop.f32.mrf.mxu0
    %v7301 = vadd.f32 %v7025, %v7300
    %v7302 = vpop.f32.mrf.mxu0
    %v7303 = vadd.f32 %v7025, %v7302
    %7304 = vmatmul.bf16.gmra.mxu0 %v6928
    %v7305 = vpop.f32.mrf.mxu0
    %v7306 = vadd.f32 %v7025, %v7305
    %v7307 = vpop.f32.mrf.mxu0
    %v7308 = vadd.f32 %v7025, %v7307
    %7309 = vmatmul.bf16.gmra.mxu0 %v6931
    %v7310 = vpop.f32.mrf.mxu0
    %v7311 = vadd.f32 %v7025, %v7310
    %v7312 = vpop.f32.mrf.mxu0
    %v7313 = vadd.f32 %v7025, %v7312
    %7314 = vmatmul.bf16.gmra.mxu0 %v6934
    %v7315 = vpop.f32.mrf.mxu0
    %v7316 = vadd.f32 %v7025, %v7315
    %v7317 = vpop.f32.mrf.mxu0
    %v7318 = vadd.f32 %v7025, %v7317
    %7319 = vmatmul.bf16.gmra.mxu0 %v6937
    %v7320 = vpop.f32.mrf.mxu0
    %v7321 = vadd.f32 %v7025, %v7320
    %v7322 = vpop.f32.mrf.mxu0
    %v7323 = vadd.f32 %v7025, %v7322
    %7324 = vmatmul.bf16.gmra.mxu0 %v6940
    %v7325 = vpop.f32.mrf.mxu0
    %v7326 = vadd.f32 %v7025, %v7325
    %v7327 = vpop.f32.mrf.mxu0
    %v7328 = vadd.f32 %v7025, %v7327
    %7329 = vmatmul.bf16.gmra.mxu0 %v6943
    %v7330 = vpop.f32.mrf.mxu0
    %v7331 = vadd.f32 %v7025, %v7330
    %v7332 = vpop.f32.mrf.mxu0
    %v7333 = vadd.f32 %v7025, %v7332
    %7334 = vmatmul.bf16.gmra.mxu0 %v6946
    %v7335 = vpop.f32.mrf.mxu0
    %v7336 = vadd.f32 %v7025, %v7335
    %v7337 = vpop.f32.mrf.mxu0
    %v7338 = vadd.f32 %v7025, %v7337
    %7339 = vmatmul.bf16.gmra.mxu0 %v6949
    %v7340 = vpop.f32.mrf.mxu0
    %v7341 = vadd.f32 %v7025, %v7340
    %v7342 = vpop.f32.mrf.mxu0
    %v7343 = vadd.f32 %v7025, %v7342
    %7344 = vmatmul.bf16.gmra.mxu0 %v6952
    %v7345 = vpop.f32.mrf.mxu0
    %v7346 = vadd.f32 %v7025, %v7345
    %v7347 = vpop.f32.mrf.mxu0
    %v7348 = vadd.f32 %v7025, %v7347
    %7349 = vmatmul.bf16.gmra.mxu0 %v6955
    %v7350 = vpop.f32.mrf.mxu0
    %v7351 = vadd.f32 %v7025, %v7350
    %v7352 = vpop.f32.mrf.mxu0
    %v7353 = vadd.f32 %v7025, %v7352
    %7354 = vmatmul.bf16.gmra.mxu0 %v6958
    %v7355 = vpop.f32.mrf.mxu0
    %v7356 = vadd.f32 %v7025, %v7355
    %v7357 = vpop.f32.mrf.mxu0
    %v7358 = vadd.f32 %v7025, %v7357
    %7359 = vmatmul.bf16.gmra.mxu0 %v6961
    %v7360 = vpop.f32.mrf.mxu0
    %v7361 = vadd.f32 %v7025, %v7360
    %v7362 = vpop.f32.mrf.mxu0
    %v7363 = vadd.f32 %v7025, %v7362
    %7364 = vmatmul.bf16.gmra.mxu0 %v6964
    %v7365 = vpop.f32.mrf.mxu0
    %v7366 = vadd.f32 %v7025, %v7365
    %v7367 = vpop.f32.mrf.mxu0
    %v7368 = vadd.f32 %v7025, %v7367
    %7369 = vmatmul.bf16.gmra.mxu0 %v6967
    %v7370 = vpop.f32.mrf.mxu0
    %v7371 = vadd.f32 %v7025, %v7370
    %v7372 = vpop.f32.mrf.mxu0
    %v7373 = vadd.f32 %v7025, %v7372
    %7374 = vmatmul.bf16.gmra.mxu0 %v6970
    %v7375 = vpop.f32.mrf.mxu0
    %v7376 = vadd.f32 %v7025, %v7375
    %v7377 = vpop.f32.mrf.mxu0
    %v7378 = vadd.f32 %v7025, %v7377
    %7379 = vmatmul.bf16.gmra.mxu0 %v6973
    %v7380 = vpop.f32.mrf.mxu0
    %v7381 = vadd.f32 %v7025, %v7380
    %v7382 = vpop.f32.mrf.mxu0
    %v7383 = vadd.f32 %v7025, %v7382
    %7384 = vmatmul.bf16.gmra.mxu0 %v6976
    %v7385 = vpop.f32.mrf.mxu0
    %v7386 = vadd.f32 %v7025, %v7385
    %v7387 = vpop.f32.mrf.mxu0
    %v7388 = vadd.f32 %v7025, %v7387
    %7389 = vmatmul.bf16.gmra.mxu0 %v6979
    %v7390 = vpop.f32.mrf.mxu0
    %v7391 = vadd.f32 %v7025, %v7390
    %v7392 = vpop.f32.mrf.mxu0
    %v7393 = vadd.f32 %v7025, %v7392
    %7394 = vmatmul.bf16.gmra.mxu0 %v6982
    %v7395 = vpop.f32.mrf.mxu0
    %v7396 = vadd.f32 %v7025, %v7395
    %v7397 = vpop.f32.mrf.mxu0
    %v7398 = vadd.f32 %v7025, %v7397
    %7399 = vdwg.mxu0
    %7400 = vmatpush.bf16.msra.mxu0 %v7114
    %7401 = vmatpush.bf16.msra.mxu0 %v7113
    %7402 = vmatpush.bf16.msra.mxu0 %v7112
    %7403 = vmatpush.bf16.msra.mxu0 %v7111
    %7404 = vmatpush.bf16.msra.mxu0 %v7110
    %7405 = vmatpush.bf16.msra.mxu0 %v7109
    %7406 = vmatpush.bf16.msra.mxu0 %v7108
    %7407 = vmatpush.bf16.msra.mxu0 %v7107
    %7408 = vmatmul.bf16.gmra.mxu0 %v6890
    %v7409 = vpop.f32.mrf.mxu0
    %v7410 = vadd.f32 %v7241, %v7409
    %v7411 = vpop.f32.mrf.mxu0
    %v7412 = vadd.f32 %v7243, %v7411
    %7413 = vmatmul.bf16.gmra.mxu0 %v6893
    %v7414 = vpop.f32.mrf.mxu0
    %v7415 = vadd.f32 %v7246, %v7414
    %v7416 = vpop.f32.mrf.mxu0
    %v7417 = vadd.f32 %v7248, %v7416
    %7418 = vmatmul.bf16.gmra.mxu0 %v6896
    %v7419 = vpop.f32.mrf.mxu0
    %v7420 = vadd.f32 %v7251, %v7419
    %v7421 = vpop.f32.mrf.mxu0
    %v7422 = vadd.f32 %v7253, %v7421
    %7423 = vmatmul.bf16.gmra.mxu0 %v6899
    %v7424 = vpop.f32.mrf.mxu0
    %v7425 = vadd.f32 %v7256, %v7424
    %v7426 = vpop.f32.mrf.mxu0
    %v7427 = vadd.f32 %v7258, %v7426
    %7428 = vmatmul.bf16.gmra.mxu0 %v6902
    %v7429 = vpop.f32.mrf.mxu0
    %v7430 = vadd.f32 %v7261, %v7429
    %v7431 = vpop.f32.mrf.mxu0
    %v7432 = vadd.f32 %v7263, %v7431
    %7433 = vmatmul.bf16.gmra.mxu0 %v6905
    %v7434 = vpop.f32.mrf.mxu0
    %v7435 = vadd.f32 %v7266, %v7434
    %v7436 = vpop.f32.mrf.mxu0
    %v7437 = vadd.f32 %v7268, %v7436
    %7438 = vmatmul.bf16.gmra.mxu0 %v6908
    %v7439 = vpop.f32.mrf.mxu0
    %v7440 = vadd.f32 %v7271, %v7439
    %v7441 = vpop.f32.mrf.mxu0
    %v7442 = vadd.f32 %v7273, %v7441
    %7443 = vmatmul.bf16.gmra.mxu0 %v6911
    %v7444 = vpop.f32.mrf.mxu0
    %v7445 = vadd.f32 %v7276, %v7444
    %v7446 = vpop.f32.mrf.mxu0
    %v7447 = vadd.f32 %v7278, %v7446
    %7448 = vmatmul.bf16.gmra.mxu0 %v6914
    %v7449 = vpop.f32.mrf.mxu0
    %v7450 = vadd.f32 %v7281, %v7449
    %v7451 = vpop.f32.mrf.mxu0
    %v7452 = vadd.f32 %v7283, %v7451
    %7453 = vmatmul.bf16.gmra.mxu0 %v6917
    %v7454 = vpop.f32.mrf.mxu0
    %v7455 = vadd.f32 %v7286, %v7454
    %v7456 = vpop.f32.mrf.mxu0
    %v7457 = vadd.f32 %v7288, %v7456
    %7458 = vmatmul.bf16.gmra.mxu0 %v6920
    %v7459 = vpop.f32.mrf.mxu0
    %v7460 = vadd.f32 %v7291, %v7459
    %v7461 = vpop.f32.mrf.mxu0
    %v7462 = vadd.f32 %v7293, %v7461
    %7463 = vmatmul.bf16.gmra.mxu0 %v6923
    %v7464 = vpop.f32.mrf.mxu0
    %v7465 = vadd.f32 %v7296, %v7464
    %v7466 = vpop.f32.mrf.mxu0
    %v7467 = vadd.f32 %v7298, %v7466
    %7468 = vmatmul.bf16.gmra.mxu0 %v6926
    %v7469 = vpop.f32.mrf.mxu0
    %v7470 = vadd.f32 %v7301, %v7469
    %v7471 = vpop.f32.mrf.mxu0
    %v7472 = vadd.f32 %v7303, %v7471
    %7473 = vmatmul.bf16.gmra.mxu0 %v6929
    %v7474 = vpop.f32.mrf.mxu0
    %v7475 = vadd.f32 %v7306, %v7474
    %v7476 = vpop.f32.mrf.mxu0
    %v7477 = vadd.f32 %v7308, %v7476
    %7478 = vmatmul.bf16.gmra.mxu0 %v6932
    %v7479 = vpop.f32.mrf.mxu0
    %v7480 = vadd.f32 %v7311, %v7479
    %v7481 = vpop.f32.mrf.mxu0
    %v7482 = vadd.f32 %v7313, %v7481
    %7483 = vmatmul.bf16.gmra.mxu0 %v6935
    %v7484 = vpop.f32.mrf.mxu0
    %v7485 = vadd.f32 %v7316, %v7484
    %v7486 = vpop.f32.mrf.mxu0
    %v7487 = vadd.f32 %v7318, %v7486
    %7488 = vmatmul.bf16.gmra.mxu0 %v6938
    %v7489 = vpop.f32.mrf.mxu0
    %v7490 = vadd.f32 %v7321, %v7489
    %v7491 = vpop.f32.mrf.mxu0
    %v7492 = vadd.f32 %v7323, %v7491
    %7493 = vmatmul.bf16.gmra.mxu0 %v6941
    %v7494 = vpop.f32.mrf.mxu0
    %v7495 = vadd.f32 %v7326, %v7494
    %v7496 = vpop.f32.mrf.mxu0
    %v7497 = vadd.f32 %v7328, %v7496
    %7498 = vmatmul.bf16.gmra.mxu0 %v6944
    %v7499 = vpop.f32.mrf.mxu0
    %v7500 = vadd.f32 %v7331, %v7499
    %v7501 = vpop.f32.mrf.mxu0
    %v7502 = vadd.f32 %v7333, %v7501
    %7503 = vmatmul.bf16.gmra.mxu0 %v6947
    %v7504 = vpop.f32.mrf.mxu0
    %v7505 = vadd.f32 %v7336, %v7504
    %v7506 = vpop.f32.mrf.mxu0
    %v7507 = vadd.f32 %v7338, %v7506
    %7508 = vmatmul.bf16.gmra.mxu0 %v6950
    %v7509 = vpop.f32.mrf.mxu0
    %v7510 = vadd.f32 %v7341, %v7509
    %v7511 = vpop.f32.mrf.mxu0
    %v7512 = vadd.f32 %v7343, %v7511
    %7513 = vmatmul.bf16.gmra.mxu0 %v6953
    %v7514 = vpop.f32.mrf.mxu0
    %v7515 = vadd.f32 %v7346, %v7514
    %v7516 = vpop.f32.mrf.mxu0
    %v7517 = vadd.f32 %v7348, %v7516
    %7518 = vmatmul.bf16.gmra.mxu0 %v6956
    %v7519 = vpop.f32.mrf.mxu0
    %v7520 = vadd.f32 %v7351, %v7519
    %v7521 = vpop.f32.mrf.mxu0
    %v7522 = vadd.f32 %v7353, %v7521
    %7523 = vmatmul.bf16.gmra.mxu0 %v6959
    %v7524 = vpop.f32.mrf.mxu0
    %v7525 = vadd.f32 %v7356, %v7524
    %v7526 = vpop.f32.mrf.mxu0
    %v7527 = vadd.f32 %v7358, %v7526
    %7528 = vmatmul.bf16.gmra.mxu0 %v6962
    %v7529 = vpop.f32.mrf.mxu0
    %v7530 = vadd.f32 %v7361, %v7529
    %v7531 = vpop.f32.mrf.mxu0
    %v7532 = vadd.f32 %v7363, %v7531
    %7533 = vmatmul.bf16.gmra.mxu0 %v6965
    %v7534 = vpop.f32.mrf.mxu0
    %v7535 = vadd.f32 %v7366, %v7534
    %v7536 = vpop.f32.mrf.mxu0
    %v7537 = vadd.f32 %v7368, %v7536
    %7538 = vmatmul.bf16.gmra.mxu0 %v6968
    %v7539 = vpop.f32.mrf.mxu0
    %v7540 = vadd.f32 %v7371, %v7539
    %v7541 = vpop.f32.mrf.mxu0
    %v7542 = vadd.f32 %v7373, %v7541
    %7543 = vmatmul.bf16.gmra.mxu0 %v6971
    %v7544 = vpop.f32.mrf.mxu0
    %v7545 = vadd.f32 %v7376, %v7544
    %v7546 = vpop.f32.mrf.mxu0
    %v7547 = vadd.f32 %v7378, %v7546
    %7548 = vmatmul.bf16.gmra.mxu0 %v6974
    %v7549 = vpop.f32.mrf.mxu0
    %v7550 = vadd.f32 %v7381, %v7549
    %v7551 = vpop.f32.mrf.mxu0
    %v7552 = vadd.f32 %v7383, %v7551
    %7553 = vmatmul.bf16.gmra.mxu0 %v6977
    %v7554 = vpop.f32.mrf.mxu0
    %v7555 = vadd.f32 %v7386, %v7554
    %v7556 = vpop.f32.mrf.mxu0
    %v7557 = vadd.f32 %v7388, %v7556
    %7558 = vmatmul.bf16.gmra.mxu0 %v6980
    %v7559 = vpop.f32.mrf.mxu0
    %v7560 = vadd.f32 %v7391, %v7559
    %v7561 = vpop.f32.mrf.mxu0
    %v7562 = vadd.f32 %v7393, %v7561
    %7563 = vmatmul.bf16.gmra.mxu0 %v6983
    %v7564 = vpop.f32.mrf.mxu0
    %v7565 = vadd.f32 %v7396, %v7564
    %v7566 = vpop.f32.mrf.mxu0
    %v7567 = vadd.f32 %v7398, %v7566
    %7568 = vdwg.mxu0
    %7569 = vmatpush.bf16.msra.mxu0 0
    %7570 = vmatpush.bf16.msra.mxu0 0
    %7571 = vmatpush.bf16.msra.mxu0 0
    %7572 = vmatpush.bf16.msra.mxu0 0
    %7573 = vmatpush.bf16.msra.mxu0 0
    %7574 = vmatpush.bf16.msra.mxu0 0
    %7575 = vmatpush.bf16.msra.mxu0 %v7116
    %7576 = vmatpush.bf16.msra.mxu0 %v7115
    %7577 = vmatmul.bf16.gmra.mxu0 %v7136
    %v7578 = vpop.f32.mrf.mxu0
    %v7579 = vadd.f32 %v7410, %v7578
    %v7580 = vpop.f32.mrf.mxu0
    %v7581 = vadd.f32 %v7412, %v7580
    %7582 = vmatmul.bf16.gmra.mxu0 %v7139
    %v7583 = vpop.f32.mrf.mxu0
    %v7584 = vadd.f32 %v7415, %v7583
    %v7585 = vpop.f32.mrf.mxu0
    %v7586 = vadd.f32 %v7417, %v7585
    %7587 = vmatmul.bf16.gmra.mxu0 %v7142
    %v7588 = vpop.f32.mrf.mxu0
    %v7589 = vadd.f32 %v7420, %v7588
    %v7590 = vpop.f32.mrf.mxu0
    %v7591 = vadd.f32 %v7422, %v7590
    %7592 = vmatmul.bf16.gmra.mxu0 %v7145
    %v7593 = vpop.f32.mrf.mxu0
    %v7594 = vadd.f32 %v7425, %v7593
    %v7595 = vpop.f32.mrf.mxu0
    %v7596 = vadd.f32 %v7427, %v7595
    %7597 = vmatmul.bf16.gmra.mxu0 %v7148
    %v7598 = vpop.f32.mrf.mxu0
    %v7599 = vadd.f32 %v7430, %v7598
    %v7600 = vpop.f32.mrf.mxu0
    %v7601 = vadd.f32 %v7432, %v7600
    %7602 = vmatmul.bf16.gmra.mxu0 %v7151
    %v7603 = vpop.f32.mrf.mxu0
    %v7604 = vadd.f32 %v7435, %v7603
    %v7605 = vpop.f32.mrf.mxu0
    %v7606 = vadd.f32 %v7437, %v7605
    %7607 = vmatmul.bf16.gmra.mxu0 %v7154
    %v7608 = vpop.f32.mrf.mxu0
    %v7609 = vadd.f32 %v7440, %v7608
    %v7610 = vpop.f32.mrf.mxu0
    %v7611 = vadd.f32 %v7442, %v7610
    %7612 = vmatmul.bf16.gmra.mxu0 %v7157
    %v7613 = vpop.f32.mrf.mxu0
    %v7614 = vadd.f32 %v7445, %v7613
    %v7615 = vpop.f32.mrf.mxu0
    %v7616 = vadd.f32 %v7447, %v7615
    %7617 = vmatmul.bf16.gmra.mxu0 %v7160
    %v7618 = vpop.f32.mrf.mxu0
    %v7619 = vadd.f32 %v7450, %v7618
    %v7620 = vpop.f32.mrf.mxu0
    %v7621 = vadd.f32 %v7452, %v7620
    %7622 = vmatmul.bf16.gmra.mxu0 %v7163
    %v7623 = vpop.f32.mrf.mxu0
    %v7624 = vadd.f32 %v7455, %v7623
    %v7625 = vpop.f32.mrf.mxu0
    %v7626 = vadd.f32 %v7457, %v7625
    %7627 = vmatmul.bf16.gmra.mxu0 %v7166
    %v7628 = vpop.f32.mrf.mxu0
    %v7629 = vadd.f32 %v7460, %v7628
    %v7630 = vpop.f32.mrf.mxu0
    %v7631 = vadd.f32 %v7462, %v7630
    %7632 = vmatmul.bf16.gmra.mxu0 %v7169
    %v7633 = vpop.f32.mrf.mxu0
    %v7634 = vadd.f32 %v7465, %v7633
    %v7635 = vpop.f32.mrf.mxu0
    %v7636 = vadd.f32 %v7467, %v7635
    %7637 = vmatmul.bf16.gmra.mxu0 %v7172
    %v7638 = vpop.f32.mrf.mxu0
    %v7639 = vadd.f32 %v7470, %v7638
    %v7640 = vpop.f32.mrf.mxu0
    %v7641 = vadd.f32 %v7472, %v7640
    %7642 = vmatmul.bf16.gmra.mxu0 %v7175
    %v7643 = vpop.f32.mrf.mxu0
    %v7644 = vadd.f32 %v7475, %v7643
    %v7645 = vpop.f32.mrf.mxu0
    %v7646 = vadd.f32 %v7477, %v7645
    %7647 = vmatmul.bf16.gmra.mxu0 %v7178
    %v7648 = vpop.f32.mrf.mxu0
    %v7649 = vadd.f32 %v7480, %v7648
    %v7650 = vpop.f32.mrf.mxu0
    %v7651 = vadd.f32 %v7482, %v7650
    %7652 = vmatmul.bf16.gmra.mxu0 %v7181
    %v7653 = vpop.f32.mrf.mxu0
    %v7654 = vadd.f32 %v7485, %v7653
    %v7655 = vpop.f32.mrf.mxu0
    %v7656 = vadd.f32 %v7487, %v7655
    %7657 = vmatmul.bf16.gmra.mxu0 %v7184
    %v7658 = vpop.f32.mrf.mxu0
    %v7659 = vadd.f32 %v7490, %v7658
    %v7660 = vpop.f32.mrf.mxu0
    %v7661 = vadd.f32 %v7492, %v7660
    %7662 = vmatmul.bf16.gmra.mxu0 %v7187
    %v7663 = vpop.f32.mrf.mxu0
    %v7664 = vadd.f32 %v7495, %v7663
    %v7665 = vpop.f32.mrf.mxu0
    %v7666 = vadd.f32 %v7497, %v7665
    %7667 = vmatmul.bf16.gmra.mxu0 %v7190
    %v7668 = vpop.f32.mrf.mxu0
    %v7669 = vadd.f32 %v7500, %v7668
    %v7670 = vpop.f32.mrf.mxu0
    %v7671 = vadd.f32 %v7502, %v7670
    %7672 = vmatmul.bf16.gmra.mxu0 %v7193
    %v7673 = vpop.f32.mrf.mxu0
    %v7674 = vadd.f32 %v7505, %v7673
    %v7675 = vpop.f32.mrf.mxu0
    %v7676 = vadd.f32 %v7507, %v7675
    %7677 = vmatmul.bf16.gmra.mxu0 %v7196
    %v7678 = vpop.f32.mrf.mxu0
    %v7679 = vadd.f32 %v7510, %v7678
    %v7680 = vpop.f32.mrf.mxu0
    %v7681 = vadd.f32 %v7512, %v7680
    %7682 = vmatmul.bf16.gmra.mxu0 %v7199
    %v7683 = vpop.f32.mrf.mxu0
    %v7684 = vadd.f32 %v7515, %v7683
    %v7685 = vpop.f32.mrf.mxu0
    %v7686 = vadd.f32 %v7517, %v7685
    %7687 = vmatmul.bf16.gmra.mxu0 %v7202
    %v7688 = vpop.f32.mrf.mxu0
    %v7689 = vadd.f32 %v7520, %v7688
    %v7690 = vpop.f32.mrf.mxu0
    %v7691 = vadd.f32 %v7522, %v7690
    %7692 = vmatmul.bf16.gmra.mxu0 %v7205
    %v7693 = vpop.f32.mrf.mxu0
    %v7694 = vadd.f32 %v7525, %v7693
    %v7695 = vpop.f32.mrf.mxu0
    %v7696 = vadd.f32 %v7527, %v7695
    %7697 = vmatmul.bf16.gmra.mxu0 %v7208
    %v7698 = vpop.f32.mrf.mxu0
    %v7699 = vadd.f32 %v7530, %v7698
    %v7700 = vpop.f32.mrf.mxu0
    %v7701 = vadd.f32 %v7532, %v7700
    %7702 = vmatmul.bf16.gmra.mxu0 %v7211
    %v7703 = vpop.f32.mrf.mxu0
    %v7704 = vadd.f32 %v7535, %v7703
    %v7705 = vpop.f32.mrf.mxu0
    %v7706 = vadd.f32 %v7537, %v7705
    %7707 = vmatmul.bf16.gmra.mxu0 %v7214
    %v7708 = vpop.f32.mrf.mxu0
    %v7709 = vadd.f32 %v7540, %v7708
    %v7710 = vpop.f32.mrf.mxu0
    %v7711 = vadd.f32 %v7542, %v7710
    %7712 = vmatmul.bf16.gmra.mxu0 %v7217
    %v7713 = vpop.f32.mrf.mxu0
    %v7714 = vadd.f32 %v7545, %v7713
    %v7715 = vpop.f32.mrf.mxu0
    %v7716 = vadd.f32 %v7547, %v7715
    %7717 = vmatmul.bf16.gmra.mxu0 %v7220
    %v7718 = vpop.f32.mrf.mxu0
    %v7719 = vadd.f32 %v7550, %v7718
    %v7720 = vpop.f32.mrf.mxu0
    %v7721 = vadd.f32 %v7552, %v7720
    %7722 = vmatmul.bf16.gmra.mxu0 %v7223
    %v7723 = vpop.f32.mrf.mxu0
    %v7724 = vadd.f32 %v7555, %v7723
    %v7725 = vpop.f32.mrf.mxu0
    %v7726 = vadd.f32 %v7557, %v7725
    %7727 = vmatmul.bf16.gmra.mxu0 %v7226
    %v7728 = vpop.f32.mrf.mxu0
    %v7729 = vadd.f32 %v7560, %v7728
    %v7730 = vpop.f32.mrf.mxu0
    %v7731 = vadd.f32 %v7562, %v7730
    %7732 = vmatmul.bf16.gmra.mxu0 %v7229
    %v7733 = vpop.f32.mrf.mxu0
    %v7734 = vadd.f32 %v7565, %v7733
    %v7735 = vpop.f32.mrf.mxu0
    %v7736 = vadd.f32 %v7567, %v7735
    %7737 = vdwg.mxu0
    %v7738 = vmax.f32 %v7579, 0.0
    %v7739 = vmax.f32 %v7581, 0.0
    %v7740 = vmax.f32 %v7584, 0.0
    %v7741 = vmax.f32 %v7586, 0.0
    %v7742 = vmax.f32 %v7589, 0.0
    %v7743 = vmax.f32 %v7591, 0.0
    %v7744 = vmax.f32 %v7594, 0.0
    %v7745 = vmax.f32 %v7596, 0.0
    %v7746 = vmax.f32 %v7599, 0.0
    %v7747 = vmax.f32 %v7601, 0.0
    %v7748 = vmax.f32 %v7604, 0.0
    %v7749 = vmax.f32 %v7606, 0.0
    %v7750 = vmax.f32 %v7609, 0.0
    %v7751 = vmax.f32 %v7611, 0.0
    %v7752 = vmax.f32 %v7614, 0.0
    %v7753 = vmax.f32 %v7616, 0.0
    %v7754 = vmax.f32 %v7619, 0.0
    %v7755 = vmax.f32 %v7621, 0.0
    %v7756 = vmax.f32 %v7624, 0.0
    %v7757 = vmax.f32 %v7626, 0.0
    %v7758 = vmax.f32 %v7629, 0.0
    %v7759 = vmax.f32 %v7631, 0.0
    %v7760 = vmax.f32 %v7634, 0.0
    %v7761 = vmax.f32 %v7636, 0.0
    %v7762 = vmax.f32 %v7639, 0.0
    %v7763 = vmax.f32 %v7641, 0.0
    %v7764 = vmax.f32 %v7644, 0.0
    %v7765 = vmax.f32 %v7646, 0.0
    %v7766 = vmax.f32 %v7649, 0.0
    %v7767 = vmax.f32 %v7651, 0.0
    %v7768 = vmax.f32 %v7654, 0.0
    %v7769 = vmax.f32 %v7656, 0.0
    %v7770 = vmax.f32 %v7659, 0.0
    %v7771 = vmax.f32 %v7661, 0.0
    %v7772 = vmax.f32 %v7664, 0.0
    %v7773 = vmax.f32 %v7666, 0.0
    %v7774 = vmax.f32 %v7669, 0.0
    %v7775 = vmax.f32 %v7671, 0.0
    %v7776 = vmax.f32 %v7674, 0.0
    %v7777 = vmax.f32 %v7676, 0.0
    %v7778 = vmax.f32 %v7679, 0.0
    %v7779 = vmax.f32 %v7681, 0.0
    %v7780 = vmax.f32 %v7684, 0.0
    %v7781 = vmax.f32 %v7686, 0.0
    %v7782 = vmax.f32 %v7689, 0.0
    %v7783 = vmax.f32 %v7691, 0.0
    %v7784 = vmax.f32 %v7694, 0.0
    %v7785 = vmax.f32 %v7696, 0.0
    %v7786 = vmax.f32 %v7699, 0.0
    %v7787 = vmax.f32 %v7701, 0.0
    %v7788 = vmax.f32 %v7704, 0.0
    %v7789 = vmax.f32 %v7706, 0.0
    %v7790 = vmax.f32 %v7709, 0.0
    %v7791 = vmax.f32 %v7711, 0.0
    %v7792 = vmax.f32 %v7714, 0.0
    %v7793 = vmax.f32 %v7716, 0.0
    %v7794 = vmax.f32 %v7719, 0.0
    %v7795 = vmax.f32 %v7721, 0.0
    %v7796 = vmax.f32 %v7724, 0.0
    %v7797 = vmax.f32 %v7726, 0.0
    %v7798 = vmax.f32 %v7729, 0.0
    %v7799 = vmax.f32 %v7731, 0.0
    %v7800 = vmax.f32 %v7734, 0.0
    %v7801 = vmax.f32 %v7736, 0.0
    %s7802 = scalar_lea.vmem %s3, 1
    %v7803 = vld [vmem:[%s7802] sm:$0x1]
    %s7804 = scalar_lea.vmem %s4, 1
    %v7805 = vld [vmem:[%s7804] sm:$0x1]
    %v7806 = vsel %vm31, %v7738, 0.0
    %v7807 = vsel %vm31, %v7739, 0.0
    %v7808 = vadd.f32 %v7806, %v7807
    %v7809 = vsel %vm31, %v7740, 0.0
    %v7810 = vadd.f32 %v7808, %v7809
    %v7811 = vsel %vm31, %v7741, 0.0
    %v7812 = vadd.f32 %v7810, %v7811
    %v7813 = vsel %vm31, %v7742, 0.0
    %v7814 = vadd.f32 %v7812, %v7813
    %v7815 = vsel %vm31, %v7743, 0.0
    %v7816 = vadd.f32 %v7814, %v7815
    %v7817 = vsel %vm31, %v7744, 0.0
    %v7818 = vadd.f32 %v7816, %v7817
    %v7819 = vsel %vm31, %v7745, 0.0
    %v7820 = vadd.f32 %v7818, %v7819
    %v7821 = vsel %vm31, %v7746, 0.0
    %v7822 = vadd.f32 %v7820, %v7821
    %v7823 = vsel %vm31, %v7747, 0.0
    %v7824 = vadd.f32 %v7822, %v7823
    %v7825 = vsel %vm31, %v7748, 0.0
    %v7826 = vadd.f32 %v7824, %v7825
    %v7827 = vsel %vm31, %v7749, 0.0
    %v7828 = vadd.f32 %v7826, %v7827
    %v7829 = vsel %vm31, %v7750, 0.0
    %v7830 = vadd.f32 %v7828, %v7829
    %v7831 = vsel %vm31, %v7751, 0.0
    %v7832 = vadd.f32 %v7830, %v7831
    %v7833 = vsel %vm31, %v7752, 0.0
    %v7834 = vadd.f32 %v7832, %v7833
    %v7835 = vsel %vm31, %v7753, 0.0
    %v7836 = vadd.f32 %v7834, %v7835
    %v7837 = vsel %vm31, %v7754, 0.0
    %v7838 = vadd.f32 %v7836, %v7837
    %v7839 = vsel %vm31, %v7755, 0.0
    %v7840 = vadd.f32 %v7838, %v7839
    %v7841 = vsel %vm31, %v7756, 0.0
    %v7842 = vadd.f32 %v7840, %v7841
    %v7843 = vsel %vm31, %v7757, 0.0
    %v7844 = vadd.f32 %v7842, %v7843
    %v7845 = vsel %vm31, %v7758, 0.0
    %v7846 = vadd.f32 %v7844, %v7845
    %v7847 = vsel %vm31, %v7759, 0.0
    %v7848 = vadd.f32 %v7846, %v7847
    %v7849 = vsel %vm31, %v7760, 0.0
    %v7850 = vadd.f32 %v7848, %v7849
    %v7851 = vsel %vm31, %v7761, 0.0
    %v7852 = vadd.f32 %v7850, %v7851
    %v7853 = vsel %vm31, %v7762, 0.0
    %v7854 = vadd.f32 %v7852, %v7853
    %v7855 = vsel %vm31, %v7763, 0.0
    %v7856 = vadd.f32 %v7854, %v7855
    %v7857 = vsel %vm31, %v7764, 0.0
    %v7858 = vadd.f32 %v7856, %v7857
    %v7859 = vsel %vm31, %v7765, 0.0
    %v7860 = vadd.f32 %v7858, %v7859
    %v7861 = vsel %vm31, %v7766, 0.0
    %v7862 = vadd.f32 %v7860, %v7861
    %v7863 = vsel %vm31, %v7767, 0.0
    %v7864 = vadd.f32 %v7862, %v7863
    %v7865 = vsel %vm31, %v7768, 0.0
    %v7866 = vadd.f32 %v7864, %v7865
    %v7867 = vsel %vm31, %v7769, 0.0
    %v7868 = vadd.f32 %v7866, %v7867
    %v7869 = vsel %vm31, %v7770, 0.0
    %v7870 = vadd.f32 %v7868, %v7869
    %v7871 = vsel %vm31, %v7771, 0.0
    %v7872 = vadd.f32 %v7870, %v7871
    %v7873 = vsel %vm31, %v7772, 0.0
    %v7874 = vadd.f32 %v7872, %v7873
    %v7875 = vsel %vm31, %v7773, 0.0
    %v7876 = vadd.f32 %v7874, %v7875
    %v7877 = vsel %vm31, %v7774, 0.0
    %v7878 = vadd.f32 %v7876, %v7877
    %v7879 = vsel %vm31, %v7775, 0.0
    %v7880 = vadd.f32 %v7878, %v7879
    %v7881 = vsel %vm31, %v7776, 0.0
    %v7882 = vadd.f32 %v7880, %v7881
    %v7883 = vsel %vm31, %v7777, 0.0
    %v7884 = vadd.f32 %v7882, %v7883
    %v7885 = vsel %vm31, %v7778, 0.0
    %v7886 = vadd.f32 %v7884, %v7885
    %v7887 = vsel %vm31, %v7779, 0.0
    %v7888 = vadd.f32 %v7886, %v7887
    %v7889 = vsel %vm31, %v7780, 0.0
    %v7890 = vadd.f32 %v7888, %v7889
    %v7891 = vsel %vm31, %v7781, 0.0
    %v7892 = vadd.f32 %v7890, %v7891
    %v7893 = vsel %vm31, %v7782, 0.0
    %v7894 = vadd.f32 %v7892, %v7893
    %v7895 = vsel %vm31, %v7783, 0.0
    %v7896 = vadd.f32 %v7894, %v7895
    %v7897 = vsel %vm31, %v7784, 0.0
    %v7898 = vadd.f32 %v7896, %v7897
    %v7899 = vsel %vm31, %v7785, 0.0
    %v7900 = vadd.f32 %v7898, %v7899
    %v7901 = vsel %vm31, %v7786, 0.0
    %v7902 = vadd.f32 %v7900, %v7901
    %v7903 = vsel %vm31, %v7787, 0.0
    %v7904 = vadd.f32 %v7902, %v7903
    %v7905 = vsel %vm31, %v7788, 0.0
    %v7906 = vadd.f32 %v7904, %v7905
    %v7907 = vsel %vm31, %v7789, 0.0
    %v7908 = vadd.f32 %v7906, %v7907
    %v7909 = vsel %vm31, %v7790, 0.0
    %v7910 = vadd.f32 %v7908, %v7909
    %v7911 = vsel %vm31, %v7791, 0.0
    %v7912 = vadd.f32 %v7910, %v7911
    %v7913 = vsel %vm31, %v7792, 0.0
    %v7914 = vadd.f32 %v7912, %v7913
    %v7915 = vsel %vm31, %v7793, 0.0
    %v7916 = vadd.f32 %v7914, %v7915
    %v7917 = vsel %vm31, %v7794, 0.0
    %v7918 = vadd.f32 %v7916, %v7917
    %v7919 = vsel %vm31, %v7795, 0.0
    %v7920 = vadd.f32 %v7918, %v7919
    %v7921 = vsel %vm31, %v7796, 0.0
    %v7922 = vadd.f32 %v7920, %v7921
    %v7923 = vsel %vm31, %v7797, 0.0
    %v7924 = vadd.f32 %v7922, %v7923
    %v7925 = vsel %vm31, %v7798, 0.0
    %v7926 = vadd.f32 %v7924, %v7925
    %v7927 = vsel %vm31, %v7799, 0.0
    %v7928 = vadd.f32 %v7926, %v7927
    %v7929 = vsel %vm31, %v7800, 0.0
    %v7930 = vadd.f32 %v7928, %v7929
    %v7931 = vsel %vm31, %v7801, 0.0
    %v7932 = vadd.f32 %v7930, %v7931
    %v7933 = vrot.slane %v7932, 4
    %v7934 = vadd.f32 %v7932, %v7933
    %v7935 = vrot.slane %v7934, 2
    %v7936 = vadd.f32 %v7934, %v7935
    %v7937 = vrot.slane %v7936, 1
    %v7938 = vadd.f32 %v7936, %v7937
    %v7939 = vmul.f32 %v7938, %v3856
    %v7940 = vsub.f32 %v7738, %v7939
    %v7941 = vsub.f32 %v7739, %v7939
    %v7942 = vsub.f32 %v7740, %v7939
    %v7943 = vsub.f32 %v7741, %v7939
    %v7944 = vsub.f32 %v7742, %v7939
    %v7945 = vsub.f32 %v7743, %v7939
    %v7946 = vsub.f32 %v7744, %v7939
    %v7947 = vsub.f32 %v7745, %v7939
    %v7948 = vsub.f32 %v7746, %v7939
    %v7949 = vsub.f32 %v7747, %v7939
    %v7950 = vsub.f32 %v7748, %v7939
    %v7951 = vsub.f32 %v7749, %v7939
    %v7952 = vsub.f32 %v7750, %v7939
    %v7953 = vsub.f32 %v7751, %v7939
    %v7954 = vsub.f32 %v7752, %v7939
    %v7955 = vsub.f32 %v7753, %v7939
    %v7956 = vsub.f32 %v7754, %v7939
    %v7957 = vsub.f32 %v7755, %v7939
    %v7958 = vsub.f32 %v7756, %v7939
    %v7959 = vsub.f32 %v7757, %v7939
    %v7960 = vsub.f32 %v7758, %v7939
    %v7961 = vsub.f32 %v7759, %v7939
    %v7962 = vsub.f32 %v7760, %v7939
    %v7963 = vsub.f32 %v7761, %v7939
    %v7964 = vsub.f32 %v7762, %v7939
    %v7965 = vsub.f32 %v7763, %v7939
    %v7966 = vsub.f32 %v7764, %v7939
    %v7967 = vsub.f32 %v7765, %v7939
    %v7968 = vsub.f32 %v7766, %v7939
    %v7969 = vsub.f32 %v7767, %v7939
    %v7970 = vsub.f32 %v7768, %v7939
    %v7971 = vsub.f32 %v7769, %v7939
    %v7972 = vsub.f32 %v7770, %v7939
    %v7973 = vsub.f32 %v7771, %v7939
    %v7974 = vsub.f32 %v7772, %v7939
    %v7975 = vsub.f32 %v7773, %v7939
    %v7976 = vsub.f32 %v7774, %v7939
    %v7977 = vsub.f32 %v7775, %v7939
    %v7978 = vsub.f32 %v7776, %v7939
    %v7979 = vsub.f32 %v7777, %v7939
    %v7980 = vsub.f32 %v7778, %v7939
    %v7981 = vsub.f32 %v7779, %v7939
    %v7982 = vsub.f32 %v7780, %v7939
    %v7983 = vsub.f32 %v7781, %v7939
    %v7984 = vsub.f32 %v7782, %v7939
    %v7985 = vsub.f32 %v7783, %v7939
    %v7986 = vsub.f32 %v7784, %v7939
    %v7987 = vsub.f32 %v7785, %v7939
    %v7988 = vsub.f32 %v7786, %v7939
    %v7989 = vsub.f32 %v7787, %v7939
    %v7990 = vsub.f32 %v7788, %v7939
    %v7991 = vsub.f32 %v7789, %v7939
    %v7992 = vsub.f32 %v7790, %v7939
    %v7993 = vsub.f32 %v7791, %v7939
    %v7994 = vsub.f32 %v7792, %v7939
    %v7995 = vsub.f32 %v7793, %v7939
    %v7996 = vsub.f32 %v7794, %v7939
    %v7997 = vsub.f32 %v7795, %v7939
    %v7998 = vsub.f32 %v7796, %v7939
    %v7999 = vsub.f32 %v7797, %v7939
    %v8000 = vsub.f32 %v7798, %v7939
    %v8001 = vsub.f32 %v7799, %v7939
    %v8002 = vsub.f32 %v7800, %v7939
    %v8003 = vsub.f32 %v7801, %v7939
    %v8004 = vmul.f32 %v7940, %v7940
    %v8005 = vmul.f32 %v7941, %v7941
    %v8006 = vmul.f32 %v7942, %v7942
    %v8007 = vmul.f32 %v7943, %v7943
    %v8008 = vmul.f32 %v7944, %v7944
    %v8009 = vmul.f32 %v7945, %v7945
    %v8010 = vmul.f32 %v7946, %v7946
    %v8011 = vmul.f32 %v7947, %v7947
    %v8012 = vmul.f32 %v7948, %v7948
    %v8013 = vmul.f32 %v7949, %v7949
    %v8014 = vmul.f32 %v7950, %v7950
    %v8015 = vmul.f32 %v7951, %v7951
    %v8016 = vmul.f32 %v7952, %v7952
    %v8017 = vmul.f32 %v7953, %v7953
    %v8018 = vmul.f32 %v7954, %v7954
    %v8019 = vmul.f32 %v7955, %v7955
    %v8020 = vmul.f32 %v7956, %v7956
    %v8021 = vmul.f32 %v7957, %v7957
    %v8022 = vmul.f32 %v7958, %v7958
    %v8023 = vmul.f32 %v7959, %v7959
    %v8024 = vmul.f32 %v7960, %v7960
    %v8025 = vmul.f32 %v7961, %v7961
    %v8026 = vmul.f32 %v7962, %v7962
    %v8027 = vmul.f32 %v7963, %v7963
    %v8028 = vmul.f32 %v7964, %v7964
    %v8029 = vmul.f32 %v7965, %v7965
    %v8030 = vmul.f32 %v7966, %v7966
    %v8031 = vmul.f32 %v7967, %v7967
    %v8032 = vmul.f32 %v7968, %v7968
    %v8033 = vmul.f32 %v7969, %v7969
    %v8034 = vmul.f32 %v7970, %v7970
    %v8035 = vmul.f32 %v7971, %v7971
    %v8036 = vmul.f32 %v7972, %v7972
    %v8037 = vmul.f32 %v7973, %v7973
    %v8038 = vmul.f32 %v7974, %v7974
    %v8039 = vmul.f32 %v7975, %v7975
    %v8040 = vmul.f32 %v7976, %v7976
    %v8041 = vmul.f32 %v7977, %v7977
    %v8042 = vmul.f32 %v7978, %v7978
    %v8043 = vmul.f32 %v7979, %v7979
    %v8044 = vmul.f32 %v7980, %v7980
    %v8045 = vmul.f32 %v7981, %v7981
    %v8046 = vmul.f32 %v7982, %v7982
    %v8047 = vmul.f32 %v7983, %v7983
    %v8048 = vmul.f32 %v7984, %v7984
    %v8049 = vmul.f32 %v7985, %v7985
    %v8050 = vmul.f32 %v7986, %v7986
    %v8051 = vmul.f32 %v7987, %v7987
    %v8052 = vmul.f32 %v7988, %v7988
    %v8053 = vmul.f32 %v7989, %v7989
    %v8054 = vmul.f32 %v7990, %v7990
    %v8055 = vmul.f32 %v7991, %v7991
    %v8056 = vmul.f32 %v7992, %v7992
    %v8057 = vmul.f32 %v7993, %v7993
    %v8058 = vmul.f32 %v7994, %v7994
    %v8059 = vmul.f32 %v7995, %v7995
    %v8060 = vmul.f32 %v7996, %v7996
    %v8061 = vmul.f32 %v7997, %v7997
    %v8062 = vmul.f32 %v7998, %v7998
    %v8063 = vmul.f32 %v7999, %v7999
    %v8064 = vmul.f32 %v8000, %v8000
    %v8065 = vmul.f32 %v8001, %v8001
    %v8066 = vmul.f32 %v8002, %v8002
    %v8067 = vmul.f32 %v8003, %v8003
    %v8068 = vsel %vm31, %v8004, 0.0
    %v8069 = vsel %vm31, %v8005, 0.0
    %v8070 = vadd.f32 %v8068, %v8069
    %v8071 = vsel %vm31, %v8006, 0.0
    %v8072 = vadd.f32 %v8070, %v8071
    %v8073 = vsel %vm31, %v8007, 0.0
    %v8074 = vadd.f32 %v8072, %v8073
    %v8075 = vsel %vm31, %v8008, 0.0
    %v8076 = vadd.f32 %v8074, %v8075
    %v8077 = vsel %vm31, %v8009, 0.0
    %v8078 = vadd.f32 %v8076, %v8077
    %v8079 = vsel %vm31, %v8010, 0.0
    %v8080 = vadd.f32 %v8078, %v8079
    %v8081 = vsel %vm31, %v8011, 0.0
    %v8082 = vadd.f32 %v8080, %v8081
    %v8083 = vsel %vm31, %v8012, 0.0
    %v8084 = vadd.f32 %v8082, %v8083
    %v8085 = vsel %vm31, %v8013, 0.0
    %v8086 = vadd.f32 %v8084, %v8085
    %v8087 = vsel %vm31, %v8014, 0.0
    %v8088 = vadd.f32 %v8086, %v8087
    %v8089 = vsel %vm31, %v8015, 0.0
    %v8090 = vadd.f32 %v8088, %v8089
    %v8091 = vsel %vm31, %v8016, 0.0
    %v8092 = vadd.f32 %v8090, %v8091
    %v8093 = vsel %vm31, %v8017, 0.0
    %v8094 = vadd.f32 %v8092, %v8093
    %v8095 = vsel %vm31, %v8018, 0.0
    %v8096 = vadd.f32 %v8094, %v8095
    %v8097 = vsel %vm31, %v8019, 0.0
    %v8098 = vadd.f32 %v8096, %v8097
    %v8099 = vsel %vm31, %v8020, 0.0
    %v8100 = vadd.f32 %v8098, %v8099
    %v8101 = vsel %vm31, %v8021, 0.0
    %v8102 = vadd.f32 %v8100, %v8101
    %v8103 = vsel %vm31, %v8022, 0.0
    %v8104 = vadd.f32 %v8102, %v8103
    %v8105 = vsel %vm31, %v8023, 0.0
    %v8106 = vadd.f32 %v8104, %v8105
    %v8107 = vsel %vm31, %v8024, 0.0
    %v8108 = vadd.f32 %v8106, %v8107
    %v8109 = vsel %vm31, %v8025, 0.0
    %v8110 = vadd.f32 %v8108, %v8109
    %v8111 = vsel %vm31, %v8026, 0.0
    %v8112 = vadd.f32 %v8110, %v8111
    %v8113 = vsel %vm31, %v8027, 0.0
    %v8114 = vadd.f32 %v8112, %v8113
    %v8115 = vsel %vm31, %v8028, 0.0
    %v8116 = vadd.f32 %v8114, %v8115
    %v8117 = vsel %vm31, %v8029, 0.0
    %v8118 = vadd.f32 %v8116, %v8117
    %v8119 = vsel %vm31, %v8030, 0.0
    %v8120 = vadd.f32 %v8118, %v8119
    %v8121 = vsel %vm31, %v8031, 0.0
    %v8122 = vadd.f32 %v8120, %v8121
    %v8123 = vsel %vm31, %v8032, 0.0
    %v8124 = vadd.f32 %v8122, %v8123
    %v8125 = vsel %vm31, %v8033, 0.0
    %v8126 = vadd.f32 %v8124, %v8125
    %v8127 = vsel %vm31, %v8034, 0.0
    %v8128 = vadd.f32 %v8126, %v8127
    %v8129 = vsel %vm31, %v8035, 0.0
    %v8130 = vadd.f32 %v8128, %v8129
    %v8131 = vsel %vm31, %v8036, 0.0
    %v8132 = vadd.f32 %v8130, %v8131
    %v8133 = vsel %vm31, %v8037, 0.0
    %v8134 = vadd.f32 %v8132, %v8133
    %v8135 = vsel %vm31, %v8038, 0.0
    %v8136 = vadd.f32 %v8134, %v8135
    %v8137 = vsel %vm31, %v8039, 0.0
    %v8138 = vadd.f32 %v8136, %v8137
    %v8139 = vsel %vm31, %v8040, 0.0
    %v8140 = vadd.f32 %v8138, %v8139
    %v8141 = vsel %vm31, %v8041, 0.0
    %v8142 = vadd.f32 %v8140, %v8141
    %v8143 = vsel %vm31, %v8042, 0.0
    %v8144 = vadd.f32 %v8142, %v8143
    %v8145 = vsel %vm31, %v8043, 0.0
    %v8146 = vadd.f32 %v8144, %v8145
    %v8147 = vsel %vm31, %v8044, 0.0
    %v8148 = vadd.f32 %v8146, %v8147
    %v8149 = vsel %vm31, %v8045, 0.0
    %v8150 = vadd.f32 %v8148, %v8149
    %v8151 = vsel %vm31, %v8046, 0.0
    %v8152 = vadd.f32 %v8150, %v8151
    %v8153 = vsel %vm31, %v8047, 0.0
    %v8154 = vadd.f32 %v8152, %v8153
    %v8155 = vsel %vm31, %v8048, 0.0
    %v8156 = vadd.f32 %v8154, %v8155
    %v8157 = vsel %vm31, %v8049, 0.0
    %v8158 = vadd.f32 %v8156, %v8157
    %v8159 = vsel %vm31, %v8050, 0.0
    %v8160 = vadd.f32 %v8158, %v8159
    %v8161 = vsel %vm31, %v8051, 0.0
    %v8162 = vadd.f32 %v8160, %v8161
    %v8163 = vsel %vm31, %v8052, 0.0
    %v8164 = vadd.f32 %v8162, %v8163
    %v8165 = vsel %vm31, %v8053, 0.0
    %v8166 = vadd.f32 %v8164, %v8165
    %v8167 = vsel %vm31, %v8054, 0.0
    %v8168 = vadd.f32 %v8166, %v8167
    %v8169 = vsel %vm31, %v8055, 0.0
    %v8170 = vadd.f32 %v8168, %v8169
    %v8171 = vsel %vm31, %v8056, 0.0
    %v8172 = vadd.f32 %v8170, %v8171
    %v8173 = vsel %vm31, %v8057, 0.0
    %v8174 = vadd.f32 %v8172, %v8173
    %v8175 = vsel %vm31, %v8058, 0.0
    %v8176 = vadd.f32 %v8174, %v8175
    %v8177 = vsel %vm31, %v8059, 0.0
    %v8178 = vadd.f32 %v8176, %v8177
    %v8179 = vsel %vm31, %v8060, 0.0
    %v8180 = vadd.f32 %v8178, %v8179
    %v8181 = vsel %vm31, %v8061, 0.0
    %v8182 = vadd.f32 %v8180, %v8181
    %v8183 = vsel %vm31, %v8062, 0.0
    %v8184 = vadd.f32 %v8182, %v8183
    %v8185 = vsel %vm31, %v8063, 0.0
    %v8186 = vadd.f32 %v8184, %v8185
    %v8187 = vsel %vm31, %v8064, 0.0
    %v8188 = vadd.f32 %v8186, %v8187
    %v8189 = vsel %vm31, %v8065, 0.0
    %v8190 = vadd.f32 %v8188, %v8189
    %v8191 = vsel %vm31, %v8066, 0.0
    %v8192 = vadd.f32 %v8190, %v8191
    %v8193 = vsel %vm31, %v8067, 0.0
    %v8194 = vadd.f32 %v8192, %v8193
    %v8195 = vrot.slane %v8194, 4
    %v8196 = vadd.f32 %v8194, %v8195
    %v8197 = vrot.slane %v8196, 2
    %v8198 = vadd.f32 %v8196, %v8197
    %v8199 = vrot.slane %v8198, 1
    %v8200 = vadd.f32 %v8198, %v8199
    %v8201 = vmul.f32 %v8200, %v3856
    %v8202 = vadd.f32 %v8201, 1e-05
    %v8203 = vrsqrt.pop %v8202
    %v8204 = vmul.f32 %v8203, %v8202
    %v8205 = vmul.f32 %v8204, %v8203
    %v8206 = vmul.f32 0.5, %v8205
    %v8207 = vsub.f32 1.5, %v8206
    %v8208 = vmul.f32 %v8203, %v8207
    %vm8209 = vweird.f32 %v8202
    %vm8210 = vweird.f32 %v8203
    %vm8211 = vmor %vm8209, %vm8210
    %v8212 = vsel %vm8211, %v8203, %v8208
    %v8213 = vmul.f32 %v7940, %v8212
    %v8214 = vmul.f32 %v7941, %v8212
    %v8215 = vmul.f32 %v7942, %v8212
    %v8216 = vmul.f32 %v7943, %v8212
    %v8217 = vmul.f32 %v7944, %v8212
    %v8218 = vmul.f32 %v7945, %v8212
    %v8219 = vmul.f32 %v7946, %v8212
    %v8220 = vmul.f32 %v7947, %v8212
    %v8221 = vmul.f32 %v7948, %v8212
    %v8222 = vmul.f32 %v7949, %v8212
    %v8223 = vmul.f32 %v7950, %v8212
    %v8224 = vmul.f32 %v7951, %v8212
    %v8225 = vmul.f32 %v7952, %v8212
    %v8226 = vmul.f32 %v7953, %v8212
    %v8227 = vmul.f32 %v7954, %v8212
    %v8228 = vmul.f32 %v7955, %v8212
    %v8229 = vmul.f32 %v7956, %v8212
    %v8230 = vmul.f32 %v7957, %v8212
    %v8231 = vmul.f32 %v7958, %v8212
    %v8232 = vmul.f32 %v7959, %v8212
    %v8233 = vmul.f32 %v7960, %v8212
    %v8234 = vmul.f32 %v7961, %v8212
    %v8235 = vmul.f32 %v7962, %v8212
    %v8236 = vmul.f32 %v7963, %v8212
    %v8237 = vmul.f32 %v7964, %v8212
    %v8238 = vmul.f32 %v7965, %v8212
    %v8239 = vmul.f32 %v7966, %v8212
    %v8240 = vmul.f32 %v7967, %v8212
    %v8241 = vmul.f32 %v7968, %v8212
    %v8242 = vmul.f32 %v7969, %v8212
    %v8243 = vmul.f32 %v7970, %v8212
    %v8244 = vmul.f32 %v7971, %v8212
    %v8245 = vmul.f32 %v7972, %v8212
    %v8246 = vmul.f32 %v7973, %v8212
    %v8247 = vmul.f32 %v7974, %v8212
    %v8248 = vmul.f32 %v7975, %v8212
    %v8249 = vmul.f32 %v7976, %v8212
    %v8250 = vmul.f32 %v7977, %v8212
    %v8251 = vmul.f32 %v7978, %v8212
    %v8252 = vmul.f32 %v7979, %v8212
    %v8253 = vmul.f32 %v7980, %v8212
    %v8254 = vmul.f32 %v7981, %v8212
    %v8255 = vmul.f32 %v7982, %v8212
    %v8256 = vmul.f32 %v7983, %v8212
    %v8257 = vmul.f32 %v7984, %v8212
    %v8258 = vmul.f32 %v7985, %v8212
    %v8259 = vmul.f32 %v7986, %v8212
    %v8260 = vmul.f32 %v7987, %v8212
    %v8261 = vmul.f32 %v7988, %v8212
    %v8262 = vmul.f32 %v7989, %v8212
    %v8263 = vmul.f32 %v7990, %v8212
    %v8264 = vmul.f32 %v7991, %v8212
    %v8265 = vmul.f32 %v7992, %v8212
    %v8266 = vmul.f32 %v7993, %v8212
    %v8267 = vmul.f32 %v7994, %v8212
    %v8268 = vmul.f32 %v7995, %v8212
    %v8269 = vmul.f32 %v7996, %v8212
    %v8270 = vmul.f32 %v7997, %v8212
    %v8271 = vmul.f32 %v7998, %v8212
    %v8272 = vmul.f32 %v7999, %v8212
    %v8273 = vmul.f32 %v8000, %v8212
    %v8274 = vmul.f32 %v8001, %v8212
    %v8275 = vmul.f32 %v8002, %v8212
    %v8276 = vmul.f32 %v8003, %v8212
    %v8278 = vperm.slane %v7803, 0
    %v8280 = vmul.f32 %v8213, %v8278
    %v8281 = vmul.f32 %v8214, %v8278
    %v8282 = vmul.f32 %v8215, %v8278
    %v8283 = vmul.f32 %v8216, %v8278
    %v8284 = vmul.f32 %v8217, %v8278
    %v8285 = vmul.f32 %v8218, %v8278
    %v8286 = vmul.f32 %v8219, %v8278
    %v8287 = vmul.f32 %v8220, %v8278
    %v8288 = vmul.f32 %v8221, %v8278
    %v8289 = vmul.f32 %v8222, %v8278
    %v8290 = vmul.f32 %v8223, %v8278
    %v8291 = vmul.f32 %v8224, %v8278
    %v8292 = vmul.f32 %v8225, %v8278
    %v8293 = vmul.f32 %v8226, %v8278
    %v8294 = vmul.f32 %v8227, %v8278
    %v8295 = vmul.f32 %v8228, %v8278
    %v8296 = vmul.f32 %v8229, %v8278
    %v8297 = vmul.f32 %v8230, %v8278
    %v8298 = vmul.f32 %v8231, %v8278
    %v8299 = vmul.f32 %v8232, %v8278
    %v8300 = vmul.f32 %v8233, %v8278
    %v8301 = vmul.f32 %v8234, %v8278
    %v8302 = vmul.f32 %v8235, %v8278
    %v8303 = vmul.f32 %v8236, %v8278
    %v8304 = vmul.f32 %v8237, %v8278
    %v8305 = vmul.f32 %v8238, %v8278
    %v8306 = vmul.f32 %v8239, %v8278
    %v8307 = vmul.f32 %v8240, %v8278
    %v8308 = vmul.f32 %v8241, %v8278
    %v8309 = vmul.f32 %v8242, %v8278
    %v8310 = vmul.f32 %v8243, %v8278
    %v8311 = vmul.f32 %v8244, %v8278
    %v8312 = vmul.f32 %v8245, %v8278
    %v8313 = vmul.f32 %v8246, %v8278
    %v8314 = vmul.f32 %v8247, %v8278
    %v8315 = vmul.f32 %v8248, %v8278
    %v8316 = vmul.f32 %v8249, %v8278
    %v8317 = vmul.f32 %v8250, %v8278
    %v8318 = vmul.f32 %v8251, %v8278
    %v8319 = vmul.f32 %v8252, %v8278
    %v8320 = vmul.f32 %v8253, %v8278
    %v8321 = vmul.f32 %v8254, %v8278
    %v8322 = vmul.f32 %v8255, %v8278
    %v8323 = vmul.f32 %v8256, %v8278
    %v8324 = vmul.f32 %v8257, %v8278
    %v8325 = vmul.f32 %v8258, %v8278
    %v8326 = vmul.f32 %v8259, %v8278
    %v8327 = vmul.f32 %v8260, %v8278
    %v8328 = vmul.f32 %v8261, %v8278
    %v8329 = vmul.f32 %v8262, %v8278
    %v8330 = vmul.f32 %v8263, %v8278
    %v8331 = vmul.f32 %v8264, %v8278
    %v8332 = vmul.f32 %v8265, %v8278
    %v8333 = vmul.f32 %v8266, %v8278
    %v8334 = vmul.f32 %v8267, %v8278
    %v8335 = vmul.f32 %v8268, %v8278
    %v8336 = vmul.f32 %v8269, %v8278
    %v8337 = vmul.f32 %v8270, %v8278
    %v8338 = vmul.f32 %v8271, %v8278
    %v8339 = vmul.f32 %v8272, %v8278
    %v8340 = vmul.f32 %v8273, %v8278
    %v8341 = vmul.f32 %v8274, %v8278
    %v8342 = vmul.f32 %v8275, %v8278
    %v8343 = vmul.f32 %v8276, %v8278
    %v8345 = vperm.slane %v7805, 0
    %v8347 = vadd.f32 %v8280, %v8345
    %v8348 = vadd.f32 %v8281, %v8345
    %v8349 = vadd.f32 %v8282, %v8345
    %v8350 = vadd.f32 %v8283, %v8345
    %v8351 = vadd.f32 %v8284, %v8345
    %v8352 = vadd.f32 %v8285, %v8345
    %v8353 = vadd.f32 %v8286, %v8345
    %v8354 = vadd.f32 %v8287, %v8345
    %v8355 = vadd.f32 %v8288, %v8345
    %v8356 = vadd.f32 %v8289, %v8345
    %v8357 = vadd.f32 %v8290, %v8345
    %v8358 = vadd.f32 %v8291, %v8345
    %v8359 = vadd.f32 %v8292, %v8345
    %v8360 = vadd.f32 %v8293, %v8345
    %v8361 = vadd.f32 %v8294, %v8345
    %v8362 = vadd.f32 %v8295, %v8345
    %v8363 = vadd.f32 %v8296, %v8345
    %v8364 = vadd.f32 %v8297, %v8345
    %v8365 = vadd.f32 %v8298, %v8345
    %v8366 = vadd.f32 %v8299, %v8345
    %v8367 = vadd.f32 %v8300, %v8345
    %v8368 = vadd.f32 %v8301, %v8345
    %v8369 = vadd.f32 %v8302, %v8345
    %v8370 = vadd.f32 %v8303, %v8345
    %v8371 = vadd.f32 %v8304, %v8345
    %v8372 = vadd.f32 %v8305, %v8345
    %v8373 = vadd.f32 %v8306, %v8345
    %v8374 = vadd.f32 %v8307, %v8345
    %v8375 = vadd.f32 %v8308, %v8345
    %v8376 = vadd.f32 %v8309, %v8345
    %v8377 = vadd.f32 %v8310, %v8345
    %v8378 = vadd.f32 %v8311, %v8345
    %v8379 = vadd.f32 %v8312, %v8345
    %v8380 = vadd.f32 %v8313, %v8345
    %v8381 = vadd.f32 %v8314, %v8345
    %v8382 = vadd.f32 %v8315, %v8345
    %v8383 = vadd.f32 %v8316, %v8345
    %v8384 = vadd.f32 %v8317, %v8345
    %v8385 = vadd.f32 %v8318, %v8345
    %v8386 = vadd.f32 %v8319, %v8345
    %v8387 = vadd.f32 %v8320, %v8345
    %v8388 = vadd.f32 %v8321, %v8345
    %v8389 = vadd.f32 %v8322, %v8345
    %v8390 = vadd.f32 %v8323, %v8345
    %v8391 = vadd.f32 %v8324, %v8345
    %v8392 = vadd.f32 %v8325, %v8345
    %v8393 = vadd.f32 %v8326, %v8345
    %v8394 = vadd.f32 %v8327, %v8345
    %v8395 = vadd.f32 %v8328, %v8345
    %v8396 = vadd.f32 %v8329, %v8345
    %v8397 = vadd.f32 %v8330, %v8345
    %v8398 = vadd.f32 %v8331, %v8345
    %v8399 = vadd.f32 %v8332, %v8345
    %v8400 = vadd.f32 %v8333, %v8345
    %v8401 = vadd.f32 %v8334, %v8345
    %v8402 = vadd.f32 %v8335, %v8345
    %v8403 = vadd.f32 %v8336, %v8345
    %v8404 = vadd.f32 %v8337, %v8345
    %v8405 = vadd.f32 %v8338, %v8345
    %v8406 = vadd.f32 %v8339, %v8345
    %v8407 = vadd.f32 %v8340, %v8345
    %v8408 = vadd.f32 %v8341, %v8345
    %v8409 = vadd.f32 %v8342, %v8345
    %v8410 = vadd.f32 %v8343, %v8345
    %8411 = vst.msk [vmem:[%s240 + $0x8] sm:$0xff] %vm31, %v8347
    %8412 = vst.msk [vmem:[%s240 + $0x10] sm:$0xff] %vm31, %v8348
    %8413 = vst.msk [vmem:[%s240 + $0x28] sm:$0xff] %vm31, %v8349
    %8414 = vst.msk [vmem:[%s240 + $0x30] sm:$0xff] %vm31, %v8350
    %8415 = vst.msk [vmem:[%s240 + $0x48] sm:$0xff] %vm31, %v8351
    %8416 = vst.msk [vmem:[%s240 + $0x50] sm:$0xff] %vm31, %v8352
    %8417 = vst.msk [vmem:[%s240 + $0x68] sm:$0xff] %vm31, %v8353
    %8418 = vst.msk [vmem:[%s240 + $0x70] sm:$0xff] %vm31, %v8354
    %8419 = vst.msk [vmem:[%s240 + $0x88] sm:$0xff] %vm31, %v8355
    %8420 = vst.msk [vmem:[%s240 + $0x90] sm:$0xff] %vm31, %v8356
    %8421 = vst.msk [vmem:[%s240 + $0xa8] sm:$0xff] %vm31, %v8357
    %8422 = vst.msk [vmem:[%s240 + $0xb0] sm:$0xff] %vm31, %v8358
    %8423 = vst.msk [vmem:[%s240 + $0xc8] sm:$0xff] %vm31, %v8359
    %8424 = vst.msk [vmem:[%s240 + $0xd0] sm:$0xff] %vm31, %v8360
    %8425 = vst.msk [vmem:[%s240 + $0xe8] sm:$0xff] %vm31, %v8361
    %8426 = vst.msk [vmem:[%s240 + $0xf0] sm:$0xff] %vm31, %v8362
    %8427 = vst.msk [vmem:[%s240 + $0x108] sm:$0xff] %vm31, %v8363
    %8428 = vst.msk [vmem:[%s240 + $0x110] sm:$0xff] %vm31, %v8364
    %8429 = vst.msk [vmem:[%s240 + $0x128] sm:$0xff] %vm31, %v8365
    %8430 = vst.msk [vmem:[%s240 + $0x130] sm:$0xff] %vm31, %v8366
    %8431 = vst.msk [vmem:[%s240 + $0x148] sm:$0xff] %vm31, %v8367
    %8432 = vst.msk [vmem:[%s240 + $0x150] sm:$0xff] %vm31, %v8368
    %8433 = vst.msk [vmem:[%s240 + $0x168] sm:$0xff] %vm31, %v8369
    %8434 = vst.msk [vmem:[%s240 + $0x170] sm:$0xff] %vm31, %v8370
    %8435 = vst.msk [vmem:[%s240 + $0x188] sm:$0xff] %vm31, %v8371
    %8436 = vst.msk [vmem:[%s240 + $0x190] sm:$0xff] %vm31, %v8372
    %8437 = vst.msk [vmem:[%s240 + $0x1a8] sm:$0xff] %vm31, %v8373
    %8438 = vst.msk [vmem:[%s240 + $0x1b0] sm:$0xff] %vm31, %v8374
    %8439 = vst.msk [vmem:[%s240 + $0x1c8] sm:$0xff] %vm31, %v8375
    %8440 = vst.msk [vmem:[%s240 + $0x1d0] sm:$0xff] %vm31, %v8376
    %8441 = vst.msk [vmem:[%s240 + $0x1e8] sm:$0xff] %vm31, %v8377
    %8442 = vst.msk [vmem:[%s240 + $0x1f0] sm:$0xff] %vm31, %v8378
    %8443 = vst.msk [vmem:[%s240 + $0x248] sm:$0xff] %vm31, %v8379
    %8444 = vst.msk [vmem:[%s240 + $0x250] sm:$0xff] %vm31, %v8380
    %8445 = vst.msk [vmem:[%s240 + $0x268] sm:$0xff] %vm31, %v8381
    %8446 = vst.msk [vmem:[%s240 + $0x270] sm:$0xff] %vm31, %v8382
    %8447 = vst.msk [vmem:[%s240 + $0x288] sm:$0xff] %vm31, %v8383
    %8448 = vst.msk [vmem:[%s240 + $0x290] sm:$0xff] %vm31, %v8384
    %8449 = vst.msk [vmem:[%s240 + $0x2a8] sm:$0xff] %vm31, %v8385
    %8450 = vst.msk [vmem:[%s240 + $0x2b0] sm:$0xff] %vm31, %v8386
    %8451 = vst.msk [vmem:[%s240 + $0x2c8] sm:$0xff] %vm31, %v8387
    %8452 = vst.msk [vmem:[%s240 + $0x2d0] sm:$0xff] %vm31, %v8388
    %8453 = vst.msk [vmem:[%s240 + $0x2e8] sm:$0xff] %vm31, %v8389
    %8454 = vst.msk [vmem:[%s240 + $0x2f0] sm:$0xff] %vm31, %v8390
    %8455 = vst.msk [vmem:[%s240 + $0x308] sm:$0xff] %vm31, %v8391
    %8456 = vst.msk [vmem:[%s240 + $0x310] sm:$0xff] %vm31, %v8392
    %8457 = vst.msk [vmem:[%s240 + $0x328] sm:$0xff] %vm31, %v8393
    %8458 = vst.msk [vmem:[%s240 + $0x330] sm:$0xff] %vm31, %v8394
    %8459 = vst.msk [vmem:[%s240 + $0x348] sm:$0xff] %vm31, %v8395
    %8460 = vst.msk [vmem:[%s240 + $0x350] sm:$0xff] %vm31, %v8396
    %8461 = vst.msk [vmem:[%s240 + $0x368] sm:$0xff] %vm31, %v8397
    %8462 = vst.msk [vmem:[%s240 + $0x370] sm:$0xff] %vm31, %v8398
    %8463 = vst.msk [vmem:[%s240 + $0x388] sm:$0xff] %vm31, %v8399
    %8464 = vst.msk [vmem:[%s240 + $0x390] sm:$0xff] %vm31, %v8400
    %8465 = vst.msk [vmem:[%s240 + $0x3a8] sm:$0xff] %vm31, %v8401
    %8466 = vst.msk [vmem:[%s240 + $0x3b0] sm:$0xff] %vm31, %v8402
    %8467 = vst.msk [vmem:[%s240 + $0x3c8] sm:$0xff] %vm31, %v8403
    %8468 = vst.msk [vmem:[%s240 + $0x3d0] sm:$0xff] %vm31, %v8404
    %8469 = vst.msk [vmem:[%s240 + $0x3e8] sm:$0xff] %vm31, %v8405
    %8470 = vst.msk [vmem:[%s240 + $0x3f0] sm:$0xff] %vm31, %v8406
    %8471 = vst.msk [vmem:[%s240 + $0x408] sm:$0xff] %vm31, %v8407
    %8472 = vst.msk [vmem:[%s240 + $0x410] sm:$0xff] %vm31, %v8408
    %8473 = vst.msk [vmem:[%s240 + $0x428] sm:$0xff] %vm31, %v8409
    %8474 = vst.msk [vmem:[%s240 + $0x430] sm:$0xff] %vm31, %v8410
    %v8475 = vld [vmem:[#allocation2 + $0x7] sm:$0xff]
    %v8476 = vld [vmem:[#allocation2 + $0xf] sm:$0xff]
    %v8477 = vld [vmem:[#allocation2 + $0x27] sm:$0xff]
    %v8478 = vld [vmem:[#allocation2 + $0x2f] sm:$0xff]
    %v8479 = vld [vmem:[#allocation2 + $0x47] sm:$0xff]
    %v8480 = vld [vmem:[#allocation2 + $0x4f] sm:$0xff]
    %v8481 = vld [vmem:[#allocation2 + $0x67] sm:$0xff]
    %v8482 = vld [vmem:[#allocation2 + $0x6f] sm:$0xff]
    %v8483 = vld [vmem:[#allocation2 + $0x87] sm:$0xff]
    %v8484 = vld [vmem:[#allocation2 + $0x8f] sm:$0xff]
    %v8485 = vld [vmem:[#allocation2 + $0xa7] sm:$0xff]
    %v8486 = vld [vmem:[#allocation2 + $0xaf] sm:$0xff]
    %v8487 = vld [vmem:[#allocation2 + $0xc7] sm:$0xff]
    %v8488 = vld [vmem:[#allocation2 + $0xcf] sm:$0xff]
    %v8489 = vld [vmem:[#allocation2 + $0xe7] sm:$0xff]
    %v8490 = vld [vmem:[#allocation2 + $0xef] sm:$0xff]
    %v8491 = vld [vmem:[#allocation2 + $0x107] sm:$0xff]
    %v8492 = vld [vmem:[#allocation2 + $0x10f] sm:$0xff]
    %v8493 = vld [vmem:[#allocation2 + $0x127] sm:$0xff]
    %v8494 = vld [vmem:[#allocation2 + $0x12f] sm:$0xff]
    %v8495 = vld [vmem:[#allocation2 + $0x147] sm:$0xff]
    %v8496 = vld [vmem:[#allocation2 + $0x14f] sm:$0xff]
    %v8497 = vld [vmem:[#allocation2 + $0x167] sm:$0xff]
    %v8498 = vld [vmem:[#allocation2 + $0x16f] sm:$0xff]
    %v8499 = vld [vmem:[#allocation2 + $0x187] sm:$0xff]
    %v8500 = vld [vmem:[#allocation2 + $0x18f] sm:$0xff]
    %v8501 = vld [vmem:[#allocation2 + $0x1a7] sm:$0xff]
    %v8502 = vld [vmem:[#allocation2 + $0x1af] sm:$0xff]
    %v8503 = vld [vmem:[#allocation2 + $0x1c7] sm:$0xff]
    %v8504 = vld [vmem:[#allocation2 + $0x1cf] sm:$0xff]
    %v8505 = vld [vmem:[#allocation2 + $0x1e7] sm:$0xff]
    %v8506 = vld [vmem:[#allocation2 + $0x1ef] sm:$0xff]
    %v8507 = vld [vmem:[#allocation2 + $0x247] sm:$0xff]
    %v8508 = vld [vmem:[#allocation2 + $0x24f] sm:$0xff]
    %v8509 = vld [vmem:[#allocation2 + $0x267] sm:$0xff]
    %v8510 = vld [vmem:[#allocation2 + $0x26f] sm:$0xff]
    %v8511 = vld [vmem:[#allocation2 + $0x287] sm:$0xff]
    %v8512 = vld [vmem:[#allocation2 + $0x28f] sm:$0xff]
    %v8513 = vld [vmem:[#allocation2 + $0x2a7] sm:$0xff]
    %v8514 = vld [vmem:[#allocation2 + $0x2af] sm:$0xff]
    %v8515 = vld [vmem:[#allocation2 + $0x2c7] sm:$0xff]
    %v8516 = vld [vmem:[#allocation2 + $0x2cf] sm:$0xff]
    %v8517 = vld [vmem:[#allocation2 + $0x2e7] sm:$0xff]
    %v8518 = vld [vmem:[#allocation2 + $0x2ef] sm:$0xff]
    %v8519 = vld [vmem:[#allocation2 + $0x307] sm:$0xff]
    %v8520 = vld [vmem:[#allocation2 + $0x30f] sm:$0xff]
    %v8521 = vld [vmem:[#allocation2 + $0x327] sm:$0xff]
    %v8522 = vld [vmem:[#allocation2 + $0x32f] sm:$0xff]
    %v8523 = vld [vmem:[#allocation2 + $0x347] sm:$0xff]
    %v8524 = vld [vmem:[#allocation2 + $0x34f] sm:$0xff]
    %v8525 = vld [vmem:[#allocation2 + $0x367] sm:$0xff]
    %v8526 = vld [vmem:[#allocation2 + $0x36f] sm:$0xff]
    %v8527 = vld [vmem:[#allocation2 + $0x387] sm:$0xff]
    %v8528 = vld [vmem:[#allocation2 + $0x38f] sm:$0xff]
    %v8529 = vld [vmem:[#allocation2 + $0x3a7] sm:$0xff]
    %v8530 = vld [vmem:[#allocation2 + $0x3af] sm:$0xff]
    %v8531 = vld [vmem:[#allocation2 + $0x3c7] sm:$0xff]
    %v8532 = vld [vmem:[#allocation2 + $0x3cf] sm:$0xff]
    %v8533 = vld [vmem:[#allocation2 + $0x3e7] sm:$0xff]
    %v8534 = vld [vmem:[#allocation2 + $0x3ef] sm:$0xff]
    %v8535 = vld [vmem:[#allocation2 + $0x407] sm:$0xff]
    %v8536 = vld [vmem:[#allocation2 + $0x40f] sm:$0xff]
    %v8537 = vld [vmem:[#allocation2 + $0x427] sm:$0xff]
    %v8538 = vld [vmem:[#allocation2 + $0x42f] sm:$0xff]
    %v8539 = vld [vmem:[#allocation2 + $0x8] sm:$0xff]
    %v8540 = vld [vmem:[#allocation2 + $0x10] sm:$0xff]
    %v8541 = vld [vmem:[#allocation2 + $0x28] sm:$0xff]
    %v8542 = vld [vmem:[#allocation2 + $0x30] sm:$0xff]
    %v8543 = vld [vmem:[#allocation2 + $0x48] sm:$0xff]
    %v8544 = vld [vmem:[#allocation2 + $0x50] sm:$0xff]
    %v8545 = vld [vmem:[#allocation2 + $0x68] sm:$0xff]
    %v8546 = vld [vmem:[#allocation2 + $0x70] sm:$0xff]
    %v8547 = vld [vmem:[#allocation2 + $0x88] sm:$0xff]
    %v8548 = vld [vmem:[#allocation2 + $0x90] sm:$0xff]
    %v8549 = vld [vmem:[#allocation2 + $0xa8] sm:$0xff]
    %v8550 = vld [vmem:[#allocation2 + $0xb0] sm:$0xff]
    %v8551 = vld [vmem:[#allocation2 + $0xc8] sm:$0xff]
    %v8552 = vld [vmem:[#allocation2 + $0xd0] sm:$0xff]
    %v8553 = vld [vmem:[#allocation2 + $0xe8] sm:$0xff]
    %v8554 = vld [vmem:[#allocation2 + $0xf0] sm:$0xff]
    %v8555 = vld [vmem:[#allocation2 + $0x108] sm:$0xff]
    %v8556 = vld [vmem:[#allocation2 + $0x110] sm:$0xff]
    %v8557 = vld [vmem:[#allocation2 + $0x128] sm:$0xff]
    %v8558 = vld [vmem:[#allocation2 + $0x130] sm:$0xff]
    %v8559 = vld [vmem:[#allocation2 + $0x148] sm:$0xff]
    %v8560 = vld [vmem:[#allocation2 + $0x150] sm:$0xff]
    %v8561 = vld [vmem:[#allocation2 + $0x168] sm:$0xff]
    %v8562 = vld [vmem:[#allocation2 + $0x170] sm:$0xff]
    %v8563 = vld [vmem:[#allocation2 + $0x188] sm:$0xff]
    %v8564 = vld [vmem:[#allocation2 + $0x190] sm:$0xff]
    %v8565 = vld [vmem:[#allocation2 + $0x1a8] sm:$0xff]
    %v8566 = vld [vmem:[#allocation2 + $0x1b0] sm:$0xff]
    %v8567 = vld [vmem:[#allocation2 + $0x1c8] sm:$0xff]
    %v8568 = vld [vmem:[#allocation2 + $0x1d0] sm:$0xff]
    %v8569 = vld [vmem:[#allocation2 + $0x1e8] sm:$0xff]
    %v8570 = vld [vmem:[#allocation2 + $0x1f0] sm:$0xff]
    %v8571 = vld [vmem:[#allocation2 + $0x248] sm:$0xff]
    %v8572 = vld [vmem:[#allocation2 + $0x250] sm:$0xff]
    %v8573 = vld [vmem:[#allocation2 + $0x268] sm:$0xff]
    %v8574 = vld [vmem:[#allocation2 + $0x270] sm:$0xff]
    %v8575 = vld [vmem:[#allocation2 + $0x288] sm:$0xff]
    %v8576 = vld [vmem:[#allocation2 + $0x290] sm:$0xff]
    %v8577 = vld [vmem:[#allocation2 + $0x2a8] sm:$0xff]
    %v8578 = vld [vmem:[#allocation2 + $0x2b0] sm:$0xff]
    %v8579 = vld [vmem:[#allocation2 + $0x2c8] sm:$0xff]
    %v8580 = vld [vmem:[#allocation2 + $0x2d0] sm:$0xff]
    %v8581 = vld [vmem:[#allocation2 + $0x2e8] sm:$0xff]
    %v8582 = vld [vmem:[#allocation2 + $0x2f0] sm:$0xff]
    %v8583 = vld [vmem:[#allocation2 + $0x308] sm:$0xff]
    %v8584 = vld [vmem:[#allocation2 + $0x310] sm:$0xff]
    %v8585 = vld [vmem:[#allocation2 + $0x328] sm:$0xff]
    %v8586 = vld [vmem:[#allocation2 + $0x330] sm:$0xff]
    %v8587 = vld [vmem:[#allocation2 + $0x348] sm:$0xff]
    %v8588 = vld [vmem:[#allocation2 + $0x350] sm:$0xff]
    %v8589 = vld [vmem:[#allocation2 + $0x368] sm:$0xff]
    %v8590 = vld [vmem:[#allocation2 + $0x370] sm:$0xff]
    %v8591 = vld [vmem:[#allocation2 + $0x388] sm:$0xff]
    %v8592 = vld [vmem:[#allocation2 + $0x390] sm:$0xff]
    %v8593 = vld [vmem:[#allocation2 + $0x3a8] sm:$0xff]
    %v8594 = vld [vmem:[#allocation2 + $0x3b0] sm:$0xff]
    %v8595 = vld [vmem:[#allocation2 + $0x3c8] sm:$0xff]
    %v8596 = vld [vmem:[#allocation2 + $0x3d0] sm:$0xff]
    %v8597 = vld [vmem:[#allocation2 + $0x3e8] sm:$0xff]
    %v8598 = vld [vmem:[#allocation2 + $0x3f0] sm:$0xff]
    %v8599 = vld [vmem:[#allocation2 + $0x408] sm:$0xff]
    %v8600 = vld [vmem:[#allocation2 + $0x410] sm:$0xff]
    %v8601 = vld [vmem:[#allocation2 + $0x428] sm:$0xff]
    %v8602 = vld [vmem:[#allocation2 + $0x430] sm:$0xff]
    %v8603 = vld [vmem:[#allocation2 + $0x9] sm:$0xff]
    %v8604 = vld [vmem:[#allocation2 + $0x11] sm:$0xff]
    %v8605 = vld [vmem:[#allocation2 + $0x29] sm:$0xff]
    %v8606 = vld [vmem:[#allocation2 + $0x31] sm:$0xff]
    %v8607 = vld [vmem:[#allocation2 + $0x49] sm:$0xff]
    %v8608 = vld [vmem:[#allocation2 + $0x51] sm:$0xff]
    %v8609 = vld [vmem:[#allocation2 + $0x69] sm:$0xff]
    %v8610 = vld [vmem:[#allocation2 + $0x71] sm:$0xff]
    %v8611 = vld [vmem:[#allocation2 + $0x89] sm:$0xff]
    %v8612 = vld [vmem:[#allocation2 + $0x91] sm:$0xff]
    %v8613 = vld [vmem:[#allocation2 + $0xa9] sm:$0xff]
    %v8614 = vld [vmem:[#allocation2 + $0xb1] sm:$0xff]
    %v8615 = vld [vmem:[#allocation2 + $0xc9] sm:$0xff]
    %v8616 = vld [vmem:[#allocation2 + $0xd1] sm:$0xff]
    %v8617 = vld [vmem:[#allocation2 + $0xe9] sm:$0xff]
    %v8618 = vld [vmem:[#allocation2 + $0xf1] sm:$0xff]
    %v8619 = vld [vmem:[#allocation2 + $0x109] sm:$0xff]
    %v8620 = vld [vmem:[#allocation2 + $0x111] sm:$0xff]
    %v8621 = vld [vmem:[#allocation2 + $0x129] sm:$0xff]
    %v8622 = vld [vmem:[#allocation2 + $0x131] sm:$0xff]
    %v8623 = vld [vmem:[#allocation2 + $0x149] sm:$0xff]
    %v8624 = vld [vmem:[#allocation2 + $0x151] sm:$0xff]
    %v8625 = vld [vmem:[#allocation2 + $0x169] sm:$0xff]
    %v8626 = vld [vmem:[#allocation2 + $0x171] sm:$0xff]
    %v8627 = vld [vmem:[#allocation2 + $0x189] sm:$0xff]
    %v8628 = vld [vmem:[#allocation2 + $0x191] sm:$0xff]
    %v8629 = vld [vmem:[#allocation2 + $0x1a9] sm:$0xff]
    %v8630 = vld [vmem:[#allocation2 + $0x1b1] sm:$0xff]
    %v8631 = vld [vmem:[#allocation2 + $0x1c9] sm:$0xff]
    %v8632 = vld [vmem:[#allocation2 + $0x1d1] sm:$0xff]
    %v8633 = vld [vmem:[#allocation2 + $0x1e9] sm:$0xff]
    %v8634 = vld [vmem:[#allocation2 + $0x1f1] sm:$0xff]
    %v8635 = vld [vmem:[#allocation2 + $0x249] sm:$0xff]
    %v8636 = vld [vmem:[#allocation2 + $0x251] sm:$0xff]
    %v8637 = vld [vmem:[#allocation2 + $0x269] sm:$0xff]
    %v8638 = vld [vmem:[#allocation2 + $0x271] sm:$0xff]
    %v8639 = vld [vmem:[#allocation2 + $0x289] sm:$0xff]
    %v8640 = vld [vmem:[#allocation2 + $0x291] sm:$0xff]
    %v8641 = vld [vmem:[#allocation2 + $0x2a9] sm:$0xff]
    %v8642 = vld [vmem:[#allocation2 + $0x2b1] sm:$0xff]
    %v8643 = vld [vmem:[#allocation2 + $0x2c9] sm:$0xff]
    %v8644 = vld [vmem:[#allocation2 + $0x2d1] sm:$0xff]
    %v8645 = vld [vmem:[#allocation2 + $0x2e9] sm:$0xff]
    %v8646 = vld [vmem:[#allocation2 + $0x2f1] sm:$0xff]
    %v8647 = vld [vmem:[#allocation2 + $0x309] sm:$0xff]
    %v8648 = vld [vmem:[#allocation2 + $0x311] sm:$0xff]
    %v8649 = vld [vmem:[#allocation2 + $0x329] sm:$0xff]
    %v8650 = vld [vmem:[#allocation2 + $0x331] sm:$0xff]
    %v8651 = vld [vmem:[#allocation2 + $0x349] sm:$0xff]
    %v8652 = vld [vmem:[#allocation2 + $0x351] sm:$0xff]
    %v8653 = vld [vmem:[#allocation2 + $0x369] sm:$0xff]
    %v8654 = vld [vmem:[#allocation2 + $0x371] sm:$0xff]
    %v8655 = vld [vmem:[#allocation2 + $0x389] sm:$0xff]
    %v8656 = vld [vmem:[#allocation2 + $0x391] sm:$0xff]
    %v8657 = vld [vmem:[#allocation2 + $0x3a9] sm:$0xff]
    %v8658 = vld [vmem:[#allocation2 + $0x3b1] sm:$0xff]
    %v8659 = vld [vmem:[#allocation2 + $0x3c9] sm:$0xff]
    %v8660 = vld [vmem:[#allocation2 + $0x3d1] sm:$0xff]
    %v8661 = vld [vmem:[#allocation2 + $0x3e9] sm:$0xff]
    %v8662 = vld [vmem:[#allocation2 + $0x3f1] sm:$0xff]
    %v8663 = vld [vmem:[#allocation2 + $0x409] sm:$0xff]
    %v8664 = vld [vmem:[#allocation2 + $0x411] sm:$0xff]
    %v8665 = vld [vmem:[#allocation2 + $0x429] sm:$0xff]
    %v8666 = vld [vmem:[#allocation2 + $0x431] sm:$0xff]
    %v8667 = vld [vmem:[%s240 + $0x7] sm:$0xff]
    %v8668 = vld [vmem:[%s240 + $0xf] sm:$0xff]
    %v8669 = vld [vmem:[%s240 + $0x27] sm:$0xff]
    %v8670 = vld [vmem:[%s240 + $0x2f] sm:$0xff]
    %v8671 = vld [vmem:[%s240 + $0x47] sm:$0xff]
    %v8672 = vld [vmem:[%s240 + $0x4f] sm:$0xff]
    %v8673 = vld [vmem:[%s240 + $0x67] sm:$0xff]
    %v8674 = vld [vmem:[%s240 + $0x6f] sm:$0xff]
    %v8675 = vld [vmem:[%s240 + $0x87] sm:$0xff]
    %v8676 = vld [vmem:[%s240 + $0x8f] sm:$0xff]
    %v8677 = vld [vmem:[%s240 + $0xa7] sm:$0xff]
    %v8678 = vld [vmem:[%s240 + $0xaf] sm:$0xff]
    %v8679 = vld [vmem:[%s240 + $0xc7] sm:$0xff]
    %v8680 = vld [vmem:[%s240 + $0xcf] sm:$0xff]
    %v8681 = vld [vmem:[%s240 + $0xe7] sm:$0xff]
    %v8682 = vld [vmem:[%s240 + $0xef] sm:$0xff]
    %v8683 = vld [vmem:[%s240 + $0x107] sm:$0xff]
    %v8684 = vld [vmem:[%s240 + $0x10f] sm:$0xff]
    %v8685 = vld [vmem:[%s240 + $0x127] sm:$0xff]
    %v8686 = vld [vmem:[%s240 + $0x12f] sm:$0xff]
    %v8687 = vld [vmem:[%s240 + $0x147] sm:$0xff]
    %v8688 = vld [vmem:[%s240 + $0x14f] sm:$0xff]
    %v8689 = vld [vmem:[%s240 + $0x167] sm:$0xff]
    %v8690 = vld [vmem:[%s240 + $0x16f] sm:$0xff]
    %v8691 = vld [vmem:[%s240 + $0x187] sm:$0xff]
    %v8692 = vld [vmem:[%s240 + $0x18f] sm:$0xff]
    %v8693 = vld [vmem:[%s240 + $0x1a7] sm:$0xff]
    %v8694 = vld [vmem:[%s240 + $0x1af] sm:$0xff]
    %v8695 = vld [vmem:[%s240 + $0x1c7] sm:$0xff]
    %v8696 = vld [vmem:[%s240 + $0x1cf] sm:$0xff]
    %v8697 = vld [vmem:[%s240 + $0x1e7] sm:$0xff]
    %v8698 = vld [vmem:[%s240 + $0x1ef] sm:$0xff]
    %v8699 = vld [vmem:[%s240 + $0x247] sm:$0xff]
    %v8700 = vld [vmem:[%s240 + $0x24f] sm:$0xff]
    %v8701 = vld [vmem:[%s240 + $0x267] sm:$0xff]
    %v8702 = vld [vmem:[%s240 + $0x26f] sm:$0xff]
    %v8703 = vld [vmem:[%s240 + $0x287] sm:$0xff]
    %v8704 = vld [vmem:[%s240 + $0x28f] sm:$0xff]
    %v8705 = vld [vmem:[%s240 + $0x2a7] sm:$0xff]
    %v8706 = vld [vmem:[%s240 + $0x2af] sm:$0xff]
    %v8707 = vld [vmem:[%s240 + $0x2c7] sm:$0xff]
    %v8708 = vld [vmem:[%s240 + $0x2cf] sm:$0xff]
    %v8709 = vld [vmem:[%s240 + $0x2e7] sm:$0xff]
    %v8710 = vld [vmem:[%s240 + $0x2ef] sm:$0xff]
    %v8711 = vld [vmem:[%s240 + $0x307] sm:$0xff]
    %v8712 = vld [vmem:[%s240 + $0x30f] sm:$0xff]
    %v8713 = vld [vmem:[%s240 + $0x327] sm:$0xff]
    %v8714 = vld [vmem:[%s240 + $0x32f] sm:$0xff]
    %v8715 = vld [vmem:[%s240 + $0x347] sm:$0xff]
    %v8716 = vld [vmem:[%s240 + $0x34f] sm:$0xff]
    %v8717 = vld [vmem:[%s240 + $0x367] sm:$0xff]
    %v8718 = vld [vmem:[%s240 + $0x36f] sm:$0xff]
    %v8719 = vld [vmem:[%s240 + $0x387] sm:$0xff]
    %v8720 = vld [vmem:[%s240 + $0x38f] sm:$0xff]
    %v8721 = vld [vmem:[%s240 + $0x3a7] sm:$0xff]
    %v8722 = vld [vmem:[%s240 + $0x3af] sm:$0xff]
    %v8723 = vld [vmem:[%s240 + $0x3c7] sm:$0xff]
    %v8724 = vld [vmem:[%s240 + $0x3cf] sm:$0xff]
    %v8725 = vld [vmem:[%s240 + $0x3e7] sm:$0xff]
    %v8726 = vld [vmem:[%s240 + $0x3ef] sm:$0xff]
    %v8727 = vld [vmem:[%s240 + $0x407] sm:$0xff]
    %v8728 = vld [vmem:[%s240 + $0x40f] sm:$0xff]
    %v8729 = vld [vmem:[%s240 + $0x427] sm:$0xff]
    %v8730 = vld [vmem:[%s240 + $0x42f] sm:$0xff]
    %v8731 = vld [vmem:[%s240 + $0x8] sm:$0xff]
    %v8732 = vld [vmem:[%s240 + $0x10] sm:$0xff]
    %v8733 = vld [vmem:[%s240 + $0x28] sm:$0xff]
    %v8734 = vld [vmem:[%s240 + $0x30] sm:$0xff]
    %v8735 = vld [vmem:[%s240 + $0x48] sm:$0xff]
    %v8736 = vld [vmem:[%s240 + $0x50] sm:$0xff]
    %v8737 = vld [vmem:[%s240 + $0x68] sm:$0xff]
    %v8738 = vld [vmem:[%s240 + $0x70] sm:$0xff]
    %v8739 = vld [vmem:[%s240 + $0x88] sm:$0xff]
    %v8740 = vld [vmem:[%s240 + $0x90] sm:$0xff]
    %v8741 = vld [vmem:[%s240 + $0xa8] sm:$0xff]
    %v8742 = vld [vmem:[%s240 + $0xb0] sm:$0xff]
    %v8743 = vld [vmem:[%s240 + $0xc8] sm:$0xff]
    %v8744 = vld [vmem:[%s240 + $0xd0] sm:$0xff]
    %v8745 = vld [vmem:[%s240 + $0xe8] sm:$0xff]
    %v8746 = vld [vmem:[%s240 + $0xf0] sm:$0xff]
    %v8747 = vld [vmem:[%s240 + $0x108] sm:$0xff]
    %v8748 = vld [vmem:[%s240 + $0x110] sm:$0xff]
    %v8749 = vld [vmem:[%s240 + $0x128] sm:$0xff]
    %v8750 = vld [vmem:[%s240 + $0x130] sm:$0xff]
    %v8751 = vld [vmem:[%s240 + $0x148] sm:$0xff]
    %v8752 = vld [vmem:[%s240 + $0x150] sm:$0xff]
    %v8753 = vld [vmem:[%s240 + $0x168] sm:$0xff]
    %v8754 = vld [vmem:[%s240 + $0x170] sm:$0xff]
    %v8755 = vld [vmem:[%s240 + $0x188] sm:$0xff]
    %v8756 = vld [vmem:[%s240 + $0x190] sm:$0xff]
    %v8757 = vld [vmem:[%s240 + $0x1a8] sm:$0xff]
    %v8758 = vld [vmem:[%s240 + $0x1b0] sm:$0xff]
    %v8759 = vld [vmem:[%s240 + $0x1c8] sm:$0xff]
    %v8760 = vld [vmem:[%s240 + $0x1d0] sm:$0xff]
    %v8761 = vld [vmem:[%s240 + $0x1e8] sm:$0xff]
    %v8762 = vld [vmem:[%s240 + $0x1f0] sm:$0xff]
    %v8763 = vld [vmem:[%s240 + $0x248] sm:$0xff]
    %v8764 = vld [vmem:[%s240 + $0x250] sm:$0xff]
    %v8765 = vld [vmem:[%s240 + $0x268] sm:$0xff]
    %v8766 = vld [vmem:[%s240 + $0x270] sm:$0xff]
    %v8767 = vld [vmem:[%s240 + $0x288] sm:$0xff]
    %v8768 = vld [vmem:[%s240 + $0x290] sm:$0xff]
    %v8769 = vld [vmem:[%s240 + $0x2a8] sm:$0xff]
    %v8770 = vld [vmem:[%s240 + $0x2b0] sm:$0xff]
    %v8771 = vld [vmem:[%s240 + $0x2c8] sm:$0xff]
    %v8772 = vld [vmem:[%s240 + $0x2d0] sm:$0xff]
    %v8773 = vld [vmem:[%s240 + $0x2e8] sm:$0xff]
    %v8774 = vld [vmem:[%s240 + $0x2f0] sm:$0xff]
    %v8775 = vld [vmem:[%s240 + $0x308] sm:$0xff]
    %v8776 = vld [vmem:[%s240 + $0x310] sm:$0xff]
    %v8777 = vld [vmem:[%s240 + $0x328] sm:$0xff]
    %v8778 = vld [vmem:[%s240 + $0x330] sm:$0xff]
    %v8779 = vld [vmem:[%s240 + $0x348] sm:$0xff]
    %v8780 = vld [vmem:[%s240 + $0x350] sm:$0xff]
    %v8781 = vld [vmem:[%s240 + $0x368] sm:$0xff]
    %v8782 = vld [vmem:[%s240 + $0x370] sm:$0xff]
    %v8783 = vld [vmem:[%s240 + $0x388] sm:$0xff]
    %v8784 = vld [vmem:[%s240 + $0x390] sm:$0xff]
    %v8785 = vld [vmem:[%s240 + $0x3a8] sm:$0xff]
    %v8786 = vld [vmem:[%s240 + $0x3b0] sm:$0xff]
    %v8787 = vld [vmem:[%s240 + $0x3c8] sm:$0xff]
    %v8788 = vld [vmem:[%s240 + $0x3d0] sm:$0xff]
    %v8789 = vld [vmem:[%s240 + $0x3e8] sm:$0xff]
    %v8790 = vld [vmem:[%s240 + $0x3f0] sm:$0xff]
    %v8791 = vld [vmem:[%s240 + $0x408] sm:$0xff]
    %v8792 = vld [vmem:[%s240 + $0x410] sm:$0xff]
    %v8793 = vld [vmem:[%s240 + $0x428] sm:$0xff]
    %v8794 = vld [vmem:[%s240 + $0x430] sm:$0xff]
    %v8795 = vld [vmem:[%s240 + $0x9] sm:$0xff]
    %v8796 = vld [vmem:[%s240 + $0x11] sm:$0xff]
    %v8797 = vld [vmem:[%s240 + $0x29] sm:$0xff]
    %v8798 = vld [vmem:[%s240 + $0x31] sm:$0xff]
    %v8799 = vld [vmem:[%s240 + $0x49] sm:$0xff]
    %v8800 = vld [vmem:[%s240 + $0x51] sm:$0xff]
    %v8801 = vld [vmem:[%s240 + $0x69] sm:$0xff]
    %v8802 = vld [vmem:[%s240 + $0x71] sm:$0xff]
    %v8803 = vld [vmem:[%s240 + $0x89] sm:$0xff]
    %v8804 = vld [vmem:[%s240 + $0x91] sm:$0xff]
    %v8805 = vld [vmem:[%s240 + $0xa9] sm:$0xff]
    %v8806 = vld [vmem:[%s240 + $0xb1] sm:$0xff]
    %v8807 = vld [vmem:[%s240 + $0xc9] sm:$0xff]
    %v8808 = vld [vmem:[%s240 + $0xd1] sm:$0xff]
    %v8809 = vld [vmem:[%s240 + $0xe9] sm:$0xff]
    %v8810 = vld [vmem:[%s240 + $0xf1] sm:$0xff]
    %v8811 = vld [vmem:[%s240 + $0x109] sm:$0xff]
    %v8812 = vld [vmem:[%s240 + $0x111] sm:$0xff]
    %v8813 = vld [vmem:[%s240 + $0x129] sm:$0xff]
    %v8814 = vld [vmem:[%s240 + $0x131] sm:$0xff]
    %v8815 = vld [vmem:[%s240 + $0x149] sm:$0xff]
    %v8816 = vld [vmem:[%s240 + $0x151] sm:$0xff]
    %v8817 = vld [vmem:[%s240 + $0x169] sm:$0xff]
    %v8818 = vld [vmem:[%s240 + $0x171] sm:$0xff]
    %v8819 = vld [vmem:[%s240 + $0x189] sm:$0xff]
    %v8820 = vld [vmem:[%s240 + $0x191] sm:$0xff]
    %v8821 = vld [vmem:[%s240 + $0x1a9] sm:$0xff]
    %v8822 = vld [vmem:[%s240 + $0x1b1] sm:$0xff]
    %v8823 = vld [vmem:[%s240 + $0x1c9] sm:$0xff]
    %v8824 = vld [vmem:[%s240 + $0x1d1] sm:$0xff]
    %v8825 = vld [vmem:[%s240 + $0x1e9] sm:$0xff]
    %v8826 = vld [vmem:[%s240 + $0x1f1] sm:$0xff]
    %v8827 = vld [vmem:[%s240 + $0x249] sm:$0xff]
    %v8828 = vld [vmem:[%s240 + $0x251] sm:$0xff]
    %v8829 = vld [vmem:[%s240 + $0x269] sm:$0xff]
    %v8830 = vld [vmem:[%s240 + $0x271] sm:$0xff]
    %v8831 = vld [vmem:[%s240 + $0x289] sm:$0xff]
    %v8832 = vld [vmem:[%s240 + $0x291] sm:$0xff]
    %v8833 = vld [vmem:[%s240 + $0x2a9] sm:$0xff]
    %v8834 = vld [vmem:[%s240 + $0x2b1] sm:$0xff]
    %v8835 = vld [vmem:[%s240 + $0x2c9] sm:$0xff]
    %v8836 = vld [vmem:[%s240 + $0x2d1] sm:$0xff]
    %v8837 = vld [vmem:[%s240 + $0x2e9] sm:$0xff]
    %v8838 = vld [vmem:[%s240 + $0x2f1] sm:$0xff]
    %v8839 = vld [vmem:[%s240 + $0x309] sm:$0xff]
    %v8840 = vld [vmem:[%s240 + $0x311] sm:$0xff]
    %v8841 = vld [vmem:[%s240 + $0x329] sm:$0xff]
    %v8842 = vld [vmem:[%s240 + $0x331] sm:$0xff]
    %v8843 = vld [vmem:[%s240 + $0x349] sm:$0xff]
    %v8844 = vld [vmem:[%s240 + $0x351] sm:$0xff]
    %v8845 = vld [vmem:[%s240 + $0x369] sm:$0xff]
    %v8846 = vld [vmem:[%s240 + $0x371] sm:$0xff]
    %v8847 = vld [vmem:[%s240 + $0x389] sm:$0xff]
    %v8848 = vld [vmem:[%s240 + $0x391] sm:$0xff]
    %v8849 = vld [vmem:[%s240 + $0x3a9] sm:$0xff]
    %v8850 = vld [vmem:[%s240 + $0x3b1] sm:$0xff]
    %v8851 = vld [vmem:[%s240 + $0x3c9] sm:$0xff]
    %v8852 = vld [vmem:[%s240 + $0x3d1] sm:$0xff]
    %v8853 = vld [vmem:[%s240 + $0x3e9] sm:$0xff]
    %v8854 = vld [vmem:[%s240 + $0x3f1] sm:$0xff]
    %v8855 = vld [vmem:[%s240 + $0x409] sm:$0xff]
    %v8856 = vld [vmem:[%s240 + $0x411] sm:$0xff]
    %v8857 = vld [vmem:[%s240 + $0x429] sm:$0xff]
    %v8858 = vld [vmem:[%s240 + $0x431] sm:$0xff]
    %v8859 = vld [vmem:[%s689 + $0x7] sm:$0xff]
    %v8860 = vld [vmem:[%s689 + $0xf] sm:$0xff]
    %v8861 = vld [vmem:[%s689 + $0x27] sm:$0xff]
    %v8862 = vld [vmem:[%s689 + $0x2f] sm:$0xff]
    %v8863 = vld [vmem:[%s689 + $0x47] sm:$0xff]
    %v8864 = vld [vmem:[%s689 + $0x4f] sm:$0xff]
    %v8865 = vld [vmem:[%s689 + $0x67] sm:$0xff]
    %v8866 = vld [vmem:[%s689 + $0x6f] sm:$0xff]
    %v8867 = vld [vmem:[%s689 + $0x87] sm:$0xff]
    %v8868 = vld [vmem:[%s689 + $0x8f] sm:$0xff]
    %v8869 = vld [vmem:[%s689 + $0xa7] sm:$0xff]
    %v8870 = vld [vmem:[%s689 + $0xaf] sm:$0xff]
    %v8871 = vld [vmem:[%s689 + $0xc7] sm:$0xff]
    %v8872 = vld [vmem:[%s689 + $0xcf] sm:$0xff]
    %v8873 = vld [vmem:[%s689 + $0xe7] sm:$0xff]
    %v8874 = vld [vmem:[%s689 + $0xef] sm:$0xff]
    %v8875 = vld [vmem:[%s689 + $0x107] sm:$0xff]
    %v8876 = vld [vmem:[%s689 + $0x10f] sm:$0xff]
    %v8877 = vld [vmem:[%s689 + $0x127] sm:$0xff]
    %v8878 = vld [vmem:[%s689 + $0x12f] sm:$0xff]
    %v8879 = vld [vmem:[%s689 + $0x147] sm:$0xff]
    %v8880 = vld [vmem:[%s689 + $0x14f] sm:$0xff]
    %v8881 = vld [vmem:[%s689 + $0x167] sm:$0xff]
    %v8882 = vld [vmem:[%s689 + $0x16f] sm:$0xff]
    %v8883 = vld [vmem:[%s689 + $0x187] sm:$0xff]
    %v8884 = vld [vmem:[%s689 + $0x18f] sm:$0xff]
    %v8885 = vld [vmem:[%s689 + $0x1a7] sm:$0xff]
    %v8886 = vld [vmem:[%s689 + $0x1af] sm:$0xff]
    %v8887 = vld [vmem:[%s689 + $0x1c7] sm:$0xff]
    %v8888 = vld [vmem:[%s689 + $0x1cf] sm:$0xff]
    %v8889 = vld [vmem:[%s689 + $0x1e7] sm:$0xff]
    %v8890 = vld [vmem:[%s689 + $0x1ef] sm:$0xff]
    %v8891 = vld [vmem:[%s689 + $0x247] sm:$0xff]
    %v8892 = vld [vmem:[%s689 + $0x24f] sm:$0xff]
    %v8893 = vld [vmem:[%s689 + $0x267] sm:$0xff]
    %v8894 = vld [vmem:[%s689 + $0x26f] sm:$0xff]
    %v8895 = vld [vmem:[%s689 + $0x287] sm:$0xff]
    %v8896 = vld [vmem:[%s689 + $0x28f] sm:$0xff]
    %v8897 = vld [vmem:[%s689 + $0x2a7] sm:$0xff]
    %v8898 = vld [vmem:[%s689 + $0x2af] sm:$0xff]
    %v8899 = vld [vmem:[%s689 + $0x2c7] sm:$0xff]
    %v8900 = vld [vmem:[%s689 + $0x2cf] sm:$0xff]
    %v8901 = vld [vmem:[%s689 + $0x2e7] sm:$0xff]
    %v8902 = vld [vmem:[%s689 + $0x2ef] sm:$0xff]
    %v8903 = vld [vmem:[%s689 + $0x307] sm:$0xff]
    %v8904 = vld [vmem:[%s689 + $0x30f] sm:$0xff]
    %v8905 = vld [vmem:[%s689 + $0x327] sm:$0xff]
    %v8906 = vld [vmem:[%s689 + $0x32f] sm:$0xff]
    %v8907 = vld [vmem:[%s689 + $0x347] sm:$0xff]
    %v8908 = vld [vmem:[%s689 + $0x34f] sm:$0xff]
    %v8909 = vld [vmem:[%s689 + $0x367] sm:$0xff]
    %v8910 = vld [vmem:[%s689 + $0x36f] sm:$0xff]
    %v8911 = vld [vmem:[%s689 + $0x387] sm:$0xff]
    %v8912 = vld [vmem:[%s689 + $0x38f] sm:$0xff]
    %v8913 = vld [vmem:[%s689 + $0x3a7] sm:$0xff]
    %v8914 = vld [vmem:[%s689 + $0x3af] sm:$0xff]
    %v8915 = vld [vmem:[%s689 + $0x3c7] sm:$0xff]
    %v8916 = vld [vmem:[%s689 + $0x3cf] sm:$0xff]
    %v8917 = vld [vmem:[%s689 + $0x3e7] sm:$0xff]
    %v8918 = vld [vmem:[%s689 + $0x3ef] sm:$0xff]
    %v8919 = vld [vmem:[%s689 + $0x407] sm:$0xff]
    %v8920 = vld [vmem:[%s689 + $0x40f] sm:$0xff]
    %v8921 = vld [vmem:[%s689 + $0x427] sm:$0xff]
    %v8922 = vld [vmem:[%s689 + $0x42f] sm:$0xff]
    %v8923 = vld [vmem:[%s689 + $0x8] sm:$0xff]
    %v8924 = vld [vmem:[%s689 + $0x10] sm:$0xff]
    %v8925 = vld [vmem:[%s689 + $0x28] sm:$0xff]
    %v8926 = vld [vmem:[%s689 + $0x30] sm:$0xff]
    %v8927 = vld [vmem:[%s689 + $0x48] sm:$0xff]
    %v8928 = vld [vmem:[%s689 + $0x50] sm:$0xff]
    %v8929 = vld [vmem:[%s689 + $0x68] sm:$0xff]
    %v8930 = vld [vmem:[%s689 + $0x70] sm:$0xff]
    %v8931 = vld [vmem:[%s689 + $0x88] sm:$0xff]
    %v8932 = vld [vmem:[%s689 + $0x90] sm:$0xff]
    %v8933 = vld [vmem:[%s689 + $0xa8] sm:$0xff]
    %v8934 = vld [vmem:[%s689 + $0xb0] sm:$0xff]
    %v8935 = vld [vmem:[%s689 + $0xc8] sm:$0xff]
    %v8936 = vld [vmem:[%s689 + $0xd0] sm:$0xff]
    %v8937 = vld [vmem:[%s689 + $0xe8] sm:$0xff]
    %v8938 = vld [vmem:[%s689 + $0xf0] sm:$0xff]
    %v8939 = vld [vmem:[%s689 + $0x108] sm:$0xff]
    %v8940 = vld [vmem:[%s689 + $0x110] sm:$0xff]
    %v8941 = vld [vmem:[%s689 + $0x128] sm:$0xff]
    %v8942 = vld [vmem:[%s689 + $0x130] sm:$0xff]
    %v8943 = vld [vmem:[%s689 + $0x148] sm:$0xff]
    %v8944 = vld [vmem:[%s689 + $0x150] sm:$0xff]
    %v8945 = vld [vmem:[%s689 + $0x168] sm:$0xff]
    %v8946 = vld [vmem:[%s689 + $0x170] sm:$0xff]
    %v8947 = vld [vmem:[%s689 + $0x188] sm:$0xff]
    %v8948 = vld [vmem:[%s689 + $0x190] sm:$0xff]
    %v8949 = vld [vmem:[%s689 + $0x1a8] sm:$0xff]
    %v8950 = vld [vmem:[%s689 + $0x1b0] sm:$0xff]
    %v8951 = vld [vmem:[%s689 + $0x1c8] sm:$0xff]
    %v8952 = vld [vmem:[%s689 + $0x1d0] sm:$0xff]
    %v8953 = vld [vmem:[%s689 + $0x1e8] sm:$0xff]
    %v8954 = vld [vmem:[%s689 + $0x1f0] sm:$0xff]
    %v8955 = vld [vmem:[%s689 + $0x248] sm:$0xff]
    %v8956 = vld [vmem:[%s689 + $0x250] sm:$0xff]
    %v8957 = vld [vmem:[%s689 + $0x268] sm:$0xff]
    %v8958 = vld [vmem:[%s689 + $0x270] sm:$0xff]
    %v8959 = vld [vmem:[%s689 + $0x288] sm:$0xff]
    %v8960 = vld [vmem:[%s689 + $0x290] sm:$0xff]
    %v8961 = vld [vmem:[%s689 + $0x2a8] sm:$0xff]
    %v8962 = vld [vmem:[%s689 + $0x2b0] sm:$0xff]
    %v8963 = vld [vmem:[%s689 + $0x2c8] sm:$0xff]
    %v8964 = vld [vmem:[%s689 + $0x2d0] sm:$0xff]
    %v8965 = vld [vmem:[%s689 + $0x2e8] sm:$0xff]
    %v8966 = vld [vmem:[%s689 + $0x2f0] sm:$0xff]
    %v8967 = vld [vmem:[%s689 + $0x308] sm:$0xff]
    %v8968 = vld [vmem:[%s689 + $0x310] sm:$0xff]
    %v8969 = vld [vmem:[%s689 + $0x328] sm:$0xff]
    %v8970 = vld [vmem:[%s689 + $0x330] sm:$0xff]
    %v8971 = vld [vmem:[%s689 + $0x348] sm:$0xff]
    %v8972 = vld [vmem:[%s689 + $0x350] sm:$0xff]
    %v8973 = vld [vmem:[%s689 + $0x368] sm:$0xff]
    %v8974 = vld [vmem:[%s689 + $0x370] sm:$0xff]
    %v8975 = vld [vmem:[%s689 + $0x388] sm:$0xff]
    %v8976 = vld [vmem:[%s689 + $0x390] sm:$0xff]
    %v8977 = vld [vmem:[%s689 + $0x3a8] sm:$0xff]
    %v8978 = vld [vmem:[%s689 + $0x3b0] sm:$0xff]
    %v8979 = vld [vmem:[%s689 + $0x3c8] sm:$0xff]
    %v8980 = vld [vmem:[%s689 + $0x3d0] sm:$0xff]
    %v8981 = vld [vmem:[%s689 + $0x3e8] sm:$0xff]
    %v8982 = vld [vmem:[%s689 + $0x3f0] sm:$0xff]
    %v8983 = vld [vmem:[%s689 + $0x408] sm:$0xff]
    %v8984 = vld [vmem:[%s689 + $0x410] sm:$0xff]
    %v8985 = vld [vmem:[%s689 + $0x428] sm:$0xff]
    %v8986 = vld [vmem:[%s689 + $0x430] sm:$0xff]
    %v8987 = vld [vmem:[%s689 + $0x9] sm:$0xff]
    %v8988 = vld [vmem:[%s689 + $0x11] sm:$0xff]
    %v8989 = vld [vmem:[%s689 + $0x29] sm:$0xff]
    %v8990 = vld [vmem:[%s689 + $0x31] sm:$0xff]
    %v8991 = vld [vmem:[%s689 + $0x49] sm:$0xff]
    %v8992 = vld [vmem:[%s689 + $0x51] sm:$0xff]
    %v8993 = vld [vmem:[%s689 + $0x69] sm:$0xff]
    %v8994 = vld [vmem:[%s689 + $0x71] sm:$0xff]
    %v8995 = vld [vmem:[%s689 + $0x89] sm:$0xff]
    %v8996 = vld [vmem:[%s689 + $0x91] sm:$0xff]
    %v8997 = vld [vmem:[%s689 + $0xa9] sm:$0xff]
    %v8998 = vld [vmem:[%s689 + $0xb1] sm:$0xff]
    %v8999 = vld [vmem:[%s689 + $0xc9] sm:$0xff]
    %v9000 = vld [vmem:[%s689 + $0xd1] sm:$0xff]
    %v9001 = vld [vmem:[%s689 + $0xe9] sm:$0xff]
    %v9002 = vld [vmem:[%s689 + $0xf1] sm:$0xff]
    %v9003 = vld [vmem:[%s689 + $0x109] sm:$0xff]
    %v9004 = vld [vmem:[%s689 + $0x111] sm:$0xff]
    %v9005 = vld [vmem:[%s689 + $0x129] sm:$0xff]
    %v9006 = vld [vmem:[%s689 + $0x131] sm:$0xff]
    %v9007 = vld [vmem:[%s689 + $0x149] sm:$0xff]
    %v9008 = vld [vmem:[%s689 + $0x151] sm:$0xff]
    %v9009 = vld [vmem:[%s689 + $0x169] sm:$0xff]
    %v9010 = vld [vmem:[%s689 + $0x171] sm:$0xff]
    %v9011 = vld [vmem:[%s689 + $0x189] sm:$0xff]
    %v9012 = vld [vmem:[%s689 + $0x191] sm:$0xff]
    %v9013 = vld [vmem:[%s689 + $0x1a9] sm:$0xff]
    %v9014 = vld [vmem:[%s689 + $0x1b1] sm:$0xff]
    %v9015 = vld [vmem:[%s689 + $0x1c9] sm:$0xff]
    %v9016 = vld [vmem:[%s689 + $0x1d1] sm:$0xff]
    %v9017 = vld [vmem:[%s689 + $0x1e9] sm:$0xff]
    %v9018 = vld [vmem:[%s689 + $0x1f1] sm:$0xff]
    %v9019 = vld [vmem:[%s689 + $0x249] sm:$0xff]
    %v9020 = vld [vmem:[%s689 + $0x251] sm:$0xff]
    %v9021 = vld [vmem:[%s689 + $0x269] sm:$0xff]
    %v9022 = vld [vmem:[%s689 + $0x271] sm:$0xff]
    %v9023 = vld [vmem:[%s689 + $0x289] sm:$0xff]
    %v9024 = vld [vmem:[%s689 + $0x291] sm:$0xff]
    %v9025 = vld [vmem:[%s689 + $0x2a9] sm:$0xff]
    %v9026 = vld [vmem:[%s689 + $0x2b1] sm:$0xff]
    %v9027 = vld [vmem:[%s689 + $0x2c9] sm:$0xff]
    %v9028 = vld [vmem:[%s689 + $0x2d1] sm:$0xff]
    %v9029 = vld [vmem:[%s689 + $0x2e9] sm:$0xff]
    %v9030 = vld [vmem:[%s689 + $0x2f1] sm:$0xff]
    %v9031 = vld [vmem:[%s689 + $0x309] sm:$0xff]
    %v9032 = vld [vmem:[%s689 + $0x311] sm:$0xff]
    %v9033 = vld [vmem:[%s689 + $0x329] sm:$0xff]
    %v9034 = vld [vmem:[%s689 + $0x331] sm:$0xff]
    %v9035 = vld [vmem:[%s689 + $0x349] sm:$0xff]
    %v9036 = vld [vmem:[%s689 + $0x351] sm:$0xff]
    %v9037 = vld [vmem:[%s689 + $0x369] sm:$0xff]
    %v9038 = vld [vmem:[%s689 + $0x371] sm:$0xff]
    %v9039 = vld [vmem:[%s689 + $0x389] sm:$0xff]
    %v9040 = vld [vmem:[%s689 + $0x391] sm:$0xff]
    %v9041 = vld [vmem:[%s689 + $0x3a9] sm:$0xff]
    %v9042 = vld [vmem:[%s689 + $0x3b1] sm:$0xff]
    %v9043 = vld [vmem:[%s689 + $0x3c9] sm:$0xff]
    %v9044 = vld [vmem:[%s689 + $0x3d1] sm:$0xff]
    %v9045 = vld [vmem:[%s689 + $0x3e9] sm:$0xff]
    %v9046 = vld [vmem:[%s689 + $0x3f1] sm:$0xff]
    %v9047 = vld [vmem:[%s689 + $0x409] sm:$0xff]
    %v9048 = vld [vmem:[%s689 + $0x411] sm:$0xff]
    %v9049 = vld [vmem:[%s689 + $0x429] sm:$0xff]
    %v9050 = vld [vmem:[%s689 + $0x431] sm:$0xff]
    %9115 = vrot.lane.b32.xlu0 %v8539, 32
    %v9116 = vpop.permute.xlu0 %9115
    %9117 = vrot.lane.b32.xlu0 %v8540, 32
    %v9118 = vpop.permute.xlu0 %9117
    %9119 = vrot.lane.b32.xlu0 %v8541, 32
    %v9120 = vpop.permute.xlu0 %9119
    %9121 = vrot.lane.b32.xlu0 %v8542, 32
    %v9122 = vpop.permute.xlu0 %9121
    %9123 = vrot.lane.b32.xlu0 %v8543, 32
    %v9124 = vpop.permute.xlu0 %9123
    %9125 = vrot.lane.b32.xlu0 %v8544, 32
    %v9126 = vpop.permute.xlu0 %9125
    %9127 = vrot.lane.b32.xlu0 %v8545, 32
    %v9128 = vpop.permute.xlu0 %9127
    %9129 = vrot.lane.b32.xlu0 %v8546, 32
    %v9130 = vpop.permute.xlu0 %9129
    %9131 = vrot.lane.b32.xlu0 %v8547, 32
    %v9132 = vpop.permute.xlu0 %9131
    %9133 = vrot.lane.b32.xlu0 %v8548, 32
    %v9134 = vpop.permute.xlu0 %9133
    %9135 = vrot.lane.b32.xlu0 %v8549, 32
    %v9136 = vpop.permute.xlu0 %9135
    %9137 = vrot.lane.b32.xlu0 %v8550, 32
    %v9138 = vpop.permute.xlu0 %9137
    %9139 = vrot.lane.b32.xlu0 %v8551, 32
    %v9140 = vpop.permute.xlu0 %9139
    %9141 = vrot.lane.b32.xlu0 %v8552, 32
    %v9142 = vpop.permute.xlu0 %9141
    %9143 = vrot.lane.b32.xlu0 %v8553, 32
    %v9144 = vpop.permute.xlu0 %9143
    %9145 = vrot.lane.b32.xlu0 %v8554, 32
    %v9146 = vpop.permute.xlu0 %9145
    %9147 = vrot.lane.b32.xlu0 %v8555, 32
    %v9148 = vpop.permute.xlu0 %9147
    %9149 = vrot.lane.b32.xlu0 %v8556, 32
    %v9150 = vpop.permute.xlu0 %9149
    %9151 = vrot.lane.b32.xlu0 %v8557, 32
    %v9152 = vpop.permute.xlu0 %9151
    %9153 = vrot.lane.b32.xlu0 %v8558, 32
    %v9154 = vpop.permute.xlu0 %9153
    %9155 = vrot.lane.b32.xlu0 %v8559, 32
    %v9156 = vpop.permute.xlu0 %9155
    %9157 = vrot.lane.b32.xlu0 %v8560, 32
    %v9158 = vpop.permute.xlu0 %9157
    %9159 = vrot.lane.b32.xlu0 %v8561, 32
    %v9160 = vpop.permute.xlu0 %9159
    %9161 = vrot.lane.b32.xlu0 %v8562, 32
    %v9162 = vpop.permute.xlu0 %9161
    %9163 = vrot.lane.b32.xlu0 %v8563, 32
    %v9164 = vpop.permute.xlu0 %9163
    %9165 = vrot.lane.b32.xlu0 %v8564, 32
    %v9166 = vpop.permute.xlu0 %9165
    %9167 = vrot.lane.b32.xlu0 %v8565, 32
    %v9168 = vpop.permute.xlu0 %9167
    %9169 = vrot.lane.b32.xlu0 %v8566, 32
    %v9170 = vpop.permute.xlu0 %9169
    %9171 = vrot.lane.b32.xlu0 %v8567, 32
    %v9172 = vpop.permute.xlu0 %9171
    %9173 = vrot.lane.b32.xlu0 %v8568, 32
    %v9174 = vpop.permute.xlu0 %9173
    %9175 = vrot.lane.b32.xlu0 %v8569, 32
    %v9176 = vpop.permute.xlu0 %9175
    %9177 = vrot.lane.b32.xlu0 %v8570, 32
    %v9178 = vpop.permute.xlu0 %9177
    %9179 = vrot.lane.b32.xlu0 %v8571, 32
    %v9180 = vpop.permute.xlu0 %9179
    %9181 = vrot.lane.b32.xlu0 %v8572, 32
    %v9182 = vpop.permute.xlu0 %9181
    %9183 = vrot.lane.b32.xlu0 %v8573, 32
    %v9184 = vpop.permute.xlu0 %9183
    %9185 = vrot.lane.b32.xlu0 %v8574, 32
    %v9186 = vpop.permute.xlu0 %9185
    %9187 = vrot.lane.b32.xlu0 %v8575, 32
    %v9188 = vpop.permute.xlu0 %9187
    %9189 = vrot.lane.b32.xlu0 %v8576, 32
    %v9190 = vpop.permute.xlu0 %9189
    %9191 = vrot.lane.b32.xlu0 %v8577, 32
    %v9192 = vpop.permute.xlu0 %9191
    %9193 = vrot.lane.b32.xlu0 %v8578, 32
    %v9194 = vpop.permute.xlu0 %9193
    %9195 = vrot.lane.b32.xlu0 %v8579, 32
    %v9196 = vpop.permute.xlu0 %9195
    %9197 = vrot.lane.b32.xlu0 %v8580, 32
    %v9198 = vpop.permute.xlu0 %9197
    %9199 = vrot.lane.b32.xlu0 %v8581, 32
    %v9200 = vpop.permute.xlu0 %9199
    %9201 = vrot.lane.b32.xlu0 %v8582, 32
    %v9202 = vpop.permute.xlu0 %9201
    %9203 = vrot.lane.b32.xlu0 %v8583, 32
    %v9204 = vpop.permute.xlu0 %9203
    %9205 = vrot.lane.b32.xlu0 %v8584, 32
    %v9206 = vpop.permute.xlu0 %9205
    %9207 = vrot.lane.b32.xlu0 %v8585, 32
    %v9208 = vpop.permute.xlu0 %9207
    %9209 = vrot.lane.b32.xlu0 %v8586, 32
    %v9210 = vpop.permute.xlu0 %9209
    %9211 = vrot.lane.b32.xlu0 %v8587, 32
    %v9212 = vpop.permute.xlu0 %9211
    %9213 = vrot.lane.b32.xlu0 %v8588, 32
    %v9214 = vpop.permute.xlu0 %9213
    %9215 = vrot.lane.b32.xlu0 %v8589, 32
    %v9216 = vpop.permute.xlu0 %9215
    %9217 = vrot.lane.b32.xlu0 %v8590, 32
    %v9218 = vpop.permute.xlu0 %9217
    %9219 = vrot.lane.b32.xlu0 %v8591, 32
    %v9220 = vpop.permute.xlu0 %9219
    %9221 = vrot.lane.b32.xlu0 %v8592, 32
    %v9222 = vpop.permute.xlu0 %9221
    %9223 = vrot.lane.b32.xlu0 %v8593, 32
    %v9224 = vpop.permute.xlu0 %9223
    %9225 = vrot.lane.b32.xlu0 %v8594, 32
    %v9226 = vpop.permute.xlu0 %9225
    %9227 = vrot.lane.b32.xlu0 %v8595, 32
    %v9228 = vpop.permute.xlu0 %9227
    %9229 = vrot.lane.b32.xlu0 %v8596, 32
    %v9230 = vpop.permute.xlu0 %9229
    %9231 = vrot.lane.b32.xlu0 %v8597, 32
    %v9232 = vpop.permute.xlu0 %9231
    %9233 = vrot.lane.b32.xlu0 %v8598, 32
    %v9234 = vpop.permute.xlu0 %9233
    %9235 = vrot.lane.b32.xlu0 %v8599, 32
    %v9236 = vpop.permute.xlu0 %9235
    %9237 = vrot.lane.b32.xlu0 %v8600, 32
    %v9238 = vpop.permute.xlu0 %9237
    %9239 = vrot.lane.b32.xlu0 %v8601, 32
    %v9240 = vpop.permute.xlu0 %9239
    %9241 = vrot.lane.b32.xlu0 %v8602, 32
    %v9242 = vpop.permute.xlu0 %9241
    %9371 = vrot.lane.b32.xlu0 %v8603, 64
    %v9372 = vpop.permute.xlu0 %9371
    %9373 = vrot.lane.b32.xlu0 %v8604, 64
    %v9374 = vpop.permute.xlu0 %9373
    %9375 = vrot.lane.b32.xlu0 %v8605, 64
    %v9376 = vpop.permute.xlu0 %9375
    %9377 = vrot.lane.b32.xlu0 %v8606, 64
    %v9378 = vpop.permute.xlu0 %9377
    %9379 = vrot.lane.b32.xlu0 %v8607, 64
    %v9380 = vpop.permute.xlu0 %9379
    %9381 = vrot.lane.b32.xlu0 %v8608, 64
    %v9382 = vpop.permute.xlu0 %9381
    %9383 = vrot.lane.b32.xlu0 %v8609, 64
    %v9384 = vpop.permute.xlu0 %9383
    %9385 = vrot.lane.b32.xlu0 %v8610, 64
    %v9386 = vpop.permute.xlu0 %9385
    %9387 = vrot.lane.b32.xlu0 %v8611, 64
    %v9388 = vpop.permute.xlu0 %9387
    %9389 = vrot.lane.b32.xlu0 %v8612, 64
    %v9390 = vpop.permute.xlu0 %9389
    %9391 = vrot.lane.b32.xlu0 %v8613, 64
    %v9392 = vpop.permute.xlu0 %9391
    %9393 = vrot.lane.b32.xlu0 %v8614, 64
    %v9394 = vpop.permute.xlu0 %9393
    %9395 = vrot.lane.b32.xlu0 %v8615, 64
    %v9396 = vpop.permute.xlu0 %9395
    %9397 = vrot.lane.b32.xlu0 %v8616, 64
    %v9398 = vpop.permute.xlu0 %9397
    %9399 = vrot.lane.b32.xlu0 %v8617, 64
    %v9400 = vpop.permute.xlu0 %9399
    %9401 = vrot.lane.b32.xlu0 %v8618, 64
    %v9402 = vpop.permute.xlu0 %9401
    %9403 = vrot.lane.b32.xlu0 %v8619, 64
    %v9404 = vpop.permute.xlu0 %9403
    %9405 = vrot.lane.b32.xlu0 %v8620, 64
    %v9406 = vpop.permute.xlu0 %9405
    %9407 = vrot.lane.b32.xlu0 %v8621, 64
    %v9408 = vpop.permute.xlu0 %9407
    %9409 = vrot.lane.b32.xlu0 %v8622, 64
    %v9410 = vpop.permute.xlu0 %9409
    %9411 = vrot.lane.b32.xlu0 %v8623, 64
    %v9412 = vpop.permute.xlu0 %9411
    %9413 = vrot.lane.b32.xlu0 %v8624, 64
    %v9414 = vpop.permute.xlu0 %9413
    %9415 = vrot.lane.b32.xlu0 %v8625, 64
    %v9416 = vpop.permute.xlu0 %9415
    %9417 = vrot.lane.b32.xlu0 %v8626, 64
    %v9418 = vpop.permute.xlu0 %9417
    %9419 = vrot.lane.b32.xlu0 %v8627, 64
    %v9420 = vpop.permute.xlu0 %9419
    %9421 = vrot.lane.b32.xlu0 %v8628, 64
    %v9422 = vpop.permute.xlu0 %9421
    %9423 = vrot.lane.b32.xlu0 %v8629, 64
    %v9424 = vpop.permute.xlu0 %9423
    %9425 = vrot.lane.b32.xlu0 %v8630, 64
    %v9426 = vpop.permute.xlu0 %9425
    %9427 = vrot.lane.b32.xlu0 %v8631, 64
    %v9428 = vpop.permute.xlu0 %9427
    %9429 = vrot.lane.b32.xlu0 %v8632, 64
    %v9430 = vpop.permute.xlu0 %9429
    %9431 = vrot.lane.b32.xlu0 %v8633, 64
    %v9432 = vpop.permute.xlu0 %9431
    %9433 = vrot.lane.b32.xlu0 %v8634, 64
    %v9434 = vpop.permute.xlu0 %9433
    %9435 = vrot.lane.b32.xlu0 %v8635, 64
    %v9436 = vpop.permute.xlu0 %9435
    %9437 = vrot.lane.b32.xlu0 %v8636, 64
    %v9438 = vpop.permute.xlu0 %9437
    %9439 = vrot.lane.b32.xlu0 %v8637, 64
    %v9440 = vpop.permute.xlu0 %9439
    %9441 = vrot.lane.b32.xlu0 %v8638, 64
    %v9442 = vpop.permute.xlu0 %9441
    %9443 = vrot.lane.b32.xlu0 %v8639, 64
    %v9444 = vpop.permute.xlu0 %9443
    %9445 = vrot.lane.b32.xlu0 %v8640, 64
    %v9446 = vpop.permute.xlu0 %9445
    %9447 = vrot.lane.b32.xlu0 %v8641, 64
    %v9448 = vpop.permute.xlu0 %9447
    %9449 = vrot.lane.b32.xlu0 %v8642, 64
    %v9450 = vpop.permute.xlu0 %9449
    %9451 = vrot.lane.b32.xlu0 %v8643, 64
    %v9452 = vpop.permute.xlu0 %9451
    %9453 = vrot.lane.b32.xlu0 %v8644, 64
    %v9454 = vpop.permute.xlu0 %9453
    %9455 = vrot.lane.b32.xlu0 %v8645, 64
    %v9456 = vpop.permute.xlu0 %9455
    %9457 = vrot.lane.b32.xlu0 %v8646, 64
    %v9458 = vpop.permute.xlu0 %9457
    %9459 = vrot.lane.b32.xlu0 %v8647, 64
    %v9460 = vpop.permute.xlu0 %9459
    %9461 = vrot.lane.b32.xlu0 %v8648, 64
    %v9462 = vpop.permute.xlu0 %9461
    %9463 = vrot.lane.b32.xlu0 %v8649, 64
    %v9464 = vpop.permute.xlu0 %9463
    %9465 = vrot.lane.b32.xlu0 %v8650, 64
    %v9466 = vpop.permute.xlu0 %9465
    %9467 = vrot.lane.b32.xlu0 %v8651, 64
    %v9468 = vpop.permute.xlu0 %9467
    %9469 = vrot.lane.b32.xlu0 %v8652, 64
    %v9470 = vpop.permute.xlu0 %9469
    %9471 = vrot.lane.b32.xlu0 %v8653, 64
    %v9472 = vpop.permute.xlu0 %9471
    %9473 = vrot.lane.b32.xlu0 %v8654, 64
    %v9474 = vpop.permute.xlu0 %9473
    %9475 = vrot.lane.b32.xlu0 %v8655, 64
    %v9476 = vpop.permute.xlu0 %9475
    %9477 = vrot.lane.b32.xlu0 %v8656, 64
    %v9478 = vpop.permute.xlu0 %9477
    %9479 = vrot.lane.b32.xlu0 %v8657, 64
    %v9480 = vpop.permute.xlu0 %9479
    %9481 = vrot.lane.b32.xlu0 %v8658, 64
    %v9482 = vpop.permute.xlu0 %9481
    %9483 = vrot.lane.b32.xlu0 %v8659, 64
    %v9484 = vpop.permute.xlu0 %9483
    %9485 = vrot.lane.b32.xlu0 %v8660, 64
    %v9486 = vpop.permute.xlu0 %9485
    %9487 = vrot.lane.b32.xlu0 %v8661, 64
    %v9488 = vpop.permute.xlu0 %9487
    %9489 = vrot.lane.b32.xlu0 %v8662, 64
    %v9490 = vpop.permute.xlu0 %9489
    %9491 = vrot.lane.b32.xlu0 %v8663, 64
    %v9492 = vpop.permute.xlu0 %9491
    %9493 = vrot.lane.b32.xlu0 %v8664, 64
    %v9494 = vpop.permute.xlu0 %9493
    %9495 = vrot.lane.b32.xlu0 %v8665, 64
    %v9496 = vpop.permute.xlu0 %9495
    %9497 = vrot.lane.b32.xlu0 %v8666, 64
    %v9498 = vpop.permute.xlu0 %9497
    %9627 = vrot.lane.b32.xlu0 %v8667, 96
    %v9628 = vpop.permute.xlu0 %9627
    %9629 = vrot.lane.b32.xlu0 %v8668, 96
    %v9630 = vpop.permute.xlu0 %9629
    %9631 = vrot.lane.b32.xlu0 %v8669, 96
    %v9632 = vpop.permute.xlu0 %9631
    %9633 = vrot.lane.b32.xlu0 %v8670, 96
    %v9634 = vpop.permute.xlu0 %9633
    %9635 = vrot.lane.b32.xlu0 %v8671, 96
    %v9636 = vpop.permute.xlu0 %9635
    %9637 = vrot.lane.b32.xlu0 %v8672, 96
    %v9638 = vpop.permute.xlu0 %9637
    %9639 = vrot.lane.b32.xlu0 %v8673, 96
    %v9640 = vpop.permute.xlu0 %9639
    %9641 = vrot.lane.b32.xlu0 %v8674, 96
    %v9642 = vpop.permute.xlu0 %9641
    %9643 = vrot.lane.b32.xlu0 %v8675, 96
    %v9644 = vpop.permute.xlu0 %9643
    %9645 = vrot.lane.b32.xlu0 %v8676, 96
    %v9646 = vpop.permute.xlu0 %9645
    %9647 = vrot.lane.b32.xlu0 %v8677, 96
    %v9648 = vpop.permute.xlu0 %9647
    %9649 = vrot.lane.b32.xlu0 %v8678, 96
    %v9650 = vpop.permute.xlu0 %9649
    %9651 = vrot.lane.b32.xlu0 %v8679, 96
    %v9652 = vpop.permute.xlu0 %9651
    %9653 = vrot.lane.b32.xlu0 %v8680, 96
    %v9654 = vpop.permute.xlu0 %9653
    %9655 = vrot.lane.b32.xlu0 %v8681, 96
    %v9656 = vpop.permute.xlu0 %9655
    %9657 = vrot.lane.b32.xlu0 %v8682, 96
    %v9658 = vpop.permute.xlu0 %9657
    %9659 = vrot.lane.b32.xlu0 %v8683, 96
    %v9660 = vpop.permute.xlu0 %9659
    %9661 = vrot.lane.b32.xlu0 %v8684, 96
    %v9662 = vpop.permute.xlu0 %9661
    %9663 = vrot.lane.b32.xlu0 %v8685, 96
    %v9664 = vpop.permute.xlu0 %9663
    %9665 = vrot.lane.b32.xlu0 %v8686, 96
    %v9666 = vpop.permute.xlu0 %9665
    %9667 = vrot.lane.b32.xlu0 %v8687, 96
    %v9668 = vpop.permute.xlu0 %9667
    %9669 = vrot.lane.b32.xlu0 %v8688, 96
    %v9670 = vpop.permute.xlu0 %9669
    %9671 = vrot.lane.b32.xlu0 %v8689, 96
    %v9672 = vpop.permute.xlu0 %9671
    %9673 = vrot.lane.b32.xlu0 %v8690, 96
    %v9674 = vpop.permute.xlu0 %9673
    %9675 = vrot.lane.b32.xlu0 %v8691, 96
    %v9676 = vpop.permute.xlu0 %9675
    %9677 = vrot.lane.b32.xlu0 %v8692, 96
    %v9678 = vpop.permute.xlu0 %9677
    %9679 = vrot.lane.b32.xlu0 %v8693, 96
    %v9680 = vpop.permute.xlu0 %9679
    %9681 = vrot.lane.b32.xlu0 %v8694, 96
    %v9682 = vpop.permute.xlu0 %9681
    %9683 = vrot.lane.b32.xlu0 %v8695, 96
    %v9684 = vpop.permute.xlu0 %9683
    %9685 = vrot.lane.b32.xlu0 %v8696, 96
    %v9686 = vpop.permute.xlu0 %9685
    %9687 = vrot.lane.b32.xlu0 %v8697, 96
    %v9688 = vpop.permute.xlu0 %9687
    %9689 = vrot.lane.b32.xlu0 %v8698, 96
    %v9690 = vpop.permute.xlu0 %9689
    %9691 = vrot.lane.b32.xlu0 %v8699, 96
    %v9692 = vpop.permute.xlu0 %9691
    %9693 = vrot.lane.b32.xlu0 %v8700, 96
    %v9694 = vpop.permute.xlu0 %9693
    %9695 = vrot.lane.b32.xlu0 %v8701, 96
    %v9696 = vpop.permute.xlu0 %9695
    %9697 = vrot.lane.b32.xlu0 %v8702, 96
    %v9698 = vpop.permute.xlu0 %9697
    %9699 = vrot.lane.b32.xlu0 %v8703, 96
    %v9700 = vpop.permute.xlu0 %9699
    %9701 = vrot.lane.b32.xlu0 %v8704, 96
    %v9702 = vpop.permute.xlu0 %9701
    %9703 = vrot.lane.b32.xlu0 %v8705, 96
    %v9704 = vpop.permute.xlu0 %9703
    %9705 = vrot.lane.b32.xlu0 %v8706, 96
    %v9706 = vpop.permute.xlu0 %9705
    %9707 = vrot.lane.b32.xlu0 %v8707, 96
    %v9708 = vpop.permute.xlu0 %9707
    %9709 = vrot.lane.b32.xlu0 %v8708, 96
    %v9710 = vpop.permute.xlu0 %9709
    %9711 = vrot.lane.b32.xlu0 %v8709, 96
    %v9712 = vpop.permute.xlu0 %9711
    %9713 = vrot.lane.b32.xlu0 %v8710, 96
    %v9714 = vpop.permute.xlu0 %9713
    %9715 = vrot.lane.b32.xlu0 %v8711, 96
    %v9716 = vpop.permute.xlu0 %9715
    %9717 = vrot.lane.b32.xlu0 %v8712, 96
    %v9718 = vpop.permute.xlu0 %9717
    %9719 = vrot.lane.b32.xlu0 %v8713, 96
    %v9720 = vpop.permute.xlu0 %9719
    %9721 = vrot.lane.b32.xlu0 %v8714, 96
    %v9722 = vpop.permute.xlu0 %9721
    %9723 = vrot.lane.b32.xlu0 %v8715, 96
    %v9724 = vpop.permute.xlu0 %9723
    %9725 = vrot.lane.b32.xlu0 %v8716, 96
    %v9726 = vpop.permute.xlu0 %9725
    %9727 = vrot.lane.b32.xlu0 %v8717, 96
    %v9728 = vpop.permute.xlu0 %9727
    %9729 = vrot.lane.b32.xlu0 %v8718, 96
    %v9730 = vpop.permute.xlu0 %9729
    %9731 = vrot.lane.b32.xlu0 %v8719, 96
    %v9732 = vpop.permute.xlu0 %9731
    %9733 = vrot.lane.b32.xlu0 %v8720, 96
    %v9734 = vpop.permute.xlu0 %9733
    %9735 = vrot.lane.b32.xlu0 %v8721, 96
    %v9736 = vpop.permute.xlu0 %9735
    %9737 = vrot.lane.b32.xlu0 %v8722, 96
    %v9738 = vpop.permute.xlu0 %9737
    %9739 = vrot.lane.b32.xlu0 %v8723, 96
    %v9740 = vpop.permute.xlu0 %9739
    %9741 = vrot.lane.b32.xlu0 %v8724, 96
    %v9742 = vpop.permute.xlu0 %9741
    %9743 = vrot.lane.b32.xlu0 %v8725, 96
    %v9744 = vpop.permute.xlu0 %9743
    %9745 = vrot.lane.b32.xlu0 %v8726, 96
    %v9746 = vpop.permute.xlu0 %9745
    %9747 = vrot.lane.b32.xlu0 %v8727, 96
    %v9748 = vpop.permute.xlu0 %9747
    %9749 = vrot.lane.b32.xlu0 %v8728, 96
    %v9750 = vpop.permute.xlu0 %9749
    %9751 = vrot.lane.b32.xlu0 %v8729, 96
    %v9752 = vpop.permute.xlu0 %9751
    %9753 = vrot.lane.b32.xlu0 %v8730, 96
    %v9754 = vpop.permute.xlu0 %9753
    %9883 = vrot.lane.b32.xlu0 %v8795, 32
    %v9884 = vpop.permute.xlu0 %9883
    %9885 = vrot.lane.b32.xlu0 %v8796, 32
    %v9886 = vpop.permute.xlu0 %9885
    %9887 = vrot.lane.b32.xlu0 %v8797, 32
    %v9888 = vpop.permute.xlu0 %9887
    %9889 = vrot.lane.b32.xlu0 %v8798, 32
    %v9890 = vpop.permute.xlu0 %9889
    %9891 = vrot.lane.b32.xlu0 %v8799, 32
    %v9892 = vpop.permute.xlu0 %9891
    %9893 = vrot.lane.b32.xlu0 %v8800, 32
    %v9894 = vpop.permute.xlu0 %9893
    %9895 = vrot.lane.b32.xlu0 %v8801, 32
    %v9896 = vpop.permute.xlu0 %9895
    %9897 = vrot.lane.b32.xlu0 %v8802, 32
    %v9898 = vpop.permute.xlu0 %9897
    %9899 = vrot.lane.b32.xlu0 %v8803, 32
    %v9900 = vpop.permute.xlu0 %9899
    %9901 = vrot.lane.b32.xlu0 %v8804, 32
    %v9902 = vpop.permute.xlu0 %9901
    %9903 = vrot.lane.b32.xlu0 %v8805, 32
    %v9904 = vpop.permute.xlu0 %9903
    %9905 = vrot.lane.b32.xlu0 %v8806, 32
    %v9906 = vpop.permute.xlu0 %9905
    %9907 = vrot.lane.b32.xlu0 %v8807, 32
    %v9908 = vpop.permute.xlu0 %9907
    %9909 = vrot.lane.b32.xlu0 %v8808, 32
    %v9910 = vpop.permute.xlu0 %9909
    %9911 = vrot.lane.b32.xlu0 %v8809, 32
    %v9912 = vpop.permute.xlu0 %9911
    %9913 = vrot.lane.b32.xlu0 %v8810, 32
    %v9914 = vpop.permute.xlu0 %9913
    %9915 = vrot.lane.b32.xlu0 %v8811, 32
    %v9916 = vpop.permute.xlu0 %9915
    %9917 = vrot.lane.b32.xlu0 %v8812, 32
    %v9918 = vpop.permute.xlu0 %9917
    %9919 = vrot.lane.b32.xlu0 %v8813, 32
    %v9920 = vpop.permute.xlu0 %9919
    %9921 = vrot.lane.b32.xlu0 %v8814, 32
    %v9922 = vpop.permute.xlu0 %9921
    %9923 = vrot.lane.b32.xlu0 %v8815, 32
    %v9924 = vpop.permute.xlu0 %9923
    %9925 = vrot.lane.b32.xlu0 %v8816, 32
    %v9926 = vpop.permute.xlu0 %9925
    %9927 = vrot.lane.b32.xlu0 %v8817, 32
    %v9928 = vpop.permute.xlu0 %9927
    %9929 = vrot.lane.b32.xlu0 %v8818, 32
    %v9930 = vpop.permute.xlu0 %9929
    %9931 = vrot.lane.b32.xlu0 %v8819, 32
    %v9932 = vpop.permute.xlu0 %9931
    %9933 = vrot.lane.b32.xlu0 %v8820, 32
    %v9934 = vpop.permute.xlu0 %9933
    %9935 = vrot.lane.b32.xlu0 %v8821, 32
    %v9936 = vpop.permute.xlu0 %9935
    %9937 = vrot.lane.b32.xlu0 %v8822, 32
    %v9938 = vpop.permute.xlu0 %9937
    %9939 = vrot.lane.b32.xlu0 %v8823, 32
    %v9940 = vpop.permute.xlu0 %9939
    %9941 = vrot.lane.b32.xlu0 %v8824, 32
    %v9942 = vpop.permute.xlu0 %9941
    %9943 = vrot.lane.b32.xlu0 %v8825, 32
    %v9944 = vpop.permute.xlu0 %9943
    %9945 = vrot.lane.b32.xlu0 %v8826, 32
    %v9946 = vpop.permute.xlu0 %9945
    %9947 = vrot.lane.b32.xlu0 %v8827, 32
    %v9948 = vpop.permute.xlu0 %9947
    %9949 = vrot.lane.b32.xlu0 %v8828, 32
    %v9950 = vpop.permute.xlu0 %9949
    %9951 = vrot.lane.b32.xlu0 %v8829, 32
    %v9952 = vpop.permute.xlu0 %9951
    %9953 = vrot.lane.b32.xlu0 %v8830, 32
    %v9954 = vpop.permute.xlu0 %9953
    %9955 = vrot.lane.b32.xlu0 %v8831, 32
    %v9956 = vpop.permute.xlu0 %9955
    %9957 = vrot.lane.b32.xlu0 %v8832, 32
    %v9958 = vpop.permute.xlu0 %9957
    %9959 = vrot.lane.b32.xlu0 %v8833, 32
    %v9960 = vpop.permute.xlu0 %9959
    %9961 = vrot.lane.b32.xlu0 %v8834, 32
    %v9962 = vpop.permute.xlu0 %9961
    %9963 = vrot.lane.b32.xlu0 %v8835, 32
    %v9964 = vpop.permute.xlu0 %9963
    %9965 = vrot.lane.b32.xlu0 %v8836, 32
    %v9966 = vpop.permute.xlu0 %9965
    %9967 = vrot.lane.b32.xlu0 %v8837, 32
    %v9968 = vpop.permute.xlu0 %9967
    %9969 = vrot.lane.b32.xlu0 %v8838, 32
    %v9970 = vpop.permute.xlu0 %9969
    %9971 = vrot.lane.b32.xlu0 %v8839, 32
    %v9972 = vpop.permute.xlu0 %9971
    %9973 = vrot.lane.b32.xlu0 %v8840, 32
    %v9974 = vpop.permute.xlu0 %9973
    %9975 = vrot.lane.b32.xlu0 %v8841, 32
    %v9976 = vpop.permute.xlu0 %9975
    %9977 = vrot.lane.b32.xlu0 %v8842, 32
    %v9978 = vpop.permute.xlu0 %9977
    %9979 = vrot.lane.b32.xlu0 %v8843, 32
    %v9980 = vpop.permute.xlu0 %9979
    %9981 = vrot.lane.b32.xlu0 %v8844, 32
    %v9982 = vpop.permute.xlu0 %9981
    %9983 = vrot.lane.b32.xlu0 %v8845, 32
    %v9984 = vpop.permute.xlu0 %9983
    %9985 = vrot.lane.b32.xlu0 %v8846, 32
    %v9986 = vpop.permute.xlu0 %9985
    %9987 = vrot.lane.b32.xlu0 %v8847, 32
    %v9988 = vpop.permute.xlu0 %9987
    %9989 = vrot.lane.b32.xlu0 %v8848, 32
    %v9990 = vpop.permute.xlu0 %9989
    %9991 = vrot.lane.b32.xlu0 %v8849, 32
    %v9992 = vpop.permute.xlu0 %9991
    %9993 = vrot.lane.b32.xlu0 %v8850, 32
    %v9994 = vpop.permute.xlu0 %9993
    %9995 = vrot.lane.b32.xlu0 %v8851, 32
    %v9996 = vpop.permute.xlu0 %9995
    %9997 = vrot.lane.b32.xlu0 %v8852, 32
    %v9998 = vpop.permute.xlu0 %9997
    %9999 = vrot.lane.b32.xlu0 %v8853, 32
    %v10000 = vpop.permute.xlu0 %9999
    %10001 = vrot.lane.b32.xlu0 %v8854, 32
    %v10002 = vpop.permute.xlu0 %10001
    %10003 = vrot.lane.b32.xlu0 %v8855, 32
    %v10004 = vpop.permute.xlu0 %10003
    %10005 = vrot.lane.b32.xlu0 %v8856, 32
    %v10006 = vpop.permute.xlu0 %10005
    %10007 = vrot.lane.b32.xlu0 %v8857, 32
    %v10008 = vpop.permute.xlu0 %10007
    %10009 = vrot.lane.b32.xlu0 %v8858, 32
    %v10010 = vpop.permute.xlu0 %10009
    %10139 = vrot.lane.b32.xlu0 %v8859, 64
    %v10140 = vpop.permute.xlu0 %10139
    %10141 = vrot.lane.b32.xlu0 %v8860, 64
    %v10142 = vpop.permute.xlu0 %10141
    %10143 = vrot.lane.b32.xlu0 %v8861, 64
    %v10144 = vpop.permute.xlu0 %10143
    %10145 = vrot.lane.b32.xlu0 %v8862, 64
    %v10146 = vpop.permute.xlu0 %10145
    %10147 = vrot.lane.b32.xlu0 %v8863, 64
    %v10148 = vpop.permute.xlu0 %10147
    %10149 = vrot.lane.b32.xlu0 %v8864, 64
    %v10150 = vpop.permute.xlu0 %10149
    %10151 = vrot.lane.b32.xlu0 %v8865, 64
    %v10152 = vpop.permute.xlu0 %10151
    %10153 = vrot.lane.b32.xlu0 %v8866, 64
    %v10154 = vpop.permute.xlu0 %10153
    %10155 = vrot.lane.b32.xlu0 %v8867, 64
    %v10156 = vpop.permute.xlu0 %10155
    %10157 = vrot.lane.b32.xlu0 %v8868, 64
    %v10158 = vpop.permute.xlu0 %10157
    %10159 = vrot.lane.b32.xlu0 %v8869, 64
    %v10160 = vpop.permute.xlu0 %10159
    %10161 = vrot.lane.b32.xlu0 %v8870, 64
    %v10162 = vpop.permute.xlu0 %10161
    %10163 = vrot.lane.b32.xlu0 %v8871, 64
    %v10164 = vpop.permute.xlu0 %10163
    %10165 = vrot.lane.b32.xlu0 %v8872, 64
    %v10166 = vpop.permute.xlu0 %10165
    %10167 = vrot.lane.b32.xlu0 %v8873, 64
    %v10168 = vpop.permute.xlu0 %10167
    %10169 = vrot.lane.b32.xlu0 %v8874, 64
    %v10170 = vpop.permute.xlu0 %10169
    %10171 = vrot.lane.b32.xlu0 %v8875, 64
    %v10172 = vpop.permute.xlu0 %10171
    %10173 = vrot.lane.b32.xlu0 %v8876, 64
    %v10174 = vpop.permute.xlu0 %10173
    %10175 = vrot.lane.b32.xlu0 %v8877, 64
    %v10176 = vpop.permute.xlu0 %10175
    %10177 = vrot.lane.b32.xlu0 %v8878, 64
    %v10178 = vpop.permute.xlu0 %10177
    %10179 = vrot.lane.b32.xlu0 %v8879, 64
    %v10180 = vpop.permute.xlu0 %10179
    %10181 = vrot.lane.b32.xlu0 %v8880, 64
    %v10182 = vpop.permute.xlu0 %10181
    %10183 = vrot.lane.b32.xlu0 %v8881, 64
    %v10184 = vpop.permute.xlu0 %10183
    %10185 = vrot.lane.b32.xlu0 %v8882, 64
    %v10186 = vpop.permute.xlu0 %10185
    %10187 = vrot.lane.b32.xlu0 %v8883, 64
    %v10188 = vpop.permute.xlu0 %10187
    %10189 = vrot.lane.b32.xlu0 %v8884, 64
    %v10190 = vpop.permute.xlu0 %10189
    %10191 = vrot.lane.b32.xlu0 %v8885, 64
    %v10192 = vpop.permute.xlu0 %10191
    %10193 = vrot.lane.b32.xlu0 %v8886, 64
    %v10194 = vpop.permute.xlu0 %10193
    %10195 = vrot.lane.b32.xlu0 %v8887, 64
    %v10196 = vpop.permute.xlu0 %10195
    %10197 = vrot.lane.b32.xlu0 %v8888, 64
    %v10198 = vpop.permute.xlu0 %10197
    %10199 = vrot.lane.b32.xlu0 %v8889, 64
    %v10200 = vpop.permute.xlu0 %10199
    %10201 = vrot.lane.b32.xlu0 %v8890, 64
    %v10202 = vpop.permute.xlu0 %10201
    %10203 = vrot.lane.b32.xlu0 %v8891, 64
    %v10204 = vpop.permute.xlu0 %10203
    %10205 = vrot.lane.b32.xlu0 %v8892, 64
    %v10206 = vpop.permute.xlu0 %10205
    %10207 = vrot.lane.b32.xlu0 %v8893, 64
    %v10208 = vpop.permute.xlu0 %10207
    %10209 = vrot.lane.b32.xlu0 %v8894, 64
    %v10210 = vpop.permute.xlu0 %10209
    %10211 = vrot.lane.b32.xlu0 %v8895, 64
    %v10212 = vpop.permute.xlu0 %10211
    %10213 = vrot.lane.b32.xlu0 %v8896, 64
    %v10214 = vpop.permute.xlu0 %10213
    %10215 = vrot.lane.b32.xlu0 %v8897, 64
    %v10216 = vpop.permute.xlu0 %10215
    %10217 = vrot.lane.b32.xlu0 %v8898, 64
    %v10218 = vpop.permute.xlu0 %10217
    %10219 = vrot.lane.b32.xlu0 %v8899, 64
    %v10220 = vpop.permute.xlu0 %10219
    %10221 = vrot.lane.b32.xlu0 %v8900, 64
    %v10222 = vpop.permute.xlu0 %10221
    %10223 = vrot.lane.b32.xlu0 %v8901, 64
    %v10224 = vpop.permute.xlu0 %10223
    %10225 = vrot.lane.b32.xlu0 %v8902, 64
    %v10226 = vpop.permute.xlu0 %10225
    %10227 = vrot.lane.b32.xlu0 %v8903, 64
    %v10228 = vpop.permute.xlu0 %10227
    %10229 = vrot.lane.b32.xlu0 %v8904, 64
    %v10230 = vpop.permute.xlu0 %10229
    %10231 = vrot.lane.b32.xlu0 %v8905, 64
    %v10232 = vpop.permute.xlu0 %10231
    %10233 = vrot.lane.b32.xlu0 %v8906, 64
    %v10234 = vpop.permute.xlu0 %10233
    %10235 = vrot.lane.b32.xlu0 %v8907, 64
    %v10236 = vpop.permute.xlu0 %10235
    %10237 = vrot.lane.b32.xlu0 %v8908, 64
    %v10238 = vpop.permute.xlu0 %10237
    %10239 = vrot.lane.b32.xlu0 %v8909, 64
    %v10240 = vpop.permute.xlu0 %10239
    %10241 = vrot.lane.b32.xlu0 %v8910, 64
    %v10242 = vpop.permute.xlu0 %10241
    %10243 = vrot.lane.b32.xlu0 %v8911, 64
    %v10244 = vpop.permute.xlu0 %10243
    %10245 = vrot.lane.b32.xlu0 %v8912, 64
    %v10246 = vpop.permute.xlu0 %10245
    %10247 = vrot.lane.b32.xlu0 %v8913, 64
    %v10248 = vpop.permute.xlu0 %10247
    %10249 = vrot.lane.b32.xlu0 %v8914, 64
    %v10250 = vpop.permute.xlu0 %10249
    %10251 = vrot.lane.b32.xlu0 %v8915, 64
    %v10252 = vpop.permute.xlu0 %10251
    %10253 = vrot.lane.b32.xlu0 %v8916, 64
    %v10254 = vpop.permute.xlu0 %10253
    %10255 = vrot.lane.b32.xlu0 %v8917, 64
    %v10256 = vpop.permute.xlu0 %10255
    %10257 = vrot.lane.b32.xlu0 %v8918, 64
    %v10258 = vpop.permute.xlu0 %10257
    %10259 = vrot.lane.b32.xlu0 %v8919, 64
    %v10260 = vpop.permute.xlu0 %10259
    %10261 = vrot.lane.b32.xlu0 %v8920, 64
    %v10262 = vpop.permute.xlu0 %10261
    %10263 = vrot.lane.b32.xlu0 %v8921, 64
    %v10264 = vpop.permute.xlu0 %10263
    %10265 = vrot.lane.b32.xlu0 %v8922, 64
    %v10266 = vpop.permute.xlu0 %10265
    %10395 = vrot.lane.b32.xlu0 %v8923, 96
    %v10396 = vpop.permute.xlu0 %10395
    %10397 = vrot.lane.b32.xlu0 %v8924, 96
    %v10398 = vpop.permute.xlu0 %10397
    %10399 = vrot.lane.b32.xlu0 %v8925, 96
    %v10400 = vpop.permute.xlu0 %10399
    %10401 = vrot.lane.b32.xlu0 %v8926, 96
    %v10402 = vpop.permute.xlu0 %10401
    %10403 = vrot.lane.b32.xlu0 %v8927, 96
    %v10404 = vpop.permute.xlu0 %10403
    %10405 = vrot.lane.b32.xlu0 %v8928, 96
    %v10406 = vpop.permute.xlu0 %10405
    %10407 = vrot.lane.b32.xlu0 %v8929, 96
    %v10408 = vpop.permute.xlu0 %10407
    %10409 = vrot.lane.b32.xlu0 %v8930, 96
    %v10410 = vpop.permute.xlu0 %10409
    %10411 = vrot.lane.b32.xlu0 %v8931, 96
    %v10412 = vpop.permute.xlu0 %10411
    %10413 = vrot.lane.b32.xlu0 %v8932, 96
    %v10414 = vpop.permute.xlu0 %10413
    %10415 = vrot.lane.b32.xlu0 %v8933, 96
    %v10416 = vpop.permute.xlu0 %10415
    %10417 = vrot.lane.b32.xlu0 %v8934, 96
    %v10418 = vpop.permute.xlu0 %10417
    %10419 = vrot.lane.b32.xlu0 %v8935, 96
    %v10420 = vpop.permute.xlu0 %10419
    %10421 = vrot.lane.b32.xlu0 %v8936, 96
    %v10422 = vpop.permute.xlu0 %10421
    %10423 = vrot.lane.b32.xlu0 %v8937, 96
    %v10424 = vpop.permute.xlu0 %10423
    %10425 = vrot.lane.b32.xlu0 %v8938, 96
    %v10426 = vpop.permute.xlu0 %10425
    %10427 = vrot.lane.b32.xlu0 %v8939, 96
    %v10428 = vpop.permute.xlu0 %10427
    %10429 = vrot.lane.b32.xlu0 %v8940, 96
    %v10430 = vpop.permute.xlu0 %10429
    %10431 = vrot.lane.b32.xlu0 %v8941, 96
    %v10432 = vpop.permute.xlu0 %10431
    %10433 = vrot.lane.b32.xlu0 %v8942, 96
    %v10434 = vpop.permute.xlu0 %10433
    %10435 = vrot.lane.b32.xlu0 %v8943, 96
    %v10436 = vpop.permute.xlu0 %10435
    %10437 = vrot.lane.b32.xlu0 %v8944, 96
    %v10438 = vpop.permute.xlu0 %10437
    %10439 = vrot.lane.b32.xlu0 %v8945, 96
    %v10440 = vpop.permute.xlu0 %10439
    %10441 = vrot.lane.b32.xlu0 %v8946, 96
    %v10442 = vpop.permute.xlu0 %10441
    %10443 = vrot.lane.b32.xlu0 %v8947, 96
    %v10444 = vpop.permute.xlu0 %10443
    %10445 = vrot.lane.b32.xlu0 %v8948, 96
    %v10446 = vpop.permute.xlu0 %10445
    %10447 = vrot.lane.b32.xlu0 %v8949, 96
    %v10448 = vpop.permute.xlu0 %10447
    %10449 = vrot.lane.b32.xlu0 %v8950, 96
    %v10450 = vpop.permute.xlu0 %10449
    %10451 = vrot.lane.b32.xlu0 %v8951, 96
    %v10452 = vpop.permute.xlu0 %10451
    %10453 = vrot.lane.b32.xlu0 %v8952, 96
    %v10454 = vpop.permute.xlu0 %10453
    %10455 = vrot.lane.b32.xlu0 %v8953, 96
    %v10456 = vpop.permute.xlu0 %10455
    %10457 = vrot.lane.b32.xlu0 %v8954, 96
    %v10458 = vpop.permute.xlu0 %10457
    %10459 = vrot.lane.b32.xlu0 %v8955, 96
    %v10460 = vpop.permute.xlu0 %10459
    %10461 = vrot.lane.b32.xlu0 %v8956, 96
    %v10462 = vpop.permute.xlu0 %10461
    %10463 = vrot.lane.b32.xlu0 %v8957, 96
    %v10464 = vpop.permute.xlu0 %10463
    %10465 = vrot.lane.b32.xlu0 %v8958, 96
    %v10466 = vpop.permute.xlu0 %10465
    %10467 = vrot.lane.b32.xlu0 %v8959, 96
    %v10468 = vpop.permute.xlu0 %10467
    %10469 = vrot.lane.b32.xlu0 %v8960, 96
    %v10470 = vpop.permute.xlu0 %10469
    %10471 = vrot.lane.b32.xlu0 %v8961, 96
    %v10472 = vpop.permute.xlu0 %10471
    %10473 = vrot.lane.b32.xlu0 %v8962, 96
    %v10474 = vpop.permute.xlu0 %10473
    %10475 = vrot.lane.b32.xlu0 %v8963, 96
    %v10476 = vpop.permute.xlu0 %10475
    %10477 = vrot.lane.b32.xlu0 %v8964, 96
    %v10478 = vpop.permute.xlu0 %10477
    %10479 = vrot.lane.b32.xlu0 %v8965, 96
    %v10480 = vpop.permute.xlu0 %10479
    %10481 = vrot.lane.b32.xlu0 %v8966, 96
    %v10482 = vpop.permute.xlu0 %10481
    %10483 = vrot.lane.b32.xlu0 %v8967, 96
    %v10484 = vpop.permute.xlu0 %10483
    %10485 = vrot.lane.b32.xlu0 %v8968, 96
    %v10486 = vpop.permute.xlu0 %10485
    %10487 = vrot.lane.b32.xlu0 %v8969, 96
    %v10488 = vpop.permute.xlu0 %10487
    %10489 = vrot.lane.b32.xlu0 %v8970, 96
    %v10490 = vpop.permute.xlu0 %10489
    %10491 = vrot.lane.b32.xlu0 %v8971, 96
    %v10492 = vpop.permute.xlu0 %10491
    %10493 = vrot.lane.b32.xlu0 %v8972, 96
    %v10494 = vpop.permute.xlu0 %10493
    %10495 = vrot.lane.b32.xlu0 %v8973, 96
    %v10496 = vpop.permute.xlu0 %10495
    %10497 = vrot.lane.b32.xlu0 %v8974, 96
    %v10498 = vpop.permute.xlu0 %10497
    %10499 = vrot.lane.b32.xlu0 %v8975, 96
    %v10500 = vpop.permute.xlu0 %10499
    %10501 = vrot.lane.b32.xlu0 %v8976, 96
    %v10502 = vpop.permute.xlu0 %10501
    %10503 = vrot.lane.b32.xlu0 %v8977, 96
    %v10504 = vpop.permute.xlu0 %10503
    %10505 = vrot.lane.b32.xlu0 %v8978, 96
    %v10506 = vpop.permute.xlu0 %10505
    %10507 = vrot.lane.b32.xlu0 %v8979, 96
    %v10508 = vpop.permute.xlu0 %10507
    %10509 = vrot.lane.b32.xlu0 %v8980, 96
    %v10510 = vpop.permute.xlu0 %10509
    %10511 = vrot.lane.b32.xlu0 %v8981, 96
    %v10512 = vpop.permute.xlu0 %10511
    %10513 = vrot.lane.b32.xlu0 %v8982, 96
    %v10514 = vpop.permute.xlu0 %10513
    %10515 = vrot.lane.b32.xlu0 %v8983, 96
    %v10516 = vpop.permute.xlu0 %10515
    %10517 = vrot.lane.b32.xlu0 %v8984, 96
    %v10518 = vpop.permute.xlu0 %10517
    %10519 = vrot.lane.b32.xlu0 %v8985, 96
    %v10520 = vpop.permute.xlu0 %10519
    %10521 = vrot.lane.b32.xlu0 %v8986, 96
    %v10522 = vpop.permute.xlu0 %10521
    %v10587 = vsel %vm31, %v8475, %v9116
    %v10588 = vsel %vm31, %v8476, %v9118
    %v10589 = vsel %vm31, %v8477, %v9120
    %v10590 = vsel %vm31, %v8478, %v9122
    %v10591 = vsel %vm31, %v8479, %v9124
    %v10592 = vsel %vm31, %v8480, %v9126
    %v10593 = vsel %vm31, %v8481, %v9128
    %v10594 = vsel %vm31, %v8482, %v9130
    %v10595 = vsel %vm31, %v8483, %v9132
    %v10596 = vsel %vm31, %v8484, %v9134
    %v10597 = vsel %vm31, %v8485, %v9136
    %v10598 = vsel %vm31, %v8486, %v9138
    %v10599 = vsel %vm31, %v8487, %v9140
    %v10600 = vsel %vm31, %v8488, %v9142
    %v10601 = vsel %vm31, %v8489, %v9144
    %v10602 = vsel %vm31, %v8490, %v9146
    %v10603 = vsel %vm31, %v8491, %v9148
    %v10604 = vsel %vm31, %v8492, %v9150
    %v10605 = vsel %vm31, %v8493, %v9152
    %v10606 = vsel %vm31, %v8494, %v9154
    %v10607 = vsel %vm31, %v8495, %v9156
    %v10608 = vsel %vm31, %v8496, %v9158
    %v10609 = vsel %vm31, %v8497, %v9160
    %v10610 = vsel %vm31, %v8498, %v9162
    %v10611 = vsel %vm31, %v8499, %v9164
    %v10612 = vsel %vm31, %v8500, %v9166
    %v10613 = vsel %vm31, %v8501, %v9168
    %v10614 = vsel %vm31, %v8502, %v9170
    %v10615 = vsel %vm31, %v8503, %v9172
    %v10616 = vsel %vm31, %v8504, %v9174
    %v10617 = vsel %vm31, %v8505, %v9176
    %v10618 = vsel %vm31, %v8506, %v9178
    %v10619 = vsel %vm31, %v8507, %v9180
    %v10620 = vsel %vm31, %v8508, %v9182
    %v10621 = vsel %vm31, %v8509, %v9184
    %v10622 = vsel %vm31, %v8510, %v9186
    %v10623 = vsel %vm31, %v8511, %v9188
    %v10624 = vsel %vm31, %v8512, %v9190
    %v10625 = vsel %vm31, %v8513, %v9192
    %v10626 = vsel %vm31, %v8514, %v9194
    %v10627 = vsel %vm31, %v8515, %v9196
    %v10628 = vsel %vm31, %v8516, %v9198
    %v10629 = vsel %vm31, %v8517, %v9200
    %v10630 = vsel %vm31, %v8518, %v9202
    %v10631 = vsel %vm31, %v8519, %v9204
    %v10632 = vsel %vm31, %v8520, %v9206
    %v10633 = vsel %vm31, %v8521, %v9208
    %v10634 = vsel %vm31, %v8522, %v9210
    %v10635 = vsel %vm31, %v8523, %v9212
    %v10636 = vsel %vm31, %v8524, %v9214
    %v10637 = vsel %vm31, %v8525, %v9216
    %v10638 = vsel %vm31, %v8526, %v9218
    %v10639 = vsel %vm31, %v8527, %v9220
    %v10640 = vsel %vm31, %v8528, %v9222
    %v10641 = vsel %vm31, %v8529, %v9224
    %v10642 = vsel %vm31, %v8530, %v9226
    %v10643 = vsel %vm31, %v8531, %v9228
    %v10644 = vsel %vm31, %v8532, %v9230
    %v10645 = vsel %vm31, %v8533, %v9232
    %v10646 = vsel %vm31, %v8534, %v9234
    %v10647 = vsel %vm31, %v8535, %v9236
    %v10648 = vsel %vm31, %v8536, %v9238
    %v10649 = vsel %vm31, %v8537, %v9240
    %v10650 = vsel %vm31, %v8538, %v9242
    %v10651 = vsel %vm2482, %v10587, %v9372
    %v10652 = vsel %vm2482, %v10588, %v9374
    %v10653 = vsel %vm2482, %v10589, %v9376
    %v10654 = vsel %vm2482, %v10590, %v9378
    %v10655 = vsel %vm2482, %v10591, %v9380
    %v10656 = vsel %vm2482, %v10592, %v9382
    %v10657 = vsel %vm2482, %v10593, %v9384
    %v10658 = vsel %vm2482, %v10594, %v9386
    %v10659 = vsel %vm2482, %v10595, %v9388
    %v10660 = vsel %vm2482, %v10596, %v9390
    %v10661 = vsel %vm2482, %v10597, %v9392
    %v10662 = vsel %vm2482, %v10598, %v9394
    %v10663 = vsel %vm2482, %v10599, %v9396
    %v10664 = vsel %vm2482, %v10600, %v9398
    %v10665 = vsel %vm2482, %v10601, %v9400
    %v10666 = vsel %vm2482, %v10602, %v9402
    %v10667 = vsel %vm2482, %v10603, %v9404
    %v10668 = vsel %vm2482, %v10604, %v9406
    %v10669 = vsel %vm2482, %v10605, %v9408
    %v10670 = vsel %vm2482, %v10606, %v9410
    %v10671 = vsel %vm2482, %v10607, %v9412
    %v10672 = vsel %vm2482, %v10608, %v9414
    %v10673 = vsel %vm2482, %v10609, %v9416
    %v10674 = vsel %vm2482, %v10610, %v9418
    %v10675 = vsel %vm2482, %v10611, %v9420
    %v10676 = vsel %vm2482, %v10612, %v9422
    %v10677 = vsel %vm2482, %v10613, %v9424
    %v10678 = vsel %vm2482, %v10614, %v9426
    %v10679 = vsel %vm2482, %v10615, %v9428
    %v10680 = vsel %vm2482, %v10616, %v9430
    %v10681 = vsel %vm2482, %v10617, %v9432
    %v10682 = vsel %vm2482, %v10618, %v9434
    %v10683 = vsel %vm2482, %v10619, %v9436
    %v10684 = vsel %vm2482, %v10620, %v9438
    %v10685 = vsel %vm2482, %v10621, %v9440
    %v10686 = vsel %vm2482, %v10622, %v9442
    %v10687 = vsel %vm2482, %v10623, %v9444
    %v10688 = vsel %vm2482, %v10624, %v9446
    %v10689 = vsel %vm2482, %v10625, %v9448
    %v10690 = vsel %vm2482, %v10626, %v9450
    %v10691 = vsel %vm2482, %v10627, %v9452
    %v10692 = vsel %vm2482, %v10628, %v9454
    %v10693 = vsel %vm2482, %v10629, %v9456
    %v10694 = vsel %vm2482, %v10630, %v9458
    %v10695 = vsel %vm2482, %v10631, %v9460
    %v10696 = vsel %vm2482, %v10632, %v9462
    %v10697 = vsel %vm2482, %v10633, %v9464
    %v10698 = vsel %vm2482, %v10634, %v9466
    %v10699 = vsel %vm2482, %v10635, %v9468
    %v10700 = vsel %vm2482, %v10636, %v9470
    %v10701 = vsel %vm2482, %v10637, %v9472
    %v10702 = vsel %vm2482, %v10638, %v9474
    %v10703 = vsel %vm2482, %v10639, %v9476
    %v10704 = vsel %vm2482, %v10640, %v9478
    %v10705 = vsel %vm2482, %v10641, %v9480
    %v10706 = vsel %vm2482, %v10642, %v9482
    %v10707 = vsel %vm2482, %v10643, %v9484
    %v10708 = vsel %vm2482, %v10644, %v9486
    %v10709 = vsel %vm2482, %v10645, %v9488
    %v10710 = vsel %vm2482, %v10646, %v9490
    %v10711 = vsel %vm2482, %v10647, %v9492
    %v10712 = vsel %vm2482, %v10648, %v9494
    %v10713 = vsel %vm2482, %v10649, %v9496
    %v10714 = vsel %vm2482, %v10650, %v9498
    %v10715 = vsel %vm2547, %v10651, %v9628
    %v10716 = vsel %vm2547, %v10652, %v9630
    %v10717 = vsel %vm2547, %v10653, %v9632
    %v10718 = vsel %vm2547, %v10654, %v9634
    %v10719 = vsel %vm2547, %v10655, %v9636
    %v10720 = vsel %vm2547, %v10656, %v9638
    %v10721 = vsel %vm2547, %v10657, %v9640
    %v10722 = vsel %vm2547, %v10658, %v9642
    %v10723 = vsel %vm2547, %v10659, %v9644
    %v10724 = vsel %vm2547, %v10660, %v9646
    %v10725 = vsel %vm2547, %v10661, %v9648
    %v10726 = vsel %vm2547, %v10662, %v9650
    %v10727 = vsel %vm2547, %v10663, %v9652
    %v10728 = vsel %vm2547, %v10664, %v9654
    %v10729 = vsel %vm2547, %v10665, %v9656
    %v10730 = vsel %vm2547, %v10666, %v9658
    %v10731 = vsel %vm2547, %v10667, %v9660
    %v10732 = vsel %vm2547, %v10668, %v9662
    %v10733 = vsel %vm2547, %v10669, %v9664
    %v10734 = vsel %vm2547, %v10670, %v9666
    %v10735 = vsel %vm2547, %v10671, %v9668
    %v10736 = vsel %vm2547, %v10672, %v9670
    %v10737 = vsel %vm2547, %v10673, %v9672
    %v10738 = vsel %vm2547, %v10674, %v9674
    %v10739 = vsel %vm2547, %v10675, %v9676
    %v10740 = vsel %vm2547, %v10676, %v9678
    %v10741 = vsel %vm2547, %v10677, %v9680
    %v10742 = vsel %vm2547, %v10678, %v9682
    %v10743 = vsel %vm2547, %v10679, %v9684
    %v10744 = vsel %vm2547, %v10680, %v9686
    %v10745 = vsel %vm2547, %v10681, %v9688
    %v10746 = vsel %vm2547, %v10682, %v9690
    %v10747 = vsel %vm2547, %v10683, %v9692
    %v10748 = vsel %vm2547, %v10684, %v9694
    %v10749 = vsel %vm2547, %v10685, %v9696
    %v10750 = vsel %vm2547, %v10686, %v9698
    %v10751 = vsel %vm2547, %v10687, %v9700
    %v10752 = vsel %vm2547, %v10688, %v9702
    %v10753 = vsel %vm2547, %v10689, %v9704
    %v10754 = vsel %vm2547, %v10690, %v9706
    %v10755 = vsel %vm2547, %v10691, %v9708
    %v10756 = vsel %vm2547, %v10692, %v9710
    %v10757 = vsel %vm2547, %v10693, %v9712
    %v10758 = vsel %vm2547, %v10694, %v9714
    %v10759 = vsel %vm2547, %v10695, %v9716
    %v10760 = vsel %vm2547, %v10696, %v9718
    %v10761 = vsel %vm2547, %v10697, %v9720
    %v10762 = vsel %vm2547, %v10698, %v9722
    %v10763 = vsel %vm2547, %v10699, %v9724
    %v10764 = vsel %vm2547, %v10700, %v9726
    %v10765 = vsel %vm2547, %v10701, %v9728
    %v10766 = vsel %vm2547, %v10702, %v9730
    %v10767 = vsel %vm2547, %v10703, %v9732
    %v10768 = vsel %vm2547, %v10704, %v9734
    %v10769 = vsel %vm2547, %v10705, %v9736
    %v10770 = vsel %vm2547, %v10706, %v9738
    %v10771 = vsel %vm2547, %v10707, %v9740
    %v10772 = vsel %vm2547, %v10708, %v9742
    %v10773 = vsel %vm2547, %v10709, %v9744
    %v10774 = vsel %vm2547, %v10710, %v9746
    %v10775 = vsel %vm2547, %v10711, %v9748
    %v10776 = vsel %vm2547, %v10712, %v9750
    %v10777 = vsel %vm2547, %v10713, %v9752
    %v10778 = vsel %vm2547, %v10714, %v9754
    %v10779 = vsel %vm31, %v8731, %v9884
    %v10780 = vsel %vm31, %v8732, %v9886
    %v10781 = vsel %vm31, %v8733, %v9888
    %v10782 = vsel %vm31, %v8734, %v9890
    %v10783 = vsel %vm31, %v8735, %v9892
    %v10784 = vsel %vm31, %v8736, %v9894
    %v10785 = vsel %vm31, %v8737, %v9896
    %v10786 = vsel %vm31, %v8738, %v9898
    %v10787 = vsel %vm31, %v8739, %v9900
    %v10788 = vsel %vm31, %v8740, %v9902
    %v10789 = vsel %vm31, %v8741, %v9904
    %v10790 = vsel %vm31, %v8742, %v9906
    %v10791 = vsel %vm31, %v8743, %v9908
    %v10792 = vsel %vm31, %v8744, %v9910
    %v10793 = vsel %vm31, %v8745, %v9912
    %v10794 = vsel %vm31, %v8746, %v9914
    %v10795 = vsel %vm31, %v8747, %v9916
    %v10796 = vsel %vm31, %v8748, %v9918
    %v10797 = vsel %vm31, %v8749, %v9920
    %v10798 = vsel %vm31, %v8750, %v9922
    %v10799 = vsel %vm31, %v8751, %v9924
    %v10800 = vsel %vm31, %v8752, %v9926
    %v10801 = vsel %vm31, %v8753, %v9928
    %v10802 = vsel %vm31, %v8754, %v9930
    %v10803 = vsel %vm31, %v8755, %v9932
    %v10804 = vsel %vm31, %v8756, %v9934
    %v10805 = vsel %vm31, %v8757, %v9936
    %v10806 = vsel %vm31, %v8758, %v9938
    %v10807 = vsel %vm31, %v8759, %v9940
    %v10808 = vsel %vm31, %v8760, %v9942
    %v10809 = vsel %vm31, %v8761, %v9944
    %v10810 = vsel %vm31, %v8762, %v9946
    %v10811 = vsel %vm31, %v8763, %v9948
    %v10812 = vsel %vm31, %v8764, %v9950
    %v10813 = vsel %vm31, %v8765, %v9952
    %v10814 = vsel %vm31, %v8766, %v9954
    %v10815 = vsel %vm31, %v8767, %v9956
    %v10816 = vsel %vm31, %v8768, %v9958
    %v10817 = vsel %vm31, %v8769, %v9960
    %v10818 = vsel %vm31, %v8770, %v9962
    %v10819 = vsel %vm31, %v8771, %v9964
    %v10820 = vsel %vm31, %v8772, %v9966
    %v10821 = vsel %vm31, %v8773, %v9968
    %v10822 = vsel %vm31, %v8774, %v9970
    %v10823 = vsel %vm31, %v8775, %v9972
    %v10824 = vsel %vm31, %v8776, %v9974
    %v10825 = vsel %vm31, %v8777, %v9976
    %v10826 = vsel %vm31, %v8778, %v9978
    %v10827 = vsel %vm31, %v8779, %v9980
    %v10828 = vsel %vm31, %v8780, %v9982
    %v10829 = vsel %vm31, %v8781, %v9984
    %v10830 = vsel %vm31, %v8782, %v9986
    %v10831 = vsel %vm31, %v8783, %v9988
    %v10832 = vsel %vm31, %v8784, %v9990
    %v10833 = vsel %vm31, %v8785, %v9992
    %v10834 = vsel %vm31, %v8786, %v9994
    %v10835 = vsel %vm31, %v8787, %v9996
    %v10836 = vsel %vm31, %v8788, %v9998
    %v10837 = vsel %vm31, %v8789, %v10000
    %v10838 = vsel %vm31, %v8790, %v10002
    %v10839 = vsel %vm31, %v8791, %v10004
    %v10840 = vsel %vm31, %v8792, %v10006
    %v10841 = vsel %vm31, %v8793, %v10008
    %v10842 = vsel %vm31, %v8794, %v10010
    %v10843 = vsel %vm2482, %v10779, %v10140
    %v10844 = vsel %vm2482, %v10780, %v10142
    %v10845 = vsel %vm2482, %v10781, %v10144
    %v10846 = vsel %vm2482, %v10782, %v10146
    %v10847 = vsel %vm2482, %v10783, %v10148
    %v10848 = vsel %vm2482, %v10784, %v10150
    %v10849 = vsel %vm2482, %v10785, %v10152
    %v10850 = vsel %vm2482, %v10786, %v10154
    %v10851 = vsel %vm2482, %v10787, %v10156
    %v10852 = vsel %vm2482, %v10788, %v10158
    %v10853 = vsel %vm2482, %v10789, %v10160
    %v10854 = vsel %vm2482, %v10790, %v10162
    %v10855 = vsel %vm2482, %v10791, %v10164
    %v10856 = vsel %vm2482, %v10792, %v10166
    %v10857 = vsel %vm2482, %v10793, %v10168
    %v10858 = vsel %vm2482, %v10794, %v10170
    %v10859 = vsel %vm2482, %v10795, %v10172
    %v10860 = vsel %vm2482, %v10796, %v10174
    %v10861 = vsel %vm2482, %v10797, %v10176
    %v10862 = vsel %vm2482, %v10798, %v10178
    %v10863 = vsel %vm2482, %v10799, %v10180
    %v10864 = vsel %vm2482, %v10800, %v10182
    %v10865 = vsel %vm2482, %v10801, %v10184
    %v10866 = vsel %vm2482, %v10802, %v10186
    %v10867 = vsel %vm2482, %v10803, %v10188
    %v10868 = vsel %vm2482, %v10804, %v10190
    %v10869 = vsel %vm2482, %v10805, %v10192
    %v10870 = vsel %vm2482, %v10806, %v10194
    %v10871 = vsel %vm2482, %v10807, %v10196
    %v10872 = vsel %vm2482, %v10808, %v10198
    %v10873 = vsel %vm2482, %v10809, %v10200
    %v10874 = vsel %vm2482, %v10810, %v10202
    %v10875 = vsel %vm2482, %v10811, %v10204
    %v10876 = vsel %vm2482, %v10812, %v10206
    %v10877 = vsel %vm2482, %v10813, %v10208
    %v10878 = vsel %vm2482, %v10814, %v10210
    %v10879 = vsel %vm2482, %v10815, %v10212
    %v10880 = vsel %vm2482, %v10816, %v10214
    %v10881 = vsel %vm2482, %v10817, %v10216
    %v10882 = vsel %vm2482, %v10818, %v10218
    %v10883 = vsel %vm2482, %v10819, %v10220
    %v10884 = vsel %vm2482, %v10820, %v10222
    %v10885 = vsel %vm2482, %v10821, %v10224
    %v10886 = vsel %vm2482, %v10822, %v10226
    %v10887 = vsel %vm2482, %v10823, %v10228
    %v10888 = vsel %vm2482, %v10824, %v10230
    %v10889 = vsel %vm2482, %v10825, %v10232
    %v10890 = vsel %vm2482, %v10826, %v10234
    %v10891 = vsel %vm2482, %v10827, %v10236
    %v10892 = vsel %vm2482, %v10828, %v10238
    %v10893 = vsel %vm2482, %v10829, %v10240
    %v10894 = vsel %vm2482, %v10830, %v10242
    %v10895 = vsel %vm2482, %v10831, %v10244
    %v10896 = vsel %vm2482, %v10832, %v10246
    %v10897 = vsel %vm2482, %v10833, %v10248
    %v10898 = vsel %vm2482, %v10834, %v10250
    %v10899 = vsel %vm2482, %v10835, %v10252
    %v10900 = vsel %vm2482, %v10836, %v10254
    %v10901 = vsel %vm2482, %v10837, %v10256
    %v10902 = vsel %vm2482, %v10838, %v10258
    %v10903 = vsel %vm2482, %v10839, %v10260
    %v10904 = vsel %vm2482, %v10840, %v10262
    %v10905 = vsel %vm2482, %v10841, %v10264
    %v10906 = vsel %vm2482, %v10842, %v10266
    %v10907 = vsel %vm2547, %v10843, %v10396
    %v10908 = vsel %vm2547, %v10844, %v10398
    %v10909 = vsel %vm2547, %v10845, %v10400
    %v10910 = vsel %vm2547, %v10846, %v10402
    %v10911 = vsel %vm2547, %v10847, %v10404
    %v10912 = vsel %vm2547, %v10848, %v10406
    %v10913 = vsel %vm2547, %v10849, %v10408
    %v10914 = vsel %vm2547, %v10850, %v10410
    %v10915 = vsel %vm2547, %v10851, %v10412
    %v10916 = vsel %vm2547, %v10852, %v10414
    %v10917 = vsel %vm2547, %v10853, %v10416
    %v10918 = vsel %vm2547, %v10854, %v10418
    %v10919 = vsel %vm2547, %v10855, %v10420
    %v10920 = vsel %vm2547, %v10856, %v10422
    %v10921 = vsel %vm2547, %v10857, %v10424
    %v10922 = vsel %vm2547, %v10858, %v10426
    %v10923 = vsel %vm2547, %v10859, %v10428
    %v10924 = vsel %vm2547, %v10860, %v10430
    %v10925 = vsel %vm2547, %v10861, %v10432
    %v10926 = vsel %vm2547, %v10862, %v10434
    %v10927 = vsel %vm2547, %v10863, %v10436
    %v10928 = vsel %vm2547, %v10864, %v10438
    %v10929 = vsel %vm2547, %v10865, %v10440
    %v10930 = vsel %vm2547, %v10866, %v10442
    %v10931 = vsel %vm2547, %v10867, %v10444
    %v10932 = vsel %vm2547, %v10868, %v10446
    %v10933 = vsel %vm2547, %v10869, %v10448
    %v10934 = vsel %vm2547, %v10870, %v10450
    %v10935 = vsel %vm2547, %v10871, %v10452
    %v10936 = vsel %vm2547, %v10872, %v10454
    %v10937 = vsel %vm2547, %v10873, %v10456
    %v10938 = vsel %vm2547, %v10874, %v10458
    %v10939 = vsel %vm2547, %v10875, %v10460
    %v10940 = vsel %vm2547, %v10876, %v10462
    %v10941 = vsel %vm2547, %v10877, %v10464
    %v10942 = vsel %vm2547, %v10878, %v10466
    %v10943 = vsel %vm2547, %v10879, %v10468
    %v10944 = vsel %vm2547, %v10880, %v10470
    %v10945 = vsel %vm2547, %v10881, %v10472
    %v10946 = vsel %vm2547, %v10882, %v10474
    %v10947 = vsel %vm2547, %v10883, %v10476
    %v10948 = vsel %vm2547, %v10884, %v10478
    %v10949 = vsel %vm2547, %v10885, %v10480
    %v10950 = vsel %vm2547, %v10886, %v10482
    %v10951 = vsel %vm2547, %v10887, %v10484
    %v10952 = vsel %vm2547, %v10888, %v10486
    %v10953 = vsel %vm2547, %v10889, %v10488
    %v10954 = vsel %vm2547, %v10890, %v10490
    %v10955 = vsel %vm2547, %v10891, %v10492
    %v10956 = vsel %vm2547, %v10892, %v10494
    %v10957 = vsel %vm2547, %v10893, %v10496
    %v10958 = vsel %vm2547, %v10894, %v10498
    %v10959 = vsel %vm2547, %v10895, %v10500
    %v10960 = vsel %vm2547, %v10896, %v10502
    %v10961 = vsel %vm2547, %v10897, %v10504
    %v10962 = vsel %vm2547, %v10898, %v10506
    %v10963 = vsel %vm2547, %v10899, %v10508
    %v10964 = vsel %vm2547, %v10900, %v10510
    %v10965 = vsel %vm2547, %v10901, %v10512
    %v10966 = vsel %vm2547, %v10902, %v10514
    %v10967 = vsel %vm2547, %v10903, %v10516
    %v10968 = vsel %vm2547, %v10904, %v10518
    %v10969 = vsel %vm2547, %v10905, %v10520
    %v10970 = vsel %vm2547, %v10906, %v10522
    %v10971 = vpack.c.bf16 %v10716, %v10715
    %v10972 = vpack.c.bf16 %v10908, %v10907
    %v10973 = vpack.c.bf16 %v8988, %v8987
    %v10974 = vpack.c.bf16 %v10718, %v10717
    %v10975 = vpack.c.bf16 %v10910, %v10909
    %v10976 = vpack.c.bf16 %v8990, %v8989
    %v10977 = vpack.c.bf16 %v10720, %v10719
    %v10978 = vpack.c.bf16 %v10912, %v10911
    %v10979 = vpack.c.bf16 %v8992, %v8991
    %v10980 = vpack.c.bf16 %v10722, %v10721
    %v10981 = vpack.c.bf16 %v10914, %v10913
    %v10982 = vpack.c.bf16 %v8994, %v8993
    %v10983 = vpack.c.bf16 %v10724, %v10723
    %v10984 = vpack.c.bf16 %v10916, %v10915
    %v10985 = vpack.c.bf16 %v8996, %v8995
    %v10986 = vpack.c.bf16 %v10726, %v10725
    %v10987 = vpack.c.bf16 %v10918, %v10917
    %v10988 = vpack.c.bf16 %v8998, %v8997
    %v10989 = vpack.c.bf16 %v10728, %v10727
    %v10990 = vpack.c.bf16 %v10920, %v10919
    %v10991 = vpack.c.bf16 %v9000, %v8999
    %v10992 = vpack.c.bf16 %v10730, %v10729
    %v10993 = vpack.c.bf16 %v10922, %v10921
    %v10994 = vpack.c.bf16 %v9002, %v9001
    %v10995 = vpack.c.bf16 %v10732, %v10731
    %v10996 = vpack.c.bf16 %v10924, %v10923
    %v10997 = vpack.c.bf16 %v9004, %v9003
    %v10998 = vpack.c.bf16 %v10734, %v10733
    %v10999 = vpack.c.bf16 %v10926, %v10925
    %v11000 = vpack.c.bf16 %v9006, %v9005
    %v11001 = vpack.c.bf16 %v10736, %v10735
    %v11002 = vpack.c.bf16 %v10928, %v10927
    %v11003 = vpack.c.bf16 %v9008, %v9007
    %v11004 = vpack.c.bf16 %v10738, %v10737
    %v11005 = vpack.c.bf16 %v10930, %v10929
    %v11006 = vpack.c.bf16 %v9010, %v9009
    %v11007 = vpack.c.bf16 %v10740, %v10739
    %v11008 = vpack.c.bf16 %v10932, %v10931
    %v11009 = vpack.c.bf16 %v9012, %v9011
    %v11010 = vpack.c.bf16 %v10742, %v10741
    %v11011 = vpack.c.bf16 %v10934, %v10933
    %v11012 = vpack.c.bf16 %v9014, %v9013
    %v11013 = vpack.c.bf16 %v10744, %v10743
    %v11014 = vpack.c.bf16 %v10936, %v10935
    %v11015 = vpack.c.bf16 %v9016, %v9015
    %v11016 = vpack.c.bf16 %v10746, %v10745
    %v11017 = vpack.c.bf16 %v10938, %v10937
    %v11018 = vpack.c.bf16 %v9018, %v9017
    %v11019 = vpack.c.bf16 %v10748, %v10747
    %v11020 = vpack.c.bf16 %v10940, %v10939
    %v11021 = vpack.c.bf16 %v9020, %v9019
    %v11022 = vpack.c.bf16 %v10750, %v10749
    %v11023 = vpack.c.bf16 %v10942, %v10941
    %v11024 = vpack.c.bf16 %v9022, %v9021
    %v11025 = vpack.c.bf16 %v10752, %v10751
    %v11026 = vpack.c.bf16 %v10944, %v10943
    %v11027 = vpack.c.bf16 %v9024, %v9023
    %v11028 = vpack.c.bf16 %v10754, %v10753
    %v11029 = vpack.c.bf16 %v10946, %v10945
    %v11030 = vpack.c.bf16 %v9026, %v9025
    %v11031 = vpack.c.bf16 %v10756, %v10755
    %v11032 = vpack.c.bf16 %v10948, %v10947
    %v11033 = vpack.c.bf16 %v9028, %v9027
    %v11034 = vpack.c.bf16 %v10758, %v10757
    %v11035 = vpack.c.bf16 %v10950, %v10949
    %v11036 = vpack.c.bf16 %v9030, %v9029
    %v11037 = vpack.c.bf16 %v10760, %v10759
    %v11038 = vpack.c.bf16 %v10952, %v10951
    %v11039 = vpack.c.bf16 %v9032, %v9031
    %v11040 = vpack.c.bf16 %v10762, %v10761
    %v11041 = vpack.c.bf16 %v10954, %v10953
    %v11042 = vpack.c.bf16 %v9034, %v9033
    %v11043 = vpack.c.bf16 %v10764, %v10763
    %v11044 = vpack.c.bf16 %v10956, %v10955
    %v11045 = vpack.c.bf16 %v9036, %v9035
    %v11046 = vpack.c.bf16 %v10766, %v10765
    %v11047 = vpack.c.bf16 %v10958, %v10957
    %v11048 = vpack.c.bf16 %v9038, %v9037
    %v11049 = vpack.c.bf16 %v10768, %v10767
    %v11050 = vpack.c.bf16 %v10960, %v10959
    %v11051 = vpack.c.bf16 %v9040, %v9039
    %v11052 = vpack.c.bf16 %v10770, %v10769
    %v11053 = vpack.c.bf16 %v10962, %v10961
    %v11054 = vpack.c.bf16 %v9042, %v9041
    %v11055 = vpack.c.bf16 %v10772, %v10771
    %v11056 = vpack.c.bf16 %v10964, %v10963
    %v11057 = vpack.c.bf16 %v9044, %v9043
    %v11058 = vpack.c.bf16 %v10774, %v10773
    %v11059 = vpack.c.bf16 %v10966, %v10965
    %v11060 = vpack.c.bf16 %v9046, %v9045
    %v11061 = vpack.c.bf16 %v10776, %v10775
    %v11062 = vpack.c.bf16 %v10968, %v10967
    %v11063 = vpack.c.bf16 %v9048, %v9047
    %v11064 = vpack.c.bf16 %v10778, %v10777
    %v11065 = vpack.c.bf16 %v10970, %v10969
    %v11066 = vpack.c.bf16 %v9050, %v9049
    %s11067 = scalar_lea.vmem %s1, 288
    %v11068 = vld [vmem:[%s11067] sm:$0xf]
    %v11069 = vld [vmem:[%s11067 + $0x4] sm:$0xf]
    %v11070 = vld [vmem:[%s11067 + $0x8] sm:$0xf]
    %v11071 = vld [vmem:[%s11067 + $0xc] sm:$0xf]
    %v11072 = vld [vmem:[%s11067 + $0x10] sm:$0xf]
    %v11073 = vld [vmem:[%s11067 + $0x14] sm:$0xf]
    %v11074 = vld [vmem:[%s11067 + $0x18] sm:$0xf]
    %v11075 = vld [vmem:[%s11067 + $0x1c] sm:$0xf]
    %v11076 = vld [vmem:[%s11067 + $0x20] sm:$0xf]
    %v11077 = vld [vmem:[%s11067 + $0x24] sm:$0xf]
    %v11078 = vld [vmem:[%s11067 + $0x28] sm:$0xf]
    %v11079 = vld [vmem:[%s11067 + $0x2c] sm:$0xf]
    %v11080 = vld [vmem:[%s11067 + $0x30] sm:$0xf]
    %v11081 = vld [vmem:[%s11067 + $0x34] sm:$0xf]
    %v11082 = vld [vmem:[%s11067 + $0x38] sm:$0xf]
    %v11083 = vld [vmem:[%s11067 + $0x3c] sm:$0xf]
    %v11084 = vld [vmem:[%s11067 + $0x40] sm:$0xf]
    %v11085 = vld [vmem:[%s11067 + $0x44] sm:$0xf]
    %v11086 = vld [vmem:[%s11067 + $0x48] sm:$0xf]
    %v11087 = vld [vmem:[%s11067 + $0x4c] sm:$0xf]
    %v11088 = vld [vmem:[%s11067 + $0x50] sm:$0xf]
    %v11089 = vld [vmem:[%s11067 + $0x54] sm:$0xf]
    %v11090 = vld [vmem:[%s11067 + $0x58] sm:$0xf]
    %v11091 = vld [vmem:[%s11067 + $0x5c] sm:$0xf]
    %v11092 = vld [vmem:[%s11067 + $0x60] sm:$0xf]
    %v11093 = vld [vmem:[%s11067 + $0x64] sm:$0xf]
    %v11094 = vld [vmem:[%s11067 + $0x68] sm:$0xf]
    %v11095 = vld [vmem:[%s11067 + $0x6c] sm:$0xf]
    %v11096 = vld [vmem:[%s11067 + $0x70] sm:$0xf]
    %v11097 = vld [vmem:[%s11067 + $0x74] sm:$0xf]
    %v11098 = vld [vmem:[%s11067 + $0x78] sm:$0xf]
    %v11099 = vld [vmem:[%s11067 + $0x7c] sm:$0xf]
    %v11100 = vld [vmem:[%s11067 + $0x80] sm:$0xf]
    %v11101 = vld [vmem:[%s11067 + $0x84] sm:$0xf]
    %v11102 = vld [vmem:[%s11067 + $0x88] sm:$0xf]
    %v11103 = vld [vmem:[%s11067 + $0x8c] sm:$0xf]
    %s11104 = scalar_lea.vmem %s2, 2
    %v11105 = vld [vmem:[%s11104] sm:$0x1]
    %v11107 = vperm.slane %v11105, 0
    %v11145 = vunpack.c.l.b16 %v11068
    %v11146 = vunpack.c.l.b16 %v11069
    %v11147 = vunpack.c.l.b16 %v11070
    %v11148 = vunpack.c.l.b16 %v11071
    %v11149 = vunpack.c.l.b16 %v11072
    %v11150 = vunpack.c.l.b16 %v11073
    %v11151 = vunpack.c.l.b16 %v11074
    %v11152 = vunpack.c.l.b16 %v11075
    %v11153 = vunpack.c.l.b16 %v11076
    %v11154 = vunpack.c.l.b16 %v11077
    %v11155 = vunpack.c.l.b16 %v11078
    %v11156 = vunpack.c.l.b16 %v11079
    %v11157 = vunpack.c.l.b16 %v11080
    %v11158 = vunpack.c.l.b16 %v11081
    %v11159 = vunpack.c.l.b16 %v11082
    %v11160 = vunpack.c.l.b16 %v11083
    %v11161 = vunpack.c.l.b16 %v11084
    %v11162 = vunpack.c.l.b16 %v11085
    %v11163 = vunpack.c.l.b16 %v11086
    %v11164 = vunpack.c.l.b16 %v11087
    %v11165 = vunpack.c.l.b16 %v11088
    %v11166 = vunpack.c.l.b16 %v11089
    %v11167 = vunpack.c.l.b16 %v11090
    %v11168 = vunpack.c.l.b16 %v11091
    %v11169 = vunpack.c.l.b16 %v11092
    %v11170 = vunpack.c.l.b16 %v11093
    %v11171 = vunpack.c.l.b16 %v11094
    %v11172 = vunpack.c.l.b16 %v11095
    %v11173 = vunpack.c.l.b16 %v11096
    %v11174 = vunpack.c.l.b16 %v11097
    %v11175 = vunpack.c.l.b16 %v11098
    %v11176 = vunpack.c.l.b16 %v11099
    %v11177 = vunpack.c.l.b16 %v11100
    %v11178 = vunpack.c.l.b16 %v11101
    %v11179 = vunpack.c.l.b16 %v11102
    %v11180 = vunpack.c.l.b16 %v11103
    %v11181 = vpack.c.b16 %v11146, %v11145
    %v11182 = vpack.c.b16 %v11148, %v11147
    %v11183 = vpack.c.b16 %v11150, %v11149
    %v11184 = vpack.c.b16 %v11152, %v11151
    %v11185 = vpack.c.b16 %v11154, %v11153
    %v11186 = vpack.c.b16 %v11156, %v11155
    %v11187 = vpack.c.b16 %v11158, %v11157
    %v11188 = vpack.c.b16 %v11160, %v11159
    %v11189 = vpack.c.b16 %v11162, %v11161
    %v11190 = vpack.c.b16 %v11164, %v11163
    %v11191 = vpack.c.b16 %v11166, %v11165
    %v11192 = vpack.c.b16 %v11168, %v11167
    %v11193 = vpack.c.b16 %v11170, %v11169
    %v11194 = vpack.c.b16 %v11172, %v11171
    %v11195 = vpack.c.b16 %v11174, %v11173
    %v11196 = vpack.c.b16 %v11176, %v11175
    %v11197 = vpack.c.b16 %v11178, %v11177
    %v11198 = vpack.c.b16 %v11180, %v11179
    %v11218 = vsel %vm31, %v10973, 0
    %v11221 = vsel %vm31, %v10976, 0
    %v11224 = vsel %vm31, %v10979, 0
    %v11227 = vsel %vm31, %v10982, 0
    %v11230 = vsel %vm31, %v10985, 0
    %v11233 = vsel %vm31, %v10988, 0
    %v11236 = vsel %vm31, %v10991, 0
    %v11239 = vsel %vm31, %v10994, 0
    %v11242 = vsel %vm31, %v10997, 0
    %v11245 = vsel %vm31, %v11000, 0
    %v11248 = vsel %vm31, %v11003, 0
    %v11251 = vsel %vm31, %v11006, 0
    %v11254 = vsel %vm31, %v11009, 0
    %v11257 = vsel %vm31, %v11012, 0
    %v11260 = vsel %vm31, %v11015, 0
    %v11263 = vsel %vm31, %v11018, 0
    %v11266 = vsel %vm31, %v11021, 0
    %v11269 = vsel %vm31, %v11024, 0
    %v11272 = vsel %vm31, %v11027, 0
    %v11275 = vsel %vm31, %v11030, 0
    %v11278 = vsel %vm31, %v11033, 0
    %v11281 = vsel %vm31, %v11036, 0
    %v11284 = vsel %vm31, %v11039, 0
    %v11287 = vsel %vm31, %v11042, 0
    %v11290 = vsel %vm31, %v11045, 0
    %v11293 = vsel %vm31, %v11048, 0
    %v11296 = vsel %vm31, %v11051, 0
    %v11299 = vsel %vm31, %v11054, 0
    %v11302 = vsel %vm31, %v11057, 0
    %v11305 = vsel %vm31, %v11060, 0
    %v11308 = vsel %vm31, %v11063, 0
    %v11311 = vsel %vm31, %v11066, 0
    %11313 = vmatpush.bf16.msra.mxu0 %v11188
    %11314 = vmatpush.bf16.msra.mxu0 %v11187
    %11315 = vmatpush.bf16.msra.mxu0 %v11186
    %11316 = vmatpush.bf16.msra.mxu0 %v11185
    %11317 = vmatpush.bf16.msra.mxu0 %v11184
    %11318 = vmatpush.bf16.msra.mxu0 %v11183
    %11319 = vmatpush.bf16.msra.mxu0 %v11182
    %11320 = vmatpush.bf16.msra.mxu0 %v11181
    %11321 = vmatmul.bf16.gmra.mxu0 %v10971
    %v11322 = vpop.f32.mrf.mxu0
    %v11323 = vadd.f32 %v11107, %v11322
    %v11324 = vpop.f32.mrf.mxu0
    %v11325 = vadd.f32 %v11107, %v11324
    %11326 = vmatmul.bf16.gmra.mxu0 %v10974
    %v11327 = vpop.f32.mrf.mxu0
    %v11328 = vadd.f32 %v11107, %v11327
    %v11329 = vpop.f32.mrf.mxu0
    %v11330 = vadd.f32 %v11107, %v11329
    %11331 = vmatmul.bf16.gmra.mxu0 %v10977
    %v11332 = vpop.f32.mrf.mxu0
    %v11333 = vadd.f32 %v11107, %v11332
    %v11334 = vpop.f32.mrf.mxu0
    %v11335 = vadd.f32 %v11107, %v11334
    %11336 = vmatmul.bf16.gmra.mxu0 %v10980
    %v11337 = vpop.f32.mrf.mxu0
    %v11338 = vadd.f32 %v11107, %v11337
    %v11339 = vpop.f32.mrf.mxu0
    %v11340 = vadd.f32 %v11107, %v11339
    %11341 = vmatmul.bf16.gmra.mxu0 %v10983
    %v11342 = vpop.f32.mrf.mxu0
    %v11343 = vadd.f32 %v11107, %v11342
    %v11344 = vpop.f32.mrf.mxu0
    %v11345 = vadd.f32 %v11107, %v11344
    %11346 = vmatmul.bf16.gmra.mxu0 %v10986
    %v11347 = vpop.f32.mrf.mxu0
    %v11348 = vadd.f32 %v11107, %v11347
    %v11349 = vpop.f32.mrf.mxu0
    %v11350 = vadd.f32 %v11107, %v11349
    %11351 = vmatmul.bf16.gmra.mxu0 %v10989
    %v11352 = vpop.f32.mrf.mxu0
    %v11353 = vadd.f32 %v11107, %v11352
    %v11354 = vpop.f32.mrf.mxu0
    %v11355 = vadd.f32 %v11107, %v11354
    %11356 = vmatmul.bf16.gmra.mxu0 %v10992
    %v11357 = vpop.f32.mrf.mxu0
    %v11358 = vadd.f32 %v11107, %v11357
    %v11359 = vpop.f32.mrf.mxu0
    %v11360 = vadd.f32 %v11107, %v11359
    %11361 = vmatmul.bf16.gmra.mxu0 %v10995
    %v11362 = vpop.f32.mrf.mxu0
    %v11363 = vadd.f32 %v11107, %v11362
    %v11364 = vpop.f32.mrf.mxu0
    %v11365 = vadd.f32 %v11107, %v11364
    %11366 = vmatmul.bf16.gmra.mxu0 %v10998
    %v11367 = vpop.f32.mrf.mxu0
    %v11368 = vadd.f32 %v11107, %v11367
    %v11369 = vpop.f32.mrf.mxu0
    %v11370 = vadd.f32 %v11107, %v11369
    %11371 = vmatmul.bf16.gmra.mxu0 %v11001
    %v11372 = vpop.f32.mrf.mxu0
    %v11373 = vadd.f32 %v11107, %v11372
    %v11374 = vpop.f32.mrf.mxu0
    %v11375 = vadd.f32 %v11107, %v11374
    %11376 = vmatmul.bf16.gmra.mxu0 %v11004
    %v11377 = vpop.f32.mrf.mxu0
    %v11378 = vadd.f32 %v11107, %v11377
    %v11379 = vpop.f32.mrf.mxu0
    %v11380 = vadd.f32 %v11107, %v11379
    %11381 = vmatmul.bf16.gmra.mxu0 %v11007
    %v11382 = vpop.f32.mrf.mxu0
    %v11383 = vadd.f32 %v11107, %v11382
    %v11384 = vpop.f32.mrf.mxu0
    %v11385 = vadd.f32 %v11107, %v11384
    %11386 = vmatmul.bf16.gmra.mxu0 %v11010
    %v11387 = vpop.f32.mrf.mxu0
    %v11388 = vadd.f32 %v11107, %v11387
    %v11389 = vpop.f32.mrf.mxu0
    %v11390 = vadd.f32 %v11107, %v11389
    %11391 = vmatmul.bf16.gmra.mxu0 %v11013
    %v11392 = vpop.f32.mrf.mxu0
    %v11393 = vadd.f32 %v11107, %v11392
    %v11394 = vpop.f32.mrf.mxu0
    %v11395 = vadd.f32 %v11107, %v11394
    %11396 = vmatmul.bf16.gmra.mxu0 %v11016
    %v11397 = vpop.f32.mrf.mxu0
    %v11398 = vadd.f32 %v11107, %v11397
    %v11399 = vpop.f32.mrf.mxu0
    %v11400 = vadd.f32 %v11107, %v11399
    %11401 = vmatmul.bf16.gmra.mxu0 %v11019
    %v11402 = vpop.f32.mrf.mxu0
    %v11403 = vadd.f32 %v11107, %v11402
    %v11404 = vpop.f32.mrf.mxu0
    %v11405 = vadd.f32 %v11107, %v11404
    %11406 = vmatmul.bf16.gmra.mxu0 %v11022
    %v11407 = vpop.f32.mrf.mxu0
    %v11408 = vadd.f32 %v11107, %v11407
    %v11409 = vpop.f32.mrf.mxu0
    %v11410 = vadd.f32 %v11107, %v11409
    %11411 = vmatmul.bf16.gmra.mxu0 %v11025
    %v11412 = vpop.f32.mrf.mxu0
    %v11413 = vadd.f32 %v11107, %v11412
    %v11414 = vpop.f32.mrf.mxu0
    %v11415 = vadd.f32 %v11107, %v11414
    %11416 = vmatmul.bf16.gmra.mxu0 %v11028
    %v11417 = vpop.f32.mrf.mxu0
    %v11418 = vadd.f32 %v11107, %v11417
    %v11419 = vpop.f32.mrf.mxu0
    %v11420 = vadd.f32 %v11107, %v11419
    %11421 = vmatmul.bf16.gmra.mxu0 %v11031
    %v11422 = vpop.f32.mrf.mxu0
    %v11423 = vadd.f32 %v11107, %v11422
    %v11424 = vpop.f32.mrf.mxu0
    %v11425 = vadd.f32 %v11107, %v11424
    %11426 = vmatmul.bf16.gmra.mxu0 %v11034
    %v11427 = vpop.f32.mrf.mxu0
    %v11428 = vadd.f32 %v11107, %v11427
    %v11429 = vpop.f32.mrf.mxu0
    %v11430 = vadd.f32 %v11107, %v11429
    %11431 = vmatmul.bf16.gmra.mxu0 %v11037
    %v11432 = vpop.f32.mrf.mxu0
    %v11433 = vadd.f32 %v11107, %v11432
    %v11434 = vpop.f32.mrf.mxu0
    %v11435 = vadd.f32 %v11107, %v11434
    %11436 = vmatmul.bf16.gmra.mxu0 %v11040
    %v11437 = vpop.f32.mrf.mxu0
    %v11438 = vadd.f32 %v11107, %v11437
    %v11439 = vpop.f32.mrf.mxu0
    %v11440 = vadd.f32 %v11107, %v11439
    %11441 = vmatmul.bf16.gmra.mxu0 %v11043
    %v11442 = vpop.f32.mrf.mxu0
    %v11443 = vadd.f32 %v11107, %v11442
    %v11444 = vpop.f32.mrf.mxu0
    %v11445 = vadd.f32 %v11107, %v11444
    %11446 = vmatmul.bf16.gmra.mxu0 %v11046
    %v11447 = vpop.f32.mrf.mxu0
    %v11448 = vadd.f32 %v11107, %v11447
    %v11449 = vpop.f32.mrf.mxu0
    %v11450 = vadd.f32 %v11107, %v11449
    %11451 = vmatmul.bf16.gmra.mxu0 %v11049
    %v11452 = vpop.f32.mrf.mxu0
    %v11453 = vadd.f32 %v11107, %v11452
    %v11454 = vpop.f32.mrf.mxu0
    %v11455 = vadd.f32 %v11107, %v11454
    %11456 = vmatmul.bf16.gmra.mxu0 %v11052
    %v11457 = vpop.f32.mrf.mxu0
    %v11458 = vadd.f32 %v11107, %v11457
    %v11459 = vpop.f32.mrf.mxu0
    %v11460 = vadd.f32 %v11107, %v11459
    %11461 = vmatmul.bf16.gmra.mxu0 %v11055
    %v11462 = vpop.f32.mrf.mxu0
    %v11463 = vadd.f32 %v11107, %v11462
    %v11464 = vpop.f32.mrf.mxu0
    %v11465 = vadd.f32 %v11107, %v11464
    %11466 = vmatmul.bf16.gmra.mxu0 %v11058
    %v11467 = vpop.f32.mrf.mxu0
    %v11468 = vadd.f32 %v11107, %v11467
    %v11469 = vpop.f32.mrf.mxu0
    %v11470 = vadd.f32 %v11107, %v11469
    %11471 = vmatmul.bf16.gmra.mxu0 %v11061
    %v11472 = vpop.f32.mrf.mxu0
    %v11473 = vadd.f32 %v11107, %v11472
    %v11474 = vpop.f32.mrf.mxu0
    %v11475 = vadd.f32 %v11107, %v11474
    %11476 = vmatmul.bf16.gmra.mxu0 %v11064
    %v11477 = vpop.f32.mrf.mxu0
    %v11478 = vadd.f32 %v11107, %v11477
    %v11479 = vpop.f32.mrf.mxu0
    %v11480 = vadd.f32 %v11107, %v11479
    %11481 = vdwg.mxu0
    %11482 = vmatpush.bf16.msra.mxu0 %v11196
    %11483 = vmatpush.bf16.msra.mxu0 %v11195
    %11484 = vmatpush.bf16.msra.mxu0 %v11194
    %11485 = vmatpush.bf16.msra.mxu0 %v11193
    %11486 = vmatpush.bf16.msra.mxu0 %v11192
    %11487 = vmatpush.bf16.msra.mxu0 %v11191
    %11488 = vmatpush.bf16.msra.mxu0 %v11190
    %11489 = vmatpush.bf16.msra.mxu0 %v11189
    %11490 = vmatmul.bf16.gmra.mxu0 %v10972
    %v11491 = vpop.f32.mrf.mxu0
    %v11492 = vadd.f32 %v11323, %v11491
    %v11493 = vpop.f32.mrf.mxu0
    %v11494 = vadd.f32 %v11325, %v11493
    %11495 = vmatmul.bf16.gmra.mxu0 %v10975
    %v11496 = vpop.f32.mrf.mxu0
    %v11497 = vadd.f32 %v11328, %v11496
    %v11498 = vpop.f32.mrf.mxu0
    %v11499 = vadd.f32 %v11330, %v11498
    %11500 = vmatmul.bf16.gmra.mxu0 %v10978
    %v11501 = vpop.f32.mrf.mxu0
    %v11502 = vadd.f32 %v11333, %v11501
    %v11503 = vpop.f32.mrf.mxu0
    %v11504 = vadd.f32 %v11335, %v11503
    %11505 = vmatmul.bf16.gmra.mxu0 %v10981
    %v11506 = vpop.f32.mrf.mxu0
    %v11507 = vadd.f32 %v11338, %v11506
    %v11508 = vpop.f32.mrf.mxu0
    %v11509 = vadd.f32 %v11340, %v11508
    %11510 = vmatmul.bf16.gmra.mxu0 %v10984
    %v11511 = vpop.f32.mrf.mxu0
    %v11512 = vadd.f32 %v11343, %v11511
    %v11513 = vpop.f32.mrf.mxu0
    %v11514 = vadd.f32 %v11345, %v11513
    %11515 = vmatmul.bf16.gmra.mxu0 %v10987
    %v11516 = vpop.f32.mrf.mxu0
    %v11517 = vadd.f32 %v11348, %v11516
    %v11518 = vpop.f32.mrf.mxu0
    %v11519 = vadd.f32 %v11350, %v11518
    %11520 = vmatmul.bf16.gmra.mxu0 %v10990
    %v11521 = vpop.f32.mrf.mxu0
    %v11522 = vadd.f32 %v11353, %v11521
    %v11523 = vpop.f32.mrf.mxu0
    %v11524 = vadd.f32 %v11355, %v11523
    %11525 = vmatmul.bf16.gmra.mxu0 %v10993
    %v11526 = vpop.f32.mrf.mxu0
    %v11527 = vadd.f32 %v11358, %v11526
    %v11528 = vpop.f32.mrf.mxu0
    %v11529 = vadd.f32 %v11360, %v11528
    %11530 = vmatmul.bf16.gmra.mxu0 %v10996
    %v11531 = vpop.f32.mrf.mxu0
    %v11532 = vadd.f32 %v11363, %v11531
    %v11533 = vpop.f32.mrf.mxu0
    %v11534 = vadd.f32 %v11365, %v11533
    %11535 = vmatmul.bf16.gmra.mxu0 %v10999
    %v11536 = vpop.f32.mrf.mxu0
    %v11537 = vadd.f32 %v11368, %v11536
    %v11538 = vpop.f32.mrf.mxu0
    %v11539 = vadd.f32 %v11370, %v11538
    %11540 = vmatmul.bf16.gmra.mxu0 %v11002
    %v11541 = vpop.f32.mrf.mxu0
    %v11542 = vadd.f32 %v11373, %v11541
    %v11543 = vpop.f32.mrf.mxu0
    %v11544 = vadd.f32 %v11375, %v11543
    %11545 = vmatmul.bf16.gmra.mxu0 %v11005
    %v11546 = vpop.f32.mrf.mxu0
    %v11547 = vadd.f32 %v11378, %v11546
    %v11548 = vpop.f32.mrf.mxu0
    %v11549 = vadd.f32 %v11380, %v11548
    %11550 = vmatmul.bf16.gmra.mxu0 %v11008
    %v11551 = vpop.f32.mrf.mxu0
    %v11552 = vadd.f32 %v11383, %v11551
    %v11553 = vpop.f32.mrf.mxu0
    %v11554 = vadd.f32 %v11385, %v11553
    %11555 = vmatmul.bf16.gmra.mxu0 %v11011
    %v11556 = vpop.f32.mrf.mxu0
    %v11557 = vadd.f32 %v11388, %v11556
    %v11558 = vpop.f32.mrf.mxu0
    %v11559 = vadd.f32 %v11390, %v11558
    %11560 = vmatmul.bf16.gmra.mxu0 %v11014
    %v11561 = vpop.f32.mrf.mxu0
    %v11562 = vadd.f32 %v11393, %v11561
    %v11563 = vpop.f32.mrf.mxu0
    %v11564 = vadd.f32 %v11395, %v11563
    %11565 = vmatmul.bf16.gmra.mxu0 %v11017
    %v11566 = vpop.f32.mrf.mxu0
    %v11567 = vadd.f32 %v11398, %v11566
    %v11568 = vpop.f32.mrf.mxu0
    %v11569 = vadd.f32 %v11400, %v11568
    %11570 = vmatmul.bf16.gmra.mxu0 %v11020
    %v11571 = vpop.f32.mrf.mxu0
    %v11572 = vadd.f32 %v11403, %v11571
    %v11573 = vpop.f32.mrf.mxu0
    %v11574 = vadd.f32 %v11405, %v11573
    %11575 = vmatmul.bf16.gmra.mxu0 %v11023
    %v11576 = vpop.f32.mrf.mxu0
    %v11577 = vadd.f32 %v11408, %v11576
    %v11578 = vpop.f32.mrf.mxu0
    %v11579 = vadd.f32 %v11410, %v11578
    %11580 = vmatmul.bf16.gmra.mxu0 %v11026
    %v11581 = vpop.f32.mrf.mxu0
    %v11582 = vadd.f32 %v11413, %v11581
    %v11583 = vpop.f32.mrf.mxu0
    %v11584 = vadd.f32 %v11415, %v11583
    %11585 = vmatmul.bf16.gmra.mxu0 %v11029
    %v11586 = vpop.f32.mrf.mxu0
    %v11587 = vadd.f32 %v11418, %v11586
    %v11588 = vpop.f32.mrf.mxu0
    %v11589 = vadd.f32 %v11420, %v11588
    %11590 = vmatmul.bf16.gmra.mxu0 %v11032
    %v11591 = vpop.f32.mrf.mxu0
    %v11592 = vadd.f32 %v11423, %v11591
    %v11593 = vpop.f32.mrf.mxu0
    %v11594 = vadd.f32 %v11425, %v11593
    %11595 = vmatmul.bf16.gmra.mxu0 %v11035
    %v11596 = vpop.f32.mrf.mxu0
    %v11597 = vadd.f32 %v11428, %v11596
    %v11598 = vpop.f32.mrf.mxu0
    %v11599 = vadd.f32 %v11430, %v11598
    %11600 = vmatmul.bf16.gmra.mxu0 %v11038
    %v11601 = vpop.f32.mrf.mxu0
    %v11602 = vadd.f32 %v11433, %v11601
    %v11603 = vpop.f32.mrf.mxu0
    %v11604 = vadd.f32 %v11435, %v11603
    %11605 = vmatmul.bf16.gmra.mxu0 %v11041
    %v11606 = vpop.f32.mrf.mxu0
    %v11607 = vadd.f32 %v11438, %v11606
    %v11608 = vpop.f32.mrf.mxu0
    %v11609 = vadd.f32 %v11440, %v11608
    %11610 = vmatmul.bf16.gmra.mxu0 %v11044
    %v11611 = vpop.f32.mrf.mxu0
    %v11612 = vadd.f32 %v11443, %v11611
    %v11613 = vpop.f32.mrf.mxu0
    %v11614 = vadd.f32 %v11445, %v11613
    %11615 = vmatmul.bf16.gmra.mxu0 %v11047
    %v11616 = vpop.f32.mrf.mxu0
    %v11617 = vadd.f32 %v11448, %v11616
    %v11618 = vpop.f32.mrf.mxu0
    %v11619 = vadd.f32 %v11450, %v11618
    %11620 = vmatmul.bf16.gmra.mxu0 %v11050
    %v11621 = vpop.f32.mrf.mxu0
    %v11622 = vadd.f32 %v11453, %v11621
    %v11623 = vpop.f32.mrf.mxu0
    %v11624 = vadd.f32 %v11455, %v11623
    %11625 = vmatmul.bf16.gmra.mxu0 %v11053
    %v11626 = vpop.f32.mrf.mxu0
    %v11627 = vadd.f32 %v11458, %v11626
    %v11628 = vpop.f32.mrf.mxu0
    %v11629 = vadd.f32 %v11460, %v11628
    %11630 = vmatmul.bf16.gmra.mxu0 %v11056
    %v11631 = vpop.f32.mrf.mxu0
    %v11632 = vadd.f32 %v11463, %v11631
    %v11633 = vpop.f32.mrf.mxu0
    %v11634 = vadd.f32 %v11465, %v11633
    %11635 = vmatmul.bf16.gmra.mxu0 %v11059
    %v11636 = vpop.f32.mrf.mxu0
    %v11637 = vadd.f32 %v11468, %v11636
    %v11638 = vpop.f32.mrf.mxu0
    %v11639 = vadd.f32 %v11470, %v11638
    %11640 = vmatmul.bf16.gmra.mxu0 %v11062
    %v11641 = vpop.f32.mrf.mxu0
    %v11642 = vadd.f32 %v11473, %v11641
    %v11643 = vpop.f32.mrf.mxu0
    %v11644 = vadd.f32 %v11475, %v11643
    %11645 = vmatmul.bf16.gmra.mxu0 %v11065
    %v11646 = vpop.f32.mrf.mxu0
    %v11647 = vadd.f32 %v11478, %v11646
    %v11648 = vpop.f32.mrf.mxu0
    %v11649 = vadd.f32 %v11480, %v11648
    %11650 = vdwg.mxu0
    %11651 = vmatpush.bf16.msra.mxu0 0
    %11652 = vmatpush.bf16.msra.mxu0 0
    %11653 = vmatpush.bf16.msra.mxu0 0
    %11654 = vmatpush.bf16.msra.mxu0 0
    %11655 = vmatpush.bf16.msra.mxu0 0
    %11656 = vmatpush.bf16.msra.mxu0 0
    %11657 = vmatpush.bf16.msra.mxu0 %v11198
    %11658 = vmatpush.bf16.msra.mxu0 %v11197
    %11659 = vmatmul.bf16.gmra.mxu0 %v11218
    %v11660 = vpop.f32.mrf.mxu0
    %v11661 = vadd.f32 %v11492, %v11660
    %v11662 = vpop.f32.mrf.mxu0
    %v11663 = vadd.f32 %v11494, %v11662
    %11664 = vmatmul.bf16.gmra.mxu0 %v11221
    %v11665 = vpop.f32.mrf.mxu0
    %v11666 = vadd.f32 %v11497, %v11665
    %v11667 = vpop.f32.mrf.mxu0
    %v11668 = vadd.f32 %v11499, %v11667
    %11669 = vmatmul.bf16.gmra.mxu0 %v11224
    %v11670 = vpop.f32.mrf.mxu0
    %v11671 = vadd.f32 %v11502, %v11670
    %v11672 = vpop.f32.mrf.mxu0
    %v11673 = vadd.f32 %v11504, %v11672
    %11674 = vmatmul.bf16.gmra.mxu0 %v11227
    %v11675 = vpop.f32.mrf.mxu0
    %v11676 = vadd.f32 %v11507, %v11675
    %v11677 = vpop.f32.mrf.mxu0
    %v11678 = vadd.f32 %v11509, %v11677
    %11679 = vmatmul.bf16.gmra.mxu0 %v11230
    %v11680 = vpop.f32.mrf.mxu0
    %v11681 = vadd.f32 %v11512, %v11680
    %v11682 = vpop.f32.mrf.mxu0
    %v11683 = vadd.f32 %v11514, %v11682
    %11684 = vmatmul.bf16.gmra.mxu0 %v11233
    %v11685 = vpop.f32.mrf.mxu0
    %v11686 = vadd.f32 %v11517, %v11685
    %v11687 = vpop.f32.mrf.mxu0
    %v11688 = vadd.f32 %v11519, %v11687
    %11689 = vmatmul.bf16.gmra.mxu0 %v11236
    %v11690 = vpop.f32.mrf.mxu0
    %v11691 = vadd.f32 %v11522, %v11690
    %v11692 = vpop.f32.mrf.mxu0
    %v11693 = vadd.f32 %v11524, %v11692
    %11694 = vmatmul.bf16.gmra.mxu0 %v11239
    %v11695 = vpop.f32.mrf.mxu0
    %v11696 = vadd.f32 %v11527, %v11695
    %v11697 = vpop.f32.mrf.mxu0
    %v11698 = vadd.f32 %v11529, %v11697
    %11699 = vmatmul.bf16.gmra.mxu0 %v11242
    %v11700 = vpop.f32.mrf.mxu0
    %v11701 = vadd.f32 %v11532, %v11700
    %v11702 = vpop.f32.mrf.mxu0
    %v11703 = vadd.f32 %v11534, %v11702
    %11704 = vmatmul.bf16.gmra.mxu0 %v11245
    %v11705 = vpop.f32.mrf.mxu0
    %v11706 = vadd.f32 %v11537, %v11705
    %v11707 = vpop.f32.mrf.mxu0
    %v11708 = vadd.f32 %v11539, %v11707
    %11709 = vmatmul.bf16.gmra.mxu0 %v11248
    %v11710 = vpop.f32.mrf.mxu0
    %v11711 = vadd.f32 %v11542, %v11710
    %v11712 = vpop.f32.mrf.mxu0
    %v11713 = vadd.f32 %v11544, %v11712
    %11714 = vmatmul.bf16.gmra.mxu0 %v11251
    %v11715 = vpop.f32.mrf.mxu0
    %v11716 = vadd.f32 %v11547, %v11715
    %v11717 = vpop.f32.mrf.mxu0
    %v11718 = vadd.f32 %v11549, %v11717
    %11719 = vmatmul.bf16.gmra.mxu0 %v11254
    %v11720 = vpop.f32.mrf.mxu0
    %v11721 = vadd.f32 %v11552, %v11720
    %v11722 = vpop.f32.mrf.mxu0
    %v11723 = vadd.f32 %v11554, %v11722
    %11724 = vmatmul.bf16.gmra.mxu0 %v11257
    %v11725 = vpop.f32.mrf.mxu0
    %v11726 = vadd.f32 %v11557, %v11725
    %v11727 = vpop.f32.mrf.mxu0
    %v11728 = vadd.f32 %v11559, %v11727
    %11729 = vmatmul.bf16.gmra.mxu0 %v11260
    %v11730 = vpop.f32.mrf.mxu0
    %v11731 = vadd.f32 %v11562, %v11730
    %v11732 = vpop.f32.mrf.mxu0
    %v11733 = vadd.f32 %v11564, %v11732
    %11734 = vmatmul.bf16.gmra.mxu0 %v11263
    %v11735 = vpop.f32.mrf.mxu0
    %v11736 = vadd.f32 %v11567, %v11735
    %v11737 = vpop.f32.mrf.mxu0
    %v11738 = vadd.f32 %v11569, %v11737
    %11739 = vmatmul.bf16.gmra.mxu0 %v11266
    %v11740 = vpop.f32.mrf.mxu0
    %v11741 = vadd.f32 %v11572, %v11740
    %v11742 = vpop.f32.mrf.mxu0
    %v11743 = vadd.f32 %v11574, %v11742
    %11744 = vmatmul.bf16.gmra.mxu0 %v11269
    %v11745 = vpop.f32.mrf.mxu0
    %v11746 = vadd.f32 %v11577, %v11745
    %v11747 = vpop.f32.mrf.mxu0
    %v11748 = vadd.f32 %v11579, %v11747
    %11749 = vmatmul.bf16.gmra.mxu0 %v11272
    %v11750 = vpop.f32.mrf.mxu0
    %v11751 = vadd.f32 %v11582, %v11750
    %v11752 = vpop.f32.mrf.mxu0
    %v11753 = vadd.f32 %v11584, %v11752
    %11754 = vmatmul.bf16.gmra.mxu0 %v11275
    %v11755 = vpop.f32.mrf.mxu0
    %v11756 = vadd.f32 %v11587, %v11755
    %v11757 = vpop.f32.mrf.mxu0
    %v11758 = vadd.f32 %v11589, %v11757
    %11759 = vmatmul.bf16.gmra.mxu0 %v11278
    %v11760 = vpop.f32.mrf.mxu0
    %v11761 = vadd.f32 %v11592, %v11760
    %v11762 = vpop.f32.mrf.mxu0
    %v11763 = vadd.f32 %v11594, %v11762
    %11764 = vmatmul.bf16.gmra.mxu0 %v11281
    %v11765 = vpop.f32.mrf.mxu0
    %v11766 = vadd.f32 %v11597, %v11765
    %v11767 = vpop.f32.mrf.mxu0
    %v11768 = vadd.f32 %v11599, %v11767
    %11769 = vmatmul.bf16.gmra.mxu0 %v11284
    %v11770 = vpop.f32.mrf.mxu0
    %v11771 = vadd.f32 %v11602, %v11770
    %v11772 = vpop.f32.mrf.mxu0
    %v11773 = vadd.f32 %v11604, %v11772
    %11774 = vmatmul.bf16.gmra.mxu0 %v11287
    %v11775 = vpop.f32.mrf.mxu0
    %v11776 = vadd.f32 %v11607, %v11775
    %v11777 = vpop.f32.mrf.mxu0
    %v11778 = vadd.f32 %v11609, %v11777
    %11779 = vmatmul.bf16.gmra.mxu0 %v11290
    %v11780 = vpop.f32.mrf.mxu0
    %v11781 = vadd.f32 %v11612, %v11780
    %v11782 = vpop.f32.mrf.mxu0
    %v11783 = vadd.f32 %v11614, %v11782
    %11784 = vmatmul.bf16.gmra.mxu0 %v11293
    %v11785 = vpop.f32.mrf.mxu0
    %v11786 = vadd.f32 %v11617, %v11785
    %v11787 = vpop.f32.mrf.mxu0
    %v11788 = vadd.f32 %v11619, %v11787
    %11789 = vmatmul.bf16.gmra.mxu0 %v11296
    %v11790 = vpop.f32.mrf.mxu0
    %v11791 = vadd.f32 %v11622, %v11790
    %v11792 = vpop.f32.mrf.mxu0
    %v11793 = vadd.f32 %v11624, %v11792
    %11794 = vmatmul.bf16.gmra.mxu0 %v11299
    %v11795 = vpop.f32.mrf.mxu0
    %v11796 = vadd.f32 %v11627, %v11795
    %v11797 = vpop.f32.mrf.mxu0
    %v11798 = vadd.f32 %v11629, %v11797
    %11799 = vmatmul.bf16.gmra.mxu0 %v11302
    %v11800 = vpop.f32.mrf.mxu0
    %v11801 = vadd.f32 %v11632, %v11800
    %v11802 = vpop.f32.mrf.mxu0
    %v11803 = vadd.f32 %v11634, %v11802
    %11804 = vmatmul.bf16.gmra.mxu0 %v11305
    %v11805 = vpop.f32.mrf.mxu0
    %v11806 = vadd.f32 %v11637, %v11805
    %v11807 = vpop.f32.mrf.mxu0
    %v11808 = vadd.f32 %v11639, %v11807
    %11809 = vmatmul.bf16.gmra.mxu0 %v11308
    %v11810 = vpop.f32.mrf.mxu0
    %v11811 = vadd.f32 %v11642, %v11810
    %v11812 = vpop.f32.mrf.mxu0
    %v11813 = vadd.f32 %v11644, %v11812
    %11814 = vmatmul.bf16.gmra.mxu0 %v11311
    %v11815 = vpop.f32.mrf.mxu0
    %v11816 = vadd.f32 %v11647, %v11815
    %v11817 = vpop.f32.mrf.mxu0
    %v11818 = vadd.f32 %v11649, %v11817
    %11819 = vdwg.mxu0
    %v11820 = vmax.f32 %v11661, 0.0
    %v11821 = vmax.f32 %v11663, 0.0
    %v11822 = vmax.f32 %v11666, 0.0
    %v11823 = vmax.f32 %v11668, 0.0
    %v11824 = vmax.f32 %v11671, 0.0
    %v11825 = vmax.f32 %v11673, 0.0
    %v11826 = vmax.f32 %v11676, 0.0
    %v11827 = vmax.f32 %v11678, 0.0
    %v11828 = vmax.f32 %v11681, 0.0
    %v11829 = vmax.f32 %v11683, 0.0
    %v11830 = vmax.f32 %v11686, 0.0
    %v11831 = vmax.f32 %v11688, 0.0
    %v11832 = vmax.f32 %v11691, 0.0
    %v11833 = vmax.f32 %v11693, 0.0
    %v11834 = vmax.f32 %v11696, 0.0
    %v11835 = vmax.f32 %v11698, 0.0
    %v11836 = vmax.f32 %v11701, 0.0
    %v11837 = vmax.f32 %v11703, 0.0
    %v11838 = vmax.f32 %v11706, 0.0
    %v11839 = vmax.f32 %v11708, 0.0
    %v11840 = vmax.f32 %v11711, 0.0
    %v11841 = vmax.f32 %v11713, 0.0
    %v11842 = vmax.f32 %v11716, 0.0
    %v11843 = vmax.f32 %v11718, 0.0
    %v11844 = vmax.f32 %v11721, 0.0
    %v11845 = vmax.f32 %v11723, 0.0
    %v11846 = vmax.f32 %v11726, 0.0
    %v11847 = vmax.f32 %v11728, 0.0
    %v11848 = vmax.f32 %v11731, 0.0
    %v11849 = vmax.f32 %v11733, 0.0
    %v11850 = vmax.f32 %v11736, 0.0
    %v11851 = vmax.f32 %v11738, 0.0
    %v11852 = vmax.f32 %v11741, 0.0
    %v11853 = vmax.f32 %v11743, 0.0
    %v11854 = vmax.f32 %v11746, 0.0
    %v11855 = vmax.f32 %v11748, 0.0
    %v11856 = vmax.f32 %v11751, 0.0
    %v11857 = vmax.f32 %v11753, 0.0
    %v11858 = vmax.f32 %v11756, 0.0
    %v11859 = vmax.f32 %v11758, 0.0
    %v11860 = vmax.f32 %v11761, 0.0
    %v11861 = vmax.f32 %v11763, 0.0
    %v11862 = vmax.f32 %v11766, 0.0
    %v11863 = vmax.f32 %v11768, 0.0
    %v11864 = vmax.f32 %v11771, 0.0
    %v11865 = vmax.f32 %v11773, 0.0
    %v11866 = vmax.f32 %v11776, 0.0
    %v11867 = vmax.f32 %v11778, 0.0
    %v11868 = vmax.f32 %v11781, 0.0
    %v11869 = vmax.f32 %v11783, 0.0
    %v11870 = vmax.f32 %v11786, 0.0
    %v11871 = vmax.f32 %v11788, 0.0
    %v11872 = vmax.f32 %v11791, 0.0
    %v11873 = vmax.f32 %v11793, 0.0
    %v11874 = vmax.f32 %v11796, 0.0
    %v11875 = vmax.f32 %v11798, 0.0
    %v11876 = vmax.f32 %v11801, 0.0
    %v11877 = vmax.f32 %v11803, 0.0
    %v11878 = vmax.f32 %v11806, 0.0
    %v11879 = vmax.f32 %v11808, 0.0
    %v11880 = vmax.f32 %v11811, 0.0
    %v11881 = vmax.f32 %v11813, 0.0
    %v11882 = vmax.f32 %v11816, 0.0
    %v11883 = vmax.f32 %v11818, 0.0
    %s11884 = scalar_lea.vmem %s3, 2
    %v11885 = vld [vmem:[%s11884] sm:$0x1]
    %s11886 = scalar_lea.vmem %s4, 2
    %v11887 = vld [vmem:[%s11886] sm:$0x1]
    %v11888 = vsel %vm31, %v11820, 0.0
    %v11889 = vsel %vm31, %v11821, 0.0
    %v11890 = vadd.f32 %v11888, %v11889
    %v11891 = vsel %vm31, %v11822, 0.0
    %v11892 = vadd.f32 %v11890, %v11891
    %v11893 = vsel %vm31, %v11823, 0.0
    %v11894 = vadd.f32 %v11892, %v11893
    %v11895 = vsel %vm31, %v11824, 0.0
    %v11896 = vadd.f32 %v11894, %v11895
    %v11897 = vsel %vm31, %v11825, 0.0
    %v11898 = vadd.f32 %v11896, %v11897
    %v11899 = vsel %vm31, %v11826, 0.0
    %v11900 = vadd.f32 %v11898, %v11899
    %v11901 = vsel %vm31, %v11827, 0.0
    %v11902 = vadd.f32 %v11900, %v11901
    %v11903 = vsel %vm31, %v11828, 0.0
    %v11904 = vadd.f32 %v11902, %v11903
    %v11905 = vsel %vm31, %v11829, 0.0
    %v11906 = vadd.f32 %v11904, %v11905
    %v11907 = vsel %vm31, %v11830, 0.0
    %v11908 = vadd.f32 %v11906, %v11907
    %v11909 = vsel %vm31, %v11831, 0.0
    %v11910 = vadd.f32 %v11908, %v11909
    %v11911 = vsel %vm31, %v11832, 0.0
    %v11912 = vadd.f32 %v11910, %v11911
    %v11913 = vsel %vm31, %v11833, 0.0
    %v11914 = vadd.f32 %v11912, %v11913
    %v11915 = vsel %vm31, %v11834, 0.0
    %v11916 = vadd.f32 %v11914, %v11915
    %v11917 = vsel %vm31, %v11835, 0.0
    %v11918 = vadd.f32 %v11916, %v11917
    %v11919 = vsel %vm31, %v11836, 0.0
    %v11920 = vadd.f32 %v11918, %v11919
    %v11921 = vsel %vm31, %v11837, 0.0
    %v11922 = vadd.f32 %v11920, %v11921
    %v11923 = vsel %vm31, %v11838, 0.0
    %v11924 = vadd.f32 %v11922, %v11923
    %v11925 = vsel %vm31, %v11839, 0.0
    %v11926 = vadd.f32 %v11924, %v11925
    %v11927 = vsel %vm31, %v11840, 0.0
    %v11928 = vadd.f32 %v11926, %v11927
    %v11929 = vsel %vm31, %v11841, 0.0
    %v11930 = vadd.f32 %v11928, %v11929
    %v11931 = vsel %vm31, %v11842, 0.0
    %v11932 = vadd.f32 %v11930, %v11931
    %v11933 = vsel %vm31, %v11843, 0.0
    %v11934 = vadd.f32 %v11932, %v11933
    %v11935 = vsel %vm31, %v11844, 0.0
    %v11936 = vadd.f32 %v11934, %v11935
    %v11937 = vsel %vm31, %v11845, 0.0
    %v11938 = vadd.f32 %v11936, %v11937
    %v11939 = vsel %vm31, %v11846, 0.0
    %v11940 = vadd.f32 %v11938, %v11939
    %v11941 = vsel %vm31, %v11847, 0.0
    %v11942 = vadd.f32 %v11940, %v11941
    %v11943 = vsel %vm31, %v11848, 0.0
    %v11944 = vadd.f32 %v11942, %v11943
    %v11945 = vsel %vm31, %v11849, 0.0
    %v11946 = vadd.f32 %v11944, %v11945
    %v11947 = vsel %vm31, %v11850, 0.0
    %v11948 = vadd.f32 %v11946, %v11947
    %v11949 = vsel %vm31, %v11851, 0.0
    %v11950 = vadd.f32 %v11948, %v11949
    %v11951 = vsel %vm31, %v11852, 0.0
    %v11952 = vadd.f32 %v11950, %v11951
    %v11953 = vsel %vm31, %v11853, 0.0
    %v11954 = vadd.f32 %v11952, %v11953
    %v11955 = vsel %vm31, %v11854, 0.0
    %v11956 = vadd.f32 %v11954, %v11955
    %v11957 = vsel %vm31, %v11855, 0.0
    %v11958 = vadd.f32 %v11956, %v11957
    %v11959 = vsel %vm31, %v11856, 0.0
    %v11960 = vadd.f32 %v11958, %v11959
    %v11961 = vsel %vm31, %v11857, 0.0
    %v11962 = vadd.f32 %v11960, %v11961
    %v11963 = vsel %vm31, %v11858, 0.0
    %v11964 = vadd.f32 %v11962, %v11963
    %v11965 = vsel %vm31, %v11859, 0.0
    %v11966 = vadd.f32 %v11964, %v11965
    %v11967 = vsel %vm31, %v11860, 0.0
    %v11968 = vadd.f32 %v11966, %v11967
    %v11969 = vsel %vm31, %v11861, 0.0
    %v11970 = vadd.f32 %v11968, %v11969
    %v11971 = vsel %vm31, %v11862, 0.0
    %v11972 = vadd.f32 %v11970, %v11971
    %v11973 = vsel %vm31, %v11863, 0.0
    %v11974 = vadd.f32 %v11972, %v11973
    %v11975 = vsel %vm31, %v11864, 0.0
    %v11976 = vadd.f32 %v11974, %v11975
    %v11977 = vsel %vm31, %v11865, 0.0
    %v11978 = vadd.f32 %v11976, %v11977
    %v11979 = vsel %vm31, %v11866, 0.0
    %v11980 = vadd.f32 %v11978, %v11979
    %v11981 = vsel %vm31, %v11867, 0.0
    %v11982 = vadd.f32 %v11980, %v11981
    %v11983 = vsel %vm31, %v11868, 0.0
    %v11984 = vadd.f32 %v11982, %v11983
    %v11985 = vsel %vm31, %v11869, 0.0
    %v11986 = vadd.f32 %v11984, %v11985
    %v11987 = vsel %vm31, %v11870, 0.0
    %v11988 = vadd.f32 %v11986, %v11987
    %v11989 = vsel %vm31, %v11871, 0.0
    %v11990 = vadd.f32 %v11988, %v11989
    %v11991 = vsel %vm31, %v11872, 0.0
    %v11992 = vadd.f32 %v11990, %v11991
    %v11993 = vsel %vm31, %v11873, 0.0
    %v11994 = vadd.f32 %v11992, %v11993
    %v11995 = vsel %vm31, %v11874, 0.0
    %v11996 = vadd.f32 %v11994, %v11995
    %v11997 = vsel %vm31, %v11875, 0.0
    %v11998 = vadd.f32 %v11996, %v11997
    %v11999 = vsel %vm31, %v11876, 0.0
    %v12000 = vadd.f32 %v11998, %v11999
    %v12001 = vsel %vm31, %v11877, 0.0
    %v12002 = vadd.f32 %v12000, %v12001
    %v12003 = vsel %vm31, %v11878, 0.0
    %v12004 = vadd.f32 %v12002, %v12003
    %v12005 = vsel %vm31, %v11879, 0.0
    %v12006 = vadd.f32 %v12004, %v12005
    %v12007 = vsel %vm31, %v11880, 0.0
    %v12008 = vadd.f32 %v12006, %v12007
    %v12009 = vsel %vm31, %v11881, 0.0
    %v12010 = vadd.f32 %v12008, %v12009
    %v12011 = vsel %vm31, %v11882, 0.0
    %v12012 = vadd.f32 %v12010, %v12011
    %v12013 = vsel %vm31, %v11883, 0.0
    %v12014 = vadd.f32 %v12012, %v12013
    %v12015 = vrot.slane %v12014, 4
    %v12016 = vadd.f32 %v12014, %v12015
    %v12017 = vrot.slane %v12016, 2
    %v12018 = vadd.f32 %v12016, %v12017
    %v12019 = vrot.slane %v12018, 1
    %v12020 = vadd.f32 %v12018, %v12019
    %v12021 = vmul.f32 %v12020, %v3856
    %v12022 = vsub.f32 %v11820, %v12021
    %v12023 = vsub.f32 %v11821, %v12021
    %v12024 = vsub.f32 %v11822, %v12021
    %v12025 = vsub.f32 %v11823, %v12021
    %v12026 = vsub.f32 %v11824, %v12021
    %v12027 = vsub.f32 %v11825, %v12021
    %v12028 = vsub.f32 %v11826, %v12021
    %v12029 = vsub.f32 %v11827, %v12021
    %v12030 = vsub.f32 %v11828, %v12021
    %v12031 = vsub.f32 %v11829, %v12021
    %v12032 = vsub.f32 %v11830, %v12021
    %v12033 = vsub.f32 %v11831, %v12021
    %v12034 = vsub.f32 %v11832, %v12021
    %v12035 = vsub.f32 %v11833, %v12021
    %v12036 = vsub.f32 %v11834, %v12021
    %v12037 = vsub.f32 %v11835, %v12021
    %v12038 = vsub.f32 %v11836, %v12021
    %v12039 = vsub.f32 %v11837, %v12021
    %v12040 = vsub.f32 %v11838, %v12021
    %v12041 = vsub.f32 %v11839, %v12021
    %v12042 = vsub.f32 %v11840, %v12021
    %v12043 = vsub.f32 %v11841, %v12021
    %v12044 = vsub.f32 %v11842, %v12021
    %v12045 = vsub.f32 %v11843, %v12021
    %v12046 = vsub.f32 %v11844, %v12021
    %v12047 = vsub.f32 %v11845, %v12021
    %v12048 = vsub.f32 %v11846, %v12021
    %v12049 = vsub.f32 %v11847, %v12021
    %v12050 = vsub.f32 %v11848, %v12021
    %v12051 = vsub.f32 %v11849, %v12021
    %v12052 = vsub.f32 %v11850, %v12021
    %v12053 = vsub.f32 %v11851, %v12021
    %v12054 = vsub.f32 %v11852, %v12021
    %v12055 = vsub.f32 %v11853, %v12021
    %v12056 = vsub.f32 %v11854, %v12021
    %v12057 = vsub.f32 %v11855, %v12021
    %v12058 = vsub.f32 %v11856, %v12021
    %v12059 = vsub.f32 %v11857, %v12021
    %v12060 = vsub.f32 %v11858, %v12021
    %v12061 = vsub.f32 %v11859, %v12021
    %v12062 = vsub.f32 %v11860, %v12021
    %v12063 = vsub.f32 %v11861, %v12021
    %v12064 = vsub.f32 %v11862, %v12021
    %v12065 = vsub.f32 %v11863, %v12021
    %v12066 = vsub.f32 %v11864, %v12021
    %v12067 = vsub.f32 %v11865, %v12021
    %v12068 = vsub.f32 %v11866, %v12021
    %v12069 = vsub.f32 %v11867, %v12021
    %v12070 = vsub.f32 %v11868, %v12021
    %v12071 = vsub.f32 %v11869, %v12021
    %v12072 = vsub.f32 %v11870, %v12021
    %v12073 = vsub.f32 %v11871, %v12021
    %v12074 = vsub.f32 %v11872, %v12021
    %v12075 = vsub.f32 %v11873, %v12021
    %v12076 = vsub.f32 %v11874, %v12021
    %v12077 = vsub.f32 %v11875, %v12021
    %v12078 = vsub.f32 %v11876, %v12021
    %v12079 = vsub.f32 %v11877, %v12021
    %v12080 = vsub.f32 %v11878, %v12021
    %v12081 = vsub.f32 %v11879, %v12021
    %v12082 = vsub.f32 %v11880, %v12021
    %v12083 = vsub.f32 %v11881, %v12021
    %v12084 = vsub.f32 %v11882, %v12021
    %v12085 = vsub.f32 %v11883, %v12021
    %v12086 = vmul.f32 %v12022, %v12022
    %v12087 = vmul.f32 %v12023, %v12023
    %v12088 = vmul.f32 %v12024, %v12024
    %v12089 = vmul.f32 %v12025, %v12025
    %v12090 = vmul.f32 %v12026, %v12026
    %v12091 = vmul.f32 %v12027, %v12027
    %v12092 = vmul.f32 %v12028, %v12028
    %v12093 = vmul.f32 %v12029, %v12029
    %v12094 = vmul.f32 %v12030, %v12030
    %v12095 = vmul.f32 %v12031, %v12031
    %v12096 = vmul.f32 %v12032, %v12032
    %v12097 = vmul.f32 %v12033, %v12033
    %v12098 = vmul.f32 %v12034, %v12034
    %v12099 = vmul.f32 %v12035, %v12035
    %v12100 = vmul.f32 %v12036, %v12036
    %v12101 = vmul.f32 %v12037, %v12037
    %v12102 = vmul.f32 %v12038, %v12038
    %v12103 = vmul.f32 %v12039, %v12039
    %v12104 = vmul.f32 %v12040, %v12040
    %v12105 = vmul.f32 %v12041, %v12041
    %v12106 = vmul.f32 %v12042, %v12042
    %v12107 = vmul.f32 %v12043, %v12043
    %v12108 = vmul.f32 %v12044, %v12044
    %v12109 = vmul.f32 %v12045, %v12045
    %v12110 = vmul.f32 %v12046, %v12046
    %v12111 = vmul.f32 %v12047, %v12047
    %v12112 = vmul.f32 %v12048, %v12048
    %v12113 = vmul.f32 %v12049, %v12049
    %v12114 = vmul.f32 %v12050, %v12050
    %v12115 = vmul.f32 %v12051, %v12051
    %v12116 = vmul.f32 %v12052, %v12052
    %v12117 = vmul.f32 %v12053, %v12053
    %v12118 = vmul.f32 %v12054, %v12054
    %v12119 = vmul.f32 %v12055, %v12055
    %v12120 = vmul.f32 %v12056, %v12056
    %v12121 = vmul.f32 %v12057, %v12057
    %v12122 = vmul.f32 %v12058, %v12058
    %v12123 = vmul.f32 %v12059, %v12059
    %v12124 = vmul.f32 %v12060, %v12060
    %v12125 = vmul.f32 %v12061, %v12061
    %v12126 = vmul.f32 %v12062, %v12062
    %v12127 = vmul.f32 %v12063, %v12063
    %v12128 = vmul.f32 %v12064, %v12064
    %v12129 = vmul.f32 %v12065, %v12065
    %v12130 = vmul.f32 %v12066, %v12066
    %v12131 = vmul.f32 %v12067, %v12067
    %v12132 = vmul.f32 %v12068, %v12068
    %v12133 = vmul.f32 %v12069, %v12069
    %v12134 = vmul.f32 %v12070, %v12070
    %v12135 = vmul.f32 %v12071, %v12071
    %v12136 = vmul.f32 %v12072, %v12072
    %v12137 = vmul.f32 %v12073, %v12073
    %v12138 = vmul.f32 %v12074, %v12074
    %v12139 = vmul.f32 %v12075, %v12075
    %v12140 = vmul.f32 %v12076, %v12076
    %v12141 = vmul.f32 %v12077, %v12077
    %v12142 = vmul.f32 %v12078, %v12078
    %v12143 = vmul.f32 %v12079, %v12079
    %v12144 = vmul.f32 %v12080, %v12080
    %v12145 = vmul.f32 %v12081, %v12081
    %v12146 = vmul.f32 %v12082, %v12082
    %v12147 = vmul.f32 %v12083, %v12083
    %v12148 = vmul.f32 %v12084, %v12084
    %v12149 = vmul.f32 %v12085, %v12085
    %v12150 = vsel %vm31, %v12086, 0.0
    %v12151 = vsel %vm31, %v12087, 0.0
    %v12152 = vadd.f32 %v12150, %v12151
    %v12153 = vsel %vm31, %v12088, 0.0
    %v12154 = vadd.f32 %v12152, %v12153
    %v12155 = vsel %vm31, %v12089, 0.0
    %v12156 = vadd.f32 %v12154, %v12155
    %v12157 = vsel %vm31, %v12090, 0.0
    %v12158 = vadd.f32 %v12156, %v12157
    %v12159 = vsel %vm31, %v12091, 0.0
    %v12160 = vadd.f32 %v12158, %v12159
    %v12161 = vsel %vm31, %v12092, 0.0
    %v12162 = vadd.f32 %v12160, %v12161
    %v12163 = vsel %vm31, %v12093, 0.0
    %v12164 = vadd.f32 %v12162, %v12163
    %v12165 = vsel %vm31, %v12094, 0.0
    %v12166 = vadd.f32 %v12164, %v12165
    %v12167 = vsel %vm31, %v12095, 0.0
    %v12168 = vadd.f32 %v12166, %v12167
    %v12169 = vsel %vm31, %v12096, 0.0
    %v12170 = vadd.f32 %v12168, %v12169
    %v12171 = vsel %vm31, %v12097, 0.0
    %v12172 = vadd.f32 %v12170, %v12171
    %v12173 = vsel %vm31, %v12098, 0.0
    %v12174 = vadd.f32 %v12172, %v12173
    %v12175 = vsel %vm31, %v12099, 0.0
    %v12176 = vadd.f32 %v12174, %v12175
    %v12177 = vsel %vm31, %v12100, 0.0
    %v12178 = vadd.f32 %v12176, %v12177
    %v12179 = vsel %vm31, %v12101, 0.0
    %v12180 = vadd.f32 %v12178, %v12179
    %v12181 = vsel %vm31, %v12102, 0.0
    %v12182 = vadd.f32 %v12180, %v12181
    %v12183 = vsel %vm31, %v12103, 0.0
    %v12184 = vadd.f32 %v12182, %v12183
    %v12185 = vsel %vm31, %v12104, 0.0
    %v12186 = vadd.f32 %v12184, %v12185
    %v12187 = vsel %vm31, %v12105, 0.0
    %v12188 = vadd.f32 %v12186, %v12187
    %v12189 = vsel %vm31, %v12106, 0.0
    %v12190 = vadd.f32 %v12188, %v12189
    %v12191 = vsel %vm31, %v12107, 0.0
    %v12192 = vadd.f32 %v12190, %v12191
    %v12193 = vsel %vm31, %v12108, 0.0
    %v12194 = vadd.f32 %v12192, %v12193
    %v12195 = vsel %vm31, %v12109, 0.0
    %v12196 = vadd.f32 %v12194, %v12195
    %v12197 = vsel %vm31, %v12110, 0.0
    %v12198 = vadd.f32 %v12196, %v12197
    %v12199 = vsel %vm31, %v12111, 0.0
    %v12200 = vadd.f32 %v12198, %v12199
    %v12201 = vsel %vm31, %v12112, 0.0
    %v12202 = vadd.f32 %v12200, %v12201
    %v12203 = vsel %vm31, %v12113, 0.0
    %v12204 = vadd.f32 %v12202, %v12203
    %v12205 = vsel %vm31, %v12114, 0.0
    %v12206 = vadd.f32 %v12204, %v12205
    %v12207 = vsel %vm31, %v12115, 0.0
    %v12208 = vadd.f32 %v12206, %v12207
    %v12209 = vsel %vm31, %v12116, 0.0
    %v12210 = vadd.f32 %v12208, %v12209
    %v12211 = vsel %vm31, %v12117, 0.0
    %v12212 = vadd.f32 %v12210, %v12211
    %v12213 = vsel %vm31, %v12118, 0.0
    %v12214 = vadd.f32 %v12212, %v12213
    %v12215 = vsel %vm31, %v12119, 0.0
    %v12216 = vadd.f32 %v12214, %v12215
    %v12217 = vsel %vm31, %v12120, 0.0
    %v12218 = vadd.f32 %v12216, %v12217
    %v12219 = vsel %vm31, %v12121, 0.0
    %v12220 = vadd.f32 %v12218, %v12219
    %v12221 = vsel %vm31, %v12122, 0.0
    %v12222 = vadd.f32 %v12220, %v12221
    %v12223 = vsel %vm31, %v12123, 0.0
    %v12224 = vadd.f32 %v12222, %v12223
    %v12225 = vsel %vm31, %v12124, 0.0
    %v12226 = vadd.f32 %v12224, %v12225
    %v12227 = vsel %vm31, %v12125, 0.0
    %v12228 = vadd.f32 %v12226, %v12227
    %v12229 = vsel %vm31, %v12126, 0.0
    %v12230 = vadd.f32 %v12228, %v12229
    %v12231 = vsel %vm31, %v12127, 0.0
    %v12232 = vadd.f32 %v12230, %v12231
    %v12233 = vsel %vm31, %v12128, 0.0
    %v12234 = vadd.f32 %v12232, %v12233
    %v12235 = vsel %vm31, %v12129, 0.0
    %v12236 = vadd.f32 %v12234, %v12235
    %v12237 = vsel %vm31, %v12130, 0.0
    %v12238 = vadd.f32 %v12236, %v12237
    %v12239 = vsel %vm31, %v12131, 0.0
    %v12240 = vadd.f32 %v12238, %v12239
    %v12241 = vsel %vm31, %v12132, 0.0
    %v12242 = vadd.f32 %v12240, %v12241
    %v12243 = vsel %vm31, %v12133, 0.0
    %v12244 = vadd.f32 %v12242, %v12243
    %v12245 = vsel %vm31, %v12134, 0.0
    %v12246 = vadd.f32 %v12244, %v12245
    %v12247 = vsel %vm31, %v12135, 0.0
    %v12248 = vadd.f32 %v12246, %v12247
    %v12249 = vsel %vm31, %v12136, 0.0
    %v12250 = vadd.f32 %v12248, %v12249
    %v12251 = vsel %vm31, %v12137, 0.0
    %v12252 = vadd.f32 %v12250, %v12251
    %v12253 = vsel %vm31, %v12138, 0.0
    %v12254 = vadd.f32 %v12252, %v12253
    %v12255 = vsel %vm31, %v12139, 0.0
    %v12256 = vadd.f32 %v12254, %v12255
    %v12257 = vsel %vm31, %v12140, 0.0
    %v12258 = vadd.f32 %v12256, %v12257
    %v12259 = vsel %vm31, %v12141, 0.0
    %v12260 = vadd.f32 %v12258, %v12259
    %v12261 = vsel %vm31, %v12142, 0.0
    %v12262 = vadd.f32 %v12260, %v12261
    %v12263 = vsel %vm31, %v12143, 0.0
    %v12264 = vadd.f32 %v12262, %v12263
    %v12265 = vsel %vm31, %v12144, 0.0
    %v12266 = vadd.f32 %v12264, %v12265
    %v12267 = vsel %vm31, %v12145, 0.0
    %v12268 = vadd.f32 %v12266, %v12267
    %v12269 = vsel %vm31, %v12146, 0.0
    %v12270 = vadd.f32 %v12268, %v12269
    %v12271 = vsel %vm31, %v12147, 0.0
    %v12272 = vadd.f32 %v12270, %v12271
    %v12273 = vsel %vm31, %v12148, 0.0
    %v12274 = vadd.f32 %v12272, %v12273
    %v12275 = vsel %vm31, %v12149, 0.0
    %v12276 = vadd.f32 %v12274, %v12275
    %v12277 = vrot.slane %v12276, 4
    %v12278 = vadd.f32 %v12276, %v12277
    %v12279 = vrot.slane %v12278, 2
    %v12280 = vadd.f32 %v12278, %v12279
    %v12281 = vrot.slane %v12280, 1
    %v12282 = vadd.f32 %v12280, %v12281
    %v12283 = vmul.f32 %v12282, %v3856
    %v12284 = vadd.f32 %v12283, 1e-05
    %v12285 = vrsqrt.pop %v12284
    %v12286 = vmul.f32 %v12285, %v12284
    %v12287 = vmul.f32 %v12286, %v12285
    %v12288 = vmul.f32 0.5, %v12287
    %v12289 = vsub.f32 1.5, %v12288
    %v12290 = vmul.f32 %v12285, %v12289
    %vm12291 = vweird.f32 %v12284
    %vm12292 = vweird.f32 %v12285
    %vm12293 = vmor %vm12291, %vm12292
    %v12294 = vsel %vm12293, %v12285, %v12290
    %v12295 = vmul.f32 %v12022, %v12294
    %v12296 = vmul.f32 %v12023, %v12294
    %v12297 = vmul.f32 %v12024, %v12294
    %v12298 = vmul.f32 %v12025, %v12294
    %v12299 = vmul.f32 %v12026, %v12294
    %v12300 = vmul.f32 %v12027, %v12294
    %v12301 = vmul.f32 %v12028, %v12294
    %v12302 = vmul.f32 %v12029, %v12294
    %v12303 = vmul.f32 %v12030, %v12294
    %v12304 = vmul.f32 %v12031, %v12294
    %v12305 = vmul.f32 %v12032, %v12294
    %v12306 = vmul.f32 %v12033, %v12294
    %v12307 = vmul.f32 %v12034, %v12294
    %v12308 = vmul.f32 %v12035, %v12294
    %v12309 = vmul.f32 %v12036, %v12294
    %v12310 = vmul.f32 %v12037, %v12294
    %v12311 = vmul.f32 %v12038, %v12294
    %v12312 = vmul.f32 %v12039, %v12294
    %v12313 = vmul.f32 %v12040, %v12294
    %v12314 = vmul.f32 %v12041, %v12294
    %v12315 = vmul.f32 %v12042, %v12294
    %v12316 = vmul.f32 %v12043, %v12294
    %v12317 = vmul.f32 %v12044, %v12294
    %v12318 = vmul.f32 %v12045, %v12294
    %v12319 = vmul.f32 %v12046, %v12294
    %v12320 = vmul.f32 %v12047, %v12294
    %v12321 = vmul.f32 %v12048, %v12294
    %v12322 = vmul.f32 %v12049, %v12294
    %v12323 = vmul.f32 %v12050, %v12294
    %v12324 = vmul.f32 %v12051, %v12294
    %v12325 = vmul.f32 %v12052, %v12294
    %v12326 = vmul.f32 %v12053, %v12294
    %v12327 = vmul.f32 %v12054, %v12294
    %v12328 = vmul.f32 %v12055, %v12294
    %v12329 = vmul.f32 %v12056, %v12294
    %v12330 = vmul.f32 %v12057, %v12294
    %v12331 = vmul.f32 %v12058, %v12294
    %v12332 = vmul.f32 %v12059, %v12294
    %v12333 = vmul.f32 %v12060, %v12294
    %v12334 = vmul.f32 %v12061, %v12294
    %v12335 = vmul.f32 %v12062, %v12294
    %v12336 = vmul.f32 %v12063, %v12294
    %v12337 = vmul.f32 %v12064, %v12294
    %v12338 = vmul.f32 %v12065, %v12294
    %v12339 = vmul.f32 %v12066, %v12294
    %v12340 = vmul.f32 %v12067, %v12294
    %v12341 = vmul.f32 %v12068, %v12294
    %v12342 = vmul.f32 %v12069, %v12294
    %v12343 = vmul.f32 %v12070, %v12294
    %v12344 = vmul.f32 %v12071, %v12294
    %v12345 = vmul.f32 %v12072, %v12294
    %v12346 = vmul.f32 %v12073, %v12294
    %v12347 = vmul.f32 %v12074, %v12294
    %v12348 = vmul.f32 %v12075, %v12294
    %v12349 = vmul.f32 %v12076, %v12294
    %v12350 = vmul.f32 %v12077, %v12294
    %v12351 = vmul.f32 %v12078, %v12294
    %v12352 = vmul.f32 %v12079, %v12294
    %v12353 = vmul.f32 %v12080, %v12294
    %v12354 = vmul.f32 %v12081, %v12294
    %v12355 = vmul.f32 %v12082, %v12294
    %v12356 = vmul.f32 %v12083, %v12294
    %v12357 = vmul.f32 %v12084, %v12294
    %v12358 = vmul.f32 %v12085, %v12294
    %v12360 = vperm.slane %v11885, 0
    %v12362 = vmul.f32 %v12295, %v12360
    %v12363 = vmul.f32 %v12296, %v12360
    %v12364 = vmul.f32 %v12297, %v12360
    %v12365 = vmul.f32 %v12298, %v12360
    %v12366 = vmul.f32 %v12299, %v12360
    %v12367 = vmul.f32 %v12300, %v12360
    %v12368 = vmul.f32 %v12301, %v12360
    %v12369 = vmul.f32 %v12302, %v12360
    %v12370 = vmul.f32 %v12303, %v12360
    %v12371 = vmul.f32 %v12304, %v12360
    %v12372 = vmul.f32 %v12305, %v12360
    %v12373 = vmul.f32 %v12306, %v12360
    %v12374 = vmul.f32 %v12307, %v12360
    %v12375 = vmul.f32 %v12308, %v12360
    %v12376 = vmul.f32 %v12309, %v12360
    %v12377 = vmul.f32 %v12310, %v12360
    %v12378 = vmul.f32 %v12311, %v12360
    %v12379 = vmul.f32 %v12312, %v12360
    %v12380 = vmul.f32 %v12313, %v12360
    %v12381 = vmul.f32 %v12314, %v12360
    %v12382 = vmul.f32 %v12315, %v12360
    %v12383 = vmul.f32 %v12316, %v12360
    %v12384 = vmul.f32 %v12317, %v12360
    %v12385 = vmul.f32 %v12318, %v12360
    %v12386 = vmul.f32 %v12319, %v12360
    %v12387 = vmul.f32 %v12320, %v12360
    %v12388 = vmul.f32 %v12321, %v12360
    %v12389 = vmul.f32 %v12322, %v12360
    %v12390 = vmul.f32 %v12323, %v12360
    %v12391 = vmul.f32 %v12324, %v12360
    %v12392 = vmul.f32 %v12325, %v12360
    %v12393 = vmul.f32 %v12326, %v12360
    %v12394 = vmul.f32 %v12327, %v12360
    %v12395 = vmul.f32 %v12328, %v12360
    %v12396 = vmul.f32 %v12329, %v12360
    %v12397 = vmul.f32 %v12330, %v12360
    %v12398 = vmul.f32 %v12331, %v12360
    %v12399 = vmul.f32 %v12332, %v12360
    %v12400 = vmul.f32 %v12333, %v12360
    %v12401 = vmul.f32 %v12334, %v12360
    %v12402 = vmul.f32 %v12335, %v12360
    %v12403 = vmul.f32 %v12336, %v12360
    %v12404 = vmul.f32 %v12337, %v12360
    %v12405 = vmul.f32 %v12338, %v12360
    %v12406 = vmul.f32 %v12339, %v12360
    %v12407 = vmul.f32 %v12340, %v12360
    %v12408 = vmul.f32 %v12341, %v12360
    %v12409 = vmul.f32 %v12342, %v12360
    %v12410 = vmul.f32 %v12343, %v12360
    %v12411 = vmul.f32 %v12344, %v12360
    %v12412 = vmul.f32 %v12345, %v12360
    %v12413 = vmul.f32 %v12346, %v12360
    %v12414 = vmul.f32 %v12347, %v12360
    %v12415 = vmul.f32 %v12348, %v12360
    %v12416 = vmul.f32 %v12349, %v12360
    %v12417 = vmul.f32 %v12350, %v12360
    %v12418 = vmul.f32 %v12351, %v12360
    %v12419 = vmul.f32 %v12352, %v12360
    %v12420 = vmul.f32 %v12353, %v12360
    %v12421 = vmul.f32 %v12354, %v12360
    %v12422 = vmul.f32 %v12355, %v12360
    %v12423 = vmul.f32 %v12356, %v12360
    %v12424 = vmul.f32 %v12357, %v12360
    %v12425 = vmul.f32 %v12358, %v12360
    %v12427 = vperm.slane %v11887, 0
    %v12429 = vadd.f32 %v12362, %v12427
    %v12430 = vadd.f32 %v12363, %v12427
    %v12431 = vadd.f32 %v12364, %v12427
    %v12432 = vadd.f32 %v12365, %v12427
    %v12433 = vadd.f32 %v12366, %v12427
    %v12434 = vadd.f32 %v12367, %v12427
    %v12435 = vadd.f32 %v12368, %v12427
    %v12436 = vadd.f32 %v12369, %v12427
    %v12437 = vadd.f32 %v12370, %v12427
    %v12438 = vadd.f32 %v12371, %v12427
    %v12439 = vadd.f32 %v12372, %v12427
    %v12440 = vadd.f32 %v12373, %v12427
    %v12441 = vadd.f32 %v12374, %v12427
    %v12442 = vadd.f32 %v12375, %v12427
    %v12443 = vadd.f32 %v12376, %v12427
    %v12444 = vadd.f32 %v12377, %v12427
    %v12445 = vadd.f32 %v12378, %v12427
    %v12446 = vadd.f32 %v12379, %v12427
    %v12447 = vadd.f32 %v12380, %v12427
    %v12448 = vadd.f32 %v12381, %v12427
    %v12449 = vadd.f32 %v12382, %v12427
    %v12450 = vadd.f32 %v12383, %v12427
    %v12451 = vadd.f32 %v12384, %v12427
    %v12452 = vadd.f32 %v12385, %v12427
    %v12453 = vadd.f32 %v12386, %v12427
    %v12454 = vadd.f32 %v12387, %v12427
    %v12455 = vadd.f32 %v12388, %v12427
    %v12456 = vadd.f32 %v12389, %v12427
    %v12457 = vadd.f32 %v12390, %v12427
    %v12458 = vadd.f32 %v12391, %v12427
    %v12459 = vadd.f32 %v12392, %v12427
    %v12460 = vadd.f32 %v12393, %v12427
    %v12461 = vadd.f32 %v12394, %v12427
    %v12462 = vadd.f32 %v12395, %v12427
    %v12463 = vadd.f32 %v12396, %v12427
    %v12464 = vadd.f32 %v12397, %v12427
    %v12465 = vadd.f32 %v12398, %v12427
    %v12466 = vadd.f32 %v12399, %v12427
    %v12467 = vadd.f32 %v12400, %v12427
    %v12468 = vadd.f32 %v12401, %v12427
    %v12469 = vadd.f32 %v12402, %v12427
    %v12470 = vadd.f32 %v12403, %v12427
    %v12471 = vadd.f32 %v12404, %v12427
    %v12472 = vadd.f32 %v12405, %v12427
    %v12473 = vadd.f32 %v12406, %v12427
    %v12474 = vadd.f32 %v12407, %v12427
    %v12475 = vadd.f32 %v12408, %v12427
    %v12476 = vadd.f32 %v12409, %v12427
    %v12477 = vadd.f32 %v12410, %v12427
    %v12478 = vadd.f32 %v12411, %v12427
    %v12479 = vadd.f32 %v12412, %v12427
    %v12480 = vadd.f32 %v12413, %v12427
    %v12481 = vadd.f32 %v12414, %v12427
    %v12482 = vadd.f32 %v12415, %v12427
    %v12483 = vadd.f32 %v12416, %v12427
    %v12484 = vadd.f32 %v12417, %v12427
    %v12485 = vadd.f32 %v12418, %v12427
    %v12486 = vadd.f32 %v12419, %v12427
    %v12487 = vadd.f32 %v12420, %v12427
    %v12488 = vadd.f32 %v12421, %v12427
    %v12489 = vadd.f32 %v12422, %v12427
    %v12490 = vadd.f32 %v12423, %v12427
    %v12491 = vadd.f32 %v12424, %v12427
    %v12492 = vadd.f32 %v12425, %v12427
    %v12493 = vpack.c.bf16 %v12430, %v12429
    %v12494 = vpack.c.bf16 %v12432, %v12431
    %v12495 = vpack.c.bf16 %v12434, %v12433
    %v12496 = vpack.c.bf16 %v12436, %v12435
    %v12497 = vpack.c.bf16 %v12438, %v12437
    %v12498 = vpack.c.bf16 %v12440, %v12439
    %v12499 = vpack.c.bf16 %v12442, %v12441
    %v12500 = vpack.c.bf16 %v12444, %v12443
    %v12501 = vpack.c.bf16 %v12446, %v12445
    %v12502 = vpack.c.bf16 %v12448, %v12447
    %v12503 = vpack.c.bf16 %v12450, %v12449
    %v12504 = vpack.c.bf16 %v12452, %v12451
    %v12505 = vpack.c.bf16 %v12454, %v12453
    %v12506 = vpack.c.bf16 %v12456, %v12455
    %v12507 = vpack.c.bf16 %v12458, %v12457
    %v12508 = vpack.c.bf16 %v12460, %v12459
    %v12509 = vpack.c.bf16 %v12462, %v12461
    %v12510 = vpack.c.bf16 %v12464, %v12463
    %v12511 = vpack.c.bf16 %v12466, %v12465
    %v12512 = vpack.c.bf16 %v12468, %v12467
    %v12513 = vpack.c.bf16 %v12470, %v12469
    %v12514 = vpack.c.bf16 %v12472, %v12471
    %v12515 = vpack.c.bf16 %v12474, %v12473
    %v12516 = vpack.c.bf16 %v12476, %v12475
    %v12517 = vpack.c.bf16 %v12478, %v12477
    %v12518 = vpack.c.bf16 %v12480, %v12479
    %v12519 = vpack.c.bf16 %v12482, %v12481
    %v12520 = vpack.c.bf16 %v12484, %v12483
    %v12521 = vpack.c.bf16 %v12486, %v12485
    %v12522 = vpack.c.bf16 %v12488, %v12487
    %v12523 = vpack.c.bf16 %v12490, %v12489
    %v12524 = vpack.c.bf16 %v12492, %v12491
    %v12525 = vld [vmem:[%s5] sm:$0xf]
    %v12526 = vld [vmem:[%s5 + $0x4] sm:$0xf]
    %v12527 = vld [vmem:[%s5 + $0x8] sm:$0xf]
    %v12528 = vld [vmem:[%s5 + $0xc] sm:$0xf]
    %v12533 = vunpack.c.l.b16 %v12525
    %v12534 = vunpack.c.l.b16 %v12526
    %v12535 = vunpack.c.l.b16 %v12527
    %v12536 = vunpack.c.l.b16 %v12528
    %v12537 = vpack.c.b16 %v12534, %v12533
    %v12538 = vpack.c.b16 %v12536, %v12535
    %v12542 = vsel %vm31, %v12493, 0
    %v12545 = vsel %vm31, %v12494, 0
    %v12548 = vsel %vm31, %v12495, 0
    %v12551 = vsel %vm31, %v12496, 0
    %v12554 = vsel %vm31, %v12497, 0
    %v12557 = vsel %vm31, %v12498, 0
    %v12560 = vsel %vm31, %v12499, 0
    %v12563 = vsel %vm31, %v12500, 0
    %v12566 = vsel %vm31, %v12501, 0
    %v12569 = vsel %vm31, %v12502, 0
    %v12572 = vsel %vm31, %v12503, 0
    %v12575 = vsel %vm31, %v12504, 0
    %v12578 = vsel %vm31, %v12505, 0
    %v12581 = vsel %vm31, %v12506, 0
    %v12584 = vsel %vm31, %v12507, 0
    %v12587 = vsel %vm31, %v12508, 0
    %v12590 = vsel %vm31, %v12509, 0
    %v12593 = vsel %vm31, %v12510, 0
    %v12596 = vsel %vm31, %v12511, 0
    %v12599 = vsel %vm31, %v12512, 0
    %v12602 = vsel %vm31, %v12513, 0
    %v12605 = vsel %vm31, %v12514, 0
    %v12608 = vsel %vm31, %v12515, 0
    %v12611 = vsel %vm31, %v12516, 0
    %v12614 = vsel %vm31, %v12517, 0
    %v12617 = vsel %vm31, %v12518, 0
    %v12620 = vsel %vm31, %v12519, 0
    %v12623 = vsel %vm31, %v12520, 0
    %v12626 = vsel %vm31, %v12521, 0
    %v12629 = vsel %vm31, %v12522, 0
    %v12632 = vsel %vm31, %v12523, 0
    %v12635 = vsel %vm31, %v12524, 0
    %12637 = vmatpush.bf16.msra.mxu0 0
    %12638 = vmatpush.bf16.msra.mxu0 0
    %12639 = vmatpush.bf16.msra.mxu0 0
    %12640 = vmatpush.bf16.msra.mxu0 0
    %12641 = vmatpush.bf16.msra.mxu0 0
    %12642 = vmatpush.bf16.msra.mxu0 0
    %12643 = vmatpush.bf16.msra.mxu0 %v12538
    %12644 = vmatpush.bf16.msra.mxu0 %v12537
    %12645 = vmatmul.bf16.gmra.mxu0 %v12542
    %v12646 = vpop.f32.mrf.mxu0
    %v12647 = vadd.f32 0.0, %v12646
    %v12648 = vpop.f32.mrf.mxu0
    %v12649 = vadd.f32 0.0, %v12648
    %12650 = vmatmul.bf16.gmra.mxu0 %v12545
    %v12651 = vpop.f32.mrf.mxu0
    %v12652 = vadd.f32 0.0, %v12651
    %v12653 = vpop.f32.mrf.mxu0
    %v12654 = vadd.f32 0.0, %v12653
    %12655 = vmatmul.bf16.gmra.mxu0 %v12548
    %v12656 = vpop.f32.mrf.mxu0
    %v12657 = vadd.f32 0.0, %v12656
    %v12658 = vpop.f32.mrf.mxu0
    %v12659 = vadd.f32 0.0, %v12658
    %12660 = vmatmul.bf16.gmra.mxu0 %v12551
    %v12661 = vpop.f32.mrf.mxu0
    %v12662 = vadd.f32 0.0, %v12661
    %v12663 = vpop.f32.mrf.mxu0
    %v12664 = vadd.f32 0.0, %v12663
    %12665 = vmatmul.bf16.gmra.mxu0 %v12554
    %v12666 = vpop.f32.mrf.mxu0
    %v12667 = vadd.f32 0.0, %v12666
    %v12668 = vpop.f32.mrf.mxu0
    %v12669 = vadd.f32 0.0, %v12668
    %12670 = vmatmul.bf16.gmra.mxu0 %v12557
    %v12671 = vpop.f32.mrf.mxu0
    %v12672 = vadd.f32 0.0, %v12671
    %v12673 = vpop.f32.mrf.mxu0
    %v12674 = vadd.f32 0.0, %v12673
    %12675 = vmatmul.bf16.gmra.mxu0 %v12560
    %v12676 = vpop.f32.mrf.mxu0
    %v12677 = vadd.f32 0.0, %v12676
    %v12678 = vpop.f32.mrf.mxu0
    %v12679 = vadd.f32 0.0, %v12678
    %12680 = vmatmul.bf16.gmra.mxu0 %v12563
    %v12681 = vpop.f32.mrf.mxu0
    %v12682 = vadd.f32 0.0, %v12681
    %v12683 = vpop.f32.mrf.mxu0
    %v12684 = vadd.f32 0.0, %v12683
    %12685 = vmatmul.bf16.gmra.mxu0 %v12566
    %v12686 = vpop.f32.mrf.mxu0
    %v12687 = vadd.f32 0.0, %v12686
    %v12688 = vpop.f32.mrf.mxu0
    %v12689 = vadd.f32 0.0, %v12688
    %12690 = vmatmul.bf16.gmra.mxu0 %v12569
    %v12691 = vpop.f32.mrf.mxu0
    %v12692 = vadd.f32 0.0, %v12691
    %v12693 = vpop.f32.mrf.mxu0
    %v12694 = vadd.f32 0.0, %v12693
    %12695 = vmatmul.bf16.gmra.mxu0 %v12572
    %v12696 = vpop.f32.mrf.mxu0
    %v12697 = vadd.f32 0.0, %v12696
    %v12698 = vpop.f32.mrf.mxu0
    %v12699 = vadd.f32 0.0, %v12698
    %12700 = vmatmul.bf16.gmra.mxu0 %v12575
    %v12701 = vpop.f32.mrf.mxu0
    %v12702 = vadd.f32 0.0, %v12701
    %v12703 = vpop.f32.mrf.mxu0
    %v12704 = vadd.f32 0.0, %v12703
    %12705 = vmatmul.bf16.gmra.mxu0 %v12578
    %v12706 = vpop.f32.mrf.mxu0
    %v12707 = vadd.f32 0.0, %v12706
    %v12708 = vpop.f32.mrf.mxu0
    %v12709 = vadd.f32 0.0, %v12708
    %12710 = vmatmul.bf16.gmra.mxu0 %v12581
    %v12711 = vpop.f32.mrf.mxu0
    %v12712 = vadd.f32 0.0, %v12711
    %v12713 = vpop.f32.mrf.mxu0
    %v12714 = vadd.f32 0.0, %v12713
    %12715 = vmatmul.bf16.gmra.mxu0 %v12584
    %v12716 = vpop.f32.mrf.mxu0
    %v12717 = vadd.f32 0.0, %v12716
    %v12718 = vpop.f32.mrf.mxu0
    %v12719 = vadd.f32 0.0, %v12718
    %12720 = vmatmul.bf16.gmra.mxu0 %v12587
    %v12721 = vpop.f32.mrf.mxu0
    %v12722 = vadd.f32 0.0, %v12721
    %v12723 = vpop.f32.mrf.mxu0
    %v12724 = vadd.f32 0.0, %v12723
    %12725 = vmatmul.bf16.gmra.mxu0 %v12590
    %v12726 = vpop.f32.mrf.mxu0
    %v12727 = vadd.f32 0.0, %v12726
    %v12728 = vpop.f32.mrf.mxu0
    %v12729 = vadd.f32 0.0, %v12728
    %12730 = vmatmul.bf16.gmra.mxu0 %v12593
    %v12731 = vpop.f32.mrf.mxu0
    %v12732 = vadd.f32 0.0, %v12731
    %v12733 = vpop.f32.mrf.mxu0
    %v12734 = vadd.f32 0.0, %v12733
    %12735 = vmatmul.bf16.gmra.mxu0 %v12596
    %v12736 = vpop.f32.mrf.mxu0
    %v12737 = vadd.f32 0.0, %v12736
    %v12738 = vpop.f32.mrf.mxu0
    %v12739 = vadd.f32 0.0, %v12738
    %12740 = vmatmul.bf16.gmra.mxu0 %v12599
    %v12741 = vpop.f32.mrf.mxu0
    %v12742 = vadd.f32 0.0, %v12741
    %v12743 = vpop.f32.mrf.mxu0
    %v12744 = vadd.f32 0.0, %v12743
    %12745 = vmatmul.bf16.gmra.mxu0 %v12602
    %v12746 = vpop.f32.mrf.mxu0
    %v12747 = vadd.f32 0.0, %v12746
    %v12748 = vpop.f32.mrf.mxu0
    %v12749 = vadd.f32 0.0, %v12748
    %12750 = vmatmul.bf16.gmra.mxu0 %v12605
    %v12751 = vpop.f32.mrf.mxu0
    %v12752 = vadd.f32 0.0, %v12751
    %v12753 = vpop.f32.mrf.mxu0
    %v12754 = vadd.f32 0.0, %v12753
    %12755 = vmatmul.bf16.gmra.mxu0 %v12608
    %v12756 = vpop.f32.mrf.mxu0
    %v12757 = vadd.f32 0.0, %v12756
    %v12758 = vpop.f32.mrf.mxu0
    %v12759 = vadd.f32 0.0, %v12758
    %12760 = vmatmul.bf16.gmra.mxu0 %v12611
    %v12761 = vpop.f32.mrf.mxu0
    %v12762 = vadd.f32 0.0, %v12761
    %v12763 = vpop.f32.mrf.mxu0
    %v12764 = vadd.f32 0.0, %v12763
    %12765 = vmatmul.bf16.gmra.mxu0 %v12614
    %v12766 = vpop.f32.mrf.mxu0
    %v12767 = vadd.f32 0.0, %v12766
    %v12768 = vpop.f32.mrf.mxu0
    %v12769 = vadd.f32 0.0, %v12768
    %12770 = vmatmul.bf16.gmra.mxu0 %v12617
    %v12771 = vpop.f32.mrf.mxu0
    %v12772 = vadd.f32 0.0, %v12771
    %v12773 = vpop.f32.mrf.mxu0
    %v12774 = vadd.f32 0.0, %v12773
    %12775 = vmatmul.bf16.gmra.mxu0 %v12620
    %v12776 = vpop.f32.mrf.mxu0
    %v12777 = vadd.f32 0.0, %v12776
    %v12778 = vpop.f32.mrf.mxu0
    %v12779 = vadd.f32 0.0, %v12778
    %12780 = vmatmul.bf16.gmra.mxu0 %v12623
    %v12781 = vpop.f32.mrf.mxu0
    %v12782 = vadd.f32 0.0, %v12781
    %v12783 = vpop.f32.mrf.mxu0
    %v12784 = vadd.f32 0.0, %v12783
    %12785 = vmatmul.bf16.gmra.mxu0 %v12626
    %v12786 = vpop.f32.mrf.mxu0
    %v12787 = vadd.f32 0.0, %v12786
    %v12788 = vpop.f32.mrf.mxu0
    %v12789 = vadd.f32 0.0, %v12788
    %12790 = vmatmul.bf16.gmra.mxu0 %v12629
    %v12791 = vpop.f32.mrf.mxu0
    %v12792 = vadd.f32 0.0, %v12791
    %v12793 = vpop.f32.mrf.mxu0
    %v12794 = vadd.f32 0.0, %v12793
    %12795 = vmatmul.bf16.gmra.mxu0 %v12632
    %v12796 = vpop.f32.mrf.mxu0
    %v12797 = vadd.f32 0.0, %v12796
    %v12798 = vpop.f32.mrf.mxu0
    %v12799 = vadd.f32 0.0, %v12798
    %12800 = vmatmul.bf16.gmra.mxu0 %v12635
    %v12801 = vpop.f32.mrf.mxu0
    %v12802 = vadd.f32 0.0, %v12801
    %v12803 = vpop.f32.mrf.mxu0
    %v12804 = vadd.f32 0.0, %v12803
    %12805 = vdwg.mxu0
    %v12806 = vld [vmem:[%s6] sm:$0x1]
    %v12807 = vld [vmem:[%s7] sm:$0x1]
    %v12808 = vsel %vm31, %v12647, 0.0
    %v12809 = vsel %vm31, %v12649, 0.0
    %v12810 = vadd.f32 %v12808, %v12809
    %v12811 = vsel %vm31, %v12652, 0.0
    %v12812 = vadd.f32 %v12810, %v12811
    %v12813 = vsel %vm31, %v12654, 0.0
    %v12814 = vadd.f32 %v12812, %v12813
    %v12815 = vsel %vm31, %v12657, 0.0
    %v12816 = vadd.f32 %v12814, %v12815
    %v12817 = vsel %vm31, %v12659, 0.0
    %v12818 = vadd.f32 %v12816, %v12817
    %v12819 = vsel %vm31, %v12662, 0.0
    %v12820 = vadd.f32 %v12818, %v12819
    %v12821 = vsel %vm31, %v12664, 0.0
    %v12822 = vadd.f32 %v12820, %v12821
    %v12823 = vsel %vm31, %v12667, 0.0
    %v12824 = vadd.f32 %v12822, %v12823
    %v12825 = vsel %vm31, %v12669, 0.0
    %v12826 = vadd.f32 %v12824, %v12825
    %v12827 = vsel %vm31, %v12672, 0.0
    %v12828 = vadd.f32 %v12826, %v12827
    %v12829 = vsel %vm31, %v12674, 0.0
    %v12830 = vadd.f32 %v12828, %v12829
    %v12831 = vsel %vm31, %v12677, 0.0
    %v12832 = vadd.f32 %v12830, %v12831
    %v12833 = vsel %vm31, %v12679, 0.0
    %v12834 = vadd.f32 %v12832, %v12833
    %v12835 = vsel %vm31, %v12682, 0.0
    %v12836 = vadd.f32 %v12834, %v12835
    %v12837 = vsel %vm31, %v12684, 0.0
    %v12838 = vadd.f32 %v12836, %v12837
    %v12839 = vsel %vm31, %v12687, 0.0
    %v12840 = vadd.f32 %v12838, %v12839
    %v12841 = vsel %vm31, %v12689, 0.0
    %v12842 = vadd.f32 %v12840, %v12841
    %v12843 = vsel %vm31, %v12692, 0.0
    %v12844 = vadd.f32 %v12842, %v12843
    %v12845 = vsel %vm31, %v12694, 0.0
    %v12846 = vadd.f32 %v12844, %v12845
    %v12847 = vsel %vm31, %v12697, 0.0
    %v12848 = vadd.f32 %v12846, %v12847
    %v12849 = vsel %vm31, %v12699, 0.0
    %v12850 = vadd.f32 %v12848, %v12849
    %v12851 = vsel %vm31, %v12702, 0.0
    %v12852 = vadd.f32 %v12850, %v12851
    %v12853 = vsel %vm31, %v12704, 0.0
    %v12854 = vadd.f32 %v12852, %v12853
    %v12855 = vsel %vm31, %v12707, 0.0
    %v12856 = vadd.f32 %v12854, %v12855
    %v12857 = vsel %vm31, %v12709, 0.0
    %v12858 = vadd.f32 %v12856, %v12857
    %v12859 = vsel %vm31, %v12712, 0.0
    %v12860 = vadd.f32 %v12858, %v12859
    %v12861 = vsel %vm31, %v12714, 0.0
    %v12862 = vadd.f32 %v12860, %v12861
    %v12863 = vsel %vm31, %v12717, 0.0
    %v12864 = vadd.f32 %v12862, %v12863
    %v12865 = vsel %vm31, %v12719, 0.0
    %v12866 = vadd.f32 %v12864, %v12865
    %v12867 = vsel %vm31, %v12722, 0.0
    %v12868 = vadd.f32 %v12866, %v12867
    %v12869 = vsel %vm31, %v12724, 0.0
    %v12870 = vadd.f32 %v12868, %v12869
    %v12871 = vsel %vm31, %v12727, 0.0
    %v12872 = vadd.f32 %v12870, %v12871
    %v12873 = vsel %vm31, %v12729, 0.0
    %v12874 = vadd.f32 %v12872, %v12873
    %v12875 = vsel %vm31, %v12732, 0.0
    %v12876 = vadd.f32 %v12874, %v12875
    %v12877 = vsel %vm31, %v12734, 0.0
    %v12878 = vadd.f32 %v12876, %v12877
    %v12879 = vsel %vm31, %v12737, 0.0
    %v12880 = vadd.f32 %v12878, %v12879
    %v12881 = vsel %vm31, %v12739, 0.0
    %v12882 = vadd.f32 %v12880, %v12881
    %v12883 = vsel %vm31, %v12742, 0.0
    %v12884 = vadd.f32 %v12882, %v12883
    %v12885 = vsel %vm31, %v12744, 0.0
    %v12886 = vadd.f32 %v12884, %v12885
    %v12887 = vsel %vm31, %v12747, 0.0
    %v12888 = vadd.f32 %v12886, %v12887
    %v12889 = vsel %vm31, %v12749, 0.0
    %v12890 = vadd.f32 %v12888, %v12889
    %v12891 = vsel %vm31, %v12752, 0.0
    %v12892 = vadd.f32 %v12890, %v12891
    %v12893 = vsel %vm31, %v12754, 0.0
    %v12894 = vadd.f32 %v12892, %v12893
    %v12895 = vsel %vm31, %v12757, 0.0
    %v12896 = vadd.f32 %v12894, %v12895
    %v12897 = vsel %vm31, %v12759, 0.0
    %v12898 = vadd.f32 %v12896, %v12897
    %v12899 = vsel %vm31, %v12762, 0.0
    %v12900 = vadd.f32 %v12898, %v12899
    %v12901 = vsel %vm31, %v12764, 0.0
    %v12902 = vadd.f32 %v12900, %v12901
    %v12903 = vsel %vm31, %v12767, 0.0
    %v12904 = vadd.f32 %v12902, %v12903
    %v12905 = vsel %vm31, %v12769, 0.0
    %v12906 = vadd.f32 %v12904, %v12905
    %v12907 = vsel %vm31, %v12772, 0.0
    %v12908 = vadd.f32 %v12906, %v12907
    %v12909 = vsel %vm31, %v12774, 0.0
    %v12910 = vadd.f32 %v12908, %v12909
    %v12911 = vsel %vm31, %v12777, 0.0
    %v12912 = vadd.f32 %v12910, %v12911
    %v12913 = vsel %vm31, %v12779, 0.0
    %v12914 = vadd.f32 %v12912, %v12913
    %v12915 = vsel %vm31, %v12782, 0.0
    %v12916 = vadd.f32 %v12914, %v12915
    %v12917 = vsel %vm31, %v12784, 0.0
    %v12918 = vadd.f32 %v12916, %v12917
    %v12919 = vsel %vm31, %v12787, 0.0
    %v12920 = vadd.f32 %v12918, %v12919
    %v12921 = vsel %vm31, %v12789, 0.0
    %v12922 = vadd.f32 %v12920, %v12921
    %v12923 = vsel %vm31, %v12792, 0.0
    %v12924 = vadd.f32 %v12922, %v12923
    %v12925 = vsel %vm31, %v12794, 0.0
    %v12926 = vadd.f32 %v12924, %v12925
    %v12927 = vsel %vm31, %v12797, 0.0
    %v12928 = vadd.f32 %v12926, %v12927
    %v12929 = vsel %vm31, %v12799, 0.0
    %v12930 = vadd.f32 %v12928, %v12929
    %v12931 = vsel %vm31, %v12802, 0.0
    %v12932 = vadd.f32 %v12930, %v12931
    %v12933 = vsel %vm31, %v12804, 0.0
    %v12934 = vadd.f32 %v12932, %v12933
    %v12935 = vrot.slane %v12934, 4
    %v12936 = vadd.f32 %v12934, %v12935
    %v12937 = vrot.slane %v12936, 2
    %v12938 = vadd.f32 %v12936, %v12937
    %v12939 = vrot.slane %v12938, 1
    %v12940 = vadd.f32 %v12938, %v12939
    %v12941 = vmul.f32 %v12940, %v3856
    %v12942 = vsub.f32 %v12647, %v12941
    %v12943 = vsub.f32 %v12649, %v12941
    %v12944 = vsub.f32 %v12652, %v12941
    %v12945 = vsub.f32 %v12654, %v12941
    %v12946 = vsub.f32 %v12657, %v12941
    %v12947 = vsub.f32 %v12659, %v12941
    %v12948 = vsub.f32 %v12662, %v12941
    %v12949 = vsub.f32 %v12664, %v12941
    %v12950 = vsub.f32 %v12667, %v12941
    %v12951 = vsub.f32 %v12669, %v12941
    %v12952 = vsub.f32 %v12672, %v12941
    %v12953 = vsub.f32 %v12674, %v12941
    %v12954 = vsub.f32 %v12677, %v12941
    %v12955 = vsub.f32 %v12679, %v12941
    %v12956 = vsub.f32 %v12682, %v12941
    %v12957 = vsub.f32 %v12684, %v12941
    %v12958 = vsub.f32 %v12687, %v12941
    %v12959 = vsub.f32 %v12689, %v12941
    %v12960 = vsub.f32 %v12692, %v12941
    %v12961 = vsub.f32 %v12694, %v12941
    %v12962 = vsub.f32 %v12697, %v12941
    %v12963 = vsub.f32 %v12699, %v12941
    %v12964 = vsub.f32 %v12702, %v12941
    %v12965 = vsub.f32 %v12704, %v12941
    %v12966 = vsub.f32 %v12707, %v12941
    %v12967 = vsub.f32 %v12709, %v12941
    %v12968 = vsub.f32 %v12712, %v12941
    %v12969 = vsub.f32 %v12714, %v12941
    %v12970 = vsub.f32 %v12717, %v12941
    %v12971 = vsub.f32 %v12719, %v12941
    %v12972 = vsub.f32 %v12722, %v12941
    %v12973 = vsub.f32 %v12724, %v12941
    %v12974 = vsub.f32 %v12727, %v12941
    %v12975 = vsub.f32 %v12729, %v12941
    %v12976 = vsub.f32 %v12732, %v12941
    %v12977 = vsub.f32 %v12734, %v12941
    %v12978 = vsub.f32 %v12737, %v12941
    %v12979 = vsub.f32 %v12739, %v12941
    %v12980 = vsub.f32 %v12742, %v12941
    %v12981 = vsub.f32 %v12744, %v12941
    %v12982 = vsub.f32 %v12747, %v12941
    %v12983 = vsub.f32 %v12749, %v12941
    %v12984 = vsub.f32 %v12752, %v12941
    %v12985 = vsub.f32 %v12754, %v12941
    %v12986 = vsub.f32 %v12757, %v12941
    %v12987 = vsub.f32 %v12759, %v12941
    %v12988 = vsub.f32 %v12762, %v12941
    %v12989 = vsub.f32 %v12764, %v12941
    %v12990 = vsub.f32 %v12767, %v12941
    %v12991 = vsub.f32 %v12769, %v12941
    %v12992 = vsub.f32 %v12772, %v12941
    %v12993 = vsub.f32 %v12774, %v12941
    %v12994 = vsub.f32 %v12777, %v12941
    %v12995 = vsub.f32 %v12779, %v12941
    %v12996 = vsub.f32 %v12782, %v12941
    %v12997 = vsub.f32 %v12784, %v12941
    %v12998 = vsub.f32 %v12787, %v12941
    %v12999 = vsub.f32 %v12789, %v12941
    %v13000 = vsub.f32 %v12792, %v12941
    %v13001 = vsub.f32 %v12794, %v12941
    %v13002 = vsub.f32 %v12797, %v12941
    %v13003 = vsub.f32 %v12799, %v12941
    %v13004 = vsub.f32 %v12802, %v12941
    %v13005 = vsub.f32 %v12804, %v12941
    %v13006 = vmul.f32 %v12942, %v12942
    %v13007 = vmul.f32 %v12943, %v12943
    %v13008 = vmul.f32 %v12944, %v12944
    %v13009 = vmul.f32 %v12945, %v12945
    %v13010 = vmul.f32 %v12946, %v12946
    %v13011 = vmul.f32 %v12947, %v12947
    %v13012 = vmul.f32 %v12948, %v12948
    %v13013 = vmul.f32 %v12949, %v12949
    %v13014 = vmul.f32 %v12950, %v12950
    %v13015 = vmul.f32 %v12951, %v12951
    %v13016 = vmul.f32 %v12952, %v12952
    %v13017 = vmul.f32 %v12953, %v12953
    %v13018 = vmul.f32 %v12954, %v12954
    %v13019 = vmul.f32 %v12955, %v12955
    %v13020 = vmul.f32 %v12956, %v12956
    %v13021 = vmul.f32 %v12957, %v12957
    %v13022 = vmul.f32 %v12958, %v12958
    %v13023 = vmul.f32 %v12959, %v12959
    %v13024 = vmul.f32 %v12960, %v12960
    %v13025 = vmul.f32 %v12961, %v12961
    %v13026 = vmul.f32 %v12962, %v12962
    %v13027 = vmul.f32 %v12963, %v12963
    %v13028 = vmul.f32 %v12964, %v12964
    %v13029 = vmul.f32 %v12965, %v12965
    %v13030 = vmul.f32 %v12966, %v12966
    %v13031 = vmul.f32 %v12967, %v12967
    %v13032 = vmul.f32 %v12968, %v12968
    %v13033 = vmul.f32 %v12969, %v12969
    %v13034 = vmul.f32 %v12970, %v12970
    %v13035 = vmul.f32 %v12971, %v12971
    %v13036 = vmul.f32 %v12972, %v12972
    %v13037 = vmul.f32 %v12973, %v12973
    %v13038 = vmul.f32 %v12974, %v12974
    %v13039 = vmul.f32 %v12975, %v12975
    %v13040 = vmul.f32 %v12976, %v12976
    %v13041 = vmul.f32 %v12977, %v12977
    %v13042 = vmul.f32 %v12978, %v12978
    %v13043 = vmul.f32 %v12979, %v12979
    %v13044 = vmul.f32 %v12980, %v12980
    %v13045 = vmul.f32 %v12981, %v12981
    %v13046 = vmul.f32 %v12982, %v12982
    %v13047 = vmul.f32 %v12983, %v12983
    %v13048 = vmul.f32 %v12984, %v12984
    %v13049 = vmul.f32 %v12985, %v12985
    %v13050 = vmul.f32 %v12986, %v12986
    %v13051 = vmul.f32 %v12987, %v12987
    %v13052 = vmul.f32 %v12988, %v12988
    %v13053 = vmul.f32 %v12989, %v12989
    %v13054 = vmul.f32 %v12990, %v12990
    %v13055 = vmul.f32 %v12991, %v12991
    %v13056 = vmul.f32 %v12992, %v12992
    %v13057 = vmul.f32 %v12993, %v12993
    %v13058 = vmul.f32 %v12994, %v12994
    %v13059 = vmul.f32 %v12995, %v12995
    %v13060 = vmul.f32 %v12996, %v12996
    %v13061 = vmul.f32 %v12997, %v12997
    %v13062 = vmul.f32 %v12998, %v12998
    %v13063 = vmul.f32 %v12999, %v12999
    %v13064 = vmul.f32 %v13000, %v13000
    %v13065 = vmul.f32 %v13001, %v13001
    %v13066 = vmul.f32 %v13002, %v13002
    %v13067 = vmul.f32 %v13003, %v13003
    %v13068 = vmul.f32 %v13004, %v13004
    %v13069 = vmul.f32 %v13005, %v13005
    %v13070 = vsel %vm31, %v13006, 0.0
    %v13071 = vsel %vm31, %v13007, 0.0
    %v13072 = vadd.f32 %v13070, %v13071
    %v13073 = vsel %vm31, %v13008, 0.0
    %v13074 = vadd.f32 %v13072, %v13073
    %v13075 = vsel %vm31, %v13009, 0.0
    %v13076 = vadd.f32 %v13074, %v13075
    %v13077 = vsel %vm31, %v13010, 0.0
    %v13078 = vadd.f32 %v13076, %v13077
    %v13079 = vsel %vm31, %v13011, 0.0
    %v13080 = vadd.f32 %v13078, %v13079
    %v13081 = vsel %vm31, %v13012, 0.0
    %v13082 = vadd.f32 %v13080, %v13081
    %v13083 = vsel %vm31, %v13013, 0.0
    %v13084 = vadd.f32 %v13082, %v13083
    %v13085 = vsel %vm31, %v13014, 0.0
    %v13086 = vadd.f32 %v13084, %v13085
    %v13087 = vsel %vm31, %v13015, 0.0
    %v13088 = vadd.f32 %v13086, %v13087
    %v13089 = vsel %vm31, %v13016, 0.0
    %v13090 = vadd.f32 %v13088, %v13089
    %v13091 = vsel %vm31, %v13017, 0.0
    %v13092 = vadd.f32 %v13090, %v13091
    %v13093 = vsel %vm31, %v13018, 0.0
    %v13094 = vadd.f32 %v13092, %v13093
    %v13095 = vsel %vm31, %v13019, 0.0
    %v13096 = vadd.f32 %v13094, %v13095
    %v13097 = vsel %vm31, %v13020, 0.0
    %v13098 = vadd.f32 %v13096, %v13097
    %v13099 = vsel %vm31, %v13021, 0.0
    %v13100 = vadd.f32 %v13098, %v13099
    %v13101 = vsel %vm31, %v13022, 0.0
    %v13102 = vadd.f32 %v13100, %v13101
    %v13103 = vsel %vm31, %v13023, 0.0
    %v13104 = vadd.f32 %v13102, %v13103
    %v13105 = vsel %vm31, %v13024, 0.0
    %v13106 = vadd.f32 %v13104, %v13105
    %v13107 = vsel %vm31, %v13025, 0.0
    %v13108 = vadd.f32 %v13106, %v13107
    %v13109 = vsel %vm31, %v13026, 0.0
    %v13110 = vadd.f32 %v13108, %v13109
    %v13111 = vsel %vm31, %v13027, 0.0
    %v13112 = vadd.f32 %v13110, %v13111
    %v13113 = vsel %vm31, %v13028, 0.0
    %v13114 = vadd.f32 %v13112, %v13113
    %v13115 = vsel %vm31, %v13029, 0.0
    %v13116 = vadd.f32 %v13114, %v13115
    %v13117 = vsel %vm31, %v13030, 0.0
    %v13118 = vadd.f32 %v13116, %v13117
    %v13119 = vsel %vm31, %v13031, 0.0
    %v13120 = vadd.f32 %v13118, %v13119
    %v13121 = vsel %vm31, %v13032, 0.0
    %v13122 = vadd.f32 %v13120, %v13121
    %v13123 = vsel %vm31, %v13033, 0.0
    %v13124 = vadd.f32 %v13122, %v13123
    %v13125 = vsel %vm31, %v13034, 0.0
    %v13126 = vadd.f32 %v13124, %v13125
    %v13127 = vsel %vm31, %v13035, 0.0
    %v13128 = vadd.f32 %v13126, %v13127
    %v13129 = vsel %vm31, %v13036, 0.0
    %v13130 = vadd.f32 %v13128, %v13129
    %v13131 = vsel %vm31, %v13037, 0.0
    %v13132 = vadd.f32 %v13130, %v13131
    %v13133 = vsel %vm31, %v13038, 0.0
    %v13134 = vadd.f32 %v13132, %v13133
    %v13135 = vsel %vm31, %v13039, 0.0
    %v13136 = vadd.f32 %v13134, %v13135
    %v13137 = vsel %vm31, %v13040, 0.0
    %v13138 = vadd.f32 %v13136, %v13137
    %v13139 = vsel %vm31, %v13041, 0.0
    %v13140 = vadd.f32 %v13138, %v13139
    %v13141 = vsel %vm31, %v13042, 0.0
    %v13142 = vadd.f32 %v13140, %v13141
    %v13143 = vsel %vm31, %v13043, 0.0
    %v13144 = vadd.f32 %v13142, %v13143
    %v13145 = vsel %vm31, %v13044, 0.0
    %v13146 = vadd.f32 %v13144, %v13145
    %v13147 = vsel %vm31, %v13045, 0.0
    %v13148 = vadd.f32 %v13146, %v13147
    %v13149 = vsel %vm31, %v13046, 0.0
    %v13150 = vadd.f32 %v13148, %v13149
    %v13151 = vsel %vm31, %v13047, 0.0
    %v13152 = vadd.f32 %v13150, %v13151
    %v13153 = vsel %vm31, %v13048, 0.0
    %v13154 = vadd.f32 %v13152, %v13153
    %v13155 = vsel %vm31, %v13049, 0.0
    %v13156 = vadd.f32 %v13154, %v13155
    %v13157 = vsel %vm31, %v13050, 0.0
    %v13158 = vadd.f32 %v13156, %v13157
    %v13159 = vsel %vm31, %v13051, 0.0
    %v13160 = vadd.f32 %v13158, %v13159
    %v13161 = vsel %vm31, %v13052, 0.0
    %v13162 = vadd.f32 %v13160, %v13161
    %v13163 = vsel %vm31, %v13053, 0.0
    %v13164 = vadd.f32 %v13162, %v13163
    %v13165 = vsel %vm31, %v13054, 0.0
    %v13166 = vadd.f32 %v13164, %v13165
    %v13167 = vsel %vm31, %v13055, 0.0
    %v13168 = vadd.f32 %v13166, %v13167
    %v13169 = vsel %vm31, %v13056, 0.0
    %v13170 = vadd.f32 %v13168, %v13169
    %v13171 = vsel %vm31, %v13057, 0.0
    %v13172 = vadd.f32 %v13170, %v13171
    %v13173 = vsel %vm31, %v13058, 0.0
    %v13174 = vadd.f32 %v13172, %v13173
    %v13175 = vsel %vm31, %v13059, 0.0
    %v13176 = vadd.f32 %v13174, %v13175
    %v13177 = vsel %vm31, %v13060, 0.0
    %v13178 = vadd.f32 %v13176, %v13177
    %v13179 = vsel %vm31, %v13061, 0.0
    %v13180 = vadd.f32 %v13178, %v13179
    %v13181 = vsel %vm31, %v13062, 0.0
    %v13182 = vadd.f32 %v13180, %v13181
    %v13183 = vsel %vm31, %v13063, 0.0
    %v13184 = vadd.f32 %v13182, %v13183
    %v13185 = vsel %vm31, %v13064, 0.0
    %v13186 = vadd.f32 %v13184, %v13185
    %v13187 = vsel %vm31, %v13065, 0.0
    %v13188 = vadd.f32 %v13186, %v13187
    %v13189 = vsel %vm31, %v13066, 0.0
    %v13190 = vadd.f32 %v13188, %v13189
    %v13191 = vsel %vm31, %v13067, 0.0
    %v13192 = vadd.f32 %v13190, %v13191
    %v13193 = vsel %vm31, %v13068, 0.0
    %v13194 = vadd.f32 %v13192, %v13193
    %v13195 = vsel %vm31, %v13069, 0.0
    %v13196 = vadd.f32 %v13194, %v13195
    %v13197 = vrot.slane %v13196, 4
    %v13198 = vadd.f32 %v13196, %v13197
    %v13199 = vrot.slane %v13198, 2
    %v13200 = vadd.f32 %v13198, %v13199
    %v13201 = vrot.slane %v13200, 1
    %v13202 = vadd.f32 %v13200, %v13201
    %v13203 = vmul.f32 %v13202, %v3856
    %v13204 = vadd.f32 %v13203, 1e-05
    %v13205 = vrsqrt.pop %v13204
    %v13206 = vmul.f32 %v13205, %v13204
    %v13207 = vmul.f32 %v13206, %v13205
    %v13208 = vmul.f32 0.5, %v13207
    %v13209 = vsub.f32 1.5, %v13208
    %v13210 = vmul.f32 %v13205, %v13209
    %vm13211 = vweird.f32 %v13204
    %vm13212 = vweird.f32 %v13205
    %vm13213 = vmor %vm13211, %vm13212
    %v13214 = vsel %vm13213, %v13205, %v13210
    %v13215 = vmul.f32 %v12942, %v13214
    %v13216 = vmul.f32 %v12943, %v13214
    %v13217 = vmul.f32 %v12944, %v13214
    %v13218 = vmul.f32 %v12945, %v13214
    %v13219 = vmul.f32 %v12946, %v13214
    %v13220 = vmul.f32 %v12947, %v13214
    %v13221 = vmul.f32 %v12948, %v13214
    %v13222 = vmul.f32 %v12949, %v13214
    %v13223 = vmul.f32 %v12950, %v13214
    %v13224 = vmul.f32 %v12951, %v13214
    %v13225 = vmul.f32 %v12952, %v13214
    %v13226 = vmul.f32 %v12953, %v13214
    %v13227 = vmul.f32 %v12954, %v13214
    %v13228 = vmul.f32 %v12955, %v13214
    %v13229 = vmul.f32 %v12956, %v13214
    %v13230 = vmul.f32 %v12957, %v13214
    %v13231 = vmul.f32 %v12958, %v13214
    %v13232 = vmul.f32 %v12959, %v13214
    %v13233 = vmul.f32 %v12960, %v13214
    %v13234 = vmul.f32 %v12961, %v13214
    %v13235 = vmul.f32 %v12962, %v13214
    %v13236 = vmul.f32 %v12963, %v13214
    %v13237 = vmul.f32 %v12964, %v13214
    %v13238 = vmul.f32 %v12965, %v13214
    %v13239 = vmul.f32 %v12966, %v13214
    %v13240 = vmul.f32 %v12967, %v13214
    %v13241 = vmul.f32 %v12968, %v13214
    %v13242 = vmul.f32 %v12969, %v13214
    %v13243 = vmul.f32 %v12970, %v13214
    %v13244 = vmul.f32 %v12971, %v13214
    %v13245 = vmul.f32 %v12972, %v13214
    %v13246 = vmul.f32 %v12973, %v13214
    %v13247 = vmul.f32 %v12974, %v13214
    %v13248 = vmul.f32 %v12975, %v13214
    %v13249 = vmul.f32 %v12976, %v13214
    %v13250 = vmul.f32 %v12977, %v13214
    %v13251 = vmul.f32 %v12978, %v13214
    %v13252 = vmul.f32 %v12979, %v13214
    %v13253 = vmul.f32 %v12980, %v13214
    %v13254 = vmul.f32 %v12981, %v13214
    %v13255 = vmul.f32 %v12982, %v13214
    %v13256 = vmul.f32 %v12983, %v13214
    %v13257 = vmul.f32 %v12984, %v13214
    %v13258 = vmul.f32 %v12985, %v13214
    %v13259 = vmul.f32 %v12986, %v13214
    %v13260 = vmul.f32 %v12987, %v13214
    %v13261 = vmul.f32 %v12988, %v13214
    %v13262 = vmul.f32 %v12989, %v13214
    %v13263 = vmul.f32 %v12990, %v13214
    %v13264 = vmul.f32 %v12991, %v13214
    %v13265 = vmul.f32 %v12992, %v13214
    %v13266 = vmul.f32 %v12993, %v13214
    %v13267 = vmul.f32 %v12994, %v13214
    %v13268 = vmul.f32 %v12995, %v13214
    %v13269 = vmul.f32 %v12996, %v13214
    %v13270 = vmul.f32 %v12997, %v13214
    %v13271 = vmul.f32 %v12998, %v13214
    %v13272 = vmul.f32 %v12999, %v13214
    %v13273 = vmul.f32 %v13000, %v13214
    %v13274 = vmul.f32 %v13001, %v13214
    %v13275 = vmul.f32 %v13002, %v13214
    %v13276 = vmul.f32 %v13003, %v13214
    %v13277 = vmul.f32 %v13004, %v13214
    %v13278 = vmul.f32 %v13005, %v13214
    %v13280 = vperm.slane %v12806, 0
    %v13282 = vmul.f32 %v13215, %v13280
    %v13283 = vmul.f32 %v13216, %v13280
    %v13284 = vmul.f32 %v13217, %v13280
    %v13285 = vmul.f32 %v13218, %v13280
    %v13286 = vmul.f32 %v13219, %v13280
    %v13287 = vmul.f32 %v13220, %v13280
    %v13288 = vmul.f32 %v13221, %v13280
    %v13289 = vmul.f32 %v13222, %v13280
    %v13290 = vmul.f32 %v13223, %v13280
    %v13291 = vmul.f32 %v13224, %v13280
    %v13292 = vmul.f32 %v13225, %v13280
    %v13293 = vmul.f32 %v13226, %v13280
    %v13294 = vmul.f32 %v13227, %v13280
    %v13295 = vmul.f32 %v13228, %v13280
    %v13296 = vmul.f32 %v13229, %v13280
    %v13297 = vmul.f32 %v13230, %v13280
    %v13298 = vmul.f32 %v13231, %v13280
    %v13299 = vmul.f32 %v13232, %v13280
    %v13300 = vmul.f32 %v13233, %v13280
    %v13301 = vmul.f32 %v13234, %v13280
    %v13302 = vmul.f32 %v13235, %v13280
    %v13303 = vmul.f32 %v13236, %v13280
    %v13304 = vmul.f32 %v13237, %v13280
    %v13305 = vmul.f32 %v13238, %v13280
    %v13306 = vmul.f32 %v13239, %v13280
    %v13307 = vmul.f32 %v13240, %v13280
    %v13308 = vmul.f32 %v13241, %v13280
    %v13309 = vmul.f32 %v13242, %v13280
    %v13310 = vmul.f32 %v13243, %v13280
    %v13311 = vmul.f32 %v13244, %v13280
    %v13312 = vmul.f32 %v13245, %v13280
    %v13313 = vmul.f32 %v13246, %v13280
    %v13314 = vmul.f32 %v13247, %v13280
    %v13315 = vmul.f32 %v13248, %v13280
    %v13316 = vmul.f32 %v13249, %v13280
    %v13317 = vmul.f32 %v13250, %v13280
    %v13318 = vmul.f32 %v13251, %v13280
    %v13319 = vmul.f32 %v13252, %v13280
    %v13320 = vmul.f32 %v13253, %v13280
    %v13321 = vmul.f32 %v13254, %v13280
    %v13322 = vmul.f32 %v13255, %v13280
    %v13323 = vmul.f32 %v13256, %v13280
    %v13324 = vmul.f32 %v13257, %v13280
    %v13325 = vmul.f32 %v13258, %v13280
    %v13326 = vmul.f32 %v13259, %v13280
    %v13327 = vmul.f32 %v13260, %v13280
    %v13328 = vmul.f32 %v13261, %v13280
    %v13329 = vmul.f32 %v13262, %v13280
    %v13330 = vmul.f32 %v13263, %v13280
    %v13331 = vmul.f32 %v13264, %v13280
    %v13332 = vmul.f32 %v13265, %v13280
    %v13333 = vmul.f32 %v13266, %v13280
    %v13334 = vmul.f32 %v13267, %v13280
    %v13335 = vmul.f32 %v13268, %v13280
    %v13336 = vmul.f32 %v13269, %v13280
    %v13337 = vmul.f32 %v13270, %v13280
    %v13338 = vmul.f32 %v13271, %v13280
    %v13339 = vmul.f32 %v13272, %v13280
    %v13340 = vmul.f32 %v13273, %v13280
    %v13341 = vmul.f32 %v13274, %v13280
    %v13342 = vmul.f32 %v13275, %v13280
    %v13343 = vmul.f32 %v13276, %v13280
    %v13344 = vmul.f32 %v13277, %v13280
    %v13345 = vmul.f32 %v13278, %v13280
    %v13347 = vperm.slane %v12807, 0
    %v13349 = vadd.f32 %v13282, %v13347
    %v13350 = vadd.f32 %v13283, %v13347
    %v13351 = vadd.f32 %v13284, %v13347
    %v13352 = vadd.f32 %v13285, %v13347
    %v13353 = vadd.f32 %v13286, %v13347
    %v13354 = vadd.f32 %v13287, %v13347
    %v13355 = vadd.f32 %v13288, %v13347
    %v13356 = vadd.f32 %v13289, %v13347
    %v13357 = vadd.f32 %v13290, %v13347
    %v13358 = vadd.f32 %v13291, %v13347
    %v13359 = vadd.f32 %v13292, %v13347
    %v13360 = vadd.f32 %v13293, %v13347
    %v13361 = vadd.f32 %v13294, %v13347
    %v13362 = vadd.f32 %v13295, %v13347
    %v13363 = vadd.f32 %v13296, %v13347
    %v13364 = vadd.f32 %v13297, %v13347
    %v13365 = vadd.f32 %v13298, %v13347
    %v13366 = vadd.f32 %v13299, %v13347
    %v13367 = vadd.f32 %v13300, %v13347
    %v13368 = vadd.f32 %v13301, %v13347
    %v13369 = vadd.f32 %v13302, %v13347
    %v13370 = vadd.f32 %v13303, %v13347
    %v13371 = vadd.f32 %v13304, %v13347
    %v13372 = vadd.f32 %v13305, %v13347
    %v13373 = vadd.f32 %v13306, %v13347
    %v13374 = vadd.f32 %v13307, %v13347
    %v13375 = vadd.f32 %v13308, %v13347
    %v13376 = vadd.f32 %v13309, %v13347
    %v13377 = vadd.f32 %v13310, %v13347
    %v13378 = vadd.f32 %v13311, %v13347
    %v13379 = vadd.f32 %v13312, %v13347
    %v13380 = vadd.f32 %v13313, %v13347
    %v13381 = vadd.f32 %v13314, %v13347
    %v13382 = vadd.f32 %v13315, %v13347
    %v13383 = vadd.f32 %v13316, %v13347
    %v13384 = vadd.f32 %v13317, %v13347
    %v13385 = vadd.f32 %v13318, %v13347
    %v13386 = vadd.f32 %v13319, %v13347
    %v13387 = vadd.f32 %v13320, %v13347
    %v13388 = vadd.f32 %v13321, %v13347
    %v13389 = vadd.f32 %v13322, %v13347
    %v13390 = vadd.f32 %v13323, %v13347
    %v13391 = vadd.f32 %v13324, %v13347
    %v13392 = vadd.f32 %v13325, %v13347
    %v13393 = vadd.f32 %v13326, %v13347
    %v13394 = vadd.f32 %v13327, %v13347
    %v13395 = vadd.f32 %v13328, %v13347
    %v13396 = vadd.f32 %v13329, %v13347
    %v13397 = vadd.f32 %v13330, %v13347
    %v13398 = vadd.f32 %v13331, %v13347
    %v13399 = vadd.f32 %v13332, %v13347
    %v13400 = vadd.f32 %v13333, %v13347
    %v13401 = vadd.f32 %v13334, %v13347
    %v13402 = vadd.f32 %v13335, %v13347
    %v13403 = vadd.f32 %v13336, %v13347
    %v13404 = vadd.f32 %v13337, %v13347
    %v13405 = vadd.f32 %v13338, %v13347
    %v13406 = vadd.f32 %v13339, %v13347
    %v13407 = vadd.f32 %v13340, %v13347
    %v13408 = vadd.f32 %v13341, %v13347
    %v13409 = vadd.f32 %v13342, %v13347
    %v13410 = vadd.f32 %v13343, %v13347
    %v13411 = vadd.f32 %v13344, %v13347
    %v13412 = vadd.f32 %v13345, %v13347
    %13413 = vst.msk [vmem:[#allocation3] sm:$0xff] %vm31, %v13349
    %13414 = vst.msk [vmem:[#allocation3 + $0x8] sm:$0xff] %vm31, %v13350
    %13415 = vst.msk [vmem:[#allocation3 + $0x10] sm:$0xff] %vm31, %v13351
    %13416 = vst.msk [vmem:[#allocation3 + $0x18] sm:$0xff] %vm31, %v13352
    %13417 = vst.msk [vmem:[#allocation3 + $0x20] sm:$0xff] %vm31, %v13353
    %13418 = vst.msk [vmem:[#allocation3 + $0x28] sm:$0xff] %vm31, %v13354
    %13419 = vst.msk [vmem:[#allocation3 + $0x30] sm:$0xff] %vm31, %v13355
    %13420 = vst.msk [vmem:[#allocation3 + $0x38] sm:$0xff] %vm31, %v13356
    %13421 = vst.msk [vmem:[#allocation3 + $0x40] sm:$0xff] %vm31, %v13357
    %13422 = vst.msk [vmem:[#allocation3 + $0x48] sm:$0xff] %vm31, %v13358
    %13423 = vst.msk [vmem:[#allocation3 + $0x50] sm:$0xff] %vm31, %v13359
    %13424 = vst.msk [vmem:[#allocation3 + $0x58] sm:$0xff] %vm31, %v13360
    %13425 = vst.msk [vmem:[#allocation3 + $0x60] sm:$0xff] %vm31, %v13361
    %13426 = vst.msk [vmem:[#allocation3 + $0x68] sm:$0xff] %vm31, %v13362
    %13427 = vst.msk [vmem:[#allocation3 + $0x70] sm:$0xff] %vm31, %v13363
    %13428 = vst.msk [vmem:[#allocation3 + $0x78] sm:$0xff] %vm31, %v13364
    %13429 = vst.msk [vmem:[#allocation3 + $0x80] sm:$0xff] %vm31, %v13365
    %13430 = vst.msk [vmem:[#allocation3 + $0x88] sm:$0xff] %vm31, %v13366
    %13431 = vst.msk [vmem:[#allocation3 + $0x90] sm:$0xff] %vm31, %v13367
    %13432 = vst.msk [vmem:[#allocation3 + $0x98] sm:$0xff] %vm31, %v13368
    %13433 = vst.msk [vmem:[#allocation3 + $0xa0] sm:$0xff] %vm31, %v13369
    %13434 = vst.msk [vmem:[#allocation3 + $0xa8] sm:$0xff] %vm31, %v13370
    %13435 = vst.msk [vmem:[#allocation3 + $0xb0] sm:$0xff] %vm31, %v13371
    %13436 = vst.msk [vmem:[#allocation3 + $0xb8] sm:$0xff] %vm31, %v13372
    %13437 = vst.msk [vmem:[#allocation3 + $0xc0] sm:$0xff] %vm31, %v13373
    %13438 = vst.msk [vmem:[#allocation3 + $0xc8] sm:$0xff] %vm31, %v13374
    %13439 = vst.msk [vmem:[#allocation3 + $0xd0] sm:$0xff] %vm31, %v13375
    %13440 = vst.msk [vmem:[#allocation3 + $0xd8] sm:$0xff] %vm31, %v13376
    %13441 = vst.msk [vmem:[#allocation3 + $0xe0] sm:$0xff] %vm31, %v13377
    %13442 = vst.msk [vmem:[#allocation3 + $0xe8] sm:$0xff] %vm31, %v13378
    %13443 = vst.msk [vmem:[#allocation3 + $0xf0] sm:$0xff] %vm31, %v13379
    %13444 = vst.msk [vmem:[#allocation3 + $0xf8] sm:$0xff] %vm31, %v13380
    %13445 = vst.msk [vmem:[#allocation3 + $0x100] sm:$0xff] %vm31, %v13381
    %13446 = vst.msk [vmem:[#allocation3 + $0x108] sm:$0xff] %vm31, %v13382
    %13447 = vst.msk [vmem:[#allocation3 + $0x110] sm:$0xff] %vm31, %v13383
    %13448 = vst.msk [vmem:[#allocation3 + $0x118] sm:$0xff] %vm31, %v13384
    %13449 = vst.msk [vmem:[#allocation3 + $0x120] sm:$0xff] %vm31, %v13385
    %13450 = vst.msk [vmem:[#allocation3 + $0x128] sm:$0xff] %vm31, %v13386
    %13451 = vst.msk [vmem:[#allocation3 + $0x130] sm:$0xff] %vm31, %v13387
    %13452 = vst.msk [vmem:[#allocation3 + $0x138] sm:$0xff] %vm31, %v13388
    %13453 = vst.msk [vmem:[#allocation3 + $0x140] sm:$0xff] %vm31, %v13389
    %13454 = vst.msk [vmem:[#allocation3 + $0x148] sm:$0xff] %vm31, %v13390
    %13455 = vst.msk [vmem:[#allocation3 + $0x150] sm:$0xff] %vm31, %v13391
    %13456 = vst.msk [vmem:[#allocation3 + $0x158] sm:$0xff] %vm31, %v13392
    %13457 = vst.msk [vmem:[#allocation3 + $0x160] sm:$0xff] %vm31, %v13393
    %13458 = vst.msk [vmem:[#allocation3 + $0x168] sm:$0xff] %vm31, %v13394
    %13459 = vst.msk [vmem:[#allocation3 + $0x170] sm:$0xff] %vm31, %v13395
    %13460 = vst.msk [vmem:[#allocation3 + $0x178] sm:$0xff] %vm31, %v13396
    %13461 = vst.msk [vmem:[#allocation3 + $0x180] sm:$0xff] %vm31, %v13397
    %13462 = vst.msk [vmem:[#allocation3 + $0x188] sm:$0xff] %vm31, %v13398
    %13463 = vst.msk [vmem:[#allocation3 + $0x190] sm:$0xff] %vm31, %v13399
    %13464 = vst.msk [vmem:[#allocation3 + $0x198] sm:$0xff] %vm31, %v13400
    %13465 = vst.msk [vmem:[#allocation3 + $0x1a0] sm:$0xff] %vm31, %v13401
    %13466 = vst.msk [vmem:[#allocation3 + $0x1a8] sm:$0xff] %vm31, %v13402
    %13467 = vst.msk [vmem:[#allocation3 + $0x1b0] sm:$0xff] %vm31, %v13403
    %13468 = vst.msk [vmem:[#allocation3 + $0x1b8] sm:$0xff] %vm31, %v13404
    %13469 = vst.msk [vmem:[#allocation3 + $0x1c0] sm:$0xff] %vm31, %v13405
    %13470 = vst.msk [vmem:[#allocation3 + $0x1c8] sm:$0xff] %vm31, %v13406
    %13471 = vst.msk [vmem:[#allocation3 + $0x1d0] sm:$0xff] %vm31, %v13407
    %13472 = vst.msk [vmem:[#allocation3 + $0x1d8] sm:$0xff] %vm31, %v13408
    %13473 = vst.msk [vmem:[#allocation3 + $0x1e0] sm:$0xff] %vm31, %v13409
    %13474 = vst.msk [vmem:[#allocation3 + $0x1e8] sm:$0xff] %vm31, %v13410
    %13475 = vst.msk [vmem:[#allocation3 + $0x1f0] sm:$0xff] %vm31, %v13411
    %13476 = vst.msk [vmem:[#allocation3 + $0x1f8] sm:$0xff] %vm31, %v13412
    // Predicated region
    $region34: #{csnet_forward.1} parent=1 // pred_check
      _
    $region35: #{csnet_forward.1} parent=1 // pred_check_branch
      %13478 = sbr.rel (0) target = $region37
    $region36: #{csnet_forward.1} parent=1 // pred_region
      %13480 = vsyncadd [#allocation4], 0
      %s13481 = sshll.u32 [#allocation3], 4
      %s13482 = int_to_ptr.vmem [resolvable:$true] %s13481
      %s13483 = sshll.u32 %s8, 4
      %s13484 = int_to_ptr.hbm [resolvable:$true] %s13483
      %13489 = dma.vmem_to_hbm [thread:$0]  %s13482, 8192, %s13484, [#allocation4], 128, 128, 8
    $region37: #{csnet_forward.1} parent=1 // pred_fallthru
      _
    // Predicated region
    $region38: #{csnet_forward.1} parent=1 // pred_check
      _
    $region39: #{csnet_forward.1} parent=1 // pred_check_branch
      %13491 = sbr.rel (0) target = $region41
    $region40: #{csnet_forward.1} parent=1 // pred_region
      %13493 = dma.done [#allocation4], 8192
    $region41: #{csnet_forward.1} parent=1 // pred_fallthru
      _
    %13494 = vsyncpa [#allocation4], 1

</llo_original>
